<compile_context>
chip_gen: v6e
topology: v6e:2x2x1
jax: 0.10.0
libtpu: 0.0.40
codegen_flags: <defaults>
</compile_context>

<pallas_src>
import functools

import jax
import jax.numpy as jnp
import numpy as np
from jax.experimental import pallas as pl
from jax.experimental.pallas import tpu as pltpu

_EPS = 1e-5


# ----------------------------------------------------------------------------
# In-kernel building blocks.
# ----------------------------------------------------------------------------
def _decode_block(act, w_ref, ep_ref):
    """One fused DecodeBlock on a single sample, row-dense layout.

    act:    (Hin, Win*Cin)  f32      dense rows; lane axis = (iw, ci), ci fastest
    w_ref:  (3, Win*Cin, Wd*Cout)    banded convT weights, one slab per kh
    ep_ref: (3, Wd*Cout)             [bias ; bn_scale ; bn_shift], row-tiled
    returns (2*Hin+1, Wd*Cout)       dense output rows; lane axis = (ow, co)
    """
    hin = act.shape[0]

    # ConvTranspose2d: 3 lane-dense MXU matmuls (one per kernel row kh).
    y0 = jnp.dot(act, w_ref[0], preferred_element_type=jnp.float32)
    y1 = jnp.dot(act, w_ref[1], preferred_element_type=jnp.float32)
    y2 = jnp.dot(act, w_ref[2], preferred_element_type=jnp.float32)

    # Row assembly: even output row 2m   <- kh=0 (ih=m) + kh=2 (ih=m-1)
    #               odd  output row 2m+1 <- kh=1 (ih=m)
    even = jnp.pad(y0, ((0, 1), (0, 0))) + jnp.pad(y2, ((1, 0), (0, 0)))  # (Hin+1, .)
    odd = jnp.pad(y1, ((0, 1), (0, 0)))                                   # last row junk

    # H-interleave even/odd rows -> dense (2*Hin+1, Wd*Cout); junk row trimmed
    # BEFORE the epilogue so it is never touched.
    inter = jnp.stack([even, odd], axis=1)        # (Hin+1, 2, Wd*Cout)
    dense = inter.reshape(2 * (hin + 1), even.shape[1])[: 2 * hin + 1, :]

    # Epilogue (single pass over the interleaved rows):
    #   +bias -> LeakyReLU(0.3) -> Dropout (eval: identity) -> BN (folded).
    ep = ep_ref[...]                              # (3, Wd*Cout)
    bias, scale, shift = ep[0:1, :], ep[1:2, :], ep[2:3, :]
    dense = dense + bias
    dense = jnp.where(dense >= 0.0, dense, 0.3 * dense)
    return dense * scale + shift


def decoder_kernel(*refs):
    # refs = (x_ref, w1, ep1, w2, ep2, w3, ep3, w4, ep4, o_ref)
    x_ref, o_ref = refs[0], refs[-1]
    blocks = refs[1:-1]
    act = x_ref[0]                                # (H0, W0*C0)
    for i in range(len(blocks) // 2):
        act = _decode_block(act, blocks[2 * i], blocks[2 * i + 1])
    o_ref[0] = act                                # (Hf, Wf*Cf), lane-dense store


# ----------------------------------------------------------------------------
# One-time parameter preparation (hoisted out of the forward path).
# ----------------------------------------------------------------------------
def init_block_params(key, cin, cout, k=3):
    k1, k2, k3, k4 = jax.random.split(key, 4)
    return dict(
        w=0.1 * jax.random.normal(k1, (cin, cout, k, k), jnp.float32),  # PyTorch ConvT layout
        b=0.1 * jax.random.normal(k2, (cout,), jnp.float32),
        gamma=1.0 + 0.1 * jax.random.normal(k3, (cout,), jnp.float32),
        beta=0.1 * jax.random.normal(k4, (cout,), jnp.float32),
        rm=jnp.zeros((cout,), jnp.float32),       # BN running mean
        rv=jnp.ones((cout,), jnp.float32),        # BN running var
    )


def prepare_decoder_params(params_list, H0, W0):
    """Band the ConvT weights into (3, Win*Cin, Wd*Cout) row matrices and fold
    bias / BatchNorm running stats into row-tiled (3, Wd*Cout) epilogue params."""
    prepped = []
    hin, win = H0, W0
    for p in params_list:
        w = np.asarray(p["w"])                    # (Cin, Cout, 3, 3)
        cin, cout, k, _ = w.shape
        wd = 2 * win + 1
        wb = np.zeros((k, win * cin, wd * cout), np.float32)
        for kh in range(k):
            for iw in range(win):
                for kw in range(k):
                    ow = 2 * iw + kw
                    wb[kh, iw * cin:(iw + 1) * cin,
                       ow * cout:(ow + 1) * cout] = w[:, :, kh, kw]
        scale = np.asarray(p["gamma"]) / np.sqrt(np.asarray(p["rv"]) + _EPS)
        shift = np.asarray(p["beta"]) - np.asarray(p["rm"]) * scale
        ep = np.stack([np.tile(np.asarray(p["b"]), wd),
                       np.tile(scale, wd),
                       np.tile(shift, wd)]).astype(np.float32)      # (3, Wd*Cout)
        prepped.append(dict(w=jnp.asarray(wb), ep=jnp.asarray(ep),
                            cin=cin, cout=cout, hin=hin, win=win))
        hin, win = 2 * hin + 1, 2 * win + 1
    return prepped


# ----------------------------------------------------------------------------
# Forward wrapper: one fused pallas_call for the whole decoder.
# ----------------------------------------------------------------------------
def decoder_forward(x_nchw, prepped):
    """x_nchw: (N, C0, H0, W0) -> NCHW output after 4 DecodeBlocks."""
    N, C0, H0, W0 = x_nchw.shape
    assert prepped[0]["cin"] == C0 and prepped[0]["hin"] == H0 and prepped[0]["win"] == W0

    # NCHW -> row-dense layout (N, H, W*C), channels fastest on the lane axis.
    x_rows = jnp.transpose(x_nchw, (0, 2, 3, 1)).reshape(N, H0, W0 * C0)

    Hf = 2 * prepped[-1]["hin"] + 1
    Wf = 2 * prepped[-1]["win"] + 1
    Cf = prepped[-1]["cout"]

    in_specs = [pl.BlockSpec((1, H0, W0 * C0), lambda n: (n, 0, 0))]
    args = [x_rows]
    for blk in prepped:
        in_specs.append(pl.BlockSpec(blk["w"].shape, lambda n: (0, 0, 0)))
        in_specs.append(pl.BlockSpec(blk["ep"].shape, lambda n: (0, 0)))
        args.append(blk["w"])
        args.append(blk["ep"])

    out_rows = pl.pallas_call(
        decoder_kernel,
        out_shape=jax.ShapeDtypeStruct((N, Hf, Wf * Cf), jnp.float32),
        grid=(N,),
        in_specs=in_specs,
        out_specs=pl.BlockSpec((1, Hf, Wf * Cf), lambda n: (n, 0, 0)),
        compiler_params=pltpu.CompilerParams(
            dimension_semantics=("parallel",)),     # v7x: one sample per core
    )(*args)

    # Final layout-only glue on the output: (N, Hf, Wf*Cf) -> NCHW.
    out = out_rows.reshape(N, Hf, Wf, Cf)
    return jnp.transpose(out, (0, 3, 1, 2))


# ----------------------------------------------------------------------------
# Pure-JAX reference (correctness check only).
# ----------------------------------------------------------------------------
def ref_decode_block(x_nchw, p):
    w = p["w"]                                    # (cin, cout, k, k)
    k = w.shape[-1]
    rhs = jnp.flip(w, axis=(2, 3)).transpose(1, 0, 2, 3)   # (cout, cin, k, k)
    out = jax.lax.conv_general_dilated(
        x_nchw, rhs, window_strides=(1, 1),
        padding=((k - 1, k - 1), (k - 1, k - 1)),
        lhs_dilation=(2, 2),
        dimension_numbers=("NCHW", "OIHW", "NCHW"))
    out = out + p["b"][None, :, None, None]
    out = jnp.where(out >= 0.0, out, 0.3 * out)
    scale = p["gamma"] / jnp.sqrt(p["rv"] + _EPS)
    shift = p["beta"] - p["rm"] * scale
    return out * scale[None, :, None, None] + shift[None, :, None, None]


def ref_decoder(x_nchw, params_list):
    out = x_nchw
    for p in params_list:
        out = ref_decode_block(out, p)
    return out


# ----------------------------------------------------------------------------
if __name__ == "__main__":
    key = jax.random.PRNGKey(0)
    kx, kp = jax.random.split(key)

    # Decoder expects 64 input channels; small 4x4 spatial, batch 2.
    x = jax.random.normal(kx, (2, 64, 4, 4), jnp.float32)

    block_dims = [(64, 32), (32, 16), (16, 8), (8, 3)]    # channels=3 at the end
    pkeys = jax.random.split(kp, len(block_dims))
    params = [init_block_params(k, cin, cout)
              for k, (cin, cout) in zip(pkeys, block_dims)]

    prepped = prepare_decoder_params(params, H0=4, W0=4)  # one-time prep

    fwd = jax.jit(functools.partial(decoder_forward, prepped=prepped))
    out = jax.block_until_ready(fwd(x))

    assert out.shape == (2, 3, 79, 79), out.shape

    ref = jax.block_until_ready(ref_decoder(x, params))
    np.testing.assert_allclose(np.asarray(out), np.asarray(ref),
                               rtol=2e-3, atol=2e-3)

    print("KERNEL_OK")
</pallas_src>

<mosaic_0001>
module attributes {stable_mosaic.version = 11 : i64} {
  func.func @decoder_kernel(%arg0: i32, %arg1: memref<1x4x256xf32, #tpu.memory_space<vmem>>, %arg2: memref<3x256x288xf32, #tpu.memory_space<vmem>>, %arg3: memref<3x288xf32, #tpu.memory_space<vmem>>, %arg4: memref<3x288x304xf32, #tpu.memory_space<vmem>>, %arg5: memref<3x304xf32, #tpu.memory_space<vmem>>, %arg6: memref<3x304x312xf32, #tpu.memory_space<vmem>>, %arg7: memref<3x312xf32, #tpu.memory_space<vmem>>, %arg8: memref<3x312x237xf32, #tpu.memory_space<vmem>>, %arg9: memref<3x237xf32, #tpu.memory_space<vmem>>, %arg10: memref<1x79x237xf32, #tpu.memory_space<vmem>>) attributes {dimension_semantics = [#tpu.dimension_semantics<parallel>], iteration_bounds = array<i64: 2>, scalar_prefetch = 0 : i64, scratch_operands = 0 : i64, tpu.core_type = #tpu.core_type<tc>, window_params = [{transform_indices = @transform_0, window_bounds = array<i64: 1, 4, 256>}, {pipeline_mode = #tpu.pipeline_mode<synchronous>, transform_indices = @transform_1, window_bounds = array<i64: 3, 256, 288>}, {pipeline_mode = #tpu.pipeline_mode<synchronous>, transform_indices = @transform_2, window_bounds = array<i64: 3, 288>}, {pipeline_mode = #tpu.pipeline_mode<synchronous>, transform_indices = @transform_3, window_bounds = array<i64: 3, 288, 304>}, {pipeline_mode = #tpu.pipeline_mode<synchronous>, transform_indices = @transform_4, window_bounds = array<i64: 3, 304>}, {pipeline_mode = #tpu.pipeline_mode<synchronous>, transform_indices = @transform_5, window_bounds = array<i64: 3, 304, 312>}, {pipeline_mode = #tpu.pipeline_mode<synchronous>, transform_indices = @transform_6, window_bounds = array<i64: 3, 312>}, {pipeline_mode = #tpu.pipeline_mode<synchronous>, transform_indices = @transform_7, window_bounds = array<i64: 3, 312, 237>}, {pipeline_mode = #tpu.pipeline_mode<synchronous>, transform_indices = @transform_8, window_bounds = array<i64: 3, 237>}, {transform_indices = @transform_9, window_bounds = array<i64: 1, 79, 237>}]} {
    %c0 = arith.constant 0 : index
    %c0_0 = arith.constant 0 : index
    %c0_1 = arith.constant 0 : index
    %0 = vector.load %arg1[%c0, %c0_0, %c0_1] : memref<1x4x256xf32, #tpu.memory_space<vmem>>, vector<1x4x256xf32>
    %1 = vector.shape_cast %0 : vector<1x4x256xf32> to vector<4x256xf32>
    %c0_2 = arith.constant 0 : index
    %c0_3 = arith.constant 0 : index
    %c0_4 = arith.constant 0 : index
    %2 = vector.load %arg2[%c0_2, %c0_3, %c0_4] : memref<3x256x288xf32, #tpu.memory_space<vmem>>, vector<1x256x288xf32>
    %3 = vector.shape_cast %2 : vector<1x256x288xf32> to vector<256x288xf32>
    %cst = arith.constant dense<0.000000e+00> : vector<4x288xf32>
    %4 = tpu.matmul %1, %3, %cst {dimension_numbers = #tpu.dot_dimension_numbers<[1], [0], [0], [1], [0, 0, 1, 1], [], []>} : vector<4x256xf32>, vector<256x288xf32>, vector<4x288xf32> -> vector<4x288xf32>
    %c1 = arith.constant 1 : index
    %c0_5 = arith.constant 0 : index
    %c0_6 = arith.constant 0 : index
    %5 = vector.load %arg2[%c1, %c0_5, %c0_6] : memref<3x256x288xf32, #tpu.memory_space<vmem>>, vector<1x256x288xf32>
    %6 = vector.shape_cast %5 : vector<1x256x288xf32> to vector<256x288xf32>
    %cst_7 = arith.constant dense<0.000000e+00> : vector<4x288xf32>
    %7 = tpu.matmul %1, %6, %cst_7 {dimension_numbers = #tpu.dot_dimension_numbers<[1], [0], [0], [1], [0, 0, 1, 1], [], []>} : vector<4x256xf32>, vector<256x288xf32>, vector<4x288xf32> -> vector<4x288xf32>
    %c2 = arith.constant 2 : index
    %c0_8 = arith.constant 0 : index
    %c0_9 = arith.constant 0 : index
    %8 = vector.load %arg2[%c2, %c0_8, %c0_9] : memref<3x256x288xf32, #tpu.memory_space<vmem>>, vector<1x256x288xf32>
    %9 = vector.shape_cast %8 : vector<1x256x288xf32> to vector<256x288xf32>
    %cst_10 = arith.constant dense<0.000000e+00> : vector<4x288xf32>
    %10 = tpu.matmul %1, %9, %cst_10 {dimension_numbers = #tpu.dot_dimension_numbers<[1], [0], [0], [1], [0, 0, 1, 1], [], []>} : vector<4x256xf32>, vector<256x288xf32>, vector<4x288xf32> -> vector<4x288xf32>
    %c0_i32 = arith.constant 0 : i32
    %11 = arith.sitofp %c0_i32 : i32 to f32
    %12 = vector.broadcast %11 : f32 to vector<1x288xf32>
    %13 = tpu.concatenate %4, %12 in 0 : vector<4x288xf32>, vector<1x288xf32> -> vector<5x288xf32>
    %c0_i32_11 = arith.constant 0 : i32
    %14 = arith.sitofp %c0_i32_11 : i32 to f32
    %15 = vector.broadcast %14 : f32 to vector<1x288xf32>
    %16 = tpu.concatenate %15, %10 in 0 : vector<1x288xf32>, vector<4x288xf32> -> vector<5x288xf32>
    %17 = arith.addf %13, %16 : vector<5x288xf32>
    %c0_i32_12 = arith.constant 0 : i32
    %18 = arith.sitofp %c0_i32_12 : i32 to f32
    %19 = vector.broadcast %18 : f32 to vector<1x288xf32>
    %20 = tpu.concatenate %7, %19 in 0 : vector<4x288xf32>, vector<1x288xf32> -> vector<5x288xf32>
    %21 = vector.shape_cast %17 : vector<5x288xf32> to vector<5x1x288xf32>
    %22 = vector.shape_cast %20 : vector<5x288xf32> to vector<5x1x288xf32>
    %23 = tpu.concatenate %21, %22 in 1 : vector<5x1x288xf32>, vector<5x1x288xf32> -> vector<5x2x288xf32>
    %24 = vector.shape_cast %23 : vector<5x2x288xf32> to vector<10x288xf32>
    %25 = vector.extract_strided_slice %24 {offsets = [0, 0], sizes = [9, 288], strides = [1, 1]} : vector<10x288xf32> to vector<9x288xf32>
    %c0_13 = arith.constant 0 : index
    %c0_14 = arith.constant 0 : index
    %26 = vector.load %arg3[%c0_13, %c0_14] : memref<3x288xf32, #tpu.memory_space<vmem>>, vector<3x288xf32>
    %27 = vector.extract_strided_slice %26 {offsets = [0, 0], sizes = [1, 288], strides = [1, 1]} : vector<3x288xf32> to vector<1x288xf32>
    %28 = vector.extract_strided_slice %26 {offsets = [1, 0], sizes = [1, 288], strides = [1, 1]} : vector<3x288xf32> to vector<1x288xf32>
    %29 = vector.extract_strided_slice %26 {offsets = [2, 0], sizes = [1, 288], strides = [1, 1]} : vector<3x288xf32> to vector<1x288xf32>
    %30 = vector.broadcast %27 : vector<1x288xf32> to vector<9x288xf32>
    %31 = arith.addf %25, %30 : vector<9x288xf32>
    %cst_15 = arith.constant 0.000000e+00 : f32
    %32 = vector.broadcast %cst_15 : f32 to vector<9x288xf32>
    %33 = arith.cmpf oge, %31, %32 : vector<9x288xf32>
    %cst_16 = arith.constant 3.000000e-01 : f32
    %34 = vector.broadcast %cst_16 : f32 to vector<9x288xf32>
    %35 = arith.mulf %34, %31 : vector<9x288xf32>
    %36 = arith.select %33, %31, %35 : vector<9x288xi1>, vector<9x288xf32>
    %37 = vector.broadcast %28 : vector<1x288xf32> to vector<9x288xf32>
    %38 = arith.mulf %36, %37 : vector<9x288xf32>
    %39 = vector.broadcast %29 : vector<1x288xf32> to vector<9x288xf32>
    %40 = arith.addf %38, %39 : vector<9x288xf32>
    %c0_17 = arith.constant 0 : index
    %c0_18 = arith.constant 0 : index
    %c0_19 = arith.constant 0 : index
    %41 = vector.load %arg4[%c0_17, %c0_18, %c0_19] : memref<3x288x304xf32, #tpu.memory_space<vmem>>, vector<1x288x304xf32>
    %42 = vector.shape_cast %41 : vector<1x288x304xf32> to vector<288x304xf32>
    %cst_20 = arith.constant dense<0.000000e+00> : vector<9x304xf32>
    %43 = tpu.matmul %40, %42, %cst_20 {dimension_numbers = #tpu.dot_dimension_numbers<[1], [0], [0], [1], [0, 0, 1, 1], [], []>} : vector<9x288xf32>, vector<288x304xf32>, vector<9x304xf32> -> vector<9x304xf32>
    %c1_21 = arith.constant 1 : index
    %c0_22 = arith.constant 0 : index
    %c0_23 = arith.constant 0 : index
    %44 = vector.load %arg4[%c1_21, %c0_22, %c0_23] : memref<3x288x304xf32, #tpu.memory_space<vmem>>, vector<1x288x304xf32>
    %45 = vector.shape_cast %44 : vector<1x288x304xf32> to vector<288x304xf32>
    %cst_24 = arith.constant dense<0.000000e+00> : vector<9x304xf32>
    %46 = tpu.matmul %40, %45, %cst_24 {dimension_numbers = #tpu.dot_dimension_numbers<[1], [0], [0], [1], [0, 0, 1, 1], [], []>} : vector<9x288xf32>, vector<288x304xf32>, vector<9x304xf32> -> vector<9x304xf32>
    %c2_25 = arith.constant 2 : index
    %c0_26 = arith.constant 0 : index
    %c0_27 = arith.constant 0 : index
    %47 = vector.load %arg4[%c2_25, %c0_26, %c0_27] : memref<3x288x304xf32, #tpu.memory_space<vmem>>, vector<1x288x304xf32>
    %48 = vector.shape_cast %47 : vector<1x288x304xf32> to vector<288x304xf32>
    %cst_28 = arith.constant dense<0.000000e+00> : vector<9x304xf32>
    %49 = tpu.matmul %40, %48, %cst_28 {dimension_numbers = #tpu.dot_dimension_numbers<[1], [0], [0], [1], [0, 0, 1, 1], [], []>} : vector<9x288xf32>, vector<288x304xf32>, vector<9x304xf32> -> vector<9x304xf32>
    %c0_i32_29 = arith.constant 0 : i32
    %50 = arith.sitofp %c0_i32_29 : i32 to f32
    %51 = vector.broadcast %50 : f32 to vector<1x304xf32>
    %52 = tpu.concatenate %43, %51 in 0 : vector<9x304xf32>, vector<1x304xf32> -> vector<10x304xf32>
    %c0_i32_30 = arith.constant 0 : i32
    %53 = arith.sitofp %c0_i32_30 : i32 to f32
    %54 = vector.broadcast %53 : f32 to vector<1x304xf32>
    %55 = tpu.concatenate %54, %49 in 0 : vector<1x304xf32>, vector<9x304xf32> -> vector<10x304xf32>
    %56 = arith.addf %52, %55 : vector<10x304xf32>
    %c0_i32_31 = arith.constant 0 : i32
    %57 = arith.sitofp %c0_i32_31 : i32 to f32
    %58 = vector.broadcast %57 : f32 to vector<1x304xf32>
    %59 = tpu.concatenate %46, %58 in 0 : vector<9x304xf32>, vector<1x304xf32> -> vector<10x304xf32>
    %60 = vector.shape_cast %56 : vector<10x304xf32> to vector<10x1x304xf32>
    %61 = vector.shape_cast %59 : vector<10x304xf32> to vector<10x1x304xf32>
    %62 = tpu.concatenate %60, %61 in 1 : vector<10x1x304xf32>, vector<10x1x304xf32> -> vector<10x2x304xf32>
    %63 = vector.shape_cast %62 : vector<10x2x304xf32> to vector<20x304xf32>
    %64 = vector.extract_strided_slice %63 {offsets = [0, 0], sizes = [19, 304], strides = [1, 1]} : vector<20x304xf32> to vector<19x304xf32>
    %c0_32 = arith.constant 0 : index
    %c0_33 = arith.constant 0 : index
    %65 = vector.load %arg5[%c0_32, %c0_33] : memref<3x304xf32, #tpu.memory_space<vmem>>, vector<3x304xf32>
    %66 = vector.extract_strided_slice %65 {offsets = [0, 0], sizes = [1, 304], strides = [1, 1]} : vector<3x304xf32> to vector<1x304xf32>
    %67 = vector.extract_strided_slice %65 {offsets = [1, 0], sizes = [1, 304], strides = [1, 1]} : vector<3x304xf32> to vector<1x304xf32>
    %68 = vector.extract_strided_slice %65 {offsets = [2, 0], sizes = [1, 304], strides = [1, 1]} : vector<3x304xf32> to vector<1x304xf32>
    %69 = vector.broadcast %66 : vector<1x304xf32> to vector<19x304xf32>
    %70 = arith.addf %64, %69 : vector<19x304xf32>
    %cst_34 = arith.constant 0.000000e+00 : f32
    %71 = vector.broadcast %cst_34 : f32 to vector<19x304xf32>
    %72 = arith.cmpf oge, %70, %71 : vector<19x304xf32>
    %cst_35 = arith.constant 3.000000e-01 : f32
    %73 = vector.broadcast %cst_35 : f32 to vector<19x304xf32>
    %74 = arith.mulf %73, %70 : vector<19x304xf32>
    %75 = arith.select %72, %70, %74 : vector<19x304xi1>, vector<19x304xf32>
    %76 = vector.broadcast %67 : vector<1x304xf32> to vector<19x304xf32>
    %77 = arith.mulf %75, %76 : vector<19x304xf32>
    %78 = vector.broadcast %68 : vector<1x304xf32> to vector<19x304xf32>
    %79 = arith.addf %77, %78 : vector<19x304xf32>
    %c0_36 = arith.constant 0 : index
    %c0_37 = arith.constant 0 : index
    %c0_38 = arith.constant 0 : index
    %80 = vector.load %arg6[%c0_36, %c0_37, %c0_38] : memref<3x304x312xf32, #tpu.memory_space<vmem>>, vector<1x304x312xf32>
    %81 = vector.shape_cast %80 : vector<1x304x312xf32> to vector<304x312xf32>
    %cst_39 = arith.constant dense<0.000000e+00> : vector<19x312xf32>
    %82 = tpu.matmul %79, %81, %cst_39 {dimension_numbers = #tpu.dot_dimension_numbers<[1], [0], [0], [1], [0, 0, 1, 1], [], []>} : vector<19x304xf32>, vector<304x312xf32>, vector<19x312xf32> -> vector<19x312xf32>
    %c1_40 = arith.constant 1 : index
    %c0_41 = arith.constant 0 : index
    %c0_42 = arith.constant 0 : index
    %83 = vector.load %arg6[%c1_40, %c0_41, %c0_42] : memref<3x304x312xf32, #tpu.memory_space<vmem>>, vector<1x304x312xf32>
    %84 = vector.shape_cast %83 : vector<1x304x312xf32> to vector<304x312xf32>
    %cst_43 = arith.constant dense<0.000000e+00> : vector<19x312xf32>
    %85 = tpu.matmul %79, %84, %cst_43 {dimension_numbers = #tpu.dot_dimension_numbers<[1], [0], [0], [1], [0, 0, 1, 1], [], []>} : vector<19x304xf32>, vector<304x312xf32>, vector<19x312xf32> -> vector<19x312xf32>
    %c2_44 = arith.constant 2 : index
    %c0_45 = arith.constant 0 : index
    %c0_46 = arith.constant 0 : index
    %86 = vector.load %arg6[%c2_44, %c0_45, %c0_46] : memref<3x304x312xf32, #tpu.memory_space<vmem>>, vector<1x304x312xf32>
    %87 = vector.shape_cast %86 : vector<1x304x312xf32> to vector<304x312xf32>
    %cst_47 = arith.constant dense<0.000000e+00> : vector<19x312xf32>
    %88 = tpu.matmul %79, %87, %cst_47 {dimension_numbers = #tpu.dot_dimension_numbers<[1], [0], [0], [1], [0, 0, 1, 1], [], []>} : vector<19x304xf32>, vector<304x312xf32>, vector<19x312xf32> -> vector<19x312xf32>
    %c0_i32_48 = arith.constant 0 : i32
    %89 = arith.sitofp %c0_i32_48 : i32 to f32
    %90 = vector.broadcast %89 : f32 to vector<1x312xf32>
    %91 = tpu.concatenate %82, %90 in 0 : vector<19x312xf32>, vector<1x312xf32> -> vector<20x312xf32>
    %c0_i32_49 = arith.constant 0 : i32
    %92 = arith.sitofp %c0_i32_49 : i32 to f32
    %93 = vector.broadcast %92 : f32 to vector<1x312xf32>
    %94 = tpu.concatenate %93, %88 in 0 : vector<1x312xf32>, vector<19x312xf32> -> vector<20x312xf32>
    %95 = arith.addf %91, %94 : vector<20x312xf32>
    %c0_i32_50 = arith.constant 0 : i32
    %96 = arith.sitofp %c0_i32_50 : i32 to f32
    %97 = vector.broadcast %96 : f32 to vector<1x312xf32>
    %98 = tpu.concatenate %85, %97 in 0 : vector<19x312xf32>, vector<1x312xf32> -> vector<20x312xf32>
    %99 = vector.shape_cast %95 : vector<20x312xf32> to vector<20x1x312xf32>
    %100 = vector.shape_cast %98 : vector<20x312xf32> to vector<20x1x312xf32>
    %101 = tpu.concatenate %99, %100 in 1 : vector<20x1x312xf32>, vector<20x1x312xf32> -> vector<20x2x312xf32>
    %102 = vector.shape_cast %101 : vector<20x2x312xf32> to vector<40x312xf32>
    %103 = vector.extract_strided_slice %102 {offsets = [0, 0], sizes = [39, 312], strides = [1, 1]} : vector<40x312xf32> to vector<39x312xf32>
    %c0_51 = arith.constant 0 : index
    %c0_52 = arith.constant 0 : index
    %104 = vector.load %arg7[%c0_51, %c0_52] : memref<3x312xf32, #tpu.memory_space<vmem>>, vector<3x312xf32>
    %105 = vector.extract_strided_slice %104 {offsets = [0, 0], sizes = [1, 312], strides = [1, 1]} : vector<3x312xf32> to vector<1x312xf32>
    %106 = vector.extract_strided_slice %104 {offsets = [1, 0], sizes = [1, 312], strides = [1, 1]} : vector<3x312xf32> to vector<1x312xf32>
    %107 = vector.extract_strided_slice %104 {offsets = [2, 0], sizes = [1, 312], strides = [1, 1]} : vector<3x312xf32> to vector<1x312xf32>
    %108 = vector.broadcast %105 : vector<1x312xf32> to vector<39x312xf32>
    %109 = arith.addf %103, %108 : vector<39x312xf32>
    %cst_53 = arith.constant 0.000000e+00 : f32
    %110 = vector.broadcast %cst_53 : f32 to vector<39x312xf32>
    %111 = arith.cmpf oge, %109, %110 : vector<39x312xf32>
    %cst_54 = arith.constant 3.000000e-01 : f32
    %112 = vector.broadcast %cst_54 : f32 to vector<39x312xf32>
    %113 = arith.mulf %112, %109 : vector<39x312xf32>
    %114 = arith.select %111, %109, %113 : vector<39x312xi1>, vector<39x312xf32>
    %115 = vector.broadcast %106 : vector<1x312xf32> to vector<39x312xf32>
    %116 = arith.mulf %114, %115 : vector<39x312xf32>
    %117 = vector.broadcast %107 : vector<1x312xf32> to vector<39x312xf32>
    %118 = arith.addf %116, %117 : vector<39x312xf32>
    %c0_55 = arith.constant 0 : index
    %c0_56 = arith.constant 0 : index
    %c0_57 = arith.constant 0 : index
    %119 = vector.load %arg8[%c0_55, %c0_56, %c0_57] : memref<3x312x237xf32, #tpu.memory_space<vmem>>, vector<1x312x237xf32>
    %120 = vector.shape_cast %119 : vector<1x312x237xf32> to vector<312x237xf32>
    %cst_58 = arith.constant dense<0.000000e+00> : vector<39x237xf32>
    %121 = tpu.matmul %118, %120, %cst_58 {dimension_numbers = #tpu.dot_dimension_numbers<[1], [0], [0], [1], [0, 0, 1, 1], [], []>} : vector<39x312xf32>, vector<312x237xf32>, vector<39x237xf32> -> vector<39x237xf32>
    %c1_59 = arith.constant 1 : index
    %c0_60 = arith.constant 0 : index
    %c0_61 = arith.constant 0 : index
    %122 = vector.load %arg8[%c1_59, %c0_60, %c0_61] : memref<3x312x237xf32, #tpu.memory_space<vmem>>, vector<1x312x237xf32>
    %123 = vector.shape_cast %122 : vector<1x312x237xf32> to vector<312x237xf32>
    %cst_62 = arith.constant dense<0.000000e+00> : vector<39x237xf32>
    %124 = tpu.matmul %118, %123, %cst_62 {dimension_numbers = #tpu.dot_dimension_numbers<[1], [0], [0], [1], [0, 0, 1, 1], [], []>} : vector<39x312xf32>, vector<312x237xf32>, vector<39x237xf32> -> vector<39x237xf32>
    %c2_63 = arith.constant 2 : index
    %c0_64 = arith.constant 0 : index
    %c0_65 = arith.constant 0 : index
    %125 = vector.load %arg8[%c2_63, %c0_64, %c0_65] : memref<3x312x237xf32, #tpu.memory_space<vmem>>, vector<1x312x237xf32>
    %126 = vector.shape_cast %125 : vector<1x312x237xf32> to vector<312x237xf32>
    %cst_66 = arith.constant dense<0.000000e+00> : vector<39x237xf32>
    %127 = tpu.matmul %118, %126, %cst_66 {dimension_numbers = #tpu.dot_dimension_numbers<[1], [0], [0], [1], [0, 0, 1, 1], [], []>} : vector<39x312xf32>, vector<312x237xf32>, vector<39x237xf32> -> vector<39x237xf32>
    %c0_i32_67 = arith.constant 0 : i32
    %128 = arith.sitofp %c0_i32_67 : i32 to f32
    %129 = vector.broadcast %128 : f32 to vector<1x237xf32>
    %130 = tpu.concatenate %121, %129 in 0 : vector<39x237xf32>, vector<1x237xf32> -> vector<40x237xf32>
    %c0_i32_68 = arith.constant 0 : i32
    %131 = arith.sitofp %c0_i32_68 : i32 to f32
    %132 = vector.broadcast %131 : f32 to vector<1x237xf32>
    %133 = tpu.concatenate %132, %127 in 0 : vector<1x237xf32>, vector<39x237xf32> -> vector<40x237xf32>
    %134 = arith.addf %130, %133 : vector<40x237xf32>
    %c0_i32_69 = arith.constant 0 : i32
    %135 = arith.sitofp %c0_i32_69 : i32 to f32
    %136 = vector.broadcast %135 : f32 to vector<1x237xf32>
    %137 = tpu.concatenate %124, %136 in 0 : vector<39x237xf32>, vector<1x237xf32> -> vector<40x237xf32>
    %138 = vector.shape_cast %134 : vector<40x237xf32> to vector<40x1x237xf32>
    %139 = vector.shape_cast %137 : vector<40x237xf32> to vector<40x1x237xf32>
    %140 = tpu.concatenate %138, %139 in 1 : vector<40x1x237xf32>, vector<40x1x237xf32> -> vector<40x2x237xf32>
    %141 = vector.shape_cast %140 : vector<40x2x237xf32> to vector<80x237xf32>
    %142 = vector.extract_strided_slice %141 {offsets = [0, 0], sizes = [79, 237], strides = [1, 1]} : vector<80x237xf32> to vector<79x237xf32>
    %c0_70 = arith.constant 0 : index
    %c0_71 = arith.constant 0 : index
    %143 = vector.load %arg9[%c0_70, %c0_71] : memref<3x237xf32, #tpu.memory_space<vmem>>, vector<3x237xf32>
    %144 = vector.extract_strided_slice %143 {offsets = [0, 0], sizes = [1, 237], strides = [1, 1]} : vector<3x237xf32> to vector<1x237xf32>
    %145 = vector.extract_strided_slice %143 {offsets = [1, 0], sizes = [1, 237], strides = [1, 1]} : vector<3x237xf32> to vector<1x237xf32>
    %146 = vector.extract_strided_slice %143 {offsets = [2, 0], sizes = [1, 237], strides = [1, 1]} : vector<3x237xf32> to vector<1x237xf32>
    %147 = vector.broadcast %144 : vector<1x237xf32> to vector<79x237xf32>
    %148 = arith.addf %142, %147 : vector<79x237xf32>
    %cst_72 = arith.constant 0.000000e+00 : f32
    %149 = vector.broadcast %cst_72 : f32 to vector<79x237xf32>
    %150 = arith.cmpf oge, %148, %149 : vector<79x237xf32>
    %cst_73 = arith.constant 3.000000e-01 : f32
    %151 = vector.broadcast %cst_73 : f32 to vector<79x237xf32>
    %152 = arith.mulf %151, %148 : vector<79x237xf32>
    %153 = arith.select %150, %148, %152 : vector<79x237xi1>, vector<79x237xf32>
    %154 = vector.broadcast %145 : vector<1x237xf32> to vector<79x237xf32>
    %155 = arith.mulf %153, %154 : vector<79x237xf32>
    %156 = vector.broadcast %146 : vector<1x237xf32> to vector<79x237xf32>
    %157 = arith.addf %155, %156 : vector<79x237xf32>
    %c0_74 = arith.constant 0 : index
    %c0_75 = arith.constant 0 : index
    %c0_76 = arith.constant 0 : index
    %158 = vector.load %arg10[%c0_74, %c0_75, %c0_76] : memref<1x79x237xf32, #tpu.memory_space<vmem>>, vector<1x79x237xf32>
    %159 = vector.shape_cast %158 : vector<1x79x237xf32> to vector<79x237xf32>
    %160 = vector.shape_cast %157 : vector<79x237xf32> to vector<1x79x237xf32>
    tpu.vector_store %arg10[%c0_74, %c0_75, %c0_76], %160 {strides = array<i32>} : memref<1x79x237xf32, #tpu.memory_space<vmem>>, vector<1x79x237xf32>,
    return
  }
  func.func @transform_0(%arg0: i32) -> (i32, i32, i32) {
    %c0_i32 = arith.constant 0 : i32
    %c0_i32_0 = arith.constant 0 : i32
    %c0_i32_1 = arith.constant 0 : i32
    return %arg0, %c0_i32, %c0_i32_0 : i32, i32, i32
  }
  func.func @transform_1(%arg0: i32) -> (i32, i32, i32) {
    %c0_i32 = arith.constant 0 : i32
    %c0_i32_0 = arith.constant 0 : i32
    %c0_i32_1 = arith.constant 0 : i32
    %c0_i32_2 = arith.constant 0 : i32
    return %c0_i32, %c0_i32_0, %c0_i32_1 : i32, i32, i32
  }
  func.func @transform_2(%arg0: i32) -> (i32, i32) {
    %c0_i32 = arith.constant 0 : i32
    %c0_i32_0 = arith.constant 0 : i32
    %c0_i32_1 = arith.constant 0 : i32
    return %c0_i32, %c0_i32_0 : i32, i32
  }
  func.func @transform_3(%arg0: i32) -> (i32, i32, i32) {
    %c0_i32 = arith.constant 0 : i32
    %c0_i32_0 = arith.constant 0 : i32
    %c0_i32_1 = arith.constant 0 : i32
    %c0_i32_2 = arith.constant 0 : i32
    return %c0_i32, %c0_i32_0, %c0_i32_1 : i32, i32, i32
  }
  func.func @transform_4(%arg0: i32) -> (i32, i32) {
    %c0_i32 = arith.constant 0 : i32
    %c0_i32_0 = arith.constant 0 : i32
    %c0_i32_1 = arith.constant 0 : i32
    return %c0_i32, %c0_i32_0 : i32, i32
  }
  func.func @transform_5(%arg0: i32) -> (i32, i32, i32) {
    %c0_i32 = arith.constant 0 : i32
    %c0_i32_0 = arith.constant 0 : i32
    %c0_i32_1 = arith.constant 0 : i32
    %c0_i32_2 = arith.constant 0 : i32
    return %c0_i32, %c0_i32_0, %c0_i32_1 : i32, i32, i32
  }
  func.func @transform_6(%arg0: i32) -> (i32, i32) {
    %c0_i32 = arith.constant 0 : i32
    %c0_i32_0 = arith.constant 0 : i32
    %c0_i32_1 = arith.constant 0 : i32
    return %c0_i32, %c0_i32_0 : i32, i32
  }
  func.func @transform_7(%arg0: i32) -> (i32, i32, i32) {
    %c0_i32 = arith.constant 0 : i32
    %c0_i32_0 = arith.constant 0 : i32
    %c0_i32_1 = arith.constant 0 : i32
    %c0_i32_2 = arith.constant 0 : i32
    return %c0_i32, %c0_i32_0, %c0_i32_1 : i32, i32, i32
  }
  func.func @transform_8(%arg0: i32) -> (i32, i32) {
    %c0_i32 = arith.constant 0 : i32
    %c0_i32_0 = arith.constant 0 : i32
    %c0_i32_1 = arith.constant 0 : i32
    return %c0_i32, %c0_i32_0 : i32, i32
  }
  func.func @transform_9(%arg0: i32) -> (i32, i32, i32) {
    %c0_i32 = arith.constant 0 : i32
    %c0_i32_0 = arith.constant 0 : i32
    %c0_i32_1 = arith.constant 0 : i32
    return %arg0, %c0_i32, %c0_i32_0 : i32, i32, i32
  }
}

</mosaic_0001>

<llo_original>
// kernel: decoder_forward.1
$region0: #{decoder_forward.1}
  #allocation0 [shape = 'u32[]', space=smem, size = 0x4, offset = 0x4, fixed_abs, tag = 'smem constant byte address 0x4 - core index']
  #allocation1 [shape = 'u32[144,128]{1,0:T(1,128)}', space=vmem, size = 0x12000, scoped, tag = 'internal scratch']
  %s0 = inlined_call_operand.vmem [shape: f32[2,4,256], index: 0, kind: input, shape index: {}]
  %s1 = inlined_call_operand.hbm [shape: f32[3,256,288], index: 1, kind: input, shape index: {}]
  %s2 = inlined_call_operand.hbm [shape: f32[3,288], index: 2, kind: input, shape index: {}]
  %s3 = inlined_call_operand.hbm [shape: f32[3,288,304], index: 3, kind: input, shape index: {}]
  %s4 = inlined_call_operand.hbm [shape: f32[3,304], index: 4, kind: input, shape index: {}]
  %s5 = inlined_call_operand.hbm [shape: f32[3,304,312], index: 5, kind: input, shape index: {}]
  %s6 = inlined_call_operand.hbm [shape: f32[3,312], index: 6, kind: input, shape index: {}]
  %s7 = inlined_call_operand.hbm [shape: f32[3,312,237], index: 7, kind: input, shape index: {}]
  %s8 = inlined_call_operand.hbm [shape: f32[3,237], index: 8, kind: input, shape index: {}]
  %s9 = inlined_call_operand.vmem [shape: f32[2,79,237], index: 9, kind: output, shape index: {}]
  %s10 = sld [smem:[#allocation0]]
  $region101: #{decoder_forward.1} parent=0
    _
  %s12 = ssub.s32 1, %s10
  %s13 = scalar_select 0, %s12, %s10
  $region1: #{decoder_forward.1} parent=0
    #allocation2 [shape = 'u8[1179648]{0}', space=vmem, size = 0x120000, scoped, tag = 'input window, operand 1, single buffered']
    #allocation3 [shape = 's32[2]{0}', space=sflag, size = 0x8, scoped, tag = 'scoped memory for decoder_forward.1']
    #allocation4 [shape = 'u8[6144]{0}', space=vmem, size = 0x1800, scoped, tag = 'input window, operand 2, single buffered']
    #allocation5 [shape = 's32[1]{0}', space=sflag, size = 0x4, scoped, tag = 'scoped memory for decoder_forward.1']
    #allocation6 [shape = 'u8[1327104]{0}', space=vmem, size = 0x144000, scoped, tag = 'input window, operand 3, single buffered']
    #allocation7 [shape = 'u8[6144]{0}', space=vmem, size = 0x1800, scoped, tag = 'input window, operand 4, single buffered']
    #allocation8 [shape = 's32[1]{0}', space=sflag, size = 0x4, scoped, tag = 'scoped memory for decoder_forward.1']
    #allocation9 [shape = 'u8[1400832]{0}', space=vmem, size = 0x156000, scoped, tag = 'input window, operand 5, single buffered']
    #allocation10 [shape = 'u8[6144]{0}', space=vmem, size = 0x1800, scoped, tag = 'input window, operand 6, single buffered']
    #allocation11 [shape = 's32[1]{0}', space=sflag, size = 0x4, scoped, tag = 'scoped memory for decoder_forward.1']
    #allocation12 [shape = 'u8[958464]{0}', space=vmem, size = 0xea000, scoped, tag = 'input window, operand 7, single buffered']
    #allocation13 [shape = 'u8[4096]{0}', space=vmem, size = 0x1000, scoped, tag = 'input window, operand 8, single buffered']
    #allocation14 [shape = 's32[1]{0}', space=sflag, size = 0x4, scoped, tag = 'scoped memory for decoder_forward.1']
    %14 = vsyncpa [#allocation3], 0
    %15 = vsyncpa [#allocation5], 0
    %16 = vsyncpa [#allocation8], 0
    %17 = vsyncpa [#allocation11], 0
    %18 = vsyncpa [#allocation14], 0
    loop: start=0, step=1, limit=4
    $region2: #{decoder_forward.1} parent=1 // loop_pre_header
      _
    $region3: #{decoder_forward.1} parent=1 // loop_header
      %s20 = sphi 0, %s24
      %p21 = scmp.ge.s32.totalorder %s20, 4
      %s30 = sphi 0, %s32
      %s33 = sphi 0, %s30
      %s34 = sphi 0, %s33
      %s50 = sphi 0, %s34
      %s54 = sphi 0, %s54
      %s56 = sphi 0, %s54
      %s57 = sphi 0, %s56
      %s71 = sphi 0, %s57
      %s75 = sphi 0, %s75
      %s77 = sphi 0, %s75
      %s78 = sphi 0, %s77
      %s92 = sphi 0, %s78
      %s96 = sphi 0, %s96
      %s98 = sphi 0, %s96
      %s99 = sphi 0, %s98
      %s113 = sphi 0, %s99
      %s117 = sphi 0, %s117
      %s119 = sphi 0, %s117
      %s120 = sphi 0, %s119
      %s134 = sphi 0, %s120
      %s138 = sphi 0, %s138
      %s140 = sphi 0, %s138
      %s141 = sphi 0, %s140
      %s155 = sphi 0, %s141
      %s159 = sphi 0, %s159
      %s161 = sphi 0, %s159
      %s162 = sphi 0, %s161
      %s176 = sphi 0, %s162
      %s180 = sphi 0, %s180
      %s182 = sphi 0, %s180
      %s183 = sphi 0, %s182
      %s197 = sphi 0, %s183
      %s201 = sphi 0, %s201
      %s203 = sphi 0, %s201
      %s204 = sphi 0, %s203
      %s218 = sphi 0, %s204
      %s224 = sphi 0, %s226
      %s227 = sphi 0, %s224
      %s228 = sphi 0, %s227
      %s244 = sphi 0, %s228
    $region4: #{decoder_forward.1} parent=1 // loop_header_branch
      %23 = sbr.rel (%p21) target = $region8
    $region5: #{decoder_forward.1} parent=1 // loop_body
      %s25 = ssub.s32 %s20, 1
      %s26 = ssub.s32 %s20, 2
      %s27 = sadd.s32 %s20, 1
      %s28 = ssub.s32 %s20, %s27
      %p29 = scmp.eq.s32.totalorder %s28, 0
      %s31 = sadd.s32 %s30, 1
      %s32 = scalar_select %p29, %s30, %s31
      %p35 = pneg %p29
      %p36 = scmp.eq.s32.totalorder %s20, 1
      %p37 = por %p35, %p36
      %p38 = scmp.ne.s32.totalorder %s30, %s33
      %p39 = scmp.eq.s32.totalorder %s20, 0
      %p40 = por %p38, %p39
      %p41 = scmp.ne.s32.totalorder %s30, %s33
      %p42 = scmp.eq.s32.totalorder %s25, 1
      %p43 = por %p41, %p42
      %p44 = scmp.ne.s32.totalorder %s33, %s34
      %p45 = scmp.eq.s32.totalorder %s25, 0
      %p46 = por %p44, %p45
      %p47 = scmp.ne.s32.totalorder %s33, %s34
      %p48 = scmp.eq.s32.totalorder %s26, 1
      %p49 = por %p47, %p48
      %p51 = scmp.ne.s32.totalorder %s34, %s50
      %p52 = scmp.eq.s32.totalorder %s26, 0
      %p53 = por %p51, %p52
      %s55 = sadd.s32 %s54, 1
      %p58 = scmp.eq.s32.totalorder %s20, 1
      %p59 = scmp.ne.s32.totalorder %s54, %s56
      %p60 = scmp.eq.s32.totalorder %s20, 0
      %p61 = por %p59, %p60
      %p62 = scmp.ne.s32.totalorder %s54, %s56
      %p63 = scmp.eq.s32.totalorder %s25, 1
      %p64 = por %p62, %p63
      %p65 = scmp.ne.s32.totalorder %s56, %s57
      %p66 = scmp.eq.s32.totalorder %s25, 0
      %p67 = por %p65, %p66
      %p68 = scmp.ne.s32.totalorder %s56, %s57
      %p69 = scmp.eq.s32.totalorder %s26, 1
      %p70 = por %p68, %p69
      %p72 = scmp.ne.s32.totalorder %s57, %s71
      %p73 = scmp.eq.s32.totalorder %s26, 0
      %p74 = por %p72, %p73
      %s76 = sadd.s32 %s75, 1
      %p79 = scmp.eq.s32.totalorder %s20, 1
      %p80 = scmp.ne.s32.totalorder %s75, %s77
      %p81 = scmp.eq.s32.totalorder %s20, 0
      %p82 = por %p80, %p81
      %p83 = scmp.ne.s32.totalorder %s75, %s77
      %p84 = scmp.eq.s32.totalorder %s25, 1
      %p85 = por %p83, %p84
      %p86 = scmp.ne.s32.totalorder %s77, %s78
      %p87 = scmp.eq.s32.totalorder %s25, 0
      %p88 = por %p86, %p87
      %p89 = scmp.ne.s32.totalorder %s77, %s78
      %p90 = scmp.eq.s32.totalorder %s26, 1
      %p91 = por %p89, %p90
      %p93 = scmp.ne.s32.totalorder %s78, %s92
      %p94 = scmp.eq.s32.totalorder %s26, 0
      %p95 = por %p93, %p94
      %s97 = sadd.s32 %s96, 1
      %p100 = scmp.eq.s32.totalorder %s20, 1
      %p101 = scmp.ne.s32.totalorder %s96, %s98
      %p102 = scmp.eq.s32.totalorder %s20, 0
      %p103 = por %p101, %p102
      %p104 = scmp.ne.s32.totalorder %s96, %s98
      %p105 = scmp.eq.s32.totalorder %s25, 1
      %p106 = por %p104, %p105
      %p107 = scmp.ne.s32.totalorder %s98, %s99
      %p108 = scmp.eq.s32.totalorder %s25, 0
      %p109 = por %p107, %p108
      %p110 = scmp.ne.s32.totalorder %s98, %s99
      %p111 = scmp.eq.s32.totalorder %s26, 1
      %p112 = por %p110, %p111
      %p114 = scmp.ne.s32.totalorder %s99, %s113
      %p115 = scmp.eq.s32.totalorder %s26, 0
      %p116 = por %p114, %p115
      %s118 = sadd.s32 %s117, 1
      %p121 = scmp.eq.s32.totalorder %s20, 1
      %p122 = scmp.ne.s32.totalorder %s117, %s119
      %p123 = scmp.eq.s32.totalorder %s20, 0
      %p124 = por %p122, %p123
      %p125 = scmp.ne.s32.totalorder %s117, %s119
      %p126 = scmp.eq.s32.totalorder %s25, 1
      %p127 = por %p125, %p126
      %p128 = scmp.ne.s32.totalorder %s119, %s120
      %p129 = scmp.eq.s32.totalorder %s25, 0
      %p130 = por %p128, %p129
      %p131 = scmp.ne.s32.totalorder %s119, %s120
      %p132 = scmp.eq.s32.totalorder %s26, 1
      %p133 = por %p131, %p132
      %p135 = scmp.ne.s32.totalorder %s120, %s134
      %p136 = scmp.eq.s32.totalorder %s26, 0
      %p137 = por %p135, %p136
      %s139 = sadd.s32 %s138, 1
      %p142 = scmp.eq.s32.totalorder %s20, 1
      %p143 = scmp.ne.s32.totalorder %s138, %s140
      %p144 = scmp.eq.s32.totalorder %s20, 0
      %p145 = por %p143, %p144
      %p146 = scmp.ne.s32.totalorder %s138, %s140
      %p147 = scmp.eq.s32.totalorder %s25, 1
      %p148 = por %p146, %p147
      %p149 = scmp.ne.s32.totalorder %s140, %s141
      %p150 = scmp.eq.s32.totalorder %s25, 0
      %p151 = por %p149, %p150
      %p152 = scmp.ne.s32.totalorder %s140, %s141
      %p153 = scmp.eq.s32.totalorder %s26, 1
      %p154 = por %p152, %p153
      %p156 = scmp.ne.s32.totalorder %s141, %s155
      %p157 = scmp.eq.s32.totalorder %s26, 0
      %p158 = por %p156, %p157
      %s160 = sadd.s32 %s159, 1
      %p163 = scmp.eq.s32.totalorder %s20, 1
      %p164 = scmp.ne.s32.totalorder %s159, %s161
      %p165 = scmp.eq.s32.totalorder %s20, 0
      %p166 = por %p164, %p165
      %p167 = scmp.ne.s32.totalorder %s159, %s161
      %p168 = scmp.eq.s32.totalorder %s25, 1
      %p169 = por %p167, %p168
      %p170 = scmp.ne.s32.totalorder %s161, %s162
      %p171 = scmp.eq.s32.totalorder %s25, 0
      %p172 = por %p170, %p171
      %p173 = scmp.ne.s32.totalorder %s161, %s162
      %p174 = scmp.eq.s32.totalorder %s26, 1
      %p175 = por %p173, %p174
      %p177 = scmp.ne.s32.totalorder %s162, %s176
      %p178 = scmp.eq.s32.totalorder %s26, 0
      %p179 = por %p177, %p178
      %s181 = sadd.s32 %s180, 1
      %p184 = scmp.eq.s32.totalorder %s20, 1
      %p185 = scmp.ne.s32.totalorder %s180, %s182
      %p186 = scmp.eq.s32.totalorder %s20, 0
      %p187 = por %p185, %p186
      %p188 = scmp.ne.s32.totalorder %s180, %s182
      %p189 = scmp.eq.s32.totalorder %s25, 1
      %p190 = por %p188, %p189
      %p191 = scmp.ne.s32.totalorder %s182, %s183
      %p192 = scmp.eq.s32.totalorder %s25, 0
      %p193 = por %p191, %p192
      %p194 = scmp.ne.s32.totalorder %s182, %s183
      %p195 = scmp.eq.s32.totalorder %s26, 1
      %p196 = por %p194, %p195
      %p198 = scmp.ne.s32.totalorder %s183, %s197
      %p199 = scmp.eq.s32.totalorder %s26, 0
      %p200 = por %p198, %p199
      %s202 = sadd.s32 %s201, 1
      %p205 = scmp.eq.s32.totalorder %s20, 1
      %p206 = scmp.ne.s32.totalorder %s201, %s203
      %p207 = scmp.eq.s32.totalorder %s20, 0
      %p208 = por %p206, %p207
      %p209 = scmp.ne.s32.totalorder %s201, %s203
      %p210 = scmp.eq.s32.totalorder %s25, 1
      %p211 = por %p209, %p210
      %p212 = scmp.ne.s32.totalorder %s203, %s204
      %p213 = scmp.eq.s32.totalorder %s25, 0
      %p214 = por %p212, %p213
      %p215 = scmp.ne.s32.totalorder %s203, %s204
      %p216 = scmp.eq.s32.totalorder %s26, 1
      %p217 = por %p215, %p216
      %p219 = scmp.ne.s32.totalorder %s204, %s218
      %p220 = scmp.eq.s32.totalorder %s26, 0
      %p221 = por %p219, %p220
      %s222 = ssub.s32 %s20, %s27
      %p223 = scmp.eq.s32.totalorder %s222, 0
      %s225 = sadd.s32 %s224, 1
      %s226 = scalar_select %p223, %s224, %s225
      %p229 = pneg %p223
      %p230 = scmp.eq.s32.totalorder %s20, 1
      %p231 = por %p229, %p230
      %p232 = scmp.ne.s32.totalorder %s224, %s227
      %p233 = scmp.eq.s32.totalorder %s20, 0
      %p234 = por %p232, %p233
      %p235 = scmp.ne.s32.totalorder %s224, %s227
      %p236 = scmp.eq.s32.totalorder %s25, 1
      %p237 = por %p235, %p236
      %p238 = scmp.ne.s32.totalorder %s227, %s228
      %p239 = scmp.eq.s32.totalorder %s25, 0
      %p240 = por %p238, %p239
      %p241 = scmp.ne.s32.totalorder %s227, %s228
      %p242 = scmp.eq.s32.totalorder %s26, 1
      %p243 = por %p241, %p242
      %p245 = scmp.ne.s32.totalorder %s228, %s244
      %p246 = scmp.eq.s32.totalorder %s26, 0
      %p247 = por %p245, %p246
      %p248 = scmp.le.s32.totalorder 1, %s20
      %p249 = scmp.lt.s32.totalorder %s20, 3
      %p250 = pnand %p248, %p249
      %p251 = pneg %p250
      // Predicated region
      $region9: #{decoder_forward.1} parent=5 // pred_check
        _
      $region10: #{decoder_forward.1} parent=5 // pred_check_branch
        %253 = sbr.rel (%p250) target = $region12
      $region11: #{decoder_forward.1} parent=5 // pred_region
        %s254 = ssub.s32 %s20, 1
        // Predicated region
        $region13: #{decoder_forward.1} parent=11 // pred_check
          %p255 = pneg %p67
        $region14: #{decoder_forward.1} parent=11 // pred_check_branch
          %257 = sbr.rel (%p255) target = $region16
        $region15: #{decoder_forward.1} parent=11 // pred_region
          %s259 = ssub.s32 36864, 36864
          %260 = vsyncadd [#allocation3], %s259
          %s261 = sshll.u32 [#allocation2], 4
          %s262 = int_to_ptr.vmem [resolvable:$true] %s261
          %267 = dma.hbm_to_vmem [thread:$0]  %s1, 36864, %s262, [#allocation3], 384, 384, 24
        $region16: #{decoder_forward.1} parent=11 // pred_fallthru
          _
        // Predicated region
        $region17: #{decoder_forward.1} parent=11 // pred_check
          %p268 = pneg %p88
        $region18: #{decoder_forward.1} parent=11 // pred_check_branch
          %270 = sbr.rel (%p268) target = $region20
        $region19: #{decoder_forward.1} parent=11 // pred_region
          %s272 = ssub.s32 192, 192
          %273 = vsyncadd [#allocation5], %s272
          %s275 = sshll.u32 [#allocation4], 4
          %s276 = int_to_ptr.vmem [resolvable:$true] %s275
          %278 = dma.hbm_to_vmem [thread:$0]  %s2, 192, %s276, [#allocation5]
        $region20: #{decoder_forward.1} parent=11 // pred_fallthru
          _
        // Predicated region
        $region21: #{decoder_forward.1} parent=11 // pred_check
          %p279 = pneg %p109
        $region22: #{decoder_forward.1} parent=11 // pred_check_branch
          %281 = sbr.rel (%p279) target = $region24
        $region23: #{decoder_forward.1} parent=11 // pred_region
          %s283 = ssub.s32 41472, 41472
          %284 = vsyncadd [#allocation5], %s283
          %s285 = sshll.u32 [#allocation6], 4
          %s286 = int_to_ptr.vmem [resolvable:$true] %s285
          %291 = dma.hbm_to_vmem [thread:$0]  %s3, 41472, %s286, [#allocation5], 384, 384, 24
        $region24: #{decoder_forward.1} parent=11 // pred_fallthru
          _
        // Predicated region
        $region25: #{decoder_forward.1} parent=11 // pred_check
          %p292 = pneg %p130
        $region26: #{decoder_forward.1} parent=11 // pred_check_branch
          %294 = sbr.rel (%p292) target = $region28
        $region27: #{decoder_forward.1} parent=11 // pred_region
          %s296 = ssub.s32 192, 192
          %297 = vsyncadd [#allocation8], %s296
          %s299 = sshll.u32 [#allocation7], 4
          %s300 = int_to_ptr.vmem [resolvable:$true] %s299
          %302 = dma.hbm_to_vmem [thread:$0]  %s4, 192, %s300, [#allocation8]
        $region28: #{decoder_forward.1} parent=11 // pred_fallthru
          _
        // Predicated region
        $region29: #{decoder_forward.1} parent=11 // pred_check
          %p303 = pneg %p151
        $region30: #{decoder_forward.1} parent=11 // pred_check_branch
          %305 = sbr.rel (%p303) target = $region32
        $region31: #{decoder_forward.1} parent=11 // pred_region
          %s307 = ssub.s32 43776, 43776
          %308 = vsyncadd [#allocation8], %s307
          %s309 = sshll.u32 [#allocation9], 4
          %s310 = int_to_ptr.vmem [resolvable:$true] %s309
          %315 = dma.hbm_to_vmem [thread:$0]  %s5, 43776, %s310, [#allocation8], 384, 384, 24
        $region32: #{decoder_forward.1} parent=11 // pred_fallthru
          _
        // Predicated region
        $region33: #{decoder_forward.1} parent=11 // pred_check
          %p316 = pneg %p172
        $region34: #{decoder_forward.1} parent=11 // pred_check_branch
          %318 = sbr.rel (%p316) target = $region36
        $region35: #{decoder_forward.1} parent=11 // pred_region
          %s320 = ssub.s32 192, 192
          %321 = vsyncadd [#allocation11], %s320
          %s323 = sshll.u32 [#allocation10], 4
          %s324 = int_to_ptr.vmem [resolvable:$true] %s323
          %326 = dma.hbm_to_vmem [thread:$0]  %s6, 192, %s324, [#allocation11]
        $region36: #{decoder_forward.1} parent=11 // pred_fallthru
          _
        // Predicated region
        $region37: #{decoder_forward.1} parent=11 // pred_check
          %p327 = pneg %p193
        $region38: #{decoder_forward.1} parent=11 // pred_check_branch
          %329 = sbr.rel (%p327) target = $region40
        $region39: #{decoder_forward.1} parent=11 // pred_region
          %s331 = ssub.s32 29952, 29952
          %332 = vsyncadd [#allocation11], %s331
          %s333 = sshll.u32 [#allocation12], 4
          %s334 = int_to_ptr.vmem [resolvable:$true] %s333
          %339 = dma.hbm_to_vmem [thread:$0]  %s7, 29952, %s334, [#allocation11], 256, 256, 16
        $region40: #{decoder_forward.1} parent=11 // pred_fallthru
          _
        // Predicated region
        $region41: #{decoder_forward.1} parent=11 // pred_check
          %p340 = pneg %p214
        $region42: #{decoder_forward.1} parent=11 // pred_check_branch
          %342 = sbr.rel (%p340) target = $region44
        $region43: #{decoder_forward.1} parent=11 // pred_region
          %s344 = ssub.s32 128, 128
          %345 = vsyncadd [#allocation14], %s344
          %s347 = sshll.u32 [#allocation13], 4
          %s348 = int_to_ptr.vmem [resolvable:$true] %s347
          %350 = dma.hbm_to_vmem [thread:$0]  %s8, 128, %s348, [#allocation14]
        $region44: #{decoder_forward.1} parent=11 // pred_fallthru
          _
      $region12: #{decoder_forward.1} parent=5 // pred_fallthru
        _
      %p351 = scmp.lt.s32.totalorder %s20, 2
      // Predicated region
      $region45: #{decoder_forward.1} parent=5 // pred_check
        %p352 = pneg %p351
      $region46: #{decoder_forward.1} parent=5 // pred_check_branch
        %354 = sbr.rel (%p352) target = $region48
      $region47: #{decoder_forward.1} parent=5 // pred_region
        // Predicated region
        $region49: #{decoder_forward.1} parent=47 // pred_check
          %p355 = pneg %p40
        $region50: #{decoder_forward.1} parent=47 // pred_check_branch
          %357 = sbr.rel (%p355) target = $region52
        $region51: #{decoder_forward.1} parent=47 // pred_region
          %p358 = scmp.lt.s32.totalorder %s20, 1
          %s359 = scalar_select %p358, %s20, 1
          %s360 = smul.addr %s359, 2
          %s361 = smul.addr %s360, 4
          %s362 = scalar_lea.vmem %s0, %s361
        $region52: #{decoder_forward.1} parent=47 // pred_fallthru
          _
      $region48: #{decoder_forward.1} parent=5 // pred_fallthru
        _
      %p363 = scmp.le.s32.totalorder 1, %s20
      %p364 = scmp.lt.s32.totalorder %s20, 3
      %p365 = pnand %p363, %p364
      %p366 = pneg %p365
      // Predicated region
      $region53: #{decoder_forward.1} parent=5 // pred_check
        _
      $region54: #{decoder_forward.1} parent=5 // pred_check_branch
        %368 = sbr.rel (%p365) target = $region56
      $region55: #{decoder_forward.1} parent=5 // pred_region
        %s369 = ssub.s32 %s20, 1
        // Predicated region
        $region57: #{decoder_forward.1} parent=55 // pred_check
          %p370 = pneg %p67
        $region58: #{decoder_forward.1} parent=55 // pred_check_branch
          %372 = sbr.rel (%p370) target = $region60
        $region59: #{decoder_forward.1} parent=55 // pred_region
          %373 = dma.done [#allocation3], 36864
        $region60: #{decoder_forward.1} parent=55 // pred_fallthru
          _
        // Predicated region
        $region61: #{decoder_forward.1} parent=55 // pred_check
          %p374 = pneg %p88
        $region62: #{decoder_forward.1} parent=55 // pred_check_branch
          %376 = sbr.rel (%p374) target = $region64
        $region63: #{decoder_forward.1} parent=55 // pred_region
          %377 = dma.done [#allocation5], 192
        $region64: #{decoder_forward.1} parent=55 // pred_fallthru
          _
        // Predicated region
        $region65: #{decoder_forward.1} parent=55 // pred_check
          %p378 = pneg %p109
        $region66: #{decoder_forward.1} parent=55 // pred_check_branch
          %380 = sbr.rel (%p378) target = $region68
        $region67: #{decoder_forward.1} parent=55 // pred_region
          %381 = dma.done [#allocation5], 41472
        $region68: #{decoder_forward.1} parent=55 // pred_fallthru
          _
        // Predicated region
        $region69: #{decoder_forward.1} parent=55 // pred_check
          %p382 = pneg %p130
        $region70: #{decoder_forward.1} parent=55 // pred_check_branch
          %384 = sbr.rel (%p382) target = $region72
        $region71: #{decoder_forward.1} parent=55 // pred_region
          %385 = dma.done [#allocation8], 192
        $region72: #{decoder_forward.1} parent=55 // pred_fallthru
          _
        // Predicated region
        $region73: #{decoder_forward.1} parent=55 // pred_check
          %p386 = pneg %p151
        $region74: #{decoder_forward.1} parent=55 // pred_check_branch
          %388 = sbr.rel (%p386) target = $region76
        $region75: #{decoder_forward.1} parent=55 // pred_region
          %389 = dma.done [#allocation8], 43776
        $region76: #{decoder_forward.1} parent=55 // pred_fallthru
          _
        // Predicated region
        $region77: #{decoder_forward.1} parent=55 // pred_check
          %p390 = pneg %p172
        $region78: #{decoder_forward.1} parent=55 // pred_check_branch
          %392 = sbr.rel (%p390) target = $region80
        $region79: #{decoder_forward.1} parent=55 // pred_region
          %393 = dma.done [#allocation11], 192
        $region80: #{decoder_forward.1} parent=55 // pred_fallthru
          _
        // Predicated region
        $region81: #{decoder_forward.1} parent=55 // pred_check
          %p394 = pneg %p193
        $region82: #{decoder_forward.1} parent=55 // pred_check_branch
          %396 = sbr.rel (%p394) target = $region84
        $region83: #{decoder_forward.1} parent=55 // pred_region
          %397 = dma.done [#allocation11], 29952
        $region84: #{decoder_forward.1} parent=55 // pred_fallthru
          _
        // Predicated region
        $region85: #{decoder_forward.1} parent=55 // pred_check
          %p398 = pneg %p214
        $region86: #{decoder_forward.1} parent=55 // pred_check_branch
          %400 = sbr.rel (%p398) target = $region88
        $region87: #{decoder_forward.1} parent=55 // pred_region
          %401 = dma.done [#allocation14], 128
        $region88: #{decoder_forward.1} parent=55 // pred_fallthru
          _
        %p402 = scmp.lt.s32.totalorder %s25, 1
        %s403 = scalar_select %p402, %s25, 1
        %s404 = smul.addr %s403, 2
        %s405 = smul.addr %s404, 4
        %s406 = scalar_lea.vmem %s0, %s405
        %p407 = pneg %p46
        %p408 = pneg %p43
        %p409 = pneg %p67
        %p410 = pneg %p64
        %p411 = pneg %p88
        %p412 = pneg %p85
        %p413 = pneg %p109
        %p414 = pneg %p106
        %p415 = pneg %p130
        %p416 = pneg %p127
        %p417 = pneg %p151
        %p418 = pneg %p148
        %p419 = pneg %p172
        %p420 = pneg %p169
        %p421 = pneg %p193
        %p422 = pneg %p190
        %p423 = pneg %p214
        %p424 = pneg %p211
        %p425 = pneg %p240
        %p426 = pneg %p237
        %p427 = scmp.lt.s32.totalorder %s25, 1
        %s428 = scalar_select %p427, %s25, 1
        %s429 = smul.addr %s428, 20
        %s430 = smul.addr %s429, 8
        %s431 = scalar_lea.vmem %s9, %s430
        %p432 = scmp.lt.s32.totalorder %s25, 1
        %s433 = scalar_select %p432, %s25, 1
        %s434 = smul.addr %s433, 2
        %s435 = smul.addr %s434, 4
        %s436 = scalar_lea.vmem %s0, %s435
        %p437 = scmp.lt.s32.totalorder %s25, 1
        %s438 = scalar_select %p437, %s25, 1
        %s439 = smul.addr %s438, 20
        %s440 = smul.addr %s439, 8
        %s441 = scalar_lea.vmem %s9, %s440
        %v442 = vld [vmem:[%s436] sm:$0xff]
        %v443 = vld [vmem:[#allocation2] sm:$0xff]
        %v444 = vld [vmem:[#allocation2 + $0x8] sm:$0xff]
        %v445 = vld [vmem:[#allocation2 + $0x10] sm:$0xff]
        %v446 = vld [vmem:[#allocation2 + $0x18] sm:$0xff]
        %v447 = vld [vmem:[#allocation2 + $0x20] sm:$0xff]
        %v448 = vld [vmem:[#allocation2 + $0x28] sm:$0xff]
        %v449 = vld [vmem:[#allocation2 + $0x30] sm:$0xff]
        %v450 = vld [vmem:[#allocation2 + $0x38] sm:$0xff]
        %v451 = vld [vmem:[#allocation2 + $0x40] sm:$0xff]
        %v452 = vld [vmem:[#allocation2 + $0x48] sm:$0xff]
        %v453 = vld [vmem:[#allocation2 + $0x50] sm:$0xff]
        %v454 = vld [vmem:[#allocation2 + $0x58] sm:$0xff]
        %v455 = vld [vmem:[#allocation2 + $0x60] sm:$0xff]
        %v456 = vld [vmem:[#allocation2 + $0x68] sm:$0xff]
        %v457 = vld [vmem:[#allocation2 + $0x70] sm:$0xff]
        %v458 = vld [vmem:[#allocation2 + $0x78] sm:$0xff]
        %v459 = vld [vmem:[#allocation2 + $0x80] sm:$0xff]
        %v460 = vld [vmem:[#allocation2 + $0x88] sm:$0xff]
        %v461 = vld [vmem:[#allocation2 + $0x90] sm:$0xff]
        %v462 = vld [vmem:[#allocation2 + $0x98] sm:$0xff]
        %v463 = vld [vmem:[#allocation2 + $0xa0] sm:$0xff]
        %v464 = vld [vmem:[#allocation2 + $0xa8] sm:$0xff]
        %v465 = vld [vmem:[#allocation2 + $0xb0] sm:$0xff]
        %v466 = vld [vmem:[#allocation2 + $0xb8] sm:$0xff]
        %v467 = vld [vmem:[#allocation2 + $0xc0] sm:$0xff]
        %v468 = vld [vmem:[#allocation2 + $0xc8] sm:$0xff]
        %v469 = vld [vmem:[#allocation2 + $0xd0] sm:$0xff]
        %v470 = vld [vmem:[#allocation2 + $0xd8] sm:$0xff]
        %v471 = vld [vmem:[#allocation2 + $0xe0] sm:$0xff]
        %v472 = vld [vmem:[#allocation2 + $0xe8] sm:$0xff]
        %v473 = vld [vmem:[#allocation2 + $0xf0] sm:$0xff]
        %v474 = vld [vmem:[#allocation2 + $0xf8] sm:$0xff]
        %v475 = vld [vmem:[#allocation2 + $0x100] sm:$0xff]
        %v476 = vld [vmem:[#allocation2 + $0x108] sm:$0xff]
        %v477 = vld [vmem:[#allocation2 + $0x110] sm:$0xff]
        %v478 = vld [vmem:[#allocation2 + $0x118] sm:$0xff]
        %v479 = vld [vmem:[#allocation2 + $0x120] sm:$0xff]
        %v480 = vld [vmem:[#allocation2 + $0x128] sm:$0xff]
        %v481 = vld [vmem:[#allocation2 + $0x130] sm:$0xff]
        %v482 = vld [vmem:[#allocation2 + $0x138] sm:$0xff]
        %v483 = vld [vmem:[#allocation2 + $0x140] sm:$0xff]
        %v484 = vld [vmem:[#allocation2 + $0x148] sm:$0xff]
        %v485 = vld [vmem:[#allocation2 + $0x150] sm:$0xff]
        %v486 = vld [vmem:[#allocation2 + $0x158] sm:$0xff]
        %v487 = vld [vmem:[#allocation2 + $0x160] sm:$0xff]
        %v488 = vld [vmem:[#allocation2 + $0x168] sm:$0xff]
        %v489 = vld [vmem:[#allocation2 + $0x170] sm:$0xff]
        %v490 = vld [vmem:[#allocation2 + $0x178] sm:$0xff]
        %v491 = vld [vmem:[#allocation2 + $0x180] sm:$0xff]
        %v492 = vld [vmem:[#allocation2 + $0x188] sm:$0xff]
        %v493 = vld [vmem:[#allocation2 + $0x190] sm:$0xff]
        %v494 = vld [vmem:[#allocation2 + $0x198] sm:$0xff]
        %v495 = vld [vmem:[#allocation2 + $0x1a0] sm:$0xff]
        %v496 = vld [vmem:[#allocation2 + $0x1a8] sm:$0xff]
        %v497 = vld [vmem:[#allocation2 + $0x1b0] sm:$0xff]
        %v498 = vld [vmem:[#allocation2 + $0x1b8] sm:$0xff]
        %v499 = vld [vmem:[#allocation2 + $0x1c0] sm:$0xff]
        %v500 = vld [vmem:[#allocation2 + $0x1c8] sm:$0xff]
        %v501 = vld [vmem:[#allocation2 + $0x1d0] sm:$0xff]
        %v502 = vld [vmem:[#allocation2 + $0x1d8] sm:$0xff]
        %v503 = vld [vmem:[#allocation2 + $0x1e0] sm:$0xff]
        %v504 = vld [vmem:[#allocation2 + $0x1e8] sm:$0xff]
        %v505 = vld [vmem:[#allocation2 + $0x1f0] sm:$0xff]
        %v506 = vld [vmem:[#allocation2 + $0x1f8] sm:$0xff]
        %v507 = vld [vmem:[#allocation2 + $0x200] sm:$0xff]
        %v508 = vld [vmem:[#allocation2 + $0x208] sm:$0xff]
        %v509 = vld [vmem:[#allocation2 + $0x210] sm:$0xff]
        %v510 = vld [vmem:[#allocation2 + $0x218] sm:$0xff]
        %v511 = vld [vmem:[#allocation2 + $0x220] sm:$0xff]
        %v512 = vld [vmem:[#allocation2 + $0x228] sm:$0xff]
        %v513 = vld [vmem:[#allocation2 + $0x230] sm:$0xff]
        %v514 = vld [vmem:[#allocation2 + $0x238] sm:$0xff]
        %v515 = vld [vmem:[#allocation2 + $0x240] sm:$0xff]
        %v516 = vld [vmem:[#allocation2 + $0x248] sm:$0xff]
        %v517 = vld [vmem:[#allocation2 + $0x250] sm:$0xff]
        %v518 = vld [vmem:[#allocation2 + $0x258] sm:$0xff]
        %v519 = vld [vmem:[#allocation2 + $0x260] sm:$0xff]
        %v520 = vld [vmem:[#allocation2 + $0x268] sm:$0xff]
        %v521 = vld [vmem:[#allocation2 + $0x270] sm:$0xff]
        %v522 = vld [vmem:[#allocation2 + $0x278] sm:$0xff]
        %v523 = vld [vmem:[#allocation2 + $0x280] sm:$0xff]
        %v524 = vld [vmem:[#allocation2 + $0x288] sm:$0xff]
        %v525 = vld [vmem:[#allocation2 + $0x290] sm:$0xff]
        %v526 = vld [vmem:[#allocation2 + $0x298] sm:$0xff]
        %v527 = vld [vmem:[#allocation2 + $0x2a0] sm:$0xff]
        %v528 = vld [vmem:[#allocation2 + $0x2a8] sm:$0xff]
        %v529 = vld [vmem:[#allocation2 + $0x2b0] sm:$0xff]
        %v530 = vld [vmem:[#allocation2 + $0x2b8] sm:$0xff]
        %v531 = vld [vmem:[#allocation2 + $0x2c0] sm:$0xff]
        %v532 = vld [vmem:[#allocation2 + $0x2c8] sm:$0xff]
        %v533 = vld [vmem:[#allocation2 + $0x2d0] sm:$0xff]
        %v534 = vld [vmem:[#allocation2 + $0x2d8] sm:$0xff]
        %v535 = vld [vmem:[#allocation2 + $0x2e0] sm:$0xff]
        %v536 = vld [vmem:[#allocation2 + $0x2e8] sm:$0xff]
        %v537 = vld [vmem:[#allocation2 + $0x2f0] sm:$0xff]
        %v538 = vld [vmem:[#allocation2 + $0x2f8] sm:$0xff]
        %v540 = vcombine.high %v442, %v442
        %542 = vmatprep.subr.mxu0 %v489
        %543 = vmatpush1.msra.mxu0 %v488
        %544 = vmatprep.subr.mxu0 %v486
        %545 = vmatpush1.msra.mxu0 %v485
        %546 = vmatprep.subr.mxu0 %v483
        %547 = vmatpush1.msra.mxu0 %v482
        %548 = vmatprep.subr.mxu0 %v480
        %549 = vmatpush1.msra.mxu0 %v479
        %550 = vmatprep.subr.mxu0 %v477
        %551 = vmatpush1.msra.mxu0 %v476
        %552 = vmatprep.subr.mxu0 %v474
        %553 = vmatpush1.msra.mxu0 %v473
        %554 = vmatprep.subr.mxu0 %v471
        %555 = vmatpush1.msra.mxu0 %v470
        %556 = vmatprep.subr.mxu0 %v468
        %557 = vmatpush1.msra.mxu0 %v467
        %558 = vmatprep.subr.mxu0 %v465
        %559 = vmatpush1.msra.mxu0 %v464
        %560 = vmatprep.subr.mxu0 %v462
        %561 = vmatpush1.msra.mxu0 %v461
        %562 = vmatprep.subr.mxu0 %v459
        %563 = vmatpush1.msra.mxu0 %v458
        %564 = vmatprep.subr.mxu0 %v456
        %565 = vmatpush1.msra.mxu0 %v455
        %566 = vmatprep.subr.mxu0 %v453
        %567 = vmatpush1.msra.mxu0 %v452
        %568 = vmatprep.subr.mxu0 %v450
        %569 = vmatpush1.msra.mxu0 %v449
        %570 = vmatprep.subr.mxu0 %v447
        %571 = vmatpush1.msra.mxu0 %v446
        %572 = vmatprep.subr.mxu0 %v444
        %573 = vmatpush1.msra.mxu0 %v443
        %574 = vmatprep.subr.mxu0 %v537
        %575 = vmatpush2.msra.mxu0 %v536
        %576 = vmatprep.subr.mxu0 %v534
        %577 = vmatpush2.msra.mxu0 %v533
        %578 = vmatprep.subr.mxu0 %v531
        %579 = vmatpush2.msra.mxu0 %v530
        %580 = vmatprep.subr.mxu0 %v528
        %581 = vmatpush2.msra.mxu0 %v527
        %582 = vmatprep.subr.mxu0 %v525
        %583 = vmatpush2.msra.mxu0 %v524
        %584 = vmatprep.subr.mxu0 %v522
        %585 = vmatpush2.msra.mxu0 %v521
        %586 = vmatprep.subr.mxu0 %v519
        %587 = vmatpush2.msra.mxu0 %v518
        %588 = vmatprep.subr.mxu0 %v516
        %589 = vmatpush2.msra.mxu0 %v515
        %590 = vmatprep.subr.mxu0 %v513
        %591 = vmatpush2.msra.mxu0 %v512
        %592 = vmatprep.subr.mxu0 %v510
        %593 = vmatpush2.msra.mxu0 %v509
        %594 = vmatprep.subr.mxu0 %v507
        %595 = vmatpush2.msra.mxu0 %v506
        %596 = vmatprep.subr.mxu0 %v504
        %597 = vmatpush2.msra.mxu0 %v503
        %598 = vmatprep.subr.mxu0 %v501
        %599 = vmatpush2.msra.mxu0 %v500
        %600 = vmatprep.subr.mxu0 %v498
        %601 = vmatpush2.msra.mxu0 %v497
        %602 = vmatprep.subr.mxu0 %v495
        %603 = vmatpush2.msra.mxu0 %v494
        %604 = vmatprep.subr.mxu0 %v492
        %605 = vmatpush2.msra.mxu0 %v491
        %606 = vmatprep.mubr.f32.mxu0 %v540
        %607 = vmatmul.mubr.f32.gmra.mxu0 %v442
        %v608 = vpop.f32.mrf.mxu0
        %v609 = vadd.f32 0.0, %v608
        %v610 = vpop.f32.mrf.mxu0
        %v611 = vadd.f32 0.0, %v610
        %612 = vdwg.mxu0
        %613 = vmatprep.subr.mxu0 0.0
        %614 = vmatpush1.msra.mxu0 %v490
        %615 = vmatprep.subr.mxu0 0.0
        %616 = vmatpush1.msra.mxu0 %v487
        %617 = vmatprep.subr.mxu0 0.0
        %618 = vmatpush1.msra.mxu0 %v484
        %619 = vmatprep.subr.mxu0 0.0
        %620 = vmatpush1.msra.mxu0 %v481
        %621 = vmatprep.subr.mxu0 0.0
        %622 = vmatpush1.msra.mxu0 %v478
        %623 = vmatprep.subr.mxu0 0.0
        %624 = vmatpush1.msra.mxu0 %v475
        %625 = vmatprep.subr.mxu0 0.0
        %626 = vmatpush1.msra.mxu0 %v472
        %627 = vmatprep.subr.mxu0 0.0
        %628 = vmatpush1.msra.mxu0 %v469
        %629 = vmatprep.subr.mxu0 0.0
        %630 = vmatpush1.msra.mxu0 %v466
        %631 = vmatprep.subr.mxu0 0.0
        %632 = vmatpush1.msra.mxu0 %v463
        %633 = vmatprep.subr.mxu0 0.0
        %634 = vmatpush1.msra.mxu0 %v460
        %635 = vmatprep.subr.mxu0 0.0
        %636 = vmatpush1.msra.mxu0 %v457
        %637 = vmatprep.subr.mxu0 0.0
        %638 = vmatpush1.msra.mxu0 %v454
        %639 = vmatprep.subr.mxu0 0.0
        %640 = vmatpush1.msra.mxu0 %v451
        %641 = vmatprep.subr.mxu0 0.0
        %642 = vmatpush1.msra.mxu0 %v448
        %643 = vmatprep.subr.mxu0 0.0
        %644 = vmatpush1.msra.mxu0 %v445
        %645 = vmatprep.subr.mxu0 0.0
        %646 = vmatpush2.msra.mxu0 %v538
        %647 = vmatprep.subr.mxu0 0.0
        %648 = vmatpush2.msra.mxu0 %v535
        %649 = vmatprep.subr.mxu0 0.0
        %650 = vmatpush2.msra.mxu0 %v532
        %651 = vmatprep.subr.mxu0 0.0
        %652 = vmatpush2.msra.mxu0 %v529
        %653 = vmatprep.subr.mxu0 0.0
        %654 = vmatpush2.msra.mxu0 %v526
        %655 = vmatprep.subr.mxu0 0.0
        %656 = vmatpush2.msra.mxu0 %v523
        %657 = vmatprep.subr.mxu0 0.0
        %658 = vmatpush2.msra.mxu0 %v520
        %659 = vmatprep.subr.mxu0 0.0
        %660 = vmatpush2.msra.mxu0 %v517
        %661 = vmatprep.subr.mxu0 0.0
        %662 = vmatpush2.msra.mxu0 %v514
        %663 = vmatprep.subr.mxu0 0.0
        %664 = vmatpush2.msra.mxu0 %v511
        %665 = vmatprep.subr.mxu0 0.0
        %666 = vmatpush2.msra.mxu0 %v508
        %667 = vmatprep.subr.mxu0 0.0
        %668 = vmatpush2.msra.mxu0 %v505
        %669 = vmatprep.subr.mxu0 0.0
        %670 = vmatpush2.msra.mxu0 %v502
        %671 = vmatprep.subr.mxu0 0.0
        %672 = vmatpush2.msra.mxu0 %v499
        %673 = vmatprep.subr.mxu0 0.0
        %674 = vmatpush2.msra.mxu0 %v496
        %675 = vmatprep.subr.mxu0 0.0
        %676 = vmatpush2.msra.mxu0 %v493
        %677 = vmatprep.mubr.f32.mxu0 %v540
        %678 = vmatmul.mubr.f32.gmra.mxu0 %v442
        %v679 = vpop.f32.mrf.mxu0
        %v680 = vadd.f32 0.0, %v679
        %v681 = vpop.f32.mrf.mxu0
        %682 = vdwg.mxu0
        %s683 = scalar_lea.vmem [#allocation2], 768
        %v684 = vld [vmem:[%s683] sm:$0xff]
        %v685 = vld [vmem:[%s683 + $0x8] sm:$0xff]
        %v686 = vld [vmem:[%s683 + $0x10] sm:$0xff]
        %v687 = vld [vmem:[%s683 + $0x18] sm:$0xff]
        %v688 = vld [vmem:[%s683 + $0x20] sm:$0xff]
        %v689 = vld [vmem:[%s683 + $0x28] sm:$0xff]
        %v690 = vld [vmem:[%s683 + $0x30] sm:$0xff]
        %v691 = vld [vmem:[%s683 + $0x38] sm:$0xff]
        %v692 = vld [vmem:[%s683 + $0x40] sm:$0xff]
        %v693 = vld [vmem:[%s683 + $0x48] sm:$0xff]
        %v694 = vld [vmem:[%s683 + $0x50] sm:$0xff]
        %v695 = vld [vmem:[%s683 + $0x58] sm:$0xff]
        %v696 = vld [vmem:[%s683 + $0x60] sm:$0xff]
        %v697 = vld [vmem:[%s683 + $0x68] sm:$0xff]
        %v698 = vld [vmem:[%s683 + $0x70] sm:$0xff]
        %v699 = vld [vmem:[%s683 + $0x78] sm:$0xff]
        %v700 = vld [vmem:[%s683 + $0x80] sm:$0xff]
        %v701 = vld [vmem:[%s683 + $0x88] sm:$0xff]
        %v702 = vld [vmem:[%s683 + $0x90] sm:$0xff]
        %v703 = vld [vmem:[%s683 + $0x98] sm:$0xff]
        %v704 = vld [vmem:[%s683 + $0xa0] sm:$0xff]
        %v705 = vld [vmem:[%s683 + $0xa8] sm:$0xff]
        %v706 = vld [vmem:[%s683 + $0xb0] sm:$0xff]
        %v707 = vld [vmem:[%s683 + $0xb8] sm:$0xff]
        %v708 = vld [vmem:[%s683 + $0xc0] sm:$0xff]
        %v709 = vld [vmem:[%s683 + $0xc8] sm:$0xff]
        %v710 = vld [vmem:[%s683 + $0xd0] sm:$0xff]
        %v711 = vld [vmem:[%s683 + $0xd8] sm:$0xff]
        %v712 = vld [vmem:[%s683 + $0xe0] sm:$0xff]
        %v713 = vld [vmem:[%s683 + $0xe8] sm:$0xff]
        %v714 = vld [vmem:[%s683 + $0xf0] sm:$0xff]
        %v715 = vld [vmem:[%s683 + $0xf8] sm:$0xff]
        %v716 = vld [vmem:[%s683 + $0x100] sm:$0xff]
        %v717 = vld [vmem:[%s683 + $0x108] sm:$0xff]
        %v718 = vld [vmem:[%s683 + $0x110] sm:$0xff]
        %v719 = vld [vmem:[%s683 + $0x118] sm:$0xff]
        %v720 = vld [vmem:[%s683 + $0x120] sm:$0xff]
        %v721 = vld [vmem:[%s683 + $0x128] sm:$0xff]
        %v722 = vld [vmem:[%s683 + $0x130] sm:$0xff]
        %v723 = vld [vmem:[%s683 + $0x138] sm:$0xff]
        %v724 = vld [vmem:[%s683 + $0x140] sm:$0xff]
        %v725 = vld [vmem:[%s683 + $0x148] sm:$0xff]
        %v726 = vld [vmem:[%s683 + $0x150] sm:$0xff]
        %v727 = vld [vmem:[%s683 + $0x158] sm:$0xff]
        %v728 = vld [vmem:[%s683 + $0x160] sm:$0xff]
        %v729 = vld [vmem:[%s683 + $0x168] sm:$0xff]
        %v730 = vld [vmem:[%s683 + $0x170] sm:$0xff]
        %v731 = vld [vmem:[%s683 + $0x178] sm:$0xff]
        %v732 = vld [vmem:[%s683 + $0x180] sm:$0xff]
        %v733 = vld [vmem:[%s683 + $0x188] sm:$0xff]
        %v734 = vld [vmem:[%s683 + $0x190] sm:$0xff]
        %v735 = vld [vmem:[%s683 + $0x198] sm:$0xff]
        %v736 = vld [vmem:[%s683 + $0x1a0] sm:$0xff]
        %v737 = vld [vmem:[%s683 + $0x1a8] sm:$0xff]
        %v738 = vld [vmem:[%s683 + $0x1b0] sm:$0xff]
        %v739 = vld [vmem:[%s683 + $0x1b8] sm:$0xff]
        %v740 = vld [vmem:[%s683 + $0x1c0] sm:$0xff]
        %v741 = vld [vmem:[%s683 + $0x1c8] sm:$0xff]
        %v742 = vld [vmem:[%s683 + $0x1d0] sm:$0xff]
        %v743 = vld [vmem:[%s683 + $0x1d8] sm:$0xff]
        %v744 = vld [vmem:[%s683 + $0x1e0] sm:$0xff]
        %v745 = vld [vmem:[%s683 + $0x1e8] sm:$0xff]
        %v746 = vld [vmem:[%s683 + $0x1f0] sm:$0xff]
        %v747 = vld [vmem:[%s683 + $0x1f8] sm:$0xff]
        %v748 = vld [vmem:[%s683 + $0x200] sm:$0xff]
        %v749 = vld [vmem:[%s683 + $0x208] sm:$0xff]
        %v750 = vld [vmem:[%s683 + $0x210] sm:$0xff]
        %v751 = vld [vmem:[%s683 + $0x218] sm:$0xff]
        %v752 = vld [vmem:[%s683 + $0x220] sm:$0xff]
        %v753 = vld [vmem:[%s683 + $0x228] sm:$0xff]
        %v754 = vld [vmem:[%s683 + $0x230] sm:$0xff]
        %v755 = vld [vmem:[%s683 + $0x238] sm:$0xff]
        %v756 = vld [vmem:[%s683 + $0x240] sm:$0xff]
        %v757 = vld [vmem:[%s683 + $0x248] sm:$0xff]
        %v758 = vld [vmem:[%s683 + $0x250] sm:$0xff]
        %v759 = vld [vmem:[%s683 + $0x258] sm:$0xff]
        %v760 = vld [vmem:[%s683 + $0x260] sm:$0xff]
        %v761 = vld [vmem:[%s683 + $0x268] sm:$0xff]
        %v762 = vld [vmem:[%s683 + $0x270] sm:$0xff]
        %v763 = vld [vmem:[%s683 + $0x278] sm:$0xff]
        %v764 = vld [vmem:[%s683 + $0x280] sm:$0xff]
        %v765 = vld [vmem:[%s683 + $0x288] sm:$0xff]
        %v766 = vld [vmem:[%s683 + $0x290] sm:$0xff]
        %v767 = vld [vmem:[%s683 + $0x298] sm:$0xff]
        %v768 = vld [vmem:[%s683 + $0x2a0] sm:$0xff]
        %v769 = vld [vmem:[%s683 + $0x2a8] sm:$0xff]
        %v770 = vld [vmem:[%s683 + $0x2b0] sm:$0xff]
        %v771 = vld [vmem:[%s683 + $0x2b8] sm:$0xff]
        %v772 = vld [vmem:[%s683 + $0x2c0] sm:$0xff]
        %v773 = vld [vmem:[%s683 + $0x2c8] sm:$0xff]
        %v774 = vld [vmem:[%s683 + $0x2d0] sm:$0xff]
        %v775 = vld [vmem:[%s683 + $0x2d8] sm:$0xff]
        %v776 = vld [vmem:[%s683 + $0x2e0] sm:$0xff]
        %v777 = vld [vmem:[%s683 + $0x2e8] sm:$0xff]
        %v778 = vld [vmem:[%s683 + $0x2f0] sm:$0xff]
        %v779 = vld [vmem:[%s683 + $0x2f8] sm:$0xff]
        %780 = vmatprep.subr.mxu0 %v730
        %781 = vmatpush1.msra.mxu0 %v729
        %782 = vmatprep.subr.mxu0 %v727
        %783 = vmatpush1.msra.mxu0 %v726
        %784 = vmatprep.subr.mxu0 %v724
        %785 = vmatpush1.msra.mxu0 %v723
        %786 = vmatprep.subr.mxu0 %v721
        %787 = vmatpush1.msra.mxu0 %v720
        %788 = vmatprep.subr.mxu0 %v718
        %789 = vmatpush1.msra.mxu0 %v717
        %790 = vmatprep.subr.mxu0 %v715
        %791 = vmatpush1.msra.mxu0 %v714
        %792 = vmatprep.subr.mxu0 %v712
        %793 = vmatpush1.msra.mxu0 %v711
        %794 = vmatprep.subr.mxu0 %v709
        %795 = vmatpush1.msra.mxu0 %v708
        %796 = vmatprep.subr.mxu0 %v706
        %797 = vmatpush1.msra.mxu0 %v705
        %798 = vmatprep.subr.mxu0 %v703
        %799 = vmatpush1.msra.mxu0 %v702
        %800 = vmatprep.subr.mxu0 %v700
        %801 = vmatpush1.msra.mxu0 %v699
        %802 = vmatprep.subr.mxu0 %v697
        %803 = vmatpush1.msra.mxu0 %v696
        %804 = vmatprep.subr.mxu0 %v694
        %805 = vmatpush1.msra.mxu0 %v693
        %806 = vmatprep.subr.mxu0 %v691
        %807 = vmatpush1.msra.mxu0 %v690
        %808 = vmatprep.subr.mxu0 %v688
        %809 = vmatpush1.msra.mxu0 %v687
        %810 = vmatprep.subr.mxu0 %v685
        %811 = vmatpush1.msra.mxu0 %v684
        %812 = vmatprep.subr.mxu0 %v778
        %813 = vmatpush2.msra.mxu0 %v777
        %814 = vmatprep.subr.mxu0 %v775
        %815 = vmatpush2.msra.mxu0 %v774
        %816 = vmatprep.subr.mxu0 %v772
        %817 = vmatpush2.msra.mxu0 %v771
        %818 = vmatprep.subr.mxu0 %v769
        %819 = vmatpush2.msra.mxu0 %v768
        %820 = vmatprep.subr.mxu0 %v766
        %821 = vmatpush2.msra.mxu0 %v765
        %822 = vmatprep.subr.mxu0 %v763
        %823 = vmatpush2.msra.mxu0 %v762
        %824 = vmatprep.subr.mxu0 %v760
        %825 = vmatpush2.msra.mxu0 %v759
        %826 = vmatprep.subr.mxu0 %v757
        %827 = vmatpush2.msra.mxu0 %v756
        %828 = vmatprep.subr.mxu0 %v754
        %829 = vmatpush2.msra.mxu0 %v753
        %830 = vmatprep.subr.mxu0 %v751
        %831 = vmatpush2.msra.mxu0 %v750
        %832 = vmatprep.subr.mxu0 %v748
        %833 = vmatpush2.msra.mxu0 %v747
        %834 = vmatprep.subr.mxu0 %v745
        %835 = vmatpush2.msra.mxu0 %v744
        %836 = vmatprep.subr.mxu0 %v742
        %837 = vmatpush2.msra.mxu0 %v741
        %838 = vmatprep.subr.mxu0 %v739
        %839 = vmatpush2.msra.mxu0 %v738
        %840 = vmatprep.subr.mxu0 %v736
        %841 = vmatpush2.msra.mxu0 %v735
        %842 = vmatprep.subr.mxu0 %v733
        %843 = vmatpush2.msra.mxu0 %v732
        %844 = vmatprep.mubr.f32.mxu0 %v540
        %845 = vmatmul.mubr.f32.gmra.mxu0 %v442
        %v846 = vpop.f32.mrf.mxu0
        %v847 = vadd.f32 0.0, %v846
        %v848 = vpop.f32.mrf.mxu0
        %v849 = vadd.f32 0.0, %v848
        %850 = vdwg.mxu0
        %851 = vmatprep.subr.mxu0 0.0
        %852 = vmatpush1.msra.mxu0 %v731
        %853 = vmatprep.subr.mxu0 0.0
        %854 = vmatpush1.msra.mxu0 %v728
        %855 = vmatprep.subr.mxu0 0.0
        %856 = vmatpush1.msra.mxu0 %v725
        %857 = vmatprep.subr.mxu0 0.0
        %858 = vmatpush1.msra.mxu0 %v722
        %859 = vmatprep.subr.mxu0 0.0
        %860 = vmatpush1.msra.mxu0 %v719
        %861 = vmatprep.subr.mxu0 0.0
        %862 = vmatpush1.msra.mxu0 %v716
        %863 = vmatprep.subr.mxu0 0.0
        %864 = vmatpush1.msra.mxu0 %v713
        %865 = vmatprep.subr.mxu0 0.0
        %866 = vmatpush1.msra.mxu0 %v710
        %867 = vmatprep.subr.mxu0 0.0
        %868 = vmatpush1.msra.mxu0 %v707
        %869 = vmatprep.subr.mxu0 0.0
        %870 = vmatpush1.msra.mxu0 %v704
        %871 = vmatprep.subr.mxu0 0.0
        %872 = vmatpush1.msra.mxu0 %v701
        %873 = vmatprep.subr.mxu0 0.0
        %874 = vmatpush1.msra.mxu0 %v698
        %875 = vmatprep.subr.mxu0 0.0
        %876 = vmatpush1.msra.mxu0 %v695
        %877 = vmatprep.subr.mxu0 0.0
        %878 = vmatpush1.msra.mxu0 %v692
        %879 = vmatprep.subr.mxu0 0.0
        %880 = vmatpush1.msra.mxu0 %v689
        %881 = vmatprep.subr.mxu0 0.0
        %882 = vmatpush1.msra.mxu0 %v686
        %883 = vmatprep.subr.mxu0 0.0
        %884 = vmatpush2.msra.mxu0 %v779
        %885 = vmatprep.subr.mxu0 0.0
        %886 = vmatpush2.msra.mxu0 %v776
        %887 = vmatprep.subr.mxu0 0.0
        %888 = vmatpush2.msra.mxu0 %v773
        %889 = vmatprep.subr.mxu0 0.0
        %890 = vmatpush2.msra.mxu0 %v770
        %891 = vmatprep.subr.mxu0 0.0
        %892 = vmatpush2.msra.mxu0 %v767
        %893 = vmatprep.subr.mxu0 0.0
        %894 = vmatpush2.msra.mxu0 %v764
        %895 = vmatprep.subr.mxu0 0.0
        %896 = vmatpush2.msra.mxu0 %v761
        %897 = vmatprep.subr.mxu0 0.0
        %898 = vmatpush2.msra.mxu0 %v758
        %899 = vmatprep.subr.mxu0 0.0
        %900 = vmatpush2.msra.mxu0 %v755
        %901 = vmatprep.subr.mxu0 0.0
        %902 = vmatpush2.msra.mxu0 %v752
        %903 = vmatprep.subr.mxu0 0.0
        %904 = vmatpush2.msra.mxu0 %v749
        %905 = vmatprep.subr.mxu0 0.0
        %906 = vmatpush2.msra.mxu0 %v746
        %907 = vmatprep.subr.mxu0 0.0
        %908 = vmatpush2.msra.mxu0 %v743
        %909 = vmatprep.subr.mxu0 0.0
        %910 = vmatpush2.msra.mxu0 %v740
        %911 = vmatprep.subr.mxu0 0.0
        %912 = vmatpush2.msra.mxu0 %v737
        %913 = vmatprep.subr.mxu0 0.0
        %914 = vmatpush2.msra.mxu0 %v734
        %915 = vmatprep.mubr.f32.mxu0 %v540
        %916 = vmatmul.mubr.f32.gmra.mxu0 %v442
        %v917 = vpop.f32.mrf.mxu0
        %v918 = vadd.f32 0.0, %v917
        %v919 = vpop.f32.mrf.mxu0
        %920 = vdwg.mxu0
        %s921 = scalar_lea.vmem [#allocation2], 1536
        %v922 = vld [vmem:[%s921] sm:$0xff]
        %v923 = vld [vmem:[%s921 + $0x8] sm:$0xff]
        %v924 = vld [vmem:[%s921 + $0x10] sm:$0xff]
        %v925 = vld [vmem:[%s921 + $0x18] sm:$0xff]
        %v926 = vld [vmem:[%s921 + $0x20] sm:$0xff]
        %v927 = vld [vmem:[%s921 + $0x28] sm:$0xff]
        %v928 = vld [vmem:[%s921 + $0x30] sm:$0xff]
        %v929 = vld [vmem:[%s921 + $0x38] sm:$0xff]
        %v930 = vld [vmem:[%s921 + $0x40] sm:$0xff]
        %v931 = vld [vmem:[%s921 + $0x48] sm:$0xff]
        %v932 = vld [vmem:[%s921 + $0x50] sm:$0xff]
        %v933 = vld [vmem:[%s921 + $0x58] sm:$0xff]
        %v934 = vld [vmem:[%s921 + $0x60] sm:$0xff]
        %v935 = vld [vmem:[%s921 + $0x68] sm:$0xff]
        %v936 = vld [vmem:[%s921 + $0x70] sm:$0xff]
        %v937 = vld [vmem:[%s921 + $0x78] sm:$0xff]
        %v938 = vld [vmem:[%s921 + $0x80] sm:$0xff]
        %v939 = vld [vmem:[%s921 + $0x88] sm:$0xff]
        %v940 = vld [vmem:[%s921 + $0x90] sm:$0xff]
        %v941 = vld [vmem:[%s921 + $0x98] sm:$0xff]
        %v942 = vld [vmem:[%s921 + $0xa0] sm:$0xff]
        %v943 = vld [vmem:[%s921 + $0xa8] sm:$0xff]
        %v944 = vld [vmem:[%s921 + $0xb0] sm:$0xff]
        %v945 = vld [vmem:[%s921 + $0xb8] sm:$0xff]
        %v946 = vld [vmem:[%s921 + $0xc0] sm:$0xff]
        %v947 = vld [vmem:[%s921 + $0xc8] sm:$0xff]
        %v948 = vld [vmem:[%s921 + $0xd0] sm:$0xff]
        %v949 = vld [vmem:[%s921 + $0xd8] sm:$0xff]
        %v950 = vld [vmem:[%s921 + $0xe0] sm:$0xff]
        %v951 = vld [vmem:[%s921 + $0xe8] sm:$0xff]
        %v952 = vld [vmem:[%s921 + $0xf0] sm:$0xff]
        %v953 = vld [vmem:[%s921 + $0xf8] sm:$0xff]
        %v954 = vld [vmem:[%s921 + $0x100] sm:$0xff]
        %v955 = vld [vmem:[%s921 + $0x108] sm:$0xff]
        %v956 = vld [vmem:[%s921 + $0x110] sm:$0xff]
        %v957 = vld [vmem:[%s921 + $0x118] sm:$0xff]
        %v958 = vld [vmem:[%s921 + $0x120] sm:$0xff]
        %v959 = vld [vmem:[%s921 + $0x128] sm:$0xff]
        %v960 = vld [vmem:[%s921 + $0x130] sm:$0xff]
        %v961 = vld [vmem:[%s921 + $0x138] sm:$0xff]
        %v962 = vld [vmem:[%s921 + $0x140] sm:$0xff]
        %v963 = vld [vmem:[%s921 + $0x148] sm:$0xff]
        %v964 = vld [vmem:[%s921 + $0x150] sm:$0xff]
        %v965 = vld [vmem:[%s921 + $0x158] sm:$0xff]
        %v966 = vld [vmem:[%s921 + $0x160] sm:$0xff]
        %v967 = vld [vmem:[%s921 + $0x168] sm:$0xff]
        %v968 = vld [vmem:[%s921 + $0x170] sm:$0xff]
        %v969 = vld [vmem:[%s921 + $0x178] sm:$0xff]
        %v970 = vld [vmem:[%s921 + $0x180] sm:$0xff]
        %v971 = vld [vmem:[%s921 + $0x188] sm:$0xff]
        %v972 = vld [vmem:[%s921 + $0x190] sm:$0xff]
        %v973 = vld [vmem:[%s921 + $0x198] sm:$0xff]
        %v974 = vld [vmem:[%s921 + $0x1a0] sm:$0xff]
        %v975 = vld [vmem:[%s921 + $0x1a8] sm:$0xff]
        %v976 = vld [vmem:[%s921 + $0x1b0] sm:$0xff]
        %v977 = vld [vmem:[%s921 + $0x1b8] sm:$0xff]
        %v978 = vld [vmem:[%s921 + $0x1c0] sm:$0xff]
        %v979 = vld [vmem:[%s921 + $0x1c8] sm:$0xff]
        %v980 = vld [vmem:[%s921 + $0x1d0] sm:$0xff]
        %v981 = vld [vmem:[%s921 + $0x1d8] sm:$0xff]
        %v982 = vld [vmem:[%s921 + $0x1e0] sm:$0xff]
        %v983 = vld [vmem:[%s921 + $0x1e8] sm:$0xff]
        %v984 = vld [vmem:[%s921 + $0x1f0] sm:$0xff]
        %v985 = vld [vmem:[%s921 + $0x1f8] sm:$0xff]
        %v986 = vld [vmem:[%s921 + $0x200] sm:$0xff]
        %v987 = vld [vmem:[%s921 + $0x208] sm:$0xff]
        %v988 = vld [vmem:[%s921 + $0x210] sm:$0xff]
        %v989 = vld [vmem:[%s921 + $0x218] sm:$0xff]
        %v990 = vld [vmem:[%s921 + $0x220] sm:$0xff]
        %v991 = vld [vmem:[%s921 + $0x228] sm:$0xff]
        %v992 = vld [vmem:[%s921 + $0x230] sm:$0xff]
        %v993 = vld [vmem:[%s921 + $0x238] sm:$0xff]
        %v994 = vld [vmem:[%s921 + $0x240] sm:$0xff]
        %v995 = vld [vmem:[%s921 + $0x248] sm:$0xff]
        %v996 = vld [vmem:[%s921 + $0x250] sm:$0xff]
        %v997 = vld [vmem:[%s921 + $0x258] sm:$0xff]
        %v998 = vld [vmem:[%s921 + $0x260] sm:$0xff]
        %v999 = vld [vmem:[%s921 + $0x268] sm:$0xff]
        %v1000 = vld [vmem:[%s921 + $0x270] sm:$0xff]
        %v1001 = vld [vmem:[%s921 + $0x278] sm:$0xff]
        %v1002 = vld [vmem:[%s921 + $0x280] sm:$0xff]
        %v1003 = vld [vmem:[%s921 + $0x288] sm:$0xff]
        %v1004 = vld [vmem:[%s921 + $0x290] sm:$0xff]
        %v1005 = vld [vmem:[%s921 + $0x298] sm:$0xff]
        %v1006 = vld [vmem:[%s921 + $0x2a0] sm:$0xff]
        %v1007 = vld [vmem:[%s921 + $0x2a8] sm:$0xff]
        %v1008 = vld [vmem:[%s921 + $0x2b0] sm:$0xff]
        %v1009 = vld [vmem:[%s921 + $0x2b8] sm:$0xff]
        %v1010 = vld [vmem:[%s921 + $0x2c0] sm:$0xff]
        %v1011 = vld [vmem:[%s921 + $0x2c8] sm:$0xff]
        %v1012 = vld [vmem:[%s921 + $0x2d0] sm:$0xff]
        %v1013 = vld [vmem:[%s921 + $0x2d8] sm:$0xff]
        %v1014 = vld [vmem:[%s921 + $0x2e0] sm:$0xff]
        %v1015 = vld [vmem:[%s921 + $0x2e8] sm:$0xff]
        %v1016 = vld [vmem:[%s921 + $0x2f0] sm:$0xff]
        %v1017 = vld [vmem:[%s921 + $0x2f8] sm:$0xff]
        %1018 = vmatprep.subr.mxu0 %v968
        %1019 = vmatpush1.msra.mxu0 %v967
        %1020 = vmatprep.subr.mxu0 %v965
        %1021 = vmatpush1.msra.mxu0 %v964
        %1022 = vmatprep.subr.mxu0 %v962
        %1023 = vmatpush1.msra.mxu0 %v961
        %1024 = vmatprep.subr.mxu0 %v959
        %1025 = vmatpush1.msra.mxu0 %v958
        %1026 = vmatprep.subr.mxu0 %v956
        %1027 = vmatpush1.msra.mxu0 %v955
        %1028 = vmatprep.subr.mxu0 %v953
        %1029 = vmatpush1.msra.mxu0 %v952
        %1030 = vmatprep.subr.mxu0 %v950
        %1031 = vmatpush1.msra.mxu0 %v949
        %1032 = vmatprep.subr.mxu0 %v947
        %1033 = vmatpush1.msra.mxu0 %v946
        %1034 = vmatprep.subr.mxu0 %v944
        %1035 = vmatpush1.msra.mxu0 %v943
        %1036 = vmatprep.subr.mxu0 %v941
        %1037 = vmatpush1.msra.mxu0 %v940
        %1038 = vmatprep.subr.mxu0 %v938
        %1039 = vmatpush1.msra.mxu0 %v937
        %1040 = vmatprep.subr.mxu0 %v935
        %1041 = vmatpush1.msra.mxu0 %v934
        %1042 = vmatprep.subr.mxu0 %v932
        %1043 = vmatpush1.msra.mxu0 %v931
        %1044 = vmatprep.subr.mxu0 %v929
        %1045 = vmatpush1.msra.mxu0 %v928
        %1046 = vmatprep.subr.mxu0 %v926
        %1047 = vmatpush1.msra.mxu0 %v925
        %1048 = vmatprep.subr.mxu0 %v923
        %1049 = vmatpush1.msra.mxu0 %v922
        %1050 = vmatprep.subr.mxu0 %v1016
        %1051 = vmatpush2.msra.mxu0 %v1015
        %1052 = vmatprep.subr.mxu0 %v1013
        %1053 = vmatpush2.msra.mxu0 %v1012
        %1054 = vmatprep.subr.mxu0 %v1010
        %1055 = vmatpush2.msra.mxu0 %v1009
        %1056 = vmatprep.subr.mxu0 %v1007
        %1057 = vmatpush2.msra.mxu0 %v1006
        %1058 = vmatprep.subr.mxu0 %v1004
        %1059 = vmatpush2.msra.mxu0 %v1003
        %1060 = vmatprep.subr.mxu0 %v1001
        %1061 = vmatpush2.msra.mxu0 %v1000
        %1062 = vmatprep.subr.mxu0 %v998
        %1063 = vmatpush2.msra.mxu0 %v997
        %1064 = vmatprep.subr.mxu0 %v995
        %1065 = vmatpush2.msra.mxu0 %v994
        %1066 = vmatprep.subr.mxu0 %v992
        %1067 = vmatpush2.msra.mxu0 %v991
        %1068 = vmatprep.subr.mxu0 %v989
        %1069 = vmatpush2.msra.mxu0 %v988
        %1070 = vmatprep.subr.mxu0 %v986
        %1071 = vmatpush2.msra.mxu0 %v985
        %1072 = vmatprep.subr.mxu0 %v983
        %1073 = vmatpush2.msra.mxu0 %v982
        %1074 = vmatprep.subr.mxu0 %v980
        %1075 = vmatpush2.msra.mxu0 %v979
        %1076 = vmatprep.subr.mxu0 %v977
        %1077 = vmatpush2.msra.mxu0 %v976
        %1078 = vmatprep.subr.mxu0 %v974
        %1079 = vmatpush2.msra.mxu0 %v973
        %1080 = vmatprep.subr.mxu0 %v971
        %1081 = vmatpush2.msra.mxu0 %v970
        %1082 = vmatprep.mubr.f32.mxu0 %v540
        %1083 = vmatmul.mubr.f32.gmra.mxu0 %v442
        %v1084 = vpop.f32.mrf.mxu0
        %v1085 = vadd.f32 0.0, %v1084
        %v1086 = vpop.f32.mrf.mxu0
        %v1087 = vadd.f32 0.0, %v1086
        %1088 = vdwg.mxu0
        %1089 = vmatprep.subr.mxu0 0.0
        %1090 = vmatpush1.msra.mxu0 %v969
        %1091 = vmatprep.subr.mxu0 0.0
        %1092 = vmatpush1.msra.mxu0 %v966
        %1093 = vmatprep.subr.mxu0 0.0
        %1094 = vmatpush1.msra.mxu0 %v963
        %1095 = vmatprep.subr.mxu0 0.0
        %1096 = vmatpush1.msra.mxu0 %v960
        %1097 = vmatprep.subr.mxu0 0.0
        %1098 = vmatpush1.msra.mxu0 %v957
        %1099 = vmatprep.subr.mxu0 0.0
        %1100 = vmatpush1.msra.mxu0 %v954
        %1101 = vmatprep.subr.mxu0 0.0
        %1102 = vmatpush1.msra.mxu0 %v951
        %1103 = vmatprep.subr.mxu0 0.0
        %1104 = vmatpush1.msra.mxu0 %v948
        %1105 = vmatprep.subr.mxu0 0.0
        %1106 = vmatpush1.msra.mxu0 %v945
        %1107 = vmatprep.subr.mxu0 0.0
        %1108 = vmatpush1.msra.mxu0 %v942
        %1109 = vmatprep.subr.mxu0 0.0
        %1110 = vmatpush1.msra.mxu0 %v939
        %1111 = vmatprep.subr.mxu0 0.0
        %1112 = vmatpush1.msra.mxu0 %v936
        %1113 = vmatprep.subr.mxu0 0.0
        %1114 = vmatpush1.msra.mxu0 %v933
        %1115 = vmatprep.subr.mxu0 0.0
        %1116 = vmatpush1.msra.mxu0 %v930
        %1117 = vmatprep.subr.mxu0 0.0
        %1118 = vmatpush1.msra.mxu0 %v927
        %1119 = vmatprep.subr.mxu0 0.0
        %1120 = vmatpush1.msra.mxu0 %v924
        %1121 = vmatprep.subr.mxu0 0.0
        %1122 = vmatpush2.msra.mxu0 %v1017
        %1123 = vmatprep.subr.mxu0 0.0
        %1124 = vmatpush2.msra.mxu0 %v1014
        %1125 = vmatprep.subr.mxu0 0.0
        %1126 = vmatpush2.msra.mxu0 %v1011
        %1127 = vmatprep.subr.mxu0 0.0
        %1128 = vmatpush2.msra.mxu0 %v1008
        %1129 = vmatprep.subr.mxu0 0.0
        %1130 = vmatpush2.msra.mxu0 %v1005
        %1131 = vmatprep.subr.mxu0 0.0
        %1132 = vmatpush2.msra.mxu0 %v1002
        %1133 = vmatprep.subr.mxu0 0.0
        %1134 = vmatpush2.msra.mxu0 %v999
        %1135 = vmatprep.subr.mxu0 0.0
        %1136 = vmatpush2.msra.mxu0 %v996
        %1137 = vmatprep.subr.mxu0 0.0
        %1138 = vmatpush2.msra.mxu0 %v993
        %1139 = vmatprep.subr.mxu0 0.0
        %1140 = vmatpush2.msra.mxu0 %v990
        %1141 = vmatprep.subr.mxu0 0.0
        %1142 = vmatpush2.msra.mxu0 %v987
        %1143 = vmatprep.subr.mxu0 0.0
        %1144 = vmatpush2.msra.mxu0 %v984
        %1145 = vmatprep.subr.mxu0 0.0
        %1146 = vmatpush2.msra.mxu0 %v981
        %1147 = vmatprep.subr.mxu0 0.0
        %1148 = vmatpush2.msra.mxu0 %v978
        %1149 = vmatprep.subr.mxu0 0.0
        %1150 = vmatpush2.msra.mxu0 %v975
        %1151 = vmatprep.subr.mxu0 0.0
        %1152 = vmatpush2.msra.mxu0 %v972
        %1153 = vmatprep.mubr.f32.mxu0 %v540
        %1154 = vmatmul.mubr.f32.gmra.mxu0 %v442
        %v1155 = vpop.f32.mrf.mxu0
        %v1156 = vadd.f32 0.0, %v1155
        %v1157 = vpop.f32.mrf.mxu0
        %1158 = vdwg.mxu0
        %vm1159 = vcmask 1043456
        %v1160 = vsel %vm1159, %v609, 0.0
        %v1161 = vsel %vm1159, %v611, 0.0
        %v1162 = vsel %vm1159, %v680, 0.0
        %v1166 = vrot.slane %v1085, 7
        %v1167 = vrot.slane %v1087, 7
        %v1168 = vrot.slane %v1156, 7
        %vm1172 = vcmask 1040384
        %v1173 = vsel %vm1172, 0.0, %v1166
        %v1174 = vsel %vm1172, 0.0, %v1167
        %v1175 = vsel %vm1172, 0.0, %v1168
        %v1176 = vadd.f32 %v1160, %v1173
        %v1177 = vadd.f32 %v1161, %v1174
        %v1178 = vadd.f32 %v1162, %v1175
        %v1179 = vsel %vm1159, %v847, 0.0
        %v1180 = vsel %vm1159, %v849, 0.0
        %v1181 = vsel %vm1159, %v918, 0.0
        %v1185 = vcombine.low %v1176, %v1177
        %v1186 = vcombine.high %v1176, %v1177
        %v1187 = vcombine.high %v1178, %v1178
        %v1189 = vunpack.c.l.s4 1966171168
        %v1190 = vunpack.c.0.s8 %v1189
        %v1191 = vlaneseq
        %v1192 = vshrl.u32 %v1191, 7
        %v1193 = vsub.s32 %v1190, %v1192
        %v1194 = vrot.slane %v1185, %v1193
        %v1196 = vunpack.c.l.s4 1966171168
        %v1197 = vunpack.c.0.s8 %v1196
        %v1198 = vlaneseq
        %v1199 = vshrl.u32 %v1198, 7
        %v1200 = vsub.s32 %v1197, %v1199
        %v1201 = vrot.slane %v1186, %v1200
        %v1203 = vunpack.c.l.s4 1966171168
        %v1204 = vunpack.c.0.s8 %v1203
        %v1205 = vlaneseq
        %v1206 = vshrl.u32 %v1205, 7
        %v1207 = vsub.s32 %v1204, %v1206
        %v1208 = vrot.slane %v1178, %v1207
        %v1210 = vunpack.c.l.s4 1966171168
        %v1211 = vunpack.c.0.s8 %v1210
        %v1212 = vlaneseq
        %v1213 = vshrl.u32 %v1212, 7
        %v1214 = vsub.s32 %v1211, %v1213
        %v1215 = vrot.slane %v1187, %v1214
        %v1216 = vcombine.low %v1194, %v1208
        %v1217 = vcombine.high %v1194, %v1208
        %v1218 = vcombine.low %v1201, %v1215
        %v1220 = vunpack.c.l.s4 1966171168
        %v1221 = vunpack.c.0.s8 %v1220
        %v1222 = vlaneseq
        %v1223 = vshrl.u32 %v1222, 7
        %v1224 = vsub.s32 %v1221, %v1223
        %v1225 = vrot.slane %v1216, %v1224
        %v1227 = vunpack.c.l.s4 1966171168
        %v1228 = vunpack.c.0.s8 %v1227
        %v1229 = vlaneseq
        %v1230 = vshrl.u32 %v1229, 7
        %v1231 = vsub.s32 %v1228, %v1230
        %v1232 = vrot.slane %v1218, %v1231
        %v1234 = vunpack.c.l.s4 1966171168
        %v1235 = vunpack.c.0.s8 %v1234
        %v1236 = vlaneseq
        %v1237 = vshrl.u32 %v1236, 7
        %v1238 = vsub.s32 %v1235, %v1237
        %v1239 = vrot.slane %v1217, %v1238
        %v1240 = vcombine.high %v1225, %v1225
        %v1241 = vcombine.high %v1239, %v1239
        %v1245 = vcombine.low %v1179, %v1180
        %v1246 = vcombine.high %v1179, %v1180
        %v1247 = vcombine.high %v1181, %v1181
        %v1249 = vunpack.c.l.s4 1966171168
        %v1250 = vunpack.c.0.s8 %v1249
        %v1251 = vlaneseq
        %v1252 = vshrl.u32 %v1251, 7
        %v1253 = vsub.s32 %v1250, %v1252
        %v1254 = vrot.slane %v1245, %v1253
        %v1256 = vunpack.c.l.s4 1966171168
        %v1257 = vunpack.c.0.s8 %v1256
        %v1258 = vlaneseq
        %v1259 = vshrl.u32 %v1258, 7
        %v1260 = vsub.s32 %v1257, %v1259
        %v1261 = vrot.slane %v1246, %v1260
        %v1263 = vunpack.c.l.s4 1966171168
        %v1264 = vunpack.c.0.s8 %v1263
        %v1265 = vlaneseq
        %v1266 = vshrl.u32 %v1265, 7
        %v1267 = vsub.s32 %v1264, %v1266
        %v1268 = vrot.slane %v1181, %v1267
        %v1270 = vunpack.c.l.s4 1966171168
        %v1271 = vunpack.c.0.s8 %v1270
        %v1272 = vlaneseq
        %v1273 = vshrl.u32 %v1272, 7
        %v1274 = vsub.s32 %v1271, %v1273
        %v1275 = vrot.slane %v1247, %v1274
        %v1276 = vcombine.low %v1254, %v1268
        %v1277 = vcombine.high %v1254, %v1268
        %v1278 = vcombine.low %v1261, %v1275
        %v1280 = vunpack.c.l.s4 1966171168
        %v1281 = vunpack.c.0.s8 %v1280
        %v1282 = vlaneseq
        %v1283 = vshrl.u32 %v1282, 7
        %v1284 = vsub.s32 %v1281, %v1283
        %v1285 = vrot.slane %v1276, %v1284
        %v1287 = vunpack.c.l.s4 1966171168
        %v1288 = vunpack.c.0.s8 %v1287
        %v1289 = vlaneseq
        %v1290 = vshrl.u32 %v1289, 7
        %v1291 = vsub.s32 %v1288, %v1290
        %v1292 = vrot.slane %v1278, %v1291
        %v1294 = vunpack.c.l.s4 1966171168
        %v1295 = vunpack.c.0.s8 %v1294
        %v1296 = vlaneseq
        %v1297 = vshrl.u32 %v1296, 7
        %v1298 = vsub.s32 %v1295, %v1297
        %v1299 = vrot.slane %v1277, %v1298
        %v1300 = vcombine.high %v1285, %v1285
        %v1301 = vcombine.high %v1299, %v1299
        %v1302 = vlaneseq
        %v1303 = vshrl.u32 %v1302, 7
        %v1304 = vsub.s32 0, %v1303
        %v1305 = vrot.slane %v1225, %v1304
        %v1306 = vlaneseq
        %v1307 = vshrl.u32 %v1306, 7
        %v1308 = vsub.s32 1, %v1307
        %v1309 = vrot.slane %v1225, %v1308
        %v1310 = vlaneseq
        %v1311 = vshrl.u32 %v1310, 7
        %v1312 = vsub.s32 2, %v1311
        %v1313 = vrot.slane %v1225, %v1312
        %v1314 = vlaneseq
        %v1315 = vshrl.u32 %v1314, 7
        %v1316 = vsub.s32 0, %v1315
        %v1317 = vrot.slane %v1239, %v1316
        %v1318 = vlaneseq
        %v1319 = vshrl.u32 %v1318, 7
        %v1320 = vsub.s32 1, %v1319
        %v1321 = vrot.slane %v1239, %v1320
        %v1322 = vlaneseq
        %v1323 = vshrl.u32 %v1322, 7
        %v1324 = vsub.s32 2, %v1323
        %v1325 = vrot.slane %v1239, %v1324
        %v1326 = vlaneseq
        %v1327 = vshrl.u32 %v1326, 7
        %v1328 = vsub.s32 0, %v1327
        %v1329 = vrot.slane %v1240, %v1328
        %v1330 = vlaneseq
        %v1331 = vshrl.u32 %v1330, 7
        %v1332 = vsub.s32 1, %v1331
        %v1333 = vrot.slane %v1240, %v1332
        %v1334 = vlaneseq
        %v1335 = vshrl.u32 %v1334, 7
        %v1336 = vsub.s32 2, %v1335
        %v1337 = vrot.slane %v1240, %v1336
        %v1338 = vlaneseq
        %v1339 = vshrl.u32 %v1338, 7
        %v1340 = vsub.s32 0, %v1339
        %v1341 = vrot.slane %v1241, %v1340
        %v1342 = vlaneseq
        %v1343 = vshrl.u32 %v1342, 7
        %v1344 = vsub.s32 1, %v1343
        %v1345 = vrot.slane %v1241, %v1344
        %v1346 = vlaneseq
        %v1347 = vshrl.u32 %v1346, 7
        %v1348 = vsub.s32 2, %v1347
        %v1349 = vrot.slane %v1241, %v1348
        %v1350 = vlaneseq
        %v1351 = vshrl.u32 %v1350, 7
        %v1352 = vsub.s32 0, %v1351
        %v1353 = vrot.slane %v1232, %v1352
        %v1354 = vlaneseq
        %v1355 = vshrl.u32 %v1354, 7
        %v1356 = vsub.s32 1, %v1355
        %v1357 = vrot.slane %v1232, %v1356
        %v1358 = vlaneseq
        %v1359 = vshrl.u32 %v1358, 7
        %v1360 = vsub.s32 2, %v1359
        %v1361 = vrot.slane %v1232, %v1360
        %v1377 = vlaneseq
        %v1378 = vshrl.u32 %v1377, 7
        %v1379 = vsub.s32 0, %v1378
        %v1380 = vrot.slane %v1285, %v1379
        %v1381 = vlaneseq
        %v1382 = vshrl.u32 %v1381, 7
        %v1383 = vsub.s32 1, %v1382
        %v1384 = vrot.slane %v1285, %v1383
        %v1385 = vlaneseq
        %v1386 = vshrl.u32 %v1385, 7
        %v1387 = vsub.s32 2, %v1386
        %v1388 = vrot.slane %v1285, %v1387
        %v1389 = vlaneseq
        %v1390 = vshrl.u32 %v1389, 7
        %v1391 = vsub.s32 0, %v1390
        %v1392 = vrot.slane %v1299, %v1391
        %v1393 = vlaneseq
        %v1394 = vshrl.u32 %v1393, 7
        %v1395 = vsub.s32 1, %v1394
        %v1396 = vrot.slane %v1299, %v1395
        %v1397 = vlaneseq
        %v1398 = vshrl.u32 %v1397, 7
        %v1399 = vsub.s32 2, %v1398
        %v1400 = vrot.slane %v1299, %v1399
        %v1401 = vlaneseq
        %v1402 = vshrl.u32 %v1401, 7
        %v1403 = vsub.s32 0, %v1402
        %v1404 = vrot.slane %v1300, %v1403
        %v1405 = vlaneseq
        %v1406 = vshrl.u32 %v1405, 7
        %v1407 = vsub.s32 1, %v1406
        %v1408 = vrot.slane %v1300, %v1407
        %v1409 = vlaneseq
        %v1410 = vshrl.u32 %v1409, 7
        %v1411 = vsub.s32 2, %v1410
        %v1412 = vrot.slane %v1300, %v1411
        %v1413 = vlaneseq
        %v1414 = vshrl.u32 %v1413, 7
        %v1415 = vsub.s32 0, %v1414
        %v1416 = vrot.slane %v1301, %v1415
        %v1417 = vlaneseq
        %v1418 = vshrl.u32 %v1417, 7
        %v1419 = vsub.s32 1, %v1418
        %v1420 = vrot.slane %v1301, %v1419
        %v1421 = vlaneseq
        %v1422 = vshrl.u32 %v1421, 7
        %v1423 = vsub.s32 2, %v1422
        %v1424 = vrot.slane %v1301, %v1423
        %v1425 = vlaneseq
        %v1426 = vshrl.u32 %v1425, 7
        %v1427 = vsub.s32 0, %v1426
        %v1428 = vrot.slane %v1292, %v1427
        %v1429 = vlaneseq
        %v1430 = vshrl.u32 %v1429, 7
        %v1431 = vsub.s32 1, %v1430
        %v1432 = vrot.slane %v1292, %v1431
        %v1433 = vlaneseq
        %v1434 = vshrl.u32 %v1433, 7
        %v1435 = vsub.s32 2, %v1434
        %v1436 = vrot.slane %v1292, %v1435
        %v1452 = vsel %vm1172, %v1305, %v1380
        %v1453 = vsel %vm1172, %v1309, %v1384
        %v1454 = vsel %vm1172, %v1313, %v1388
        %v1455 = vsel %vm1172, %v1317, %v1392
        %v1456 = vsel %vm1172, %v1321, %v1396
        %v1457 = vsel %vm1172, %v1325, %v1400
        %v1458 = vsel %vm1172, %v1329, %v1404
        %v1459 = vsel %vm1172, %v1333, %v1408
        %v1460 = vsel %vm1172, %v1337, %v1412
        %v1461 = vsel %vm1172, %v1341, %v1416
        %v1462 = vsel %vm1172, %v1345, %v1420
        %v1463 = vsel %vm1172, %v1349, %v1424
        %v1464 = vsel %vm1172, %v1353, %v1428
        %v1465 = vsel %vm1172, %v1357, %v1432
        %v1466 = vsel %vm1172, %v1361, %v1436
        %v1482 = vcombine.low %v1452, %v1453
        %v1484 = vunpack.c.l.s4 1983009808
        %v1485 = vunpack.c.0.s8 %v1484
        %v1486 = vlaneseq
        %v1487 = vshrl.u32 %v1486, 7
        %v1488 = vsub.s32 %v1485, %v1487
        %v1489 = vrot.slane %v1482, %v1488
        %v1491 = vunpack.c.l.s4 1983009808
        %v1492 = vunpack.c.0.s8 %v1491
        %v1493 = vlaneseq
        %v1494 = vshrl.u32 %v1493, 7
        %v1495 = vsub.s32 %v1492, %v1494
        %v1496 = vrot.slane %v1454, %v1495
        %v1497 = vcombine.low %v1489, %v1496
        %v1498 = vcombine.low %v1455, %v1456
        %v1500 = vunpack.c.l.s4 1983009808
        %v1501 = vunpack.c.0.s8 %v1500
        %v1502 = vlaneseq
        %v1503 = vshrl.u32 %v1502, 7
        %v1504 = vsub.s32 %v1501, %v1503
        %v1505 = vrot.slane %v1498, %v1504
        %v1507 = vunpack.c.l.s4 1983009808
        %v1508 = vunpack.c.0.s8 %v1507
        %v1509 = vlaneseq
        %v1510 = vshrl.u32 %v1509, 7
        %v1511 = vsub.s32 %v1508, %v1510
        %v1512 = vrot.slane %v1457, %v1511
        %v1513 = vcombine.low %v1505, %v1512
        %v1514 = vcombine.low %v1458, %v1459
        %v1516 = vunpack.c.l.s4 1983009808
        %v1517 = vunpack.c.0.s8 %v1516
        %v1518 = vlaneseq
        %v1519 = vshrl.u32 %v1518, 7
        %v1520 = vsub.s32 %v1517, %v1519
        %v1521 = vrot.slane %v1514, %v1520
        %v1523 = vunpack.c.l.s4 1983009808
        %v1524 = vunpack.c.0.s8 %v1523
        %v1525 = vlaneseq
        %v1526 = vshrl.u32 %v1525, 7
        %v1527 = vsub.s32 %v1524, %v1526
        %v1528 = vrot.slane %v1460, %v1527
        %v1529 = vcombine.low %v1521, %v1528
        %v1530 = vcombine.low %v1461, %v1462
        %v1532 = vunpack.c.l.s4 1983009808
        %v1533 = vunpack.c.0.s8 %v1532
        %v1534 = vlaneseq
        %v1535 = vshrl.u32 %v1534, 7
        %v1536 = vsub.s32 %v1533, %v1535
        %v1537 = vrot.slane %v1530, %v1536
        %v1539 = vunpack.c.l.s4 1983009808
        %v1540 = vunpack.c.0.s8 %v1539
        %v1541 = vlaneseq
        %v1542 = vshrl.u32 %v1541, 7
        %v1543 = vsub.s32 %v1540, %v1542
        %v1544 = vrot.slane %v1463, %v1543
        %v1545 = vcombine.low %v1537, %v1544
        %v1546 = vcombine.low %v1464, %v1465
        %v1548 = vunpack.c.l.s4 1983009808
        %v1549 = vunpack.c.0.s8 %v1548
        %v1550 = vlaneseq
        %v1551 = vshrl.u32 %v1550, 7
        %v1552 = vsub.s32 %v1549, %v1551
        %v1553 = vrot.slane %v1546, %v1552
        %v1555 = vunpack.c.l.s4 1983009808
        %v1556 = vunpack.c.0.s8 %v1555
        %v1557 = vlaneseq
        %v1558 = vshrl.u32 %v1557, 7
        %v1559 = vsub.s32 %v1556, %v1558
        %v1560 = vrot.slane %v1466, %v1559
        %v1561 = vcombine.low %v1553, %v1560
        %v1567 = vld [vmem:[#allocation4] sm:$0x77]
        %v1568 = vld [vmem:[#allocation4 + $0x8] sm:$0x7]
        %v1571 = vlaneseq
        %v1572 = vshrl.u32 %v1571, 7
        %v1573 = vsub.s32 0, %v1572
        %v1574 = vrot.slane %v1567, %v1573
        %v1575 = vlaneseq
        %v1576 = vshrl.u32 %v1575, 7
        %v1577 = vsub.s32 4, %v1576
        %v1578 = vrot.slane %v1567, %v1577
        %v1579 = vlaneseq
        %v1580 = vshrl.u32 %v1579, 7
        %v1581 = vsub.s32 0, %v1580
        %v1582 = vrot.slane %v1568, %v1581
        %v1586 = vlaneseq
        %v1587 = vshrl.u32 %v1586, 7
        %v1588 = vsub.s32 0, %v1587
        %v1589 = vrot.slane %v1574, %v1588
        %v1590 = vlaneseq
        %v1591 = vshrl.u32 %v1590, 7
        %v1592 = vsub.s32 0, %v1591
        %v1593 = vrot.slane %v1578, %v1592
        %v1594 = vlaneseq
        %v1595 = vshrl.u32 %v1594, 7
        %v1596 = vsub.s32 0, %v1595
        %v1597 = vrot.slane %v1582, %v1596
        %v1601 = vcombine.low %v1589, %v1593
        %v1602 = vcombine.high %v1589, %v1593
        %v1603 = vcombine.high %v1597, %v1597
        %v1605 = vunpack.c.l.s4 1983009808
        %v1606 = vunpack.c.0.s8 %v1605
        %v1607 = vlaneseq
        %v1608 = vshrl.u32 %v1607, 7
        %v1609 = vsub.s32 %v1606, %v1608
        %v1610 = vrot.slane %v1601, %v1609
        %v1612 = vunpack.c.l.s4 1983009808
        %v1613 = vunpack.c.0.s8 %v1612
        %v1614 = vlaneseq
        %v1615 = vshrl.u32 %v1614, 7
        %v1616 = vsub.s32 %v1613, %v1615
        %v1617 = vrot.slane %v1602, %v1616
        %v1619 = vunpack.c.l.s4 1983009808
        %v1620 = vunpack.c.0.s8 %v1619
        %v1621 = vlaneseq
        %v1622 = vshrl.u32 %v1621, 7
        %v1623 = vsub.s32 %v1620, %v1622
        %v1624 = vrot.slane %v1597, %v1623
        %v1626 = vunpack.c.l.s4 1983009808
        %v1627 = vunpack.c.0.s8 %v1626
        %v1628 = vlaneseq
        %v1629 = vshrl.u32 %v1628, 7
        %v1630 = vsub.s32 %v1627, %v1629
        %v1631 = vrot.slane %v1603, %v1630
        %v1632 = vcombine.low %v1610, %v1624
        %v1633 = vcombine.high %v1610, %v1624
        %v1634 = vcombine.low %v1617, %v1631
        %v1635 = vcombine.high %v1617, %v1631
        %v1640 = vadd.f32 %v1497, %v1632
        %v1641 = vadd.f32 %v1513, %v1633
        %v1642 = vadd.f32 %v1529, %v1634
        %v1643 = vadd.f32 %v1545, %v1635
        %v1644 = vadd.f32 %v1561, %v1632
        %vm1645 = vcmp.ge.f32.partialorder %v1640, 0.0
        %vm1646 = vcmp.ge.f32.partialorder %v1641, 0.0
        %vm1647 = vcmp.ge.f32.partialorder %v1642, 0.0
        %vm1648 = vcmp.ge.f32.partialorder %v1643, 0.0
        %vm1649 = vcmp.ge.f32.partialorder %v1644, 0.0
        %v1650 = vmul.f32 %v1640, 0.3
        %v1651 = vmul.f32 %v1641, 0.3
        %v1652 = vmul.f32 %v1642, 0.3
        %v1653 = vmul.f32 %v1643, 0.3
        %v1654 = vmul.f32 %v1644, 0.3
        %v1655 = vsel %vm1645, %v1640, %v1650
        %v1656 = vsel %vm1646, %v1641, %v1651
        %v1657 = vsel %vm1647, %v1642, %v1652
        %v1658 = vsel %vm1648, %v1643, %v1653
        %v1659 = vsel %vm1649, %v1644, %v1654
        %v1660 = vlaneseq
        %v1661 = vshrl.u32 %v1660, 7
        %v1662 = vsub.s32 1, %v1661
        %v1663 = vrot.slane %v1567, %v1662
        %v1664 = vlaneseq
        %v1665 = vshrl.u32 %v1664, 7
        %v1666 = vsub.s32 5, %v1665
        %v1667 = vrot.slane %v1567, %v1666
        %v1668 = vlaneseq
        %v1669 = vshrl.u32 %v1668, 7
        %v1670 = vsub.s32 1, %v1669
        %v1671 = vrot.slane %v1568, %v1670
        %v1675 = vlaneseq
        %v1676 = vshrl.u32 %v1675, 7
        %v1677 = vsub.s32 1, %v1676
        %v1678 = vrot.slane %v1663, %v1677
        %v1679 = vlaneseq
        %v1680 = vshrl.u32 %v1679, 7
        %v1681 = vsub.s32 1, %v1680
        %v1682 = vrot.slane %v1667, %v1681
        %v1683 = vlaneseq
        %v1684 = vshrl.u32 %v1683, 7
        %v1685 = vsub.s32 1, %v1684
        %v1686 = vrot.slane %v1671, %v1685
        %v1690 = vcombine.low %v1678, %v1682
        %v1691 = vcombine.high %v1678, %v1682
        %v1692 = vcombine.high %v1686, %v1686
        %v1694 = vunpack.c.l.s4 1983009808
        %v1695 = vunpack.c.0.s8 %v1694
        %v1696 = vlaneseq
        %v1697 = vshrl.u32 %v1696, 7
        %v1698 = vsub.s32 %v1695, %v1697
        %v1699 = vrot.slane %v1690, %v1698
        %v1701 = vunpack.c.l.s4 1983009808
        %v1702 = vunpack.c.0.s8 %v1701
        %v1703 = vlaneseq
        %v1704 = vshrl.u32 %v1703, 7
        %v1705 = vsub.s32 %v1702, %v1704
        %v1706 = vrot.slane %v1691, %v1705
        %v1708 = vunpack.c.l.s4 1983009808
        %v1709 = vunpack.c.0.s8 %v1708
        %v1710 = vlaneseq
        %v1711 = vshrl.u32 %v1710, 7
        %v1712 = vsub.s32 %v1709, %v1711
        %v1713 = vrot.slane %v1686, %v1712
        %v1715 = vunpack.c.l.s4 1983009808
        %v1716 = vunpack.c.0.s8 %v1715
        %v1717 = vlaneseq
        %v1718 = vshrl.u32 %v1717, 7
        %v1719 = vsub.s32 %v1716, %v1718
        %v1720 = vrot.slane %v1692, %v1719
        %v1721 = vcombine.low %v1699, %v1713
        %v1722 = vcombine.high %v1699, %v1713
        %v1723 = vcombine.low %v1706, %v1720
        %v1724 = vcombine.high %v1706, %v1720
        %v1729 = vmul.f32 %v1655, %v1721
        %v1730 = vmul.f32 %v1656, %v1722
        %v1731 = vmul.f32 %v1657, %v1723
        %v1732 = vmul.f32 %v1658, %v1724
        %v1733 = vmul.f32 %v1659, %v1721
        %v1734 = vlaneseq
        %v1735 = vshrl.u32 %v1734, 7
        %v1736 = vsub.s32 2, %v1735
        %v1737 = vrot.slane %v1567, %v1736
        %v1738 = vlaneseq
        %v1739 = vshrl.u32 %v1738, 7
        %v1740 = vsub.s32 6, %v1739
        %v1741 = vrot.slane %v1567, %v1740
        %v1742 = vlaneseq
        %v1743 = vshrl.u32 %v1742, 7
        %v1744 = vsub.s32 2, %v1743
        %v1745 = vrot.slane %v1568, %v1744
        %v1749 = vlaneseq
        %v1750 = vshrl.u32 %v1749, 7
        %v1751 = vsub.s32 2, %v1750
        %v1752 = vrot.slane %v1737, %v1751
        %v1753 = vlaneseq
        %v1754 = vshrl.u32 %v1753, 7
        %v1755 = vsub.s32 2, %v1754
        %v1756 = vrot.slane %v1741, %v1755
        %v1757 = vlaneseq
        %v1758 = vshrl.u32 %v1757, 7
        %v1759 = vsub.s32 2, %v1758
        %v1760 = vrot.slane %v1745, %v1759
        %v1764 = vcombine.low %v1752, %v1756
        %v1765 = vcombine.high %v1752, %v1756
        %v1766 = vcombine.high %v1760, %v1760
        %v1768 = vunpack.c.l.s4 1983009808
        %v1769 = vunpack.c.0.s8 %v1768
        %v1770 = vlaneseq
        %v1771 = vshrl.u32 %v1770, 7
        %v1772 = vsub.s32 %v1769, %v1771
        %v1773 = vrot.slane %v1764, %v1772
        %v1775 = vunpack.c.l.s4 1983009808
        %v1776 = vunpack.c.0.s8 %v1775
        %v1777 = vlaneseq
        %v1778 = vshrl.u32 %v1777, 7
        %v1779 = vsub.s32 %v1776, %v1778
        %v1780 = vrot.slane %v1765, %v1779
        %v1782 = vunpack.c.l.s4 1983009808
        %v1783 = vunpack.c.0.s8 %v1782
        %v1784 = vlaneseq
        %v1785 = vshrl.u32 %v1784, 7
        %v1786 = vsub.s32 %v1783, %v1785
        %v1787 = vrot.slane %v1760, %v1786
        %v1789 = vunpack.c.l.s4 1983009808
        %v1790 = vunpack.c.0.s8 %v1789
        %v1791 = vlaneseq
        %v1792 = vshrl.u32 %v1791, 7
        %v1793 = vsub.s32 %v1790, %v1792
        %v1794 = vrot.slane %v1766, %v1793
        %v1795 = vcombine.low %v1773, %v1787
        %v1796 = vcombine.high %v1773, %v1787
        %v1797 = vcombine.low %v1780, %v1794
        %v1798 = vcombine.high %v1780, %v1794
        %v1803 = vadd.f32 %v1729, %v1795
        %v1804 = vadd.f32 %v1730, %v1796
        %v1805 = vadd.f32 %v1731, %v1797
        %v1806 = vadd.f32 %v1732, %v1798
        %v1807 = vadd.f32 %v1733, %v1795
        %v1808 = vld [vmem:[#allocation6] sm:$0xff]
        %v1809 = vld [vmem:[#allocation6 + $0x8] sm:$0xff]
        %v1810 = vld [vmem:[#allocation6 + $0x10] sm:$0xff]
        %v1811 = vld [vmem:[#allocation6 + $0x18] sm:$0xff]
        %v1812 = vld [vmem:[#allocation6 + $0x20] sm:$0xff]
        %v1813 = vld [vmem:[#allocation6 + $0x28] sm:$0xff]
        %v1814 = vld [vmem:[#allocation6 + $0x30] sm:$0xff]
        %v1815 = vld [vmem:[#allocation6 + $0x38] sm:$0xff]
        %v1816 = vld [vmem:[#allocation6 + $0x40] sm:$0xff]
        %v1817 = vld [vmem:[#allocation6 + $0x48] sm:$0xff]
        %v1818 = vld [vmem:[#allocation6 + $0x50] sm:$0xff]
        %v1819 = vld [vmem:[#allocation6 + $0x58] sm:$0xff]
        %v1820 = vld [vmem:[#allocation6 + $0x60] sm:$0xff]
        %v1821 = vld [vmem:[#allocation6 + $0x68] sm:$0xff]
        %v1822 = vld [vmem:[#allocation6 + $0x70] sm:$0xff]
        %v1823 = vld [vmem:[#allocation6 + $0x78] sm:$0xff]
        %v1824 = vld [vmem:[#allocation6 + $0x80] sm:$0xff]
        %v1825 = vld [vmem:[#allocation6 + $0x88] sm:$0xff]
        %v1826 = vld [vmem:[#allocation6 + $0x90] sm:$0xff]
        %v1827 = vld [vmem:[#allocation6 + $0x98] sm:$0xff]
        %v1828 = vld [vmem:[#allocation6 + $0xa0] sm:$0xff]
        %v1829 = vld [vmem:[#allocation6 + $0xa8] sm:$0xff]
        %v1830 = vld [vmem:[#allocation6 + $0xb0] sm:$0xff]
        %v1831 = vld [vmem:[#allocation6 + $0xb8] sm:$0xff]
        %v1832 = vld [vmem:[#allocation6 + $0xc0] sm:$0xff]
        %v1833 = vld [vmem:[#allocation6 + $0xc8] sm:$0xff]
        %v1834 = vld [vmem:[#allocation6 + $0xd0] sm:$0xff]
        %v1835 = vld [vmem:[#allocation6 + $0xd8] sm:$0xff]
        %v1836 = vld [vmem:[#allocation6 + $0xe0] sm:$0xff]
        %v1837 = vld [vmem:[#allocation6 + $0xe8] sm:$0xff]
        %v1838 = vld [vmem:[#allocation6 + $0xf0] sm:$0xff]
        %v1839 = vld [vmem:[#allocation6 + $0xf8] sm:$0xff]
        %v1840 = vld [vmem:[#allocation6 + $0x100] sm:$0xff]
        %v1841 = vld [vmem:[#allocation6 + $0x108] sm:$0xff]
        %v1842 = vld [vmem:[#allocation6 + $0x110] sm:$0xff]
        %v1843 = vld [vmem:[#allocation6 + $0x118] sm:$0xff]
        %v1844 = vld [vmem:[#allocation6 + $0x120] sm:$0xff]
        %v1845 = vld [vmem:[#allocation6 + $0x128] sm:$0xff]
        %v1846 = vld [vmem:[#allocation6 + $0x130] sm:$0xff]
        %v1847 = vld [vmem:[#allocation6 + $0x138] sm:$0xff]
        %v1848 = vld [vmem:[#allocation6 + $0x140] sm:$0xff]
        %v1849 = vld [vmem:[#allocation6 + $0x148] sm:$0xff]
        %v1850 = vld [vmem:[#allocation6 + $0x150] sm:$0xff]
        %v1851 = vld [vmem:[#allocation6 + $0x158] sm:$0xff]
        %v1852 = vld [vmem:[#allocation6 + $0x160] sm:$0xff]
        %v1853 = vld [vmem:[#allocation6 + $0x168] sm:$0xff]
        %v1854 = vld [vmem:[#allocation6 + $0x170] sm:$0xff]
        %v1855 = vld [vmem:[#allocation6 + $0x178] sm:$0xff]
        %v1856 = vld [vmem:[#allocation6 + $0x180] sm:$0xff]
        %v1857 = vld [vmem:[#allocation6 + $0x188] sm:$0xff]
        %v1858 = vld [vmem:[#allocation6 + $0x190] sm:$0xff]
        %v1859 = vld [vmem:[#allocation6 + $0x198] sm:$0xff]
        %v1860 = vld [vmem:[#allocation6 + $0x1a0] sm:$0xff]
        %v1861 = vld [vmem:[#allocation6 + $0x1a8] sm:$0xff]
        %v1862 = vld [vmem:[#allocation6 + $0x1b0] sm:$0xff]
        %v1863 = vld [vmem:[#allocation6 + $0x1b8] sm:$0xff]
        %v1864 = vld [vmem:[#allocation6 + $0x1c0] sm:$0xff]
        %v1865 = vld [vmem:[#allocation6 + $0x1c8] sm:$0xff]
        %v1866 = vld [vmem:[#allocation6 + $0x1d0] sm:$0xff]
        %v1867 = vld [vmem:[#allocation6 + $0x1d8] sm:$0xff]
        %v1868 = vld [vmem:[#allocation6 + $0x1e0] sm:$0xff]
        %v1869 = vld [vmem:[#allocation6 + $0x1e8] sm:$0xff]
        %v1870 = vld [vmem:[#allocation6 + $0x1f0] sm:$0xff]
        %v1871 = vld [vmem:[#allocation6 + $0x1f8] sm:$0xff]
        %v1872 = vld [vmem:[#allocation6 + $0x200] sm:$0xff]
        %v1873 = vld [vmem:[#allocation6 + $0x208] sm:$0xff]
        %v1874 = vld [vmem:[#allocation6 + $0x210] sm:$0xff]
        %v1875 = vld [vmem:[#allocation6 + $0x218] sm:$0xff]
        %v1876 = vld [vmem:[#allocation6 + $0x220] sm:$0xff]
        %v1877 = vld [vmem:[#allocation6 + $0x228] sm:$0xff]
        %v1878 = vld [vmem:[#allocation6 + $0x230] sm:$0xff]
        %v1879 = vld [vmem:[#allocation6 + $0x238] sm:$0xff]
        %v1880 = vld [vmem:[#allocation6 + $0x240] sm:$0xff]
        %v1881 = vld [vmem:[#allocation6 + $0x248] sm:$0xff]
        %v1882 = vld [vmem:[#allocation6 + $0x250] sm:$0xff]
        %v1883 = vld [vmem:[#allocation6 + $0x258] sm:$0xff]
        %v1884 = vld [vmem:[#allocation6 + $0x260] sm:$0xff]
        %v1885 = vld [vmem:[#allocation6 + $0x268] sm:$0xff]
        %v1886 = vld [vmem:[#allocation6 + $0x270] sm:$0xff]
        %v1887 = vld [vmem:[#allocation6 + $0x278] sm:$0xff]
        %v1888 = vld [vmem:[#allocation6 + $0x280] sm:$0xff]
        %v1889 = vld [vmem:[#allocation6 + $0x288] sm:$0xff]
        %v1890 = vld [vmem:[#allocation6 + $0x290] sm:$0xff]
        %v1891 = vld [vmem:[#allocation6 + $0x298] sm:$0xff]
        %v1892 = vld [vmem:[#allocation6 + $0x2a0] sm:$0xff]
        %v1893 = vld [vmem:[#allocation6 + $0x2a8] sm:$0xff]
        %v1894 = vld [vmem:[#allocation6 + $0x2b0] sm:$0xff]
        %v1895 = vld [vmem:[#allocation6 + $0x2b8] sm:$0xff]
        %v1896 = vld [vmem:[#allocation6 + $0x2c0] sm:$0xff]
        %v1897 = vld [vmem:[#allocation6 + $0x2c8] sm:$0xff]
        %v1898 = vld [vmem:[#allocation6 + $0x2d0] sm:$0xff]
        %v1899 = vld [vmem:[#allocation6 + $0x2d8] sm:$0xff]
        %v1900 = vld [vmem:[#allocation6 + $0x2e0] sm:$0xff]
        %v1901 = vld [vmem:[#allocation6 + $0x2e8] sm:$0xff]
        %v1902 = vld [vmem:[#allocation6 + $0x2f0] sm:$0xff]
        %v1903 = vld [vmem:[#allocation6 + $0x2f8] sm:$0xff]
        %v1904 = vld [vmem:[#allocation6 + $0x300] sm:$0xff]
        %v1905 = vld [vmem:[#allocation6 + $0x308] sm:$0xff]
        %v1906 = vld [vmem:[#allocation6 + $0x310] sm:$0xff]
        %v1907 = vld [vmem:[#allocation6 + $0x318] sm:$0xff]
        %v1908 = vld [vmem:[#allocation6 + $0x320] sm:$0xff]
        %v1909 = vld [vmem:[#allocation6 + $0x328] sm:$0xff]
        %v1910 = vld [vmem:[#allocation6 + $0x330] sm:$0xff]
        %v1911 = vld [vmem:[#allocation6 + $0x338] sm:$0xff]
        %v1912 = vld [vmem:[#allocation6 + $0x340] sm:$0xff]
        %v1913 = vld [vmem:[#allocation6 + $0x348] sm:$0xff]
        %v1914 = vld [vmem:[#allocation6 + $0x350] sm:$0xff]
        %v1915 = vld [vmem:[#allocation6 + $0x358] sm:$0xff]
        %v1921 = vcombine.low %v1803, %v1804
        %v1922 = vcombine.high %v1803, %v1804
        %v1923 = vcombine.low %v1805, %v1806
        %v1924 = vcombine.high %v1805, %v1806
        %v1926 = vunpack.c.l.s4 1983009808
        %v1927 = vunpack.c.0.s8 %v1926
        %v1928 = vlaneseq
        %v1929 = vshrl.u32 %v1928, 7
        %v1930 = vsub.s32 %v1927, %v1929
        %v1931 = vrot.slane %v1921, %v1930
        %v1933 = vunpack.c.l.s4 1983009808
        %v1934 = vunpack.c.0.s8 %v1933
        %v1935 = vlaneseq
        %v1936 = vshrl.u32 %v1935, 7
        %v1937 = vsub.s32 %v1934, %v1936
        %v1938 = vrot.slane %v1922, %v1937
        %v1940 = vunpack.c.l.s4 1983009808
        %v1941 = vunpack.c.0.s8 %v1940
        %v1942 = vlaneseq
        %v1943 = vshrl.u32 %v1942, 7
        %v1944 = vsub.s32 %v1941, %v1943
        %v1945 = vrot.slane %v1923, %v1944
        %v1947 = vunpack.c.l.s4 1983009808
        %v1948 = vunpack.c.0.s8 %v1947
        %v1949 = vlaneseq
        %v1950 = vshrl.u32 %v1949, 7
        %v1951 = vsub.s32 %v1948, %v1950
        %v1952 = vrot.slane %v1924, %v1951
        %v1953 = vcombine.low %v1931, %v1945
        %v1954 = vcombine.high %v1931, %v1945
        %v1955 = vcombine.low %v1938, %v1952
        %v1956 = vcombine.high %v1807, %v1807
        %v1958 = vunpack.c.l.s4 1983009808
        %v1959 = vunpack.c.0.s8 %v1958
        %v1960 = vlaneseq
        %v1961 = vshrl.u32 %v1960, 7
        %v1962 = vsub.s32 %v1959, %v1961
        %v1963 = vrot.slane %v1807, %v1962
        %v1965 = vunpack.c.l.s4 1983009808
        %v1966 = vunpack.c.0.s8 %v1965
        %v1967 = vlaneseq
        %v1968 = vshrl.u32 %v1967, 7
        %v1969 = vsub.s32 %v1966, %v1968
        %v1970 = vrot.slane %v1956, %v1969
        %v1971 = vcombine.high %v1963, %v1963
        %vm1976 = vcmask 261120
        %v1977 = vsel %vm1976, %v1955, 0
        %v1979 = vsel %vm1976, %v1970, 0
        %1981 = vmatprep.subr.mxu0 %v1854
        %1982 = vmatpush1.msra.mxu0 %v1853
        %1983 = vmatprep.subr.mxu0 %v1851
        %1984 = vmatpush1.msra.mxu0 %v1850
        %1985 = vmatprep.subr.mxu0 %v1848
        %1986 = vmatpush1.msra.mxu0 %v1847
        %1987 = vmatprep.subr.mxu0 %v1845
        %1988 = vmatpush1.msra.mxu0 %v1844
        %1989 = vmatprep.subr.mxu0 %v1842
        %1990 = vmatpush1.msra.mxu0 %v1841
        %1991 = vmatprep.subr.mxu0 %v1839
        %1992 = vmatpush1.msra.mxu0 %v1838
        %1993 = vmatprep.subr.mxu0 %v1836
        %1994 = vmatpush1.msra.mxu0 %v1835
        %1995 = vmatprep.subr.mxu0 %v1833
        %1996 = vmatpush1.msra.mxu0 %v1832
        %1997 = vmatprep.subr.mxu0 %v1830
        %1998 = vmatpush1.msra.mxu0 %v1829
        %1999 = vmatprep.subr.mxu0 %v1827
        %2000 = vmatpush1.msra.mxu0 %v1826
        %2001 = vmatprep.subr.mxu0 %v1824
        %2002 = vmatpush1.msra.mxu0 %v1823
        %2003 = vmatprep.subr.mxu0 %v1821
        %2004 = vmatpush1.msra.mxu0 %v1820
        %2005 = vmatprep.subr.mxu0 %v1818
        %2006 = vmatpush1.msra.mxu0 %v1817
        %2007 = vmatprep.subr.mxu0 %v1815
        %2008 = vmatpush1.msra.mxu0 %v1814
        %2009 = vmatprep.subr.mxu0 %v1812
        %2010 = vmatpush1.msra.mxu0 %v1811
        %2011 = vmatprep.subr.mxu0 %v1809
        %2012 = vmatpush1.msra.mxu0 %v1808
        %2013 = vmatprep.subr.mxu0 %v1902
        %2014 = vmatpush2.msra.mxu0 %v1901
        %2015 = vmatprep.subr.mxu0 %v1899
        %2016 = vmatpush2.msra.mxu0 %v1898
        %2017 = vmatprep.subr.mxu0 %v1896
        %2018 = vmatpush2.msra.mxu0 %v1895
        %2019 = vmatprep.subr.mxu0 %v1893
        %2020 = vmatpush2.msra.mxu0 %v1892
        %2021 = vmatprep.subr.mxu0 %v1890
        %2022 = vmatpush2.msra.mxu0 %v1889
        %2023 = vmatprep.subr.mxu0 %v1887
        %2024 = vmatpush2.msra.mxu0 %v1886
        %2025 = vmatprep.subr.mxu0 %v1884
        %2026 = vmatpush2.msra.mxu0 %v1883
        %2027 = vmatprep.subr.mxu0 %v1881
        %2028 = vmatpush2.msra.mxu0 %v1880
        %2029 = vmatprep.subr.mxu0 %v1878
        %2030 = vmatpush2.msra.mxu0 %v1877
        %2031 = vmatprep.subr.mxu0 %v1875
        %2032 = vmatpush2.msra.mxu0 %v1874
        %2033 = vmatprep.subr.mxu0 %v1872
        %2034 = vmatpush2.msra.mxu0 %v1871
        %2035 = vmatprep.subr.mxu0 %v1869
        %2036 = vmatpush2.msra.mxu0 %v1868
        %2037 = vmatprep.subr.mxu0 %v1866
        %2038 = vmatpush2.msra.mxu0 %v1865
        %2039 = vmatprep.subr.mxu0 %v1863
        %2040 = vmatpush2.msra.mxu0 %v1862
        %2041 = vmatprep.subr.mxu0 %v1860
        %2042 = vmatpush2.msra.mxu0 %v1859
        %2043 = vmatprep.subr.mxu0 %v1857
        %2044 = vmatpush2.msra.mxu0 %v1856
        %2045 = vmatprep.mubr.f32.mxu0 %v1954
        %2046 = vmatmul.mubr.f32.gmra.mxu0 %v1953
        %v2047 = vpop.f32.mrf.mxu0
        %v2048 = vadd.f32 0.0, %v2047
        %v2049 = vpop.f32.mrf.mxu0
        %v2050 = vadd.f32 0.0, %v2049
        %2051 = vmatprep.mubr.f32.mxu0 %v1971
        %2052 = vmatmul.mubr.f32.gmra.mxu0 %v1963
        %v2053 = vpop.f32.mrf.mxu0
        %v2054 = vadd.f32 0.0, %v2053
        %v2055 = vpop.f32.mrf.mxu0
        %v2056 = vadd.f32 0.0, %v2055
        %2057 = vdwg.mxu0
        %2058 = vmatprep.subr.mxu0 0.0
        %2059 = vmatpush1.msra.mxu0 0.0
        %2060 = vmatprep.subr.mxu0 0.0
        %2061 = vmatpush1.msra.mxu0 0.0
        %2062 = vmatprep.subr.mxu0 0.0
        %2063 = vmatpush1.msra.mxu0 0.0
        %2064 = vmatprep.subr.mxu0 0.0
        %2065 = vmatpush1.msra.mxu0 0.0
        %2066 = vmatprep.subr.mxu0 0.0
        %2067 = vmatpush1.msra.mxu0 0.0
        %2068 = vmatprep.subr.mxu0 0.0
        %2069 = vmatpush1.msra.mxu0 0.0
        %2070 = vmatprep.subr.mxu0 0.0
        %2071 = vmatpush1.msra.mxu0 0.0
        %2072 = vmatprep.subr.mxu0 0.0
        %2073 = vmatpush1.msra.mxu0 0.0
        %2074 = vmatprep.subr.mxu0 0.0
        %2075 = vmatpush1.msra.mxu0 0.0
        %2076 = vmatprep.subr.mxu0 0.0
        %2077 = vmatpush1.msra.mxu0 0.0
        %2078 = vmatprep.subr.mxu0 0.0
        %2079 = vmatpush1.msra.mxu0 0.0
        %2080 = vmatprep.subr.mxu0 0.0
        %2081 = vmatpush1.msra.mxu0 0.0
        %2082 = vmatprep.subr.mxu0 %v1914
        %2083 = vmatpush1.msra.mxu0 %v1913
        %2084 = vmatprep.subr.mxu0 %v1911
        %2085 = vmatpush1.msra.mxu0 %v1910
        %2086 = vmatprep.subr.mxu0 %v1908
        %2087 = vmatpush1.msra.mxu0 %v1907
        %2088 = vmatprep.subr.mxu0 %v1905
        %2089 = vmatpush1.msra.mxu0 %v1904
        %2090 = vmatprep.subr.mxu0 0.0
        %2091 = vmatpush2.msra.mxu0 0.0
        %2092 = vmatprep.subr.mxu0 0.0
        %2093 = vmatpush2.msra.mxu0 0.0
        %2094 = vmatprep.subr.mxu0 0.0
        %2095 = vmatpush2.msra.mxu0 0.0
        %2096 = vmatprep.subr.mxu0 0.0
        %2097 = vmatpush2.msra.mxu0 0.0
        %2098 = vmatprep.subr.mxu0 0.0
        %2099 = vmatpush2.msra.mxu0 0.0
        %2100 = vmatprep.subr.mxu0 0.0
        %2101 = vmatpush2.msra.mxu0 0.0
        %2102 = vmatprep.subr.mxu0 0.0
        %2103 = vmatpush2.msra.mxu0 0.0
        %2104 = vmatprep.subr.mxu0 0.0
        %2105 = vmatpush2.msra.mxu0 0.0
        %2106 = vmatprep.subr.mxu0 0.0
        %2107 = vmatpush2.msra.mxu0 0.0
        %2108 = vmatprep.subr.mxu0 0.0
        %2109 = vmatpush2.msra.mxu0 0.0
        %2110 = vmatprep.subr.mxu0 0.0
        %2111 = vmatpush2.msra.mxu0 0.0
        %2112 = vmatprep.subr.mxu0 0.0
        %2113 = vmatpush2.msra.mxu0 0.0
        %2114 = vmatprep.subr.mxu0 0.0
        %2115 = vmatpush2.msra.mxu0 0.0
        %2116 = vmatprep.subr.mxu0 0.0
        %2117 = vmatpush2.msra.mxu0 0.0
        %2118 = vmatprep.subr.mxu0 0.0
        %2119 = vmatpush2.msra.mxu0 0.0
        %2120 = vmatprep.subr.mxu0 0.0
        %2121 = vmatpush2.msra.mxu0 0.0
        %2122 = vmatprep.mubr.f32.mxu0 0.0
        %2123 = vmatmul.mubr.f32.gmra.mxu0 %v1977
        %v2124 = vpop.f32.mrf.mxu0
        %v2125 = vadd.f32 %v2048, %v2124
        %v2126 = vpop.f32.mrf.mxu0
        %v2127 = vadd.f32 %v2050, %v2126
        %2128 = vmatprep.mubr.f32.mxu0 0.0
        %2129 = vmatmul.mubr.f32.gmra.mxu0 %v1979
        %v2130 = vpop.f32.mrf.mxu0
        %v2131 = vadd.f32 %v2054, %v2130
        %v2132 = vpop.f32.mrf.mxu0
        %v2133 = vadd.f32 %v2056, %v2132
        %2134 = vdwg.mxu0
        %2135 = vmatprep.subr.mxu0 0.0
        %2136 = vmatpush1.msra.mxu0 %v1855
        %2137 = vmatprep.subr.mxu0 0.0
        %2138 = vmatpush1.msra.mxu0 %v1852
        %2139 = vmatprep.subr.mxu0 0.0
        %2140 = vmatpush1.msra.mxu0 %v1849
        %2141 = vmatprep.subr.mxu0 0.0
        %2142 = vmatpush1.msra.mxu0 %v1846
        %2143 = vmatprep.subr.mxu0 0.0
        %2144 = vmatpush1.msra.mxu0 %v1843
        %2145 = vmatprep.subr.mxu0 0.0
        %2146 = vmatpush1.msra.mxu0 %v1840
        %2147 = vmatprep.subr.mxu0 0.0
        %2148 = vmatpush1.msra.mxu0 %v1837
        %2149 = vmatprep.subr.mxu0 0.0
        %2150 = vmatpush1.msra.mxu0 %v1834
        %2151 = vmatprep.subr.mxu0 0.0
        %2152 = vmatpush1.msra.mxu0 %v1831
        %2153 = vmatprep.subr.mxu0 0.0
        %2154 = vmatpush1.msra.mxu0 %v1828
        %2155 = vmatprep.subr.mxu0 0.0
        %2156 = vmatpush1.msra.mxu0 %v1825
        %2157 = vmatprep.subr.mxu0 0.0
        %2158 = vmatpush1.msra.mxu0 %v1822
        %2159 = vmatprep.subr.mxu0 0.0
        %2160 = vmatpush1.msra.mxu0 %v1819
        %2161 = vmatprep.subr.mxu0 0.0
        %2162 = vmatpush1.msra.mxu0 %v1816
        %2163 = vmatprep.subr.mxu0 0.0
        %2164 = vmatpush1.msra.mxu0 %v1813
        %2165 = vmatprep.subr.mxu0 0.0
        %2166 = vmatpush1.msra.mxu0 %v1810
        %2167 = vmatprep.subr.mxu0 0.0
        %2168 = vmatpush2.msra.mxu0 %v1903
        %2169 = vmatprep.subr.mxu0 0.0
        %2170 = vmatpush2.msra.mxu0 %v1900
        %2171 = vmatprep.subr.mxu0 0.0
        %2172 = vmatpush2.msra.mxu0 %v1897
        %2173 = vmatprep.subr.mxu0 0.0
        %2174 = vmatpush2.msra.mxu0 %v1894
        %2175 = vmatprep.subr.mxu0 0.0
        %2176 = vmatpush2.msra.mxu0 %v1891
        %2177 = vmatprep.subr.mxu0 0.0
        %2178 = vmatpush2.msra.mxu0 %v1888
        %2179 = vmatprep.subr.mxu0 0.0
        %2180 = vmatpush2.msra.mxu0 %v1885
        %2181 = vmatprep.subr.mxu0 0.0
        %2182 = vmatpush2.msra.mxu0 %v1882
        %2183 = vmatprep.subr.mxu0 0.0
        %2184 = vmatpush2.msra.mxu0 %v1879
        %2185 = vmatprep.subr.mxu0 0.0
        %2186 = vmatpush2.msra.mxu0 %v1876
        %2187 = vmatprep.subr.mxu0 0.0
        %2188 = vmatpush2.msra.mxu0 %v1873
        %2189 = vmatprep.subr.mxu0 0.0
        %2190 = vmatpush2.msra.mxu0 %v1870
        %2191 = vmatprep.subr.mxu0 0.0
        %2192 = vmatpush2.msra.mxu0 %v1867
        %2193 = vmatprep.subr.mxu0 0.0
        %2194 = vmatpush2.msra.mxu0 %v1864
        %2195 = vmatprep.subr.mxu0 0.0
        %2196 = vmatpush2.msra.mxu0 %v1861
        %2197 = vmatprep.subr.mxu0 0.0
        %2198 = vmatpush2.msra.mxu0 %v1858
        %2199 = vmatprep.mubr.f32.mxu0 %v1954
        %2200 = vmatmul.mubr.f32.gmra.mxu0 %v1953
        %v2201 = vpop.f32.mrf.mxu0
        %v2202 = vadd.f32 0.0, %v2201
        %v2203 = vpop.f32.mrf.mxu0
        %2204 = vmatprep.mubr.f32.mxu0 %v1971
        %2205 = vmatmul.mubr.f32.gmra.mxu0 %v1963
        %v2206 = vpop.f32.mrf.mxu0
        %v2207 = vadd.f32 0.0, %v2206
        %v2208 = vpop.f32.mrf.mxu0
        %2209 = vdwg.mxu0
        %2210 = vmatprep.subr.mxu0 0.0
        %2211 = vmatpush1.msra.mxu0 0.0
        %2212 = vmatprep.subr.mxu0 0.0
        %2213 = vmatpush1.msra.mxu0 0.0
        %2214 = vmatprep.subr.mxu0 0.0
        %2215 = vmatpush1.msra.mxu0 0.0
        %2216 = vmatprep.subr.mxu0 0.0
        %2217 = vmatpush1.msra.mxu0 0.0
        %2218 = vmatprep.subr.mxu0 0.0
        %2219 = vmatpush1.msra.mxu0 0.0
        %2220 = vmatprep.subr.mxu0 0.0
        %2221 = vmatpush1.msra.mxu0 0.0
        %2222 = vmatprep.subr.mxu0 0.0
        %2223 = vmatpush1.msra.mxu0 0.0
        %2224 = vmatprep.subr.mxu0 0.0
        %2225 = vmatpush1.msra.mxu0 0.0
        %2226 = vmatprep.subr.mxu0 0.0
        %2227 = vmatpush1.msra.mxu0 0.0
        %2228 = vmatprep.subr.mxu0 0.0
        %2229 = vmatpush1.msra.mxu0 0.0
        %2230 = vmatprep.subr.mxu0 0.0
        %2231 = vmatpush1.msra.mxu0 0.0
        %2232 = vmatprep.subr.mxu0 0.0
        %2233 = vmatpush1.msra.mxu0 0.0
        %2234 = vmatprep.subr.mxu0 0.0
        %2235 = vmatpush1.msra.mxu0 %v1915
        %2236 = vmatprep.subr.mxu0 0.0
        %2237 = vmatpush1.msra.mxu0 %v1912
        %2238 = vmatprep.subr.mxu0 0.0
        %2239 = vmatpush1.msra.mxu0 %v1909
        %2240 = vmatprep.subr.mxu0 0.0
        %2241 = vmatpush1.msra.mxu0 %v1906
        %2242 = vmatprep.subr.mxu0 0.0
        %2243 = vmatpush2.msra.mxu0 0.0
        %2244 = vmatprep.subr.mxu0 0.0
        %2245 = vmatpush2.msra.mxu0 0.0
        %2246 = vmatprep.subr.mxu0 0.0
        %2247 = vmatpush2.msra.mxu0 0.0
        %2248 = vmatprep.subr.mxu0 0.0
        %2249 = vmatpush2.msra.mxu0 0.0
        %2250 = vmatprep.subr.mxu0 0.0
        %2251 = vmatpush2.msra.mxu0 0.0
        %2252 = vmatprep.subr.mxu0 0.0
        %2253 = vmatpush2.msra.mxu0 0.0
        %2254 = vmatprep.subr.mxu0 0.0
        %2255 = vmatpush2.msra.mxu0 0.0
        %2256 = vmatprep.subr.mxu0 0.0
        %2257 = vmatpush2.msra.mxu0 0.0
        %2258 = vmatprep.subr.mxu0 0.0
        %2259 = vmatpush2.msra.mxu0 0.0
        %2260 = vmatprep.subr.mxu0 0.0
        %2261 = vmatpush2.msra.mxu0 0.0
        %2262 = vmatprep.subr.mxu0 0.0
        %2263 = vmatpush2.msra.mxu0 0.0
        %2264 = vmatprep.subr.mxu0 0.0
        %2265 = vmatpush2.msra.mxu0 0.0
        %2266 = vmatprep.subr.mxu0 0.0
        %2267 = vmatpush2.msra.mxu0 0.0
        %2268 = vmatprep.subr.mxu0 0.0
        %2269 = vmatpush2.msra.mxu0 0.0
        %2270 = vmatprep.subr.mxu0 0.0
        %2271 = vmatpush2.msra.mxu0 0.0
        %2272 = vmatprep.subr.mxu0 0.0
        %2273 = vmatpush2.msra.mxu0 0.0
        %2274 = vmatprep.mubr.f32.mxu0 0.0
        %2275 = vmatmul.mubr.f32.gmra.mxu0 %v1977
        %v2276 = vpop.f32.mrf.mxu0
        %v2277 = vadd.f32 %v2202, %v2276
        %v2278 = vpop.f32.mrf.mxu0
        %2279 = vmatprep.mubr.f32.mxu0 0.0
        %2280 = vmatmul.mubr.f32.gmra.mxu0 %v1979
        %v2281 = vpop.f32.mrf.mxu0
        %v2282 = vadd.f32 %v2207, %v2281
        %v2283 = vpop.f32.mrf.mxu0
        %2284 = vdwg.mxu0
        %s2285 = scalar_lea.vmem [#allocation6], 864
        %v2286 = vld [vmem:[%s2285] sm:$0xff]
        %v2287 = vld [vmem:[%s2285 + $0x8] sm:$0xff]
        %v2288 = vld [vmem:[%s2285 + $0x10] sm:$0xff]
        %v2289 = vld [vmem:[%s2285 + $0x18] sm:$0xff]
        %v2290 = vld [vmem:[%s2285 + $0x20] sm:$0xff]
        %v2291 = vld [vmem:[%s2285 + $0x28] sm:$0xff]
        %v2292 = vld [vmem:[%s2285 + $0x30] sm:$0xff]
        %v2293 = vld [vmem:[%s2285 + $0x38] sm:$0xff]
        %v2294 = vld [vmem:[%s2285 + $0x40] sm:$0xff]
        %v2295 = vld [vmem:[%s2285 + $0x48] sm:$0xff]
        %v2296 = vld [vmem:[%s2285 + $0x50] sm:$0xff]
        %v2297 = vld [vmem:[%s2285 + $0x58] sm:$0xff]
        %v2298 = vld [vmem:[%s2285 + $0x60] sm:$0xff]
        %v2299 = vld [vmem:[%s2285 + $0x68] sm:$0xff]
        %v2300 = vld [vmem:[%s2285 + $0x70] sm:$0xff]
        %v2301 = vld [vmem:[%s2285 + $0x78] sm:$0xff]
        %v2302 = vld [vmem:[%s2285 + $0x80] sm:$0xff]
        %v2303 = vld [vmem:[%s2285 + $0x88] sm:$0xff]
        %v2304 = vld [vmem:[%s2285 + $0x90] sm:$0xff]
        %v2305 = vld [vmem:[%s2285 + $0x98] sm:$0xff]
        %v2306 = vld [vmem:[%s2285 + $0xa0] sm:$0xff]
        %v2307 = vld [vmem:[%s2285 + $0xa8] sm:$0xff]
        %v2308 = vld [vmem:[%s2285 + $0xb0] sm:$0xff]
        %v2309 = vld [vmem:[%s2285 + $0xb8] sm:$0xff]
        %v2310 = vld [vmem:[%s2285 + $0xc0] sm:$0xff]
        %v2311 = vld [vmem:[%s2285 + $0xc8] sm:$0xff]
        %v2312 = vld [vmem:[%s2285 + $0xd0] sm:$0xff]
        %v2313 = vld [vmem:[%s2285 + $0xd8] sm:$0xff]
        %v2314 = vld [vmem:[%s2285 + $0xe0] sm:$0xff]
        %v2315 = vld [vmem:[%s2285 + $0xe8] sm:$0xff]
        %v2316 = vld [vmem:[%s2285 + $0xf0] sm:$0xff]
        %v2317 = vld [vmem:[%s2285 + $0xf8] sm:$0xff]
        %v2318 = vld [vmem:[%s2285 + $0x100] sm:$0xff]
        %v2319 = vld [vmem:[%s2285 + $0x108] sm:$0xff]
        %v2320 = vld [vmem:[%s2285 + $0x110] sm:$0xff]
        %v2321 = vld [vmem:[%s2285 + $0x118] sm:$0xff]
        %v2322 = vld [vmem:[%s2285 + $0x120] sm:$0xff]
        %v2323 = vld [vmem:[%s2285 + $0x128] sm:$0xff]
        %v2324 = vld [vmem:[%s2285 + $0x130] sm:$0xff]
        %v2325 = vld [vmem:[%s2285 + $0x138] sm:$0xff]
        %v2326 = vld [vmem:[%s2285 + $0x140] sm:$0xff]
        %v2327 = vld [vmem:[%s2285 + $0x148] sm:$0xff]
        %v2328 = vld [vmem:[%s2285 + $0x150] sm:$0xff]
        %v2329 = vld [vmem:[%s2285 + $0x158] sm:$0xff]
        %v2330 = vld [vmem:[%s2285 + $0x160] sm:$0xff]
        %v2331 = vld [vmem:[%s2285 + $0x168] sm:$0xff]
        %v2332 = vld [vmem:[%s2285 + $0x170] sm:$0xff]
        %v2333 = vld [vmem:[%s2285 + $0x178] sm:$0xff]
        %v2334 = vld [vmem:[%s2285 + $0x180] sm:$0xff]
        %v2335 = vld [vmem:[%s2285 + $0x188] sm:$0xff]
        %v2336 = vld [vmem:[%s2285 + $0x190] sm:$0xff]
        %v2337 = vld [vmem:[%s2285 + $0x198] sm:$0xff]
        %v2338 = vld [vmem:[%s2285 + $0x1a0] sm:$0xff]
        %v2339 = vld [vmem:[%s2285 + $0x1a8] sm:$0xff]
        %v2340 = vld [vmem:[%s2285 + $0x1b0] sm:$0xff]
        %v2341 = vld [vmem:[%s2285 + $0x1b8] sm:$0xff]
        %v2342 = vld [vmem:[%s2285 + $0x1c0] sm:$0xff]
        %v2343 = vld [vmem:[%s2285 + $0x1c8] sm:$0xff]
        %v2344 = vld [vmem:[%s2285 + $0x1d0] sm:$0xff]
        %v2345 = vld [vmem:[%s2285 + $0x1d8] sm:$0xff]
        %v2346 = vld [vmem:[%s2285 + $0x1e0] sm:$0xff]
        %v2347 = vld [vmem:[%s2285 + $0x1e8] sm:$0xff]
        %v2348 = vld [vmem:[%s2285 + $0x1f0] sm:$0xff]
        %v2349 = vld [vmem:[%s2285 + $0x1f8] sm:$0xff]
        %v2350 = vld [vmem:[%s2285 + $0x200] sm:$0xff]
        %v2351 = vld [vmem:[%s2285 + $0x208] sm:$0xff]
        %v2352 = vld [vmem:[%s2285 + $0x210] sm:$0xff]
        %v2353 = vld [vmem:[%s2285 + $0x218] sm:$0xff]
        %v2354 = vld [vmem:[%s2285 + $0x220] sm:$0xff]
        %v2355 = vld [vmem:[%s2285 + $0x228] sm:$0xff]
        %v2356 = vld [vmem:[%s2285 + $0x230] sm:$0xff]
        %v2357 = vld [vmem:[%s2285 + $0x238] sm:$0xff]
        %v2358 = vld [vmem:[%s2285 + $0x240] sm:$0xff]
        %v2359 = vld [vmem:[%s2285 + $0x248] sm:$0xff]
        %v2360 = vld [vmem:[%s2285 + $0x250] sm:$0xff]
        %v2361 = vld [vmem:[%s2285 + $0x258] sm:$0xff]
        %v2362 = vld [vmem:[%s2285 + $0x260] sm:$0xff]
        %v2363 = vld [vmem:[%s2285 + $0x268] sm:$0xff]
        %v2364 = vld [vmem:[%s2285 + $0x270] sm:$0xff]
        %v2365 = vld [vmem:[%s2285 + $0x278] sm:$0xff]
        %v2366 = vld [vmem:[%s2285 + $0x280] sm:$0xff]
        %v2367 = vld [vmem:[%s2285 + $0x288] sm:$0xff]
        %v2368 = vld [vmem:[%s2285 + $0x290] sm:$0xff]
        %v2369 = vld [vmem:[%s2285 + $0x298] sm:$0xff]
        %v2370 = vld [vmem:[%s2285 + $0x2a0] sm:$0xff]
        %v2371 = vld [vmem:[%s2285 + $0x2a8] sm:$0xff]
        %v2372 = vld [vmem:[%s2285 + $0x2b0] sm:$0xff]
        %v2373 = vld [vmem:[%s2285 + $0x2b8] sm:$0xff]
        %v2374 = vld [vmem:[%s2285 + $0x2c0] sm:$0xff]
        %v2375 = vld [vmem:[%s2285 + $0x2c8] sm:$0xff]
        %v2376 = vld [vmem:[%s2285 + $0x2d0] sm:$0xff]
        %v2377 = vld [vmem:[%s2285 + $0x2d8] sm:$0xff]
        %v2378 = vld [vmem:[%s2285 + $0x2e0] sm:$0xff]
        %v2379 = vld [vmem:[%s2285 + $0x2e8] sm:$0xff]
        %v2380 = vld [vmem:[%s2285 + $0x2f0] sm:$0xff]
        %v2381 = vld [vmem:[%s2285 + $0x2f8] sm:$0xff]
        %v2382 = vld [vmem:[%s2285 + $0x300] sm:$0xff]
        %v2383 = vld [vmem:[%s2285 + $0x308] sm:$0xff]
        %v2384 = vld [vmem:[%s2285 + $0x310] sm:$0xff]
        %v2385 = vld [vmem:[%s2285 + $0x318] sm:$0xff]
        %v2386 = vld [vmem:[%s2285 + $0x320] sm:$0xff]
        %v2387 = vld [vmem:[%s2285 + $0x328] sm:$0xff]
        %v2388 = vld [vmem:[%s2285 + $0x330] sm:$0xff]
        %v2389 = vld [vmem:[%s2285 + $0x338] sm:$0xff]
        %v2390 = vld [vmem:[%s2285 + $0x340] sm:$0xff]
        %v2391 = vld [vmem:[%s2285 + $0x348] sm:$0xff]
        %v2392 = vld [vmem:[%s2285 + $0x350] sm:$0xff]
        %v2393 = vld [vmem:[%s2285 + $0x358] sm:$0xff]
        %2394 = vmatprep.subr.mxu0 %v2332
        %2395 = vmatpush1.msra.mxu0 %v2331
        %2396 = vmatprep.subr.mxu0 %v2329
        %2397 = vmatpush1.msra.mxu0 %v2328
        %2398 = vmatprep.subr.mxu0 %v2326
        %2399 = vmatpush1.msra.mxu0 %v2325
        %2400 = vmatprep.subr.mxu0 %v2323
        %2401 = vmatpush1.msra.mxu0 %v2322
        %2402 = vmatprep.subr.mxu0 %v2320
        %2403 = vmatpush1.msra.mxu0 %v2319
        %2404 = vmatprep.subr.mxu0 %v2317
        %2405 = vmatpush1.msra.mxu0 %v2316
        %2406 = vmatprep.subr.mxu0 %v2314
        %2407 = vmatpush1.msra.mxu0 %v2313
        %2408 = vmatprep.subr.mxu0 %v2311
        %2409 = vmatpush1.msra.mxu0 %v2310
        %2410 = vmatprep.subr.mxu0 %v2308
        %2411 = vmatpush1.msra.mxu0 %v2307
        %2412 = vmatprep.subr.mxu0 %v2305
        %2413 = vmatpush1.msra.mxu0 %v2304
        %2414 = vmatprep.subr.mxu0 %v2302
        %2415 = vmatpush1.msra.mxu0 %v2301
        %2416 = vmatprep.subr.mxu0 %v2299
        %2417 = vmatpush1.msra.mxu0 %v2298
        %2418 = vmatprep.subr.mxu0 %v2296
        %2419 = vmatpush1.msra.mxu0 %v2295
        %2420 = vmatprep.subr.mxu0 %v2293
        %2421 = vmatpush1.msra.mxu0 %v2292
        %2422 = vmatprep.subr.mxu0 %v2290
        %2423 = vmatpush1.msra.mxu0 %v2289
        %2424 = vmatprep.subr.mxu0 %v2287
        %2425 = vmatpush1.msra.mxu0 %v2286
        %2426 = vmatprep.subr.mxu0 %v2380
        %2427 = vmatpush2.msra.mxu0 %v2379
        %2428 = vmatprep.subr.mxu0 %v2377
        %2429 = vmatpush2.msra.mxu0 %v2376
        %2430 = vmatprep.subr.mxu0 %v2374
        %2431 = vmatpush2.msra.mxu0 %v2373
        %2432 = vmatprep.subr.mxu0 %v2371
        %2433 = vmatpush2.msra.mxu0 %v2370
        %2434 = vmatprep.subr.mxu0 %v2368
        %2435 = vmatpush2.msra.mxu0 %v2367
        %2436 = vmatprep.subr.mxu0 %v2365
        %2437 = vmatpush2.msra.mxu0 %v2364
        %2438 = vmatprep.subr.mxu0 %v2362
        %2439 = vmatpush2.msra.mxu0 %v2361
        %2440 = vmatprep.subr.mxu0 %v2359
        %2441 = vmatpush2.msra.mxu0 %v2358
        %2442 = vmatprep.subr.mxu0 %v2356
        %2443 = vmatpush2.msra.mxu0 %v2355
        %2444 = vmatprep.subr.mxu0 %v2353
        %2445 = vmatpush2.msra.mxu0 %v2352
        %2446 = vmatprep.subr.mxu0 %v2350
        %2447 = vmatpush2.msra.mxu0 %v2349
        %2448 = vmatprep.subr.mxu0 %v2347
        %2449 = vmatpush2.msra.mxu0 %v2346
        %2450 = vmatprep.subr.mxu0 %v2344
        %2451 = vmatpush2.msra.mxu0 %v2343
        %2452 = vmatprep.subr.mxu0 %v2341
        %2453 = vmatpush2.msra.mxu0 %v2340
        %2454 = vmatprep.subr.mxu0 %v2338
        %2455 = vmatpush2.msra.mxu0 %v2337
        %2456 = vmatprep.subr.mxu0 %v2335
        %2457 = vmatpush2.msra.mxu0 %v2334
        %2458 = vmatprep.mubr.f32.mxu0 %v1954
        %2459 = vmatmul.mubr.f32.gmra.mxu0 %v1953
        %v2460 = vpop.f32.mrf.mxu0
        %v2461 = vadd.f32 0.0, %v2460
        %v2462 = vpop.f32.mrf.mxu0
        %v2463 = vadd.f32 0.0, %v2462
        %2464 = vmatprep.mubr.f32.mxu0 %v1971
        %2465 = vmatmul.mubr.f32.gmra.mxu0 %v1963
        %v2466 = vpop.f32.mrf.mxu0
        %v2467 = vadd.f32 0.0, %v2466
        %v2468 = vpop.f32.mrf.mxu0
        %v2469 = vadd.f32 0.0, %v2468
        %2470 = vdwg.mxu0
        %2471 = vmatprep.subr.mxu0 0.0
        %2472 = vmatpush1.msra.mxu0 0.0
        %2473 = vmatprep.subr.mxu0 0.0
        %2474 = vmatpush1.msra.mxu0 0.0
        %2475 = vmatprep.subr.mxu0 0.0
        %2476 = vmatpush1.msra.mxu0 0.0
        %2477 = vmatprep.subr.mxu0 0.0
        %2478 = vmatpush1.msra.mxu0 0.0
        %2479 = vmatprep.subr.mxu0 0.0
        %2480 = vmatpush1.msra.mxu0 0.0
        %2481 = vmatprep.subr.mxu0 0.0
        %2482 = vmatpush1.msra.mxu0 0.0
        %2483 = vmatprep.subr.mxu0 0.0
        %2484 = vmatpush1.msra.mxu0 0.0
        %2485 = vmatprep.subr.mxu0 0.0
        %2486 = vmatpush1.msra.mxu0 0.0
        %2487 = vmatprep.subr.mxu0 0.0
        %2488 = vmatpush1.msra.mxu0 0.0
        %2489 = vmatprep.subr.mxu0 0.0
        %2490 = vmatpush1.msra.mxu0 0.0
        %2491 = vmatprep.subr.mxu0 0.0
        %2492 = vmatpush1.msra.mxu0 0.0
        %2493 = vmatprep.subr.mxu0 0.0
        %2494 = vmatpush1.msra.mxu0 0.0
        %2495 = vmatprep.subr.mxu0 %v2392
        %2496 = vmatpush1.msra.mxu0 %v2391
        %2497 = vmatprep.subr.mxu0 %v2389
        %2498 = vmatpush1.msra.mxu0 %v2388
        %2499 = vmatprep.subr.mxu0 %v2386
        %2500 = vmatpush1.msra.mxu0 %v2385
        %2501 = vmatprep.subr.mxu0 %v2383
        %2502 = vmatpush1.msra.mxu0 %v2382
        %2503 = vmatprep.subr.mxu0 0.0
        %2504 = vmatpush2.msra.mxu0 0.0
        %2505 = vmatprep.subr.mxu0 0.0
        %2506 = vmatpush2.msra.mxu0 0.0
        %2507 = vmatprep.subr.mxu0 0.0
        %2508 = vmatpush2.msra.mxu0 0.0
        %2509 = vmatprep.subr.mxu0 0.0
        %2510 = vmatpush2.msra.mxu0 0.0
        %2511 = vmatprep.subr.mxu0 0.0
        %2512 = vmatpush2.msra.mxu0 0.0
        %2513 = vmatprep.subr.mxu0 0.0
        %2514 = vmatpush2.msra.mxu0 0.0
        %2515 = vmatprep.subr.mxu0 0.0
        %2516 = vmatpush2.msra.mxu0 0.0
        %2517 = vmatprep.subr.mxu0 0.0
        %2518 = vmatpush2.msra.mxu0 0.0
        %2519 = vmatprep.subr.mxu0 0.0
        %2520 = vmatpush2.msra.mxu0 0.0
        %2521 = vmatprep.subr.mxu0 0.0
        %2522 = vmatpush2.msra.mxu0 0.0
        %2523 = vmatprep.subr.mxu0 0.0
        %2524 = vmatpush2.msra.mxu0 0.0
        %2525 = vmatprep.subr.mxu0 0.0
        %2526 = vmatpush2.msra.mxu0 0.0
        %2527 = vmatprep.subr.mxu0 0.0
        %2528 = vmatpush2.msra.mxu0 0.0
        %2529 = vmatprep.subr.mxu0 0.0
        %2530 = vmatpush2.msra.mxu0 0.0
        %2531 = vmatprep.subr.mxu0 0.0
        %2532 = vmatpush2.msra.mxu0 0.0
        %2533 = vmatprep.subr.mxu0 0.0
        %2534 = vmatpush2.msra.mxu0 0.0
        %2535 = vmatprep.mubr.f32.mxu0 0.0
        %2536 = vmatmul.mubr.f32.gmra.mxu0 %v1977
        %v2537 = vpop.f32.mrf.mxu0
        %v2538 = vadd.f32 %v2461, %v2537
        %v2539 = vpop.f32.mrf.mxu0
        %v2540 = vadd.f32 %v2463, %v2539
        %2541 = vmatprep.mubr.f32.mxu0 0.0
        %2542 = vmatmul.mubr.f32.gmra.mxu0 %v1979
        %v2543 = vpop.f32.mrf.mxu0
        %v2544 = vadd.f32 %v2467, %v2543
        %v2545 = vpop.f32.mrf.mxu0
        %v2546 = vadd.f32 %v2469, %v2545
        %2547 = vdwg.mxu0
        %2548 = vmatprep.subr.mxu0 0.0
        %2549 = vmatpush1.msra.mxu0 %v2333
        %2550 = vmatprep.subr.mxu0 0.0
        %2551 = vmatpush1.msra.mxu0 %v2330
        %2552 = vmatprep.subr.mxu0 0.0
        %2553 = vmatpush1.msra.mxu0 %v2327
        %2554 = vmatprep.subr.mxu0 0.0
        %2555 = vmatpush1.msra.mxu0 %v2324
        %2556 = vmatprep.subr.mxu0 0.0
        %2557 = vmatpush1.msra.mxu0 %v2321
        %2558 = vmatprep.subr.mxu0 0.0
        %2559 = vmatpush1.msra.mxu0 %v2318
        %2560 = vmatprep.subr.mxu0 0.0
        %2561 = vmatpush1.msra.mxu0 %v2315
        %2562 = vmatprep.subr.mxu0 0.0
        %2563 = vmatpush1.msra.mxu0 %v2312
        %2564 = vmatprep.subr.mxu0 0.0
        %2565 = vmatpush1.msra.mxu0 %v2309
        %2566 = vmatprep.subr.mxu0 0.0
        %2567 = vmatpush1.msra.mxu0 %v2306
        %2568 = vmatprep.subr.mxu0 0.0
        %2569 = vmatpush1.msra.mxu0 %v2303
        %2570 = vmatprep.subr.mxu0 0.0
        %2571 = vmatpush1.msra.mxu0 %v2300
        %2572 = vmatprep.subr.mxu0 0.0
        %2573 = vmatpush1.msra.mxu0 %v2297
        %2574 = vmatprep.subr.mxu0 0.0
        %2575 = vmatpush1.msra.mxu0 %v2294
        %2576 = vmatprep.subr.mxu0 0.0
        %2577 = vmatpush1.msra.mxu0 %v2291
        %2578 = vmatprep.subr.mxu0 0.0
        %2579 = vmatpush1.msra.mxu0 %v2288
        %2580 = vmatprep.subr.mxu0 0.0
        %2581 = vmatpush2.msra.mxu0 %v2381
        %2582 = vmatprep.subr.mxu0 0.0
        %2583 = vmatpush2.msra.mxu0 %v2378
        %2584 = vmatprep.subr.mxu0 0.0
        %2585 = vmatpush2.msra.mxu0 %v2375
        %2586 = vmatprep.subr.mxu0 0.0
        %2587 = vmatpush2.msra.mxu0 %v2372
        %2588 = vmatprep.subr.mxu0 0.0
        %2589 = vmatpush2.msra.mxu0 %v2369
        %2590 = vmatprep.subr.mxu0 0.0
        %2591 = vmatpush2.msra.mxu0 %v2366
        %2592 = vmatprep.subr.mxu0 0.0
        %2593 = vmatpush2.msra.mxu0 %v2363
        %2594 = vmatprep.subr.mxu0 0.0
        %2595 = vmatpush2.msra.mxu0 %v2360
        %2596 = vmatprep.subr.mxu0 0.0
        %2597 = vmatpush2.msra.mxu0 %v2357
        %2598 = vmatprep.subr.mxu0 0.0
        %2599 = vmatpush2.msra.mxu0 %v2354
        %2600 = vmatprep.subr.mxu0 0.0
        %2601 = vmatpush2.msra.mxu0 %v2351
        %2602 = vmatprep.subr.mxu0 0.0
        %2603 = vmatpush2.msra.mxu0 %v2348
        %2604 = vmatprep.subr.mxu0 0.0
        %2605 = vmatpush2.msra.mxu0 %v2345
        %2606 = vmatprep.subr.mxu0 0.0
        %2607 = vmatpush2.msra.mxu0 %v2342
        %2608 = vmatprep.subr.mxu0 0.0
        %2609 = vmatpush2.msra.mxu0 %v2339
        %2610 = vmatprep.subr.mxu0 0.0
        %2611 = vmatpush2.msra.mxu0 %v2336
        %2612 = vmatprep.mubr.f32.mxu0 %v1954
        %2613 = vmatmul.mubr.f32.gmra.mxu0 %v1953
        %v2614 = vpop.f32.mrf.mxu0
        %v2615 = vadd.f32 0.0, %v2614
        %v2616 = vpop.f32.mrf.mxu0
        %2617 = vmatprep.mubr.f32.mxu0 %v1971
        %2618 = vmatmul.mubr.f32.gmra.mxu0 %v1963
        %v2619 = vpop.f32.mrf.mxu0
        %v2620 = vadd.f32 0.0, %v2619
        %v2621 = vpop.f32.mrf.mxu0
        %2622 = vdwg.mxu0
        %2623 = vmatprep.subr.mxu0 0.0
        %2624 = vmatpush1.msra.mxu0 0.0
        %2625 = vmatprep.subr.mxu0 0.0
        %2626 = vmatpush1.msra.mxu0 0.0
        %2627 = vmatprep.subr.mxu0 0.0
        %2628 = vmatpush1.msra.mxu0 0.0
        %2629 = vmatprep.subr.mxu0 0.0
        %2630 = vmatpush1.msra.mxu0 0.0
        %2631 = vmatprep.subr.mxu0 0.0
        %2632 = vmatpush1.msra.mxu0 0.0
        %2633 = vmatprep.subr.mxu0 0.0
        %2634 = vmatpush1.msra.mxu0 0.0
        %2635 = vmatprep.subr.mxu0 0.0
        %2636 = vmatpush1.msra.mxu0 0.0
        %2637 = vmatprep.subr.mxu0 0.0
        %2638 = vmatpush1.msra.mxu0 0.0
        %2639 = vmatprep.subr.mxu0 0.0
        %2640 = vmatpush1.msra.mxu0 0.0
        %2641 = vmatprep.subr.mxu0 0.0
        %2642 = vmatpush1.msra.mxu0 0.0
        %2643 = vmatprep.subr.mxu0 0.0
        %2644 = vmatpush1.msra.mxu0 0.0
        %2645 = vmatprep.subr.mxu0 0.0
        %2646 = vmatpush1.msra.mxu0 0.0
        %2647 = vmatprep.subr.mxu0 0.0
        %2648 = vmatpush1.msra.mxu0 %v2393
        %2649 = vmatprep.subr.mxu0 0.0
        %2650 = vmatpush1.msra.mxu0 %v2390
        %2651 = vmatprep.subr.mxu0 0.0
        %2652 = vmatpush1.msra.mxu0 %v2387
        %2653 = vmatprep.subr.mxu0 0.0
        %2654 = vmatpush1.msra.mxu0 %v2384
        %2655 = vmatprep.subr.mxu0 0.0
        %2656 = vmatpush2.msra.mxu0 0.0
        %2657 = vmatprep.subr.mxu0 0.0
        %2658 = vmatpush2.msra.mxu0 0.0
        %2659 = vmatprep.subr.mxu0 0.0
        %2660 = vmatpush2.msra.mxu0 0.0
        %2661 = vmatprep.subr.mxu0 0.0
        %2662 = vmatpush2.msra.mxu0 0.0
        %2663 = vmatprep.subr.mxu0 0.0
        %2664 = vmatpush2.msra.mxu0 0.0
        %2665 = vmatprep.subr.mxu0 0.0
        %2666 = vmatpush2.msra.mxu0 0.0
        %2667 = vmatprep.subr.mxu0 0.0
        %2668 = vmatpush2.msra.mxu0 0.0
        %2669 = vmatprep.subr.mxu0 0.0
        %2670 = vmatpush2.msra.mxu0 0.0
        %2671 = vmatprep.subr.mxu0 0.0
        %2672 = vmatpush2.msra.mxu0 0.0
        %2673 = vmatprep.subr.mxu0 0.0
        %2674 = vmatpush2.msra.mxu0 0.0
        %2675 = vmatprep.subr.mxu0 0.0
        %2676 = vmatpush2.msra.mxu0 0.0
        %2677 = vmatprep.subr.mxu0 0.0
        %2678 = vmatpush2.msra.mxu0 0.0
        %2679 = vmatprep.subr.mxu0 0.0
        %2680 = vmatpush2.msra.mxu0 0.0
        %2681 = vmatprep.subr.mxu0 0.0
        %2682 = vmatpush2.msra.mxu0 0.0
        %2683 = vmatprep.subr.mxu0 0.0
        %2684 = vmatpush2.msra.mxu0 0.0
        %2685 = vmatprep.subr.mxu0 0.0
        %2686 = vmatpush2.msra.mxu0 0.0
        %2687 = vmatprep.mubr.f32.mxu0 0.0
        %2688 = vmatmul.mubr.f32.gmra.mxu0 %v1977
        %v2689 = vpop.f32.mrf.mxu0
        %v2690 = vadd.f32 %v2615, %v2689
        %v2691 = vpop.f32.mrf.mxu0
        %2692 = vmatprep.mubr.f32.mxu0 0.0
        %2693 = vmatmul.mubr.f32.gmra.mxu0 %v1979
        %v2694 = vpop.f32.mrf.mxu0
        %v2695 = vadd.f32 %v2620, %v2694
        %v2696 = vpop.f32.mrf.mxu0
        %2697 = vdwg.mxu0
        %s2698 = scalar_lea.vmem [#allocation6], 1728
        %v2699 = vld [vmem:[%s2698] sm:$0xff]
        %v2700 = vld [vmem:[%s2698 + $0x8] sm:$0xff]
        %v2701 = vld [vmem:[%s2698 + $0x10] sm:$0xff]
        %v2702 = vld [vmem:[%s2698 + $0x18] sm:$0xff]
        %v2703 = vld [vmem:[%s2698 + $0x20] sm:$0xff]
        %v2704 = vld [vmem:[%s2698 + $0x28] sm:$0xff]
        %v2705 = vld [vmem:[%s2698 + $0x30] sm:$0xff]
        %v2706 = vld [vmem:[%s2698 + $0x38] sm:$0xff]
        %v2707 = vld [vmem:[%s2698 + $0x40] sm:$0xff]
        %v2708 = vld [vmem:[%s2698 + $0x48] sm:$0xff]
        %v2709 = vld [vmem:[%s2698 + $0x50] sm:$0xff]
        %v2710 = vld [vmem:[%s2698 + $0x58] sm:$0xff]
        %v2711 = vld [vmem:[%s2698 + $0x60] sm:$0xff]
        %v2712 = vld [vmem:[%s2698 + $0x68] sm:$0xff]
        %v2713 = vld [vmem:[%s2698 + $0x70] sm:$0xff]
        %v2714 = vld [vmem:[%s2698 + $0x78] sm:$0xff]
        %v2715 = vld [vmem:[%s2698 + $0x80] sm:$0xff]
        %v2716 = vld [vmem:[%s2698 + $0x88] sm:$0xff]
        %v2717 = vld [vmem:[%s2698 + $0x90] sm:$0xff]
        %v2718 = vld [vmem:[%s2698 + $0x98] sm:$0xff]
        %v2719 = vld [vmem:[%s2698 + $0xa0] sm:$0xff]
        %v2720 = vld [vmem:[%s2698 + $0xa8] sm:$0xff]
        %v2721 = vld [vmem:[%s2698 + $0xb0] sm:$0xff]
        %v2722 = vld [vmem:[%s2698 + $0xb8] sm:$0xff]
        %v2723 = vld [vmem:[%s2698 + $0xc0] sm:$0xff]
        %v2724 = vld [vmem:[%s2698 + $0xc8] sm:$0xff]
        %v2725 = vld [vmem:[%s2698 + $0xd0] sm:$0xff]
        %v2726 = vld [vmem:[%s2698 + $0xd8] sm:$0xff]
        %v2727 = vld [vmem:[%s2698 + $0xe0] sm:$0xff]
        %v2728 = vld [vmem:[%s2698 + $0xe8] sm:$0xff]
        %v2729 = vld [vmem:[%s2698 + $0xf0] sm:$0xff]
        %v2730 = vld [vmem:[%s2698 + $0xf8] sm:$0xff]
        %v2731 = vld [vmem:[%s2698 + $0x100] sm:$0xff]
        %v2732 = vld [vmem:[%s2698 + $0x108] sm:$0xff]
        %v2733 = vld [vmem:[%s2698 + $0x110] sm:$0xff]
        %v2734 = vld [vmem:[%s2698 + $0x118] sm:$0xff]
        %v2735 = vld [vmem:[%s2698 + $0x120] sm:$0xff]
        %v2736 = vld [vmem:[%s2698 + $0x128] sm:$0xff]
        %v2737 = vld [vmem:[%s2698 + $0x130] sm:$0xff]
        %v2738 = vld [vmem:[%s2698 + $0x138] sm:$0xff]
        %v2739 = vld [vmem:[%s2698 + $0x140] sm:$0xff]
        %v2740 = vld [vmem:[%s2698 + $0x148] sm:$0xff]
        %v2741 = vld [vmem:[%s2698 + $0x150] sm:$0xff]
        %v2742 = vld [vmem:[%s2698 + $0x158] sm:$0xff]
        %v2743 = vld [vmem:[%s2698 + $0x160] sm:$0xff]
        %v2744 = vld [vmem:[%s2698 + $0x168] sm:$0xff]
        %v2745 = vld [vmem:[%s2698 + $0x170] sm:$0xff]
        %v2746 = vld [vmem:[%s2698 + $0x178] sm:$0xff]
        %v2747 = vld [vmem:[%s2698 + $0x180] sm:$0xff]
        %v2748 = vld [vmem:[%s2698 + $0x188] sm:$0xff]
        %v2749 = vld [vmem:[%s2698 + $0x190] sm:$0xff]
        %v2750 = vld [vmem:[%s2698 + $0x198] sm:$0xff]
        %v2751 = vld [vmem:[%s2698 + $0x1a0] sm:$0xff]
        %v2752 = vld [vmem:[%s2698 + $0x1a8] sm:$0xff]
        %v2753 = vld [vmem:[%s2698 + $0x1b0] sm:$0xff]
        %v2754 = vld [vmem:[%s2698 + $0x1b8] sm:$0xff]
        %v2755 = vld [vmem:[%s2698 + $0x1c0] sm:$0xff]
        %v2756 = vld [vmem:[%s2698 + $0x1c8] sm:$0xff]
        %v2757 = vld [vmem:[%s2698 + $0x1d0] sm:$0xff]
        %v2758 = vld [vmem:[%s2698 + $0x1d8] sm:$0xff]
        %v2759 = vld [vmem:[%s2698 + $0x1e0] sm:$0xff]
        %v2760 = vld [vmem:[%s2698 + $0x1e8] sm:$0xff]
        %v2761 = vld [vmem:[%s2698 + $0x1f0] sm:$0xff]
        %v2762 = vld [vmem:[%s2698 + $0x1f8] sm:$0xff]
        %v2763 = vld [vmem:[%s2698 + $0x200] sm:$0xff]
        %v2764 = vld [vmem:[%s2698 + $0x208] sm:$0xff]
        %v2765 = vld [vmem:[%s2698 + $0x210] sm:$0xff]
        %v2766 = vld [vmem:[%s2698 + $0x218] sm:$0xff]
        %v2767 = vld [vmem:[%s2698 + $0x220] sm:$0xff]
        %v2768 = vld [vmem:[%s2698 + $0x228] sm:$0xff]
        %v2769 = vld [vmem:[%s2698 + $0x230] sm:$0xff]
        %v2770 = vld [vmem:[%s2698 + $0x238] sm:$0xff]
        %v2771 = vld [vmem:[%s2698 + $0x240] sm:$0xff]
        %v2772 = vld [vmem:[%s2698 + $0x248] sm:$0xff]
        %v2773 = vld [vmem:[%s2698 + $0x250] sm:$0xff]
        %v2774 = vld [vmem:[%s2698 + $0x258] sm:$0xff]
        %v2775 = vld [vmem:[%s2698 + $0x260] sm:$0xff]
        %v2776 = vld [vmem:[%s2698 + $0x268] sm:$0xff]
        %v2777 = vld [vmem:[%s2698 + $0x270] sm:$0xff]
        %v2778 = vld [vmem:[%s2698 + $0x278] sm:$0xff]
        %v2779 = vld [vmem:[%s2698 + $0x280] sm:$0xff]
        %v2780 = vld [vmem:[%s2698 + $0x288] sm:$0xff]
        %v2781 = vld [vmem:[%s2698 + $0x290] sm:$0xff]
        %v2782 = vld [vmem:[%s2698 + $0x298] sm:$0xff]
        %v2783 = vld [vmem:[%s2698 + $0x2a0] sm:$0xff]
        %v2784 = vld [vmem:[%s2698 + $0x2a8] sm:$0xff]
        %v2785 = vld [vmem:[%s2698 + $0x2b0] sm:$0xff]
        %v2786 = vld [vmem:[%s2698 + $0x2b8] sm:$0xff]
        %v2787 = vld [vmem:[%s2698 + $0x2c0] sm:$0xff]
        %v2788 = vld [vmem:[%s2698 + $0x2c8] sm:$0xff]
        %v2789 = vld [vmem:[%s2698 + $0x2d0] sm:$0xff]
        %v2790 = vld [vmem:[%s2698 + $0x2d8] sm:$0xff]
        %v2791 = vld [vmem:[%s2698 + $0x2e0] sm:$0xff]
        %v2792 = vld [vmem:[%s2698 + $0x2e8] sm:$0xff]
        %v2793 = vld [vmem:[%s2698 + $0x2f0] sm:$0xff]
        %v2794 = vld [vmem:[%s2698 + $0x2f8] sm:$0xff]
        %v2795 = vld [vmem:[%s2698 + $0x300] sm:$0xff]
        %v2796 = vld [vmem:[%s2698 + $0x308] sm:$0xff]
        %v2797 = vld [vmem:[%s2698 + $0x310] sm:$0xff]
        %v2798 = vld [vmem:[%s2698 + $0x318] sm:$0xff]
        %v2799 = vld [vmem:[%s2698 + $0x320] sm:$0xff]
        %v2800 = vld [vmem:[%s2698 + $0x328] sm:$0xff]
        %v2801 = vld [vmem:[%s2698 + $0x330] sm:$0xff]
        %v2802 = vld [vmem:[%s2698 + $0x338] sm:$0xff]
        %v2803 = vld [vmem:[%s2698 + $0x340] sm:$0xff]
        %v2804 = vld [vmem:[%s2698 + $0x348] sm:$0xff]
        %v2805 = vld [vmem:[%s2698 + $0x350] sm:$0xff]
        %v2806 = vld [vmem:[%s2698 + $0x358] sm:$0xff]
        %2807 = vmatprep.subr.mxu0 %v2745
        %2808 = vmatpush1.msra.mxu0 %v2744
        %2809 = vmatprep.subr.mxu0 %v2742
        %2810 = vmatpush1.msra.mxu0 %v2741
        %2811 = vmatprep.subr.mxu0 %v2739
        %2812 = vmatpush1.msra.mxu0 %v2738
        %2813 = vmatprep.subr.mxu0 %v2736
        %2814 = vmatpush1.msra.mxu0 %v2735
        %2815 = vmatprep.subr.mxu0 %v2733
        %2816 = vmatpush1.msra.mxu0 %v2732
        %2817 = vmatprep.subr.mxu0 %v2730
        %2818 = vmatpush1.msra.mxu0 %v2729
        %2819 = vmatprep.subr.mxu0 %v2727
        %2820 = vmatpush1.msra.mxu0 %v2726
        %2821 = vmatprep.subr.mxu0 %v2724
        %2822 = vmatpush1.msra.mxu0 %v2723
        %2823 = vmatprep.subr.mxu0 %v2721
        %2824 = vmatpush1.msra.mxu0 %v2720
        %2825 = vmatprep.subr.mxu0 %v2718
        %2826 = vmatpush1.msra.mxu0 %v2717
        %2827 = vmatprep.subr.mxu0 %v2715
        %2828 = vmatpush1.msra.mxu0 %v2714
        %2829 = vmatprep.subr.mxu0 %v2712
        %2830 = vmatpush1.msra.mxu0 %v2711
        %2831 = vmatprep.subr.mxu0 %v2709
        %2832 = vmatpush1.msra.mxu0 %v2708
        %2833 = vmatprep.subr.mxu0 %v2706
        %2834 = vmatpush1.msra.mxu0 %v2705
        %2835 = vmatprep.subr.mxu0 %v2703
        %2836 = vmatpush1.msra.mxu0 %v2702
        %2837 = vmatprep.subr.mxu0 %v2700
        %2838 = vmatpush1.msra.mxu0 %v2699
        %2839 = vmatprep.subr.mxu0 %v2793
        %2840 = vmatpush2.msra.mxu0 %v2792
        %2841 = vmatprep.subr.mxu0 %v2790
        %2842 = vmatpush2.msra.mxu0 %v2789
        %2843 = vmatprep.subr.mxu0 %v2787
        %2844 = vmatpush2.msra.mxu0 %v2786
        %2845 = vmatprep.subr.mxu0 %v2784
        %2846 = vmatpush2.msra.mxu0 %v2783
        %2847 = vmatprep.subr.mxu0 %v2781
        %2848 = vmatpush2.msra.mxu0 %v2780
        %2849 = vmatprep.subr.mxu0 %v2778
        %2850 = vmatpush2.msra.mxu0 %v2777
        %2851 = vmatprep.subr.mxu0 %v2775
        %2852 = vmatpush2.msra.mxu0 %v2774
        %2853 = vmatprep.subr.mxu0 %v2772
        %2854 = vmatpush2.msra.mxu0 %v2771
        %2855 = vmatprep.subr.mxu0 %v2769
        %2856 = vmatpush2.msra.mxu0 %v2768
        %2857 = vmatprep.subr.mxu0 %v2766
        %2858 = vmatpush2.msra.mxu0 %v2765
        %2859 = vmatprep.subr.mxu0 %v2763
        %2860 = vmatpush2.msra.mxu0 %v2762
        %2861 = vmatprep.subr.mxu0 %v2760
        %2862 = vmatpush2.msra.mxu0 %v2759
        %2863 = vmatprep.subr.mxu0 %v2757
        %2864 = vmatpush2.msra.mxu0 %v2756
        %2865 = vmatprep.subr.mxu0 %v2754
        %2866 = vmatpush2.msra.mxu0 %v2753
        %2867 = vmatprep.subr.mxu0 %v2751
        %2868 = vmatpush2.msra.mxu0 %v2750
        %2869 = vmatprep.subr.mxu0 %v2748
        %2870 = vmatpush2.msra.mxu0 %v2747
        %2871 = vmatprep.mubr.f32.mxu0 %v1954
        %2872 = vmatmul.mubr.f32.gmra.mxu0 %v1953
        %v2873 = vpop.f32.mrf.mxu0
        %v2874 = vadd.f32 0.0, %v2873
        %v2875 = vpop.f32.mrf.mxu0
        %v2876 = vadd.f32 0.0, %v2875
        %2877 = vmatprep.mubr.f32.mxu0 %v1971
        %2878 = vmatmul.mubr.f32.gmra.mxu0 %v1963
        %v2879 = vpop.f32.mrf.mxu0
        %v2880 = vadd.f32 0.0, %v2879
        %v2881 = vpop.f32.mrf.mxu0
        %v2882 = vadd.f32 0.0, %v2881
        %2883 = vdwg.mxu0
        %2884 = vmatprep.subr.mxu0 0.0
        %2885 = vmatpush1.msra.mxu0 0.0
        %2886 = vmatprep.subr.mxu0 0.0
        %2887 = vmatpush1.msra.mxu0 0.0
        %2888 = vmatprep.subr.mxu0 0.0
        %2889 = vmatpush1.msra.mxu0 0.0
        %2890 = vmatprep.subr.mxu0 0.0
        %2891 = vmatpush1.msra.mxu0 0.0
        %2892 = vmatprep.subr.mxu0 0.0
        %2893 = vmatpush1.msra.mxu0 0.0
        %2894 = vmatprep.subr.mxu0 0.0
        %2895 = vmatpush1.msra.mxu0 0.0
        %2896 = vmatprep.subr.mxu0 0.0
        %2897 = vmatpush1.msra.mxu0 0.0
        %2898 = vmatprep.subr.mxu0 0.0
        %2899 = vmatpush1.msra.mxu0 0.0
        %2900 = vmatprep.subr.mxu0 0.0
        %2901 = vmatpush1.msra.mxu0 0.0
        %2902 = vmatprep.subr.mxu0 0.0
        %2903 = vmatpush1.msra.mxu0 0.0
        %2904 = vmatprep.subr.mxu0 0.0
        %2905 = vmatpush1.msra.mxu0 0.0
        %2906 = vmatprep.subr.mxu0 0.0
        %2907 = vmatpush1.msra.mxu0 0.0
        %2908 = vmatprep.subr.mxu0 %v2805
        %2909 = vmatpush1.msra.mxu0 %v2804
        %2910 = vmatprep.subr.mxu0 %v2802
        %2911 = vmatpush1.msra.mxu0 %v2801
        %2912 = vmatprep.subr.mxu0 %v2799
        %2913 = vmatpush1.msra.mxu0 %v2798
        %2914 = vmatprep.subr.mxu0 %v2796
        %2915 = vmatpush1.msra.mxu0 %v2795
        %2916 = vmatprep.subr.mxu0 0.0
        %2917 = vmatpush2.msra.mxu0 0.0
        %2918 = vmatprep.subr.mxu0 0.0
        %2919 = vmatpush2.msra.mxu0 0.0
        %2920 = vmatprep.subr.mxu0 0.0
        %2921 = vmatpush2.msra.mxu0 0.0
        %2922 = vmatprep.subr.mxu0 0.0
        %2923 = vmatpush2.msra.mxu0 0.0
        %2924 = vmatprep.subr.mxu0 0.0
        %2925 = vmatpush2.msra.mxu0 0.0
        %2926 = vmatprep.subr.mxu0 0.0
        %2927 = vmatpush2.msra.mxu0 0.0
        %2928 = vmatprep.subr.mxu0 0.0
        %2929 = vmatpush2.msra.mxu0 0.0
        %2930 = vmatprep.subr.mxu0 0.0
        %2931 = vmatpush2.msra.mxu0 0.0
        %2932 = vmatprep.subr.mxu0 0.0
        %2933 = vmatpush2.msra.mxu0 0.0
        %2934 = vmatprep.subr.mxu0 0.0
        %2935 = vmatpush2.msra.mxu0 0.0
        %2936 = vmatprep.subr.mxu0 0.0
        %2937 = vmatpush2.msra.mxu0 0.0
        %2938 = vmatprep.subr.mxu0 0.0
        %2939 = vmatpush2.msra.mxu0 0.0
        %2940 = vmatprep.subr.mxu0 0.0
        %2941 = vmatpush2.msra.mxu0 0.0
        %2942 = vmatprep.subr.mxu0 0.0
        %2943 = vmatpush2.msra.mxu0 0.0
        %2944 = vmatprep.subr.mxu0 0.0
        %2945 = vmatpush2.msra.mxu0 0.0
        %2946 = vmatprep.subr.mxu0 0.0
        %2947 = vmatpush2.msra.mxu0 0.0
        %2948 = vmatprep.mubr.f32.mxu0 0.0
        %2949 = vmatmul.mubr.f32.gmra.mxu0 %v1977
        %v2950 = vpop.f32.mrf.mxu0
        %v2951 = vadd.f32 %v2874, %v2950
        %v2952 = vpop.f32.mrf.mxu0
        %v2953 = vadd.f32 %v2876, %v2952
        %2954 = vmatprep.mubr.f32.mxu0 0.0
        %2955 = vmatmul.mubr.f32.gmra.mxu0 %v1979
        %v2956 = vpop.f32.mrf.mxu0
        %v2957 = vadd.f32 %v2880, %v2956
        %v2958 = vpop.f32.mrf.mxu0
        %v2959 = vadd.f32 %v2882, %v2958
        %2960 = vdwg.mxu0
        %2961 = vmatprep.subr.mxu0 0.0
        %2962 = vmatpush1.msra.mxu0 %v2746
        %2963 = vmatprep.subr.mxu0 0.0
        %2964 = vmatpush1.msra.mxu0 %v2743
        %2965 = vmatprep.subr.mxu0 0.0
        %2966 = vmatpush1.msra.mxu0 %v2740
        %2967 = vmatprep.subr.mxu0 0.0
        %2968 = vmatpush1.msra.mxu0 %v2737
        %2969 = vmatprep.subr.mxu0 0.0
        %2970 = vmatpush1.msra.mxu0 %v2734
        %2971 = vmatprep.subr.mxu0 0.0
        %2972 = vmatpush1.msra.mxu0 %v2731
        %2973 = vmatprep.subr.mxu0 0.0
        %2974 = vmatpush1.msra.mxu0 %v2728
        %2975 = vmatprep.subr.mxu0 0.0
        %2976 = vmatpush1.msra.mxu0 %v2725
        %2977 = vmatprep.subr.mxu0 0.0
        %2978 = vmatpush1.msra.mxu0 %v2722
        %2979 = vmatprep.subr.mxu0 0.0
        %2980 = vmatpush1.msra.mxu0 %v2719
        %2981 = vmatprep.subr.mxu0 0.0
        %2982 = vmatpush1.msra.mxu0 %v2716
        %2983 = vmatprep.subr.mxu0 0.0
        %2984 = vmatpush1.msra.mxu0 %v2713
        %2985 = vmatprep.subr.mxu0 0.0
        %2986 = vmatpush1.msra.mxu0 %v2710
        %2987 = vmatprep.subr.mxu0 0.0
        %2988 = vmatpush1.msra.mxu0 %v2707
        %2989 = vmatprep.subr.mxu0 0.0
        %2990 = vmatpush1.msra.mxu0 %v2704
        %2991 = vmatprep.subr.mxu0 0.0
        %2992 = vmatpush1.msra.mxu0 %v2701
        %2993 = vmatprep.subr.mxu0 0.0
        %2994 = vmatpush2.msra.mxu0 %v2794
        %2995 = vmatprep.subr.mxu0 0.0
        %2996 = vmatpush2.msra.mxu0 %v2791
        %2997 = vmatprep.subr.mxu0 0.0
        %2998 = vmatpush2.msra.mxu0 %v2788
        %2999 = vmatprep.subr.mxu0 0.0
        %3000 = vmatpush2.msra.mxu0 %v2785
        %3001 = vmatprep.subr.mxu0 0.0
        %3002 = vmatpush2.msra.mxu0 %v2782
        %3003 = vmatprep.subr.mxu0 0.0
        %3004 = vmatpush2.msra.mxu0 %v2779
        %3005 = vmatprep.subr.mxu0 0.0
        %3006 = vmatpush2.msra.mxu0 %v2776
        %3007 = vmatprep.subr.mxu0 0.0
        %3008 = vmatpush2.msra.mxu0 %v2773
        %3009 = vmatprep.subr.mxu0 0.0
        %3010 = vmatpush2.msra.mxu0 %v2770
        %3011 = vmatprep.subr.mxu0 0.0
        %3012 = vmatpush2.msra.mxu0 %v2767
        %3013 = vmatprep.subr.mxu0 0.0
        %3014 = vmatpush2.msra.mxu0 %v2764
        %3015 = vmatprep.subr.mxu0 0.0
        %3016 = vmatpush2.msra.mxu0 %v2761
        %3017 = vmatprep.subr.mxu0 0.0
        %3018 = vmatpush2.msra.mxu0 %v2758
        %3019 = vmatprep.subr.mxu0 0.0
        %3020 = vmatpush2.msra.mxu0 %v2755
        %3021 = vmatprep.subr.mxu0 0.0
        %3022 = vmatpush2.msra.mxu0 %v2752
        %3023 = vmatprep.subr.mxu0 0.0
        %3024 = vmatpush2.msra.mxu0 %v2749
        %3025 = vmatprep.mubr.f32.mxu0 %v1954
        %3026 = vmatmul.mubr.f32.gmra.mxu0 %v1953
        %v3027 = vpop.f32.mrf.mxu0
        %v3028 = vadd.f32 0.0, %v3027
        %v3029 = vpop.f32.mrf.mxu0
        %3030 = vmatprep.mubr.f32.mxu0 %v1971
        %3031 = vmatmul.mubr.f32.gmra.mxu0 %v1963
        %v3032 = vpop.f32.mrf.mxu0
        %v3033 = vadd.f32 0.0, %v3032
        %v3034 = vpop.f32.mrf.mxu0
        %3035 = vdwg.mxu0
        %3036 = vmatprep.subr.mxu0 0.0
        %3037 = vmatpush1.msra.mxu0 0.0
        %3038 = vmatprep.subr.mxu0 0.0
        %3039 = vmatpush1.msra.mxu0 0.0
        %3040 = vmatprep.subr.mxu0 0.0
        %3041 = vmatpush1.msra.mxu0 0.0
        %3042 = vmatprep.subr.mxu0 0.0
        %3043 = vmatpush1.msra.mxu0 0.0
        %3044 = vmatprep.subr.mxu0 0.0
        %3045 = vmatpush1.msra.mxu0 0.0
        %3046 = vmatprep.subr.mxu0 0.0
        %3047 = vmatpush1.msra.mxu0 0.0
        %3048 = vmatprep.subr.mxu0 0.0
        %3049 = vmatpush1.msra.mxu0 0.0
        %3050 = vmatprep.subr.mxu0 0.0
        %3051 = vmatpush1.msra.mxu0 0.0
        %3052 = vmatprep.subr.mxu0 0.0
        %3053 = vmatpush1.msra.mxu0 0.0
        %3054 = vmatprep.subr.mxu0 0.0
        %3055 = vmatpush1.msra.mxu0 0.0
        %3056 = vmatprep.subr.mxu0 0.0
        %3057 = vmatpush1.msra.mxu0 0.0
        %3058 = vmatprep.subr.mxu0 0.0
        %3059 = vmatpush1.msra.mxu0 0.0
        %3060 = vmatprep.subr.mxu0 0.0
        %3061 = vmatpush1.msra.mxu0 %v2806
        %3062 = vmatprep.subr.mxu0 0.0
        %3063 = vmatpush1.msra.mxu0 %v2803
        %3064 = vmatprep.subr.mxu0 0.0
        %3065 = vmatpush1.msra.mxu0 %v2800
        %3066 = vmatprep.subr.mxu0 0.0
        %3067 = vmatpush1.msra.mxu0 %v2797
        %3068 = vmatprep.subr.mxu0 0.0
        %3069 = vmatpush2.msra.mxu0 0.0
        %3070 = vmatprep.subr.mxu0 0.0
        %3071 = vmatpush2.msra.mxu0 0.0
        %3072 = vmatprep.subr.mxu0 0.0
        %3073 = vmatpush2.msra.mxu0 0.0
        %3074 = vmatprep.subr.mxu0 0.0
        %3075 = vmatpush2.msra.mxu0 0.0
        %3076 = vmatprep.subr.mxu0 0.0
        %3077 = vmatpush2.msra.mxu0 0.0
        %3078 = vmatprep.subr.mxu0 0.0
        %3079 = vmatpush2.msra.mxu0 0.0
        %3080 = vmatprep.subr.mxu0 0.0
        %3081 = vmatpush2.msra.mxu0 0.0
        %3082 = vmatprep.subr.mxu0 0.0
        %3083 = vmatpush2.msra.mxu0 0.0
        %3084 = vmatprep.subr.mxu0 0.0
        %3085 = vmatpush2.msra.mxu0 0.0
        %3086 = vmatprep.subr.mxu0 0.0
        %3087 = vmatpush2.msra.mxu0 0.0
        %3088 = vmatprep.subr.mxu0 0.0
        %3089 = vmatpush2.msra.mxu0 0.0
        %3090 = vmatprep.subr.mxu0 0.0
        %3091 = vmatpush2.msra.mxu0 0.0
        %3092 = vmatprep.subr.mxu0 0.0
        %3093 = vmatpush2.msra.mxu0 0.0
        %3094 = vmatprep.subr.mxu0 0.0
        %3095 = vmatpush2.msra.mxu0 0.0
        %3096 = vmatprep.subr.mxu0 0.0
        %3097 = vmatpush2.msra.mxu0 0.0
        %3098 = vmatprep.subr.mxu0 0.0
        %3099 = vmatpush2.msra.mxu0 0.0
        %3100 = vmatprep.mubr.f32.mxu0 0.0
        %3101 = vmatmul.mubr.f32.gmra.mxu0 %v1977
        %v3102 = vpop.f32.mrf.mxu0
        %v3103 = vadd.f32 %v3028, %v3102
        %v3104 = vpop.f32.mrf.mxu0
        %3105 = vmatprep.mubr.f32.mxu0 0.0
        %3106 = vmatmul.mubr.f32.gmra.mxu0 %v1979
        %v3107 = vpop.f32.mrf.mxu0
        %v3108 = vadd.f32 %v3033, %v3107
        %v3109 = vpop.f32.mrf.mxu0
        %3110 = vdwg.mxu0
        %v3111 = vsel %vm1172, %v2131, 0.0
        %v3112 = vsel %vm1172, %v2133, 0.0
        %v3113 = vsel %vm1172, %v2282, 0.0
        %v3120 = vrot.slane %v2951, 7
        %v3121 = vrot.slane %v2953, 7
        %v3122 = vrot.slane %v3103, 7
        %v3123 = vrot.slane %v2957, 7
        %v3124 = vsel %vm1172, %v3120, %v3123
        %v3125 = vrot.slane %v2959, 7
        %v3126 = vsel %vm1172, %v3121, %v3125
        %v3127 = vrot.slane %v3108, 7
        %v3128 = vsel %vm1172, %v3122, %v3127
        %v3135 = vsel %vm1172, 0.0, %v3120
        %v3136 = vsel %vm1172, 0.0, %v3121
        %v3137 = vsel %vm1172, 0.0, %v3122
        %v3138 = vadd.f32 %v2125, %v3135
        %v3139 = vadd.f32 %v2127, %v3136
        %v3140 = vadd.f32 %v2277, %v3137
        %v3141 = vadd.f32 %v3111, %v3124
        %v3142 = vadd.f32 %v3112, %v3126
        %v3143 = vadd.f32 %v3113, %v3128
        %v3144 = vsel %vm1172, %v2544, 0.0
        %v3145 = vsel %vm1172, %v2546, 0.0
        %v3146 = vsel %vm1172, %v2695, 0.0
        %v3153 = vcombine.low %v3138, %v3139
        %v3154 = vcombine.high %v3138, %v3139
        %v3155 = vcombine.high %v3140, %v3140
        %v3157 = vunpack.c.l.s4 1966171168
        %v3158 = vunpack.c.0.s8 %v3157
        %v3159 = vlaneseq
        %v3160 = vshrl.u32 %v3159, 7
        %v3161 = vsub.s32 %v3158, %v3160
        %v3162 = vrot.slane %v3153, %v3161
        %v3164 = vunpack.c.l.s4 1966171168
        %v3165 = vunpack.c.0.s8 %v3164
        %v3166 = vlaneseq
        %v3167 = vshrl.u32 %v3166, 7
        %v3168 = vsub.s32 %v3165, %v3167
        %v3169 = vrot.slane %v3154, %v3168
        %v3171 = vunpack.c.l.s4 1966171168
        %v3172 = vunpack.c.0.s8 %v3171
        %v3173 = vlaneseq
        %v3174 = vshrl.u32 %v3173, 7
        %v3175 = vsub.s32 %v3172, %v3174
        %v3176 = vrot.slane %v3140, %v3175
        %v3178 = vunpack.c.l.s4 1966171168
        %v3179 = vunpack.c.0.s8 %v3178
        %v3180 = vlaneseq
        %v3181 = vshrl.u32 %v3180, 7
        %v3182 = vsub.s32 %v3179, %v3181
        %v3183 = vrot.slane %v3155, %v3182
        %v3184 = vcombine.low %v3162, %v3176
        %v3185 = vcombine.high %v3162, %v3176
        %v3186 = vcombine.low %v3169, %v3183
        %v3187 = vcombine.high %v3169, %v3183
        %v3189 = vunpack.c.l.s4 1966171168
        %v3190 = vunpack.c.0.s8 %v3189
        %v3191 = vlaneseq
        %v3192 = vshrl.u32 %v3191, 7
        %v3193 = vsub.s32 %v3190, %v3192
        %v3194 = vrot.slane %v3184, %v3193
        %v3196 = vunpack.c.l.s4 1966171168
        %v3197 = vunpack.c.0.s8 %v3196
        %v3198 = vlaneseq
        %v3199 = vshrl.u32 %v3198, 7
        %v3200 = vsub.s32 %v3197, %v3199
        %v3201 = vrot.slane %v3186, %v3200
        %v3203 = vunpack.c.l.s4 1966171168
        %v3204 = vunpack.c.0.s8 %v3203
        %v3205 = vlaneseq
        %v3206 = vshrl.u32 %v3205, 7
        %v3207 = vsub.s32 %v3204, %v3206
        %v3208 = vrot.slane %v3185, %v3207
        %v3210 = vunpack.c.l.s4 1966171168
        %v3211 = vunpack.c.0.s8 %v3210
        %v3212 = vlaneseq
        %v3213 = vshrl.u32 %v3212, 7
        %v3214 = vsub.s32 %v3211, %v3213
        %v3215 = vrot.slane %v3187, %v3214
        %v3216 = vcombine.high %v3194, %v3194
        %v3217 = vcombine.high %v3201, %v3201
        %v3218 = vcombine.high %v3208, %v3208
        %v3219 = vcombine.high %v3215, %v3215
        %v3220 = vcombine.low %v3141, %v3142
        %v3222 = vunpack.c.l.s4 1966171168
        %v3223 = vunpack.c.0.s8 %v3222
        %v3224 = vlaneseq
        %v3225 = vshrl.u32 %v3224, 7
        %v3226 = vsub.s32 %v3223, %v3225
        %v3227 = vrot.slane %v3220, %v3226
        %v3229 = vunpack.c.l.s4 1966171168
        %v3230 = vunpack.c.0.s8 %v3229
        %v3231 = vlaneseq
        %v3232 = vshrl.u32 %v3231, 7
        %v3233 = vsub.s32 %v3230, %v3232
        %v3234 = vrot.slane %v3143, %v3233
        %v3235 = vcombine.low %v3227, %v3234
        %v3236 = vcombine.high %v3227, %v3234
        %v3238 = vunpack.c.l.s4 1966171168
        %v3239 = vunpack.c.0.s8 %v3238
        %v3240 = vlaneseq
        %v3241 = vshrl.u32 %v3240, 7
        %v3242 = vsub.s32 %v3239, %v3241
        %v3243 = vrot.slane %v3235, %v3242
        %v3245 = vunpack.c.l.s4 1966171168
        %v3246 = vunpack.c.0.s8 %v3245
        %v3247 = vlaneseq
        %v3248 = vshrl.u32 %v3247, 7
        %v3249 = vsub.s32 %v3246, %v3248
        %v3250 = vrot.slane %v3236, %v3249
        %v3257 = vcombine.low %v2538, %v2540
        %v3258 = vcombine.high %v2538, %v2540
        %v3259 = vcombine.high %v2690, %v2690
        %v3261 = vunpack.c.l.s4 1966171168
        %v3262 = vunpack.c.0.s8 %v3261
        %v3263 = vlaneseq
        %v3264 = vshrl.u32 %v3263, 7
        %v3265 = vsub.s32 %v3262, %v3264
        %v3266 = vrot.slane %v3257, %v3265
        %v3268 = vunpack.c.l.s4 1966171168
        %v3269 = vunpack.c.0.s8 %v3268
        %v3270 = vlaneseq
        %v3271 = vshrl.u32 %v3270, 7
        %v3272 = vsub.s32 %v3269, %v3271
        %v3273 = vrot.slane %v3258, %v3272
        %v3275 = vunpack.c.l.s4 1966171168
        %v3276 = vunpack.c.0.s8 %v3275
        %v3277 = vlaneseq
        %v3278 = vshrl.u32 %v3277, 7
        %v3279 = vsub.s32 %v3276, %v3278
        %v3280 = vrot.slane %v2690, %v3279
        %v3282 = vunpack.c.l.s4 1966171168
        %v3283 = vunpack.c.0.s8 %v3282
        %v3284 = vlaneseq
        %v3285 = vshrl.u32 %v3284, 7
        %v3286 = vsub.s32 %v3283, %v3285
        %v3287 = vrot.slane %v3259, %v3286
        %v3288 = vcombine.low %v3266, %v3280
        %v3289 = vcombine.high %v3266, %v3280
        %v3290 = vcombine.low %v3273, %v3287
        %v3291 = vcombine.high %v3273, %v3287
        %v3293 = vunpack.c.l.s4 1966171168
        %v3294 = vunpack.c.0.s8 %v3293
        %v3295 = vlaneseq
        %v3296 = vshrl.u32 %v3295, 7
        %v3297 = vsub.s32 %v3294, %v3296
        %v3298 = vrot.slane %v3288, %v3297
        %v3300 = vunpack.c.l.s4 1966171168
        %v3301 = vunpack.c.0.s8 %v3300
        %v3302 = vlaneseq
        %v3303 = vshrl.u32 %v3302, 7
        %v3304 = vsub.s32 %v3301, %v3303
        %v3305 = vrot.slane %v3290, %v3304
        %v3307 = vunpack.c.l.s4 1966171168
        %v3308 = vunpack.c.0.s8 %v3307
        %v3309 = vlaneseq
        %v3310 = vshrl.u32 %v3309, 7
        %v3311 = vsub.s32 %v3308, %v3310
        %v3312 = vrot.slane %v3289, %v3311
        %v3314 = vunpack.c.l.s4 1966171168
        %v3315 = vunpack.c.0.s8 %v3314
        %v3316 = vlaneseq
        %v3317 = vshrl.u32 %v3316, 7
        %v3318 = vsub.s32 %v3315, %v3317
        %v3319 = vrot.slane %v3291, %v3318
        %v3320 = vcombine.high %v3298, %v3298
        %v3321 = vcombine.high %v3305, %v3305
        %v3322 = vcombine.high %v3312, %v3312
        %v3323 = vcombine.high %v3319, %v3319
        %v3324 = vcombine.low %v3144, %v3145
        %v3326 = vunpack.c.l.s4 1966171168
        %v3327 = vunpack.c.0.s8 %v3326
        %v3328 = vlaneseq
        %v3329 = vshrl.u32 %v3328, 7
        %v3330 = vsub.s32 %v3327, %v3329
        %v3331 = vrot.slane %v3324, %v3330
        %v3333 = vunpack.c.l.s4 1966171168
        %v3334 = vunpack.c.0.s8 %v3333
        %v3335 = vlaneseq
        %v3336 = vshrl.u32 %v3335, 7
        %v3337 = vsub.s32 %v3334, %v3336
        %v3338 = vrot.slane %v3146, %v3337
        %v3339 = vcombine.low %v3331, %v3338
        %v3340 = vcombine.high %v3331, %v3338
        %v3342 = vunpack.c.l.s4 1966171168
        %v3343 = vunpack.c.0.s8 %v3342
        %v3344 = vlaneseq
        %v3345 = vshrl.u32 %v3344, 7
        %v3346 = vsub.s32 %v3343, %v3345
        %v3347 = vrot.slane %v3339, %v3346
        %v3349 = vunpack.c.l.s4 1966171168
        %v3350 = vunpack.c.0.s8 %v3349
        %v3351 = vlaneseq
        %v3352 = vshrl.u32 %v3351, 7
        %v3353 = vsub.s32 %v3350, %v3352
        %v3354 = vrot.slane %v3340, %v3353
        %v3355 = vlaneseq
        %v3356 = vshrl.u32 %v3355, 7
        %v3357 = vsub.s32 0, %v3356
        %v3358 = vrot.slane %v3194, %v3357
        %v3359 = vlaneseq
        %v3360 = vshrl.u32 %v3359, 7
        %v3361 = vsub.s32 1, %v3360
        %v3362 = vrot.slane %v3194, %v3361
        %v3363 = vlaneseq
        %v3364 = vshrl.u32 %v3363, 7
        %v3365 = vsub.s32 2, %v3364
        %v3366 = vrot.slane %v3194, %v3365
        %v3367 = vlaneseq
        %v3368 = vshrl.u32 %v3367, 7
        %v3369 = vsub.s32 0, %v3368
        %v3370 = vrot.slane %v3208, %v3369
        %v3371 = vlaneseq
        %v3372 = vshrl.u32 %v3371, 7
        %v3373 = vsub.s32 1, %v3372
        %v3374 = vrot.slane %v3208, %v3373
        %v3375 = vlaneseq
        %v3376 = vshrl.u32 %v3375, 7
        %v3377 = vsub.s32 2, %v3376
        %v3378 = vrot.slane %v3208, %v3377
        %v3379 = vlaneseq
        %v3380 = vshrl.u32 %v3379, 7
        %v3381 = vsub.s32 0, %v3380
        %v3382 = vrot.slane %v3216, %v3381
        %v3383 = vlaneseq
        %v3384 = vshrl.u32 %v3383, 7
        %v3385 = vsub.s32 1, %v3384
        %v3386 = vrot.slane %v3216, %v3385
        %v3387 = vlaneseq
        %v3388 = vshrl.u32 %v3387, 7
        %v3389 = vsub.s32 2, %v3388
        %v3390 = vrot.slane %v3216, %v3389
        %v3391 = vlaneseq
        %v3392 = vshrl.u32 %v3391, 7
        %v3393 = vsub.s32 0, %v3392
        %v3394 = vrot.slane %v3218, %v3393
        %v3395 = vlaneseq
        %v3396 = vshrl.u32 %v3395, 7
        %v3397 = vsub.s32 1, %v3396
        %v3398 = vrot.slane %v3218, %v3397
        %v3399 = vlaneseq
        %v3400 = vshrl.u32 %v3399, 7
        %v3401 = vsub.s32 2, %v3400
        %v3402 = vrot.slane %v3218, %v3401
        %v3403 = vlaneseq
        %v3404 = vshrl.u32 %v3403, 7
        %v3405 = vsub.s32 0, %v3404
        %v3406 = vrot.slane %v3201, %v3405
        %v3407 = vlaneseq
        %v3408 = vshrl.u32 %v3407, 7
        %v3409 = vsub.s32 1, %v3408
        %v3410 = vrot.slane %v3201, %v3409
        %v3411 = vlaneseq
        %v3412 = vshrl.u32 %v3411, 7
        %v3413 = vsub.s32 2, %v3412
        %v3414 = vrot.slane %v3201, %v3413
        %v3415 = vlaneseq
        %v3416 = vshrl.u32 %v3415, 7
        %v3417 = vsub.s32 0, %v3416
        %v3418 = vrot.slane %v3215, %v3417
        %v3419 = vlaneseq
        %v3420 = vshrl.u32 %v3419, 7
        %v3421 = vsub.s32 1, %v3420
        %v3422 = vrot.slane %v3215, %v3421
        %v3423 = vlaneseq
        %v3424 = vshrl.u32 %v3423, 7
        %v3425 = vsub.s32 2, %v3424
        %v3426 = vrot.slane %v3215, %v3425
        %v3427 = vlaneseq
        %v3428 = vshrl.u32 %v3427, 7
        %v3429 = vsub.s32 0, %v3428
        %v3430 = vrot.slane %v3217, %v3429
        %v3431 = vlaneseq
        %v3432 = vshrl.u32 %v3431, 7
        %v3433 = vsub.s32 1, %v3432
        %v3434 = vrot.slane %v3217, %v3433
        %v3435 = vlaneseq
        %v3436 = vshrl.u32 %v3435, 7
        %v3437 = vsub.s32 2, %v3436
        %v3438 = vrot.slane %v3217, %v3437
        %v3439 = vlaneseq
        %v3440 = vshrl.u32 %v3439, 7
        %v3441 = vsub.s32 0, %v3440
        %v3442 = vrot.slane %v3219, %v3441
        %v3443 = vlaneseq
        %v3444 = vshrl.u32 %v3443, 7
        %v3445 = vsub.s32 1, %v3444
        %v3446 = vrot.slane %v3219, %v3445
        %v3447 = vlaneseq
        %v3448 = vshrl.u32 %v3447, 7
        %v3449 = vsub.s32 2, %v3448
        %v3450 = vrot.slane %v3219, %v3449
        %v3451 = vlaneseq
        %v3452 = vshrl.u32 %v3451, 7
        %v3453 = vsub.s32 0, %v3452
        %v3454 = vrot.slane %v3243, %v3453
        %v3455 = vlaneseq
        %v3456 = vshrl.u32 %v3455, 7
        %v3457 = vsub.s32 1, %v3456
        %v3458 = vrot.slane %v3243, %v3457
        %v3459 = vlaneseq
        %v3460 = vshrl.u32 %v3459, 7
        %v3461 = vsub.s32 2, %v3460
        %v3462 = vrot.slane %v3243, %v3461
        %v3463 = vlaneseq
        %v3464 = vshrl.u32 %v3463, 7
        %v3465 = vsub.s32 0, %v3464
        %v3466 = vrot.slane %v3250, %v3465
        %v3467 = vlaneseq
        %v3468 = vshrl.u32 %v3467, 7
        %v3469 = vsub.s32 1, %v3468
        %v3470 = vrot.slane %v3250, %v3469
        %v3471 = vlaneseq
        %v3472 = vshrl.u32 %v3471, 7
        %v3473 = vsub.s32 2, %v3472
        %v3474 = vrot.slane %v3250, %v3473
        %v3505 = vlaneseq
        %v3506 = vshrl.u32 %v3505, 7
        %v3507 = vsub.s32 0, %v3506
        %v3508 = vrot.slane %v3298, %v3507
        %v3509 = vlaneseq
        %v3510 = vshrl.u32 %v3509, 7
        %v3511 = vsub.s32 1, %v3510
        %v3512 = vrot.slane %v3298, %v3511
        %v3513 = vlaneseq
        %v3514 = vshrl.u32 %v3513, 7
        %v3515 = vsub.s32 2, %v3514
        %v3516 = vrot.slane %v3298, %v3515
        %v3517 = vlaneseq
        %v3518 = vshrl.u32 %v3517, 7
        %v3519 = vsub.s32 0, %v3518
        %v3520 = vrot.slane %v3312, %v3519
        %v3521 = vlaneseq
        %v3522 = vshrl.u32 %v3521, 7
        %v3523 = vsub.s32 1, %v3522
        %v3524 = vrot.slane %v3312, %v3523
        %v3525 = vlaneseq
        %v3526 = vshrl.u32 %v3525, 7
        %v3527 = vsub.s32 2, %v3526
        %v3528 = vrot.slane %v3312, %v3527
        %v3529 = vlaneseq
        %v3530 = vshrl.u32 %v3529, 7
        %v3531 = vsub.s32 0, %v3530
        %v3532 = vrot.slane %v3320, %v3531
        %v3533 = vlaneseq
        %v3534 = vshrl.u32 %v3533, 7
        %v3535 = vsub.s32 1, %v3534
        %v3536 = vrot.slane %v3320, %v3535
        %v3537 = vlaneseq
        %v3538 = vshrl.u32 %v3537, 7
        %v3539 = vsub.s32 2, %v3538
        %v3540 = vrot.slane %v3320, %v3539
        %v3541 = vlaneseq
        %v3542 = vshrl.u32 %v3541, 7
        %v3543 = vsub.s32 0, %v3542
        %v3544 = vrot.slane %v3322, %v3543
        %v3545 = vlaneseq
        %v3546 = vshrl.u32 %v3545, 7
        %v3547 = vsub.s32 1, %v3546
        %v3548 = vrot.slane %v3322, %v3547
        %v3549 = vlaneseq
        %v3550 = vshrl.u32 %v3549, 7
        %v3551 = vsub.s32 2, %v3550
        %v3552 = vrot.slane %v3322, %v3551
        %v3553 = vlaneseq
        %v3554 = vshrl.u32 %v3553, 7
        %v3555 = vsub.s32 0, %v3554
        %v3556 = vrot.slane %v3305, %v3555
        %v3557 = vlaneseq
        %v3558 = vshrl.u32 %v3557, 7
        %v3559 = vsub.s32 1, %v3558
        %v3560 = vrot.slane %v3305, %v3559
        %v3561 = vlaneseq
        %v3562 = vshrl.u32 %v3561, 7
        %v3563 = vsub.s32 2, %v3562
        %v3564 = vrot.slane %v3305, %v3563
        %v3565 = vlaneseq
        %v3566 = vshrl.u32 %v3565, 7
        %v3567 = vsub.s32 0, %v3566
        %v3568 = vrot.slane %v3319, %v3567
        %v3569 = vlaneseq
        %v3570 = vshrl.u32 %v3569, 7
        %v3571 = vsub.s32 1, %v3570
        %v3572 = vrot.slane %v3319, %v3571
        %v3573 = vlaneseq
        %v3574 = vshrl.u32 %v3573, 7
        %v3575 = vsub.s32 2, %v3574
        %v3576 = vrot.slane %v3319, %v3575
        %v3577 = vlaneseq
        %v3578 = vshrl.u32 %v3577, 7
        %v3579 = vsub.s32 0, %v3578
        %v3580 = vrot.slane %v3321, %v3579
        %v3581 = vlaneseq
        %v3582 = vshrl.u32 %v3581, 7
        %v3583 = vsub.s32 1, %v3582
        %v3584 = vrot.slane %v3321, %v3583
        %v3585 = vlaneseq
        %v3586 = vshrl.u32 %v3585, 7
        %v3587 = vsub.s32 2, %v3586
        %v3588 = vrot.slane %v3321, %v3587
        %v3589 = vlaneseq
        %v3590 = vshrl.u32 %v3589, 7
        %v3591 = vsub.s32 0, %v3590
        %v3592 = vrot.slane %v3323, %v3591
        %v3593 = vlaneseq
        %v3594 = vshrl.u32 %v3593, 7
        %v3595 = vsub.s32 1, %v3594
        %v3596 = vrot.slane %v3323, %v3595
        %v3597 = vlaneseq
        %v3598 = vshrl.u32 %v3597, 7
        %v3599 = vsub.s32 2, %v3598
        %v3600 = vrot.slane %v3323, %v3599
        %v3601 = vlaneseq
        %v3602 = vshrl.u32 %v3601, 7
        %v3603 = vsub.s32 0, %v3602
        %v3604 = vrot.slane %v3347, %v3603
        %v3605 = vlaneseq
        %v3606 = vshrl.u32 %v3605, 7
        %v3607 = vsub.s32 1, %v3606
        %v3608 = vrot.slane %v3347, %v3607
        %v3609 = vlaneseq
        %v3610 = vshrl.u32 %v3609, 7
        %v3611 = vsub.s32 2, %v3610
        %v3612 = vrot.slane %v3347, %v3611
        %v3613 = vlaneseq
        %v3614 = vshrl.u32 %v3613, 7
        %v3615 = vsub.s32 0, %v3614
        %v3616 = vrot.slane %v3354, %v3615
        %v3617 = vlaneseq
        %v3618 = vshrl.u32 %v3617, 7
        %v3619 = vsub.s32 1, %v3618
        %v3620 = vrot.slane %v3354, %v3619
        %v3621 = vlaneseq
        %v3622 = vshrl.u32 %v3621, 7
        %v3623 = vsub.s32 2, %v3622
        %v3624 = vrot.slane %v3354, %v3623
        %v3655 = vsel %vm1172, %v3358, %v3508
        %v3656 = vsel %vm1172, %v3362, %v3512
        %v3657 = vsel %vm1172, %v3366, %v3516
        %v3658 = vsel %vm1172, %v3370, %v3520
        %v3659 = vsel %vm1172, %v3374, %v3524
        %v3660 = vsel %vm1172, %v3378, %v3528
        %v3661 = vsel %vm1172, %v3382, %v3532
        %v3662 = vsel %vm1172, %v3386, %v3536
        %v3663 = vsel %vm1172, %v3390, %v3540
        %v3664 = vsel %vm1172, %v3394, %v3544
        %v3665 = vsel %vm1172, %v3398, %v3548
        %v3666 = vsel %vm1172, %v3402, %v3552
        %v3667 = vsel %vm1172, %v3406, %v3556
        %v3668 = vsel %vm1172, %v3410, %v3560
        %v3669 = vsel %vm1172, %v3414, %v3564
        %v3670 = vsel %vm1172, %v3418, %v3568
        %v3671 = vsel %vm1172, %v3422, %v3572
        %v3672 = vsel %vm1172, %v3426, %v3576
        %v3673 = vsel %vm1172, %v3430, %v3580
        %v3674 = vsel %vm1172, %v3434, %v3584
        %v3675 = vsel %vm1172, %v3438, %v3588
        %v3676 = vsel %vm1172, %v3442, %v3592
        %v3677 = vsel %vm1172, %v3446, %v3596
        %v3678 = vsel %vm1172, %v3450, %v3600
        %v3679 = vsel %vm1172, %v3454, %v3604
        %v3680 = vsel %vm1172, %v3458, %v3608
        %v3681 = vsel %vm1172, %v3462, %v3612
        %v3682 = vsel %vm1172, %v3466, %v3616
        %v3683 = vsel %vm1172, %v3470, %v3620
        %v3684 = vsel %vm1172, %v3474, %v3624
        %v3715 = vcombine.low %v3655, %v3656
        %v3717 = vunpack.c.l.s4 1983009808
        %v3718 = vunpack.c.0.s8 %v3717
        %v3719 = vlaneseq
        %v3720 = vshrl.u32 %v3719, 7
        %v3721 = vsub.s32 %v3718, %v3720
        %v3722 = vrot.slane %v3715, %v3721
        %v3724 = vunpack.c.l.s4 1983009808
        %v3725 = vunpack.c.0.s8 %v3724
        %v3726 = vlaneseq
        %v3727 = vshrl.u32 %v3726, 7
        %v3728 = vsub.s32 %v3725, %v3727
        %v3729 = vrot.slane %v3657, %v3728
        %v3730 = vcombine.low %v3722, %v3729
        %v3731 = vcombine.low %v3658, %v3659
        %v3733 = vunpack.c.l.s4 1983009808
        %v3734 = vunpack.c.0.s8 %v3733
        %v3735 = vlaneseq
        %v3736 = vshrl.u32 %v3735, 7
        %v3737 = vsub.s32 %v3734, %v3736
        %v3738 = vrot.slane %v3731, %v3737
        %v3740 = vunpack.c.l.s4 1983009808
        %v3741 = vunpack.c.0.s8 %v3740
        %v3742 = vlaneseq
        %v3743 = vshrl.u32 %v3742, 7
        %v3744 = vsub.s32 %v3741, %v3743
        %v3745 = vrot.slane %v3660, %v3744
        %v3746 = vcombine.low %v3738, %v3745
        %v3747 = vcombine.low %v3661, %v3662
        %v3749 = vunpack.c.l.s4 1983009808
        %v3750 = vunpack.c.0.s8 %v3749
        %v3751 = vlaneseq
        %v3752 = vshrl.u32 %v3751, 7
        %v3753 = vsub.s32 %v3750, %v3752
        %v3754 = vrot.slane %v3747, %v3753
        %v3756 = vunpack.c.l.s4 1983009808
        %v3757 = vunpack.c.0.s8 %v3756
        %v3758 = vlaneseq
        %v3759 = vshrl.u32 %v3758, 7
        %v3760 = vsub.s32 %v3757, %v3759
        %v3761 = vrot.slane %v3663, %v3760
        %v3762 = vcombine.low %v3754, %v3761
        %v3763 = vcombine.low %v3664, %v3665
        %v3765 = vunpack.c.l.s4 1983009808
        %v3766 = vunpack.c.0.s8 %v3765
        %v3767 = vlaneseq
        %v3768 = vshrl.u32 %v3767, 7
        %v3769 = vsub.s32 %v3766, %v3768
        %v3770 = vrot.slane %v3763, %v3769
        %v3772 = vunpack.c.l.s4 1983009808
        %v3773 = vunpack.c.0.s8 %v3772
        %v3774 = vlaneseq
        %v3775 = vshrl.u32 %v3774, 7
        %v3776 = vsub.s32 %v3773, %v3775
        %v3777 = vrot.slane %v3666, %v3776
        %v3778 = vcombine.low %v3770, %v3777
        %v3779 = vcombine.low %v3667, %v3668
        %v3781 = vunpack.c.l.s4 1983009808
        %v3782 = vunpack.c.0.s8 %v3781
        %v3783 = vlaneseq
        %v3784 = vshrl.u32 %v3783, 7
        %v3785 = vsub.s32 %v3782, %v3784
        %v3786 = vrot.slane %v3779, %v3785
        %v3788 = vunpack.c.l.s4 1983009808
        %v3789 = vunpack.c.0.s8 %v3788
        %v3790 = vlaneseq
        %v3791 = vshrl.u32 %v3790, 7
        %v3792 = vsub.s32 %v3789, %v3791
        %v3793 = vrot.slane %v3669, %v3792
        %v3794 = vcombine.low %v3786, %v3793
        %v3795 = vcombine.low %v3670, %v3671
        %v3797 = vunpack.c.l.s4 1983009808
        %v3798 = vunpack.c.0.s8 %v3797
        %v3799 = vlaneseq
        %v3800 = vshrl.u32 %v3799, 7
        %v3801 = vsub.s32 %v3798, %v3800
        %v3802 = vrot.slane %v3795, %v3801
        %v3804 = vunpack.c.l.s4 1983009808
        %v3805 = vunpack.c.0.s8 %v3804
        %v3806 = vlaneseq
        %v3807 = vshrl.u32 %v3806, 7
        %v3808 = vsub.s32 %v3805, %v3807
        %v3809 = vrot.slane %v3672, %v3808
        %v3810 = vcombine.low %v3802, %v3809
        %v3811 = vcombine.low %v3673, %v3674
        %v3813 = vunpack.c.l.s4 1983009808
        %v3814 = vunpack.c.0.s8 %v3813
        %v3815 = vlaneseq
        %v3816 = vshrl.u32 %v3815, 7
        %v3817 = vsub.s32 %v3814, %v3816
        %v3818 = vrot.slane %v3811, %v3817
        %v3820 = vunpack.c.l.s4 1983009808
        %v3821 = vunpack.c.0.s8 %v3820
        %v3822 = vlaneseq
        %v3823 = vshrl.u32 %v3822, 7
        %v3824 = vsub.s32 %v3821, %v3823
        %v3825 = vrot.slane %v3675, %v3824
        %v3826 = vcombine.low %v3818, %v3825
        %v3827 = vcombine.low %v3676, %v3677
        %v3829 = vunpack.c.l.s4 1983009808
        %v3830 = vunpack.c.0.s8 %v3829
        %v3831 = vlaneseq
        %v3832 = vshrl.u32 %v3831, 7
        %v3833 = vsub.s32 %v3830, %v3832
        %v3834 = vrot.slane %v3827, %v3833
        %v3836 = vunpack.c.l.s4 1983009808
        %v3837 = vunpack.c.0.s8 %v3836
        %v3838 = vlaneseq
        %v3839 = vshrl.u32 %v3838, 7
        %v3840 = vsub.s32 %v3837, %v3839
        %v3841 = vrot.slane %v3678, %v3840
        %v3842 = vcombine.low %v3834, %v3841
        %v3843 = vcombine.low %v3679, %v3680
        %v3845 = vunpack.c.l.s4 1983009808
        %v3846 = vunpack.c.0.s8 %v3845
        %v3847 = vlaneseq
        %v3848 = vshrl.u32 %v3847, 7
        %v3849 = vsub.s32 %v3846, %v3848
        %v3850 = vrot.slane %v3843, %v3849
        %v3852 = vunpack.c.l.s4 1983009808
        %v3853 = vunpack.c.0.s8 %v3852
        %v3854 = vlaneseq
        %v3855 = vshrl.u32 %v3854, 7
        %v3856 = vsub.s32 %v3853, %v3855
        %v3857 = vrot.slane %v3681, %v3856
        %v3858 = vcombine.low %v3850, %v3857
        %v3859 = vcombine.low %v3682, %v3683
        %v3861 = vunpack.c.l.s4 1983009808
        %v3862 = vunpack.c.0.s8 %v3861
        %v3863 = vlaneseq
        %v3864 = vshrl.u32 %v3863, 7
        %v3865 = vsub.s32 %v3862, %v3864
        %v3866 = vrot.slane %v3859, %v3865
        %v3868 = vunpack.c.l.s4 1983009808
        %v3869 = vunpack.c.0.s8 %v3868
        %v3870 = vlaneseq
        %v3871 = vshrl.u32 %v3870, 7
        %v3872 = vsub.s32 %v3869, %v3871
        %v3873 = vrot.slane %v3684, %v3872
        %v3874 = vcombine.low %v3866, %v3873
        %v3885 = vld [vmem:[#allocation7] sm:$0x77]
        %v3886 = vld [vmem:[#allocation7 + $0x8] sm:$0x7]
        %v3889 = vlaneseq
        %v3890 = vshrl.u32 %v3889, 7
        %v3891 = vsub.s32 0, %v3890
        %v3892 = vrot.slane %v3885, %v3891
        %v3893 = vlaneseq
        %v3894 = vshrl.u32 %v3893, 7
        %v3895 = vsub.s32 4, %v3894
        %v3896 = vrot.slane %v3885, %v3895
        %v3897 = vlaneseq
        %v3898 = vshrl.u32 %v3897, 7
        %v3899 = vsub.s32 0, %v3898
        %v3900 = vrot.slane %v3886, %v3899
        %v3904 = vlaneseq
        %v3905 = vshrl.u32 %v3904, 7
        %v3906 = vsub.s32 0, %v3905
        %v3907 = vrot.slane %v3892, %v3906
        %v3908 = vlaneseq
        %v3909 = vshrl.u32 %v3908, 7
        %v3910 = vsub.s32 0, %v3909
        %v3911 = vrot.slane %v3896, %v3910
        %v3912 = vlaneseq
        %v3913 = vshrl.u32 %v3912, 7
        %v3914 = vsub.s32 0, %v3913
        %v3915 = vrot.slane %v3900, %v3914
        %v3919 = vcombine.low %v3907, %v3911
        %v3920 = vcombine.high %v3907, %v3911
        %v3921 = vcombine.high %v3915, %v3915
        %v3923 = vunpack.c.l.s4 1983009808
        %v3924 = vunpack.c.0.s8 %v3923
        %v3925 = vlaneseq
        %v3926 = vshrl.u32 %v3925, 7
        %v3927 = vsub.s32 %v3924, %v3926
        %v3928 = vrot.slane %v3919, %v3927
        %v3930 = vunpack.c.l.s4 1983009808
        %v3931 = vunpack.c.0.s8 %v3930
        %v3932 = vlaneseq
        %v3933 = vshrl.u32 %v3932, 7
        %v3934 = vsub.s32 %v3931, %v3933
        %v3935 = vrot.slane %v3920, %v3934
        %v3937 = vunpack.c.l.s4 1983009808
        %v3938 = vunpack.c.0.s8 %v3937
        %v3939 = vlaneseq
        %v3940 = vshrl.u32 %v3939, 7
        %v3941 = vsub.s32 %v3938, %v3940
        %v3942 = vrot.slane %v3915, %v3941
        %v3944 = vunpack.c.l.s4 1983009808
        %v3945 = vunpack.c.0.s8 %v3944
        %v3946 = vlaneseq
        %v3947 = vshrl.u32 %v3946, 7
        %v3948 = vsub.s32 %v3945, %v3947
        %v3949 = vrot.slane %v3921, %v3948
        %v3950 = vcombine.low %v3928, %v3942
        %v3951 = vcombine.high %v3928, %v3942
        %v3952 = vcombine.low %v3935, %v3949
        %v3953 = vcombine.high %v3935, %v3949
        %v3958 = vadd.f32 %v3730, %v3950
        %v3959 = vadd.f32 %v3746, %v3951
        %v3960 = vadd.f32 %v3762, %v3952
        %v3961 = vadd.f32 %v3778, %v3953
        %v3962 = vadd.f32 %v3794, %v3950
        %v3963 = vadd.f32 %v3810, %v3951
        %v3964 = vadd.f32 %v3826, %v3952
        %v3965 = vadd.f32 %v3842, %v3953
        %v3966 = vadd.f32 %v3858, %v3950
        %v3967 = vadd.f32 %v3874, %v3951
        %vm3968 = vcmp.ge.f32.partialorder %v3958, 0.0
        %vm3969 = vcmp.ge.f32.partialorder %v3959, 0.0
        %vm3970 = vcmp.ge.f32.partialorder %v3960, 0.0
        %vm3971 = vcmp.ge.f32.partialorder %v3961, 0.0
        %vm3972 = vcmp.ge.f32.partialorder %v3962, 0.0
        %vm3973 = vcmp.ge.f32.partialorder %v3963, 0.0
        %vm3974 = vcmp.ge.f32.partialorder %v3964, 0.0
        %vm3975 = vcmp.ge.f32.partialorder %v3965, 0.0
        %vm3976 = vcmp.ge.f32.partialorder %v3966, 0.0
        %vm3977 = vcmp.ge.f32.partialorder %v3967, 0.0
        %v3978 = vmul.f32 %v3958, 0.3
        %v3979 = vmul.f32 %v3959, 0.3
        %v3980 = vmul.f32 %v3960, 0.3
        %v3981 = vmul.f32 %v3961, 0.3
        %v3982 = vmul.f32 %v3962, 0.3
        %v3983 = vmul.f32 %v3963, 0.3
        %v3984 = vmul.f32 %v3964, 0.3
        %v3985 = vmul.f32 %v3965, 0.3
        %v3986 = vmul.f32 %v3966, 0.3
        %v3987 = vmul.f32 %v3967, 0.3
        %v3988 = vsel %vm3968, %v3958, %v3978
        %v3989 = vsel %vm3969, %v3959, %v3979
        %v3990 = vsel %vm3970, %v3960, %v3980
        %v3991 = vsel %vm3971, %v3961, %v3981
        %v3992 = vsel %vm3972, %v3962, %v3982
        %v3993 = vsel %vm3973, %v3963, %v3983
        %v3994 = vsel %vm3974, %v3964, %v3984
        %v3995 = vsel %vm3975, %v3965, %v3985
        %v3996 = vsel %vm3976, %v3966, %v3986
        %v3997 = vsel %vm3977, %v3967, %v3987
        %v3998 = vlaneseq
        %v3999 = vshrl.u32 %v3998, 7
        %v4000 = vsub.s32 1, %v3999
        %v4001 = vrot.slane %v3885, %v4000
        %v4002 = vlaneseq
        %v4003 = vshrl.u32 %v4002, 7
        %v4004 = vsub.s32 5, %v4003
        %v4005 = vrot.slane %v3885, %v4004
        %v4006 = vlaneseq
        %v4007 = vshrl.u32 %v4006, 7
        %v4008 = vsub.s32 1, %v4007
        %v4009 = vrot.slane %v3886, %v4008
        %v4013 = vlaneseq
        %v4014 = vshrl.u32 %v4013, 7
        %v4015 = vsub.s32 1, %v4014
        %v4016 = vrot.slane %v4001, %v4015
        %v4017 = vlaneseq
        %v4018 = vshrl.u32 %v4017, 7
        %v4019 = vsub.s32 1, %v4018
        %v4020 = vrot.slane %v4005, %v4019
        %v4021 = vlaneseq
        %v4022 = vshrl.u32 %v4021, 7
        %v4023 = vsub.s32 1, %v4022
        %v4024 = vrot.slane %v4009, %v4023
        %v4028 = vcombine.low %v4016, %v4020
        %v4029 = vcombine.high %v4016, %v4020
        %v4030 = vcombine.high %v4024, %v4024
        %v4032 = vunpack.c.l.s4 1983009808
        %v4033 = vunpack.c.0.s8 %v4032
        %v4034 = vlaneseq
        %v4035 = vshrl.u32 %v4034, 7
        %v4036 = vsub.s32 %v4033, %v4035
        %v4037 = vrot.slane %v4028, %v4036
        %v4039 = vunpack.c.l.s4 1983009808
        %v4040 = vunpack.c.0.s8 %v4039
        %v4041 = vlaneseq
        %v4042 = vshrl.u32 %v4041, 7
        %v4043 = vsub.s32 %v4040, %v4042
        %v4044 = vrot.slane %v4029, %v4043
        %v4046 = vunpack.c.l.s4 1983009808
        %v4047 = vunpack.c.0.s8 %v4046
        %v4048 = vlaneseq
        %v4049 = vshrl.u32 %v4048, 7
        %v4050 = vsub.s32 %v4047, %v4049
        %v4051 = vrot.slane %v4024, %v4050
        %v4053 = vunpack.c.l.s4 1983009808
        %v4054 = vunpack.c.0.s8 %v4053
        %v4055 = vlaneseq
        %v4056 = vshrl.u32 %v4055, 7
        %v4057 = vsub.s32 %v4054, %v4056
        %v4058 = vrot.slane %v4030, %v4057
        %v4059 = vcombine.low %v4037, %v4051
        %v4060 = vcombine.high %v4037, %v4051
        %v4061 = vcombine.low %v4044, %v4058
        %v4062 = vcombine.high %v4044, %v4058
        %v4067 = vmul.f32 %v3988, %v4059
        %v4068 = vmul.f32 %v3989, %v4060
        %v4069 = vmul.f32 %v3990, %v4061
        %v4070 = vmul.f32 %v3991, %v4062
        %v4071 = vmul.f32 %v3992, %v4059
        %v4072 = vmul.f32 %v3993, %v4060
        %v4073 = vmul.f32 %v3994, %v4061
        %v4074 = vmul.f32 %v3995, %v4062
        %v4075 = vmul.f32 %v3996, %v4059
        %v4076 = vmul.f32 %v3997, %v4060
        %v4077 = vlaneseq
        %v4078 = vshrl.u32 %v4077, 7
        %v4079 = vsub.s32 2, %v4078
        %v4080 = vrot.slane %v3885, %v4079
        %v4081 = vlaneseq
        %v4082 = vshrl.u32 %v4081, 7
        %v4083 = vsub.s32 6, %v4082
        %v4084 = vrot.slane %v3885, %v4083
        %v4085 = vlaneseq
        %v4086 = vshrl.u32 %v4085, 7
        %v4087 = vsub.s32 2, %v4086
        %v4088 = vrot.slane %v3886, %v4087
        %v4092 = vlaneseq
        %v4093 = vshrl.u32 %v4092, 7
        %v4094 = vsub.s32 2, %v4093
        %v4095 = vrot.slane %v4080, %v4094
        %v4096 = vlaneseq
        %v4097 = vshrl.u32 %v4096, 7
        %v4098 = vsub.s32 2, %v4097
        %v4099 = vrot.slane %v4084, %v4098
        %v4100 = vlaneseq
        %v4101 = vshrl.u32 %v4100, 7
        %v4102 = vsub.s32 2, %v4101
        %v4103 = vrot.slane %v4088, %v4102
        %v4107 = vcombine.low %v4095, %v4099
        %v4108 = vcombine.high %v4095, %v4099
        %v4109 = vcombine.high %v4103, %v4103
        %v4111 = vunpack.c.l.s4 1983009808
        %v4112 = vunpack.c.0.s8 %v4111
        %v4113 = vlaneseq
        %v4114 = vshrl.u32 %v4113, 7
        %v4115 = vsub.s32 %v4112, %v4114
        %v4116 = vrot.slane %v4107, %v4115
        %v4118 = vunpack.c.l.s4 1983009808
        %v4119 = vunpack.c.0.s8 %v4118
        %v4120 = vlaneseq
        %v4121 = vshrl.u32 %v4120, 7
        %v4122 = vsub.s32 %v4119, %v4121
        %v4123 = vrot.slane %v4108, %v4122
        %v4125 = vunpack.c.l.s4 1983009808
        %v4126 = vunpack.c.0.s8 %v4125
        %v4127 = vlaneseq
        %v4128 = vshrl.u32 %v4127, 7
        %v4129 = vsub.s32 %v4126, %v4128
        %v4130 = vrot.slane %v4103, %v4129
        %v4132 = vunpack.c.l.s4 1983009808
        %v4133 = vunpack.c.0.s8 %v4132
        %v4134 = vlaneseq
        %v4135 = vshrl.u32 %v4134, 7
        %v4136 = vsub.s32 %v4133, %v4135
        %v4137 = vrot.slane %v4109, %v4136
        %v4138 = vcombine.low %v4116, %v4130
        %v4139 = vcombine.high %v4116, %v4130
        %v4140 = vcombine.low %v4123, %v4137
        %v4141 = vcombine.high %v4123, %v4137
        %v4146 = vadd.f32 %v4067, %v4138
        %v4147 = vadd.f32 %v4068, %v4139
        %v4148 = vadd.f32 %v4069, %v4140
        %v4149 = vadd.f32 %v4070, %v4141
        %v4150 = vadd.f32 %v4071, %v4138
        %v4151 = vadd.f32 %v4072, %v4139
        %v4152 = vadd.f32 %v4073, %v4140
        %v4153 = vadd.f32 %v4074, %v4141
        %v4154 = vadd.f32 %v4075, %v4138
        %v4155 = vadd.f32 %v4076, %v4139
        %v4156 = vld [vmem:[#allocation9] sm:$0xff]
        %v4157 = vld [vmem:[#allocation9 + $0x8] sm:$0xff]
        %v4158 = vld [vmem:[#allocation9 + $0x10] sm:$0xff]
        %v4159 = vld [vmem:[#allocation9 + $0x18] sm:$0xff]
        %v4160 = vld [vmem:[#allocation9 + $0x20] sm:$0xff]
        %v4161 = vld [vmem:[#allocation9 + $0x28] sm:$0xff]
        %v4162 = vld [vmem:[#allocation9 + $0x30] sm:$0xff]
        %v4163 = vld [vmem:[#allocation9 + $0x38] sm:$0xff]
        %v4164 = vld [vmem:[#allocation9 + $0x40] sm:$0xff]
        %v4165 = vld [vmem:[#allocation9 + $0x48] sm:$0xff]
        %v4166 = vld [vmem:[#allocation9 + $0x50] sm:$0xff]
        %v4167 = vld [vmem:[#allocation9 + $0x58] sm:$0xff]
        %v4168 = vld [vmem:[#allocation9 + $0x60] sm:$0xff]
        %v4169 = vld [vmem:[#allocation9 + $0x68] sm:$0xff]
        %v4170 = vld [vmem:[#allocation9 + $0x70] sm:$0xff]
        %v4171 = vld [vmem:[#allocation9 + $0x78] sm:$0xff]
        %v4172 = vld [vmem:[#allocation9 + $0x80] sm:$0xff]
        %v4173 = vld [vmem:[#allocation9 + $0x88] sm:$0xff]
        %v4174 = vld [vmem:[#allocation9 + $0x90] sm:$0xff]
        %v4175 = vld [vmem:[#allocation9 + $0x98] sm:$0xff]
        %v4176 = vld [vmem:[#allocation9 + $0xa0] sm:$0xff]
        %v4177 = vld [vmem:[#allocation9 + $0xa8] sm:$0xff]
        %v4178 = vld [vmem:[#allocation9 + $0xb0] sm:$0xff]
        %v4179 = vld [vmem:[#allocation9 + $0xb8] sm:$0xff]
        %v4180 = vld [vmem:[#allocation9 + $0xc0] sm:$0xff]
        %v4181 = vld [vmem:[#allocation9 + $0xc8] sm:$0xff]
        %v4182 = vld [vmem:[#allocation9 + $0xd0] sm:$0xff]
        %v4183 = vld [vmem:[#allocation9 + $0xd8] sm:$0xff]
        %v4184 = vld [vmem:[#allocation9 + $0xe0] sm:$0xff]
        %v4185 = vld [vmem:[#allocation9 + $0xe8] sm:$0xff]
        %v4186 = vld [vmem:[#allocation9 + $0xf0] sm:$0xff]
        %v4187 = vld [vmem:[#allocation9 + $0xf8] sm:$0xff]
        %v4188 = vld [vmem:[#allocation9 + $0x100] sm:$0xff]
        %v4189 = vld [vmem:[#allocation9 + $0x108] sm:$0xff]
        %v4190 = vld [vmem:[#allocation9 + $0x110] sm:$0xff]
        %v4191 = vld [vmem:[#allocation9 + $0x118] sm:$0xff]
        %v4192 = vld [vmem:[#allocation9 + $0x120] sm:$0xff]
        %v4193 = vld [vmem:[#allocation9 + $0x128] sm:$0xff]
        %v4194 = vld [vmem:[#allocation9 + $0x130] sm:$0xff]
        %v4195 = vld [vmem:[#allocation9 + $0x138] sm:$0xff]
        %v4196 = vld [vmem:[#allocation9 + $0x140] sm:$0xff]
        %v4197 = vld [vmem:[#allocation9 + $0x148] sm:$0xff]
        %v4198 = vld [vmem:[#allocation9 + $0x150] sm:$0xff]
        %v4199 = vld [vmem:[#allocation9 + $0x158] sm:$0xff]
        %v4200 = vld [vmem:[#allocation9 + $0x160] sm:$0xff]
        %v4201 = vld [vmem:[#allocation9 + $0x168] sm:$0xff]
        %v4202 = vld [vmem:[#allocation9 + $0x170] sm:$0xff]
        %v4203 = vld [vmem:[#allocation9 + $0x178] sm:$0xff]
        %v4204 = vld [vmem:[#allocation9 + $0x180] sm:$0xff]
        %v4205 = vld [vmem:[#allocation9 + $0x188] sm:$0xff]
        %v4206 = vld [vmem:[#allocation9 + $0x190] sm:$0xff]
        %v4207 = vld [vmem:[#allocation9 + $0x198] sm:$0xff]
        %v4208 = vld [vmem:[#allocation9 + $0x1a0] sm:$0xff]
        %v4209 = vld [vmem:[#allocation9 + $0x1a8] sm:$0xff]
        %v4210 = vld [vmem:[#allocation9 + $0x1b0] sm:$0xff]
        %v4211 = vld [vmem:[#allocation9 + $0x1b8] sm:$0xff]
        %v4212 = vld [vmem:[#allocation9 + $0x1c0] sm:$0xff]
        %v4213 = vld [vmem:[#allocation9 + $0x1c8] sm:$0xff]
        %v4214 = vld [vmem:[#allocation9 + $0x1d0] sm:$0xff]
        %v4215 = vld [vmem:[#allocation9 + $0x1d8] sm:$0xff]
        %v4216 = vld [vmem:[#allocation9 + $0x1e0] sm:$0xff]
        %v4217 = vld [vmem:[#allocation9 + $0x1e8] sm:$0xff]
        %v4218 = vld [vmem:[#allocation9 + $0x1f0] sm:$0xff]
        %v4219 = vld [vmem:[#allocation9 + $0x1f8] sm:$0xff]
        %v4220 = vld [vmem:[#allocation9 + $0x200] sm:$0xff]
        %v4221 = vld [vmem:[#allocation9 + $0x208] sm:$0xff]
        %v4222 = vld [vmem:[#allocation9 + $0x210] sm:$0xff]
        %v4223 = vld [vmem:[#allocation9 + $0x218] sm:$0xff]
        %v4224 = vld [vmem:[#allocation9 + $0x220] sm:$0xff]
        %v4225 = vld [vmem:[#allocation9 + $0x228] sm:$0xff]
        %v4226 = vld [vmem:[#allocation9 + $0x230] sm:$0xff]
        %v4227 = vld [vmem:[#allocation9 + $0x238] sm:$0xff]
        %v4228 = vld [vmem:[#allocation9 + $0x240] sm:$0xff]
        %v4229 = vld [vmem:[#allocation9 + $0x248] sm:$0xff]
        %v4230 = vld [vmem:[#allocation9 + $0x250] sm:$0xff]
        %v4231 = vld [vmem:[#allocation9 + $0x258] sm:$0xff]
        %v4232 = vld [vmem:[#allocation9 + $0x260] sm:$0xff]
        %v4233 = vld [vmem:[#allocation9 + $0x268] sm:$0xff]
        %v4234 = vld [vmem:[#allocation9 + $0x270] sm:$0xff]
        %v4235 = vld [vmem:[#allocation9 + $0x278] sm:$0xff]
        %v4236 = vld [vmem:[#allocation9 + $0x280] sm:$0xff]
        %v4237 = vld [vmem:[#allocation9 + $0x288] sm:$0xff]
        %v4238 = vld [vmem:[#allocation9 + $0x290] sm:$0xff]
        %v4239 = vld [vmem:[#allocation9 + $0x298] sm:$0xff]
        %v4240 = vld [vmem:[#allocation9 + $0x2a0] sm:$0xff]
        %v4241 = vld [vmem:[#allocation9 + $0x2a8] sm:$0xff]
        %v4242 = vld [vmem:[#allocation9 + $0x2b0] sm:$0xff]
        %v4243 = vld [vmem:[#allocation9 + $0x2b8] sm:$0xff]
        %v4244 = vld [vmem:[#allocation9 + $0x2c0] sm:$0xff]
        %v4245 = vld [vmem:[#allocation9 + $0x2c8] sm:$0xff]
        %v4246 = vld [vmem:[#allocation9 + $0x2d0] sm:$0xff]
        %v4247 = vld [vmem:[#allocation9 + $0x2d8] sm:$0xff]
        %v4248 = vld [vmem:[#allocation9 + $0x2e0] sm:$0xff]
        %v4249 = vld [vmem:[#allocation9 + $0x2e8] sm:$0xff]
        %v4250 = vld [vmem:[#allocation9 + $0x2f0] sm:$0xff]
        %v4251 = vld [vmem:[#allocation9 + $0x2f8] sm:$0xff]
        %v4252 = vld [vmem:[#allocation9 + $0x300] sm:$0xff]
        %v4253 = vld [vmem:[#allocation9 + $0x308] sm:$0xff]
        %v4254 = vld [vmem:[#allocation9 + $0x310] sm:$0xff]
        %v4255 = vld [vmem:[#allocation9 + $0x318] sm:$0xff]
        %v4256 = vld [vmem:[#allocation9 + $0x320] sm:$0xff]
        %v4257 = vld [vmem:[#allocation9 + $0x328] sm:$0xff]
        %v4258 = vld [vmem:[#allocation9 + $0x330] sm:$0xff]
        %v4259 = vld [vmem:[#allocation9 + $0x338] sm:$0xff]
        %v4260 = vld [vmem:[#allocation9 + $0x340] sm:$0xff]
        %v4261 = vld [vmem:[#allocation9 + $0x348] sm:$0xff]
        %v4262 = vld [vmem:[#allocation9 + $0x350] sm:$0xff]
        %v4263 = vld [vmem:[#allocation9 + $0x358] sm:$0xff]
        %v4264 = vld [vmem:[#allocation9 + $0x360] sm:$0xff]
        %v4265 = vld [vmem:[#allocation9 + $0x368] sm:$0xff]
        %v4266 = vld [vmem:[#allocation9 + $0x370] sm:$0xff]
        %v4267 = vld [vmem:[#allocation9 + $0x378] sm:$0xff]
        %v4268 = vld [vmem:[#allocation9 + $0x380] sm:$0xff]
        %v4269 = vld [vmem:[#allocation9 + $0x388] sm:$0xff]
        %v4280 = vcombine.low %v4146, %v4147
        %v4281 = vcombine.high %v4146, %v4147
        %v4282 = vcombine.low %v4148, %v4149
        %v4283 = vcombine.high %v4148, %v4149
        %v4285 = vunpack.c.l.s4 1983009808
        %v4286 = vunpack.c.0.s8 %v4285
        %v4287 = vlaneseq
        %v4288 = vshrl.u32 %v4287, 7
        %v4289 = vsub.s32 %v4286, %v4288
        %v4290 = vrot.slane %v4280, %v4289
        %v4292 = vunpack.c.l.s4 1983009808
        %v4293 = vunpack.c.0.s8 %v4292
        %v4294 = vlaneseq
        %v4295 = vshrl.u32 %v4294, 7
        %v4296 = vsub.s32 %v4293, %v4295
        %v4297 = vrot.slane %v4281, %v4296
        %v4299 = vunpack.c.l.s4 1983009808
        %v4300 = vunpack.c.0.s8 %v4299
        %v4301 = vlaneseq
        %v4302 = vshrl.u32 %v4301, 7
        %v4303 = vsub.s32 %v4300, %v4302
        %v4304 = vrot.slane %v4282, %v4303
        %v4306 = vunpack.c.l.s4 1983009808
        %v4307 = vunpack.c.0.s8 %v4306
        %v4308 = vlaneseq
        %v4309 = vshrl.u32 %v4308, 7
        %v4310 = vsub.s32 %v4307, %v4309
        %v4311 = vrot.slane %v4283, %v4310
        %v4312 = vcombine.low %v4290, %v4304
        %v4313 = vcombine.high %v4290, %v4304
        %v4314 = vcombine.low %v4297, %v4311
        %v4315 = vcombine.low %v4150, %v4151
        %v4316 = vcombine.high %v4150, %v4151
        %v4317 = vcombine.low %v4152, %v4153
        %v4318 = vcombine.high %v4152, %v4153
        %v4320 = vunpack.c.l.s4 1983009808
        %v4321 = vunpack.c.0.s8 %v4320
        %v4322 = vlaneseq
        %v4323 = vshrl.u32 %v4322, 7
        %v4324 = vsub.s32 %v4321, %v4323
        %v4325 = vrot.slane %v4315, %v4324
        %v4327 = vunpack.c.l.s4 1983009808
        %v4328 = vunpack.c.0.s8 %v4327
        %v4329 = vlaneseq
        %v4330 = vshrl.u32 %v4329, 7
        %v4331 = vsub.s32 %v4328, %v4330
        %v4332 = vrot.slane %v4316, %v4331
        %v4334 = vunpack.c.l.s4 1983009808
        %v4335 = vunpack.c.0.s8 %v4334
        %v4336 = vlaneseq
        %v4337 = vshrl.u32 %v4336, 7
        %v4338 = vsub.s32 %v4335, %v4337
        %v4339 = vrot.slane %v4317, %v4338
        %v4341 = vunpack.c.l.s4 1983009808
        %v4342 = vunpack.c.0.s8 %v4341
        %v4343 = vlaneseq
        %v4344 = vshrl.u32 %v4343, 7
        %v4345 = vsub.s32 %v4342, %v4344
        %v4346 = vrot.slane %v4318, %v4345
        %v4347 = vcombine.low %v4325, %v4339
        %v4348 = vcombine.high %v4325, %v4339
        %v4349 = vcombine.low %v4332, %v4346
        %v4350 = vcombine.low %v4154, %v4155
        %v4351 = vcombine.high %v4154, %v4155
        %v4353 = vunpack.c.l.s4 1983009808
        %v4354 = vunpack.c.0.s8 %v4353
        %v4355 = vlaneseq
        %v4356 = vshrl.u32 %v4355, 7
        %v4357 = vsub.s32 %v4354, %v4356
        %v4358 = vrot.slane %v4350, %v4357
        %v4360 = vunpack.c.l.s4 1983009808
        %v4361 = vunpack.c.0.s8 %v4360
        %v4362 = vlaneseq
        %v4363 = vshrl.u32 %v4362, 7
        %v4364 = vsub.s32 %v4361, %v4363
        %v4365 = vrot.slane %v4351, %v4364
        %v4366 = vcombine.high %v4358, %v4358
        %vm4373 = vcmask 392192
        %v4374 = vsel %vm4373, %v4314, 0
        %v4376 = vsel %vm4373, %v4349, 0
        %v4378 = vsel %vm4373, %v4365, 0
        %4380 = vmatprep.subr.mxu0 %v4202
        %4381 = vmatpush1.msra.mxu0 %v4201
        %4382 = vmatprep.subr.mxu0 %v4199
        %4383 = vmatpush1.msra.mxu0 %v4198
        %4384 = vmatprep.subr.mxu0 %v4196
        %4385 = vmatpush1.msra.mxu0 %v4195
        %4386 = vmatprep.subr.mxu0 %v4193
        %4387 = vmatpush1.msra.mxu0 %v4192
        %4388 = vmatprep.subr.mxu0 %v4190
        %4389 = vmatpush1.msra.mxu0 %v4189
        %4390 = vmatprep.subr.mxu0 %v4187
        %4391 = vmatpush1.msra.mxu0 %v4186
        %4392 = vmatprep.subr.mxu0 %v4184
        %4393 = vmatpush1.msra.mxu0 %v4183
        %4394 = vmatprep.subr.mxu0 %v4181
        %4395 = vmatpush1.msra.mxu0 %v4180
        %4396 = vmatprep.subr.mxu0 %v4178
        %4397 = vmatpush1.msra.mxu0 %v4177
        %4398 = vmatprep.subr.mxu0 %v4175
        %4399 = vmatpush1.msra.mxu0 %v4174
        %4400 = vmatprep.subr.mxu0 %v4172
        %4401 = vmatpush1.msra.mxu0 %v4171
        %4402 = vmatprep.subr.mxu0 %v4169
        %4403 = vmatpush1.msra.mxu0 %v4168
        %4404 = vmatprep.subr.mxu0 %v4166
        %4405 = vmatpush1.msra.mxu0 %v4165
        %4406 = vmatprep.subr.mxu0 %v4163
        %4407 = vmatpush1.msra.mxu0 %v4162
        %4408 = vmatprep.subr.mxu0 %v4160
        %4409 = vmatpush1.msra.mxu0 %v4159
        %4410 = vmatprep.subr.mxu0 %v4157
        %4411 = vmatpush1.msra.mxu0 %v4156
        %4412 = vmatprep.subr.mxu0 %v4250
        %4413 = vmatpush2.msra.mxu0 %v4249
        %4414 = vmatprep.subr.mxu0 %v4247
        %4415 = vmatpush2.msra.mxu0 %v4246
        %4416 = vmatprep.subr.mxu0 %v4244
        %4417 = vmatpush2.msra.mxu0 %v4243
        %4418 = vmatprep.subr.mxu0 %v4241
        %4419 = vmatpush2.msra.mxu0 %v4240
        %4420 = vmatprep.subr.mxu0 %v4238
        %4421 = vmatpush2.msra.mxu0 %v4237
        %4422 = vmatprep.subr.mxu0 %v4235
        %4423 = vmatpush2.msra.mxu0 %v4234
        %4424 = vmatprep.subr.mxu0 %v4232
        %4425 = vmatpush2.msra.mxu0 %v4231
        %4426 = vmatprep.subr.mxu0 %v4229
        %4427 = vmatpush2.msra.mxu0 %v4228
        %4428 = vmatprep.subr.mxu0 %v4226
        %4429 = vmatpush2.msra.mxu0 %v4225
        %4430 = vmatprep.subr.mxu0 %v4223
        %4431 = vmatpush2.msra.mxu0 %v4222
        %4432 = vmatprep.subr.mxu0 %v4220
        %4433 = vmatpush2.msra.mxu0 %v4219
        %4434 = vmatprep.subr.mxu0 %v4217
        %4435 = vmatpush2.msra.mxu0 %v4216
        %4436 = vmatprep.subr.mxu0 %v4214
        %4437 = vmatpush2.msra.mxu0 %v4213
        %4438 = vmatprep.subr.mxu0 %v4211
        %4439 = vmatpush2.msra.mxu0 %v4210
        %4440 = vmatprep.subr.mxu0 %v4208
        %4441 = vmatpush2.msra.mxu0 %v4207
        %4442 = vmatprep.subr.mxu0 %v4205
        %4443 = vmatpush2.msra.mxu0 %v4204
        %4444 = vmatprep.mubr.f32.mxu0 %v4313
        %4445 = vmatmul.mubr.f32.gmra.mxu0 %v4312
        %v4446 = vpop.f32.mrf.mxu0
        %v4447 = vadd.f32 0.0, %v4446
        %v4448 = vpop.f32.mrf.mxu0
        %v4449 = vadd.f32 0.0, %v4448
        %4450 = vmatprep.mubr.f32.mxu0 %v4348
        %4451 = vmatmul.mubr.f32.gmra.mxu0 %v4347
        %v4452 = vpop.f32.mrf.mxu0
        %v4453 = vadd.f32 0.0, %v4452
        %v4454 = vpop.f32.mrf.mxu0
        %v4455 = vadd.f32 0.0, %v4454
        %4456 = vmatprep.mubr.f32.mxu0 %v4366
        %4457 = vmatmul.mubr.f32.gmra.mxu0 %v4358
        %v4458 = vpop.f32.mrf.mxu0
        %v4459 = vadd.f32 0.0, %v4458
        %v4460 = vpop.f32.mrf.mxu0
        %v4461 = vadd.f32 0.0, %v4460
        %4462 = vdwg.mxu0
        %4463 = vmatprep.subr.mxu0 0.0
        %4464 = vmatpush1.msra.mxu0 0.0
        %4465 = vmatprep.subr.mxu0 0.0
        %4466 = vmatpush1.msra.mxu0 0.0
        %4467 = vmatprep.subr.mxu0 0.0
        %4468 = vmatpush1.msra.mxu0 0.0
        %4469 = vmatprep.subr.mxu0 0.0
        %4470 = vmatpush1.msra.mxu0 0.0
        %4471 = vmatprep.subr.mxu0 0.0
        %4472 = vmatpush1.msra.mxu0 0.0
        %4473 = vmatprep.subr.mxu0 0.0
        %4474 = vmatpush1.msra.mxu0 0.0
        %4475 = vmatprep.subr.mxu0 0.0
        %4476 = vmatpush1.msra.mxu0 0.0
        %4477 = vmatprep.subr.mxu0 0.0
        %4478 = vmatpush1.msra.mxu0 0.0
        %4479 = vmatprep.subr.mxu0 0.0
        %4480 = vmatpush1.msra.mxu0 0.0
        %4481 = vmatprep.subr.mxu0 0.0
        %4482 = vmatpush1.msra.mxu0 0.0
        %4483 = vmatprep.subr.mxu0 %v4268
        %4484 = vmatpush1.msra.mxu0 %v4267
        %4485 = vmatprep.subr.mxu0 %v4265
        %4486 = vmatpush1.msra.mxu0 %v4264
        %4487 = vmatprep.subr.mxu0 %v4262
        %4488 = vmatpush1.msra.mxu0 %v4261
        %4489 = vmatprep.subr.mxu0 %v4259
        %4490 = vmatpush1.msra.mxu0 %v4258
        %4491 = vmatprep.subr.mxu0 %v4256
        %4492 = vmatpush1.msra.mxu0 %v4255
        %4493 = vmatprep.subr.mxu0 %v4253
        %4494 = vmatpush1.msra.mxu0 %v4252
        %4495 = vmatprep.subr.mxu0 0.0
        %4496 = vmatpush2.msra.mxu0 0.0
        %4497 = vmatprep.subr.mxu0 0.0
        %4498 = vmatpush2.msra.mxu0 0.0
        %4499 = vmatprep.subr.mxu0 0.0
        %4500 = vmatpush2.msra.mxu0 0.0
        %4501 = vmatprep.subr.mxu0 0.0
        %4502 = vmatpush2.msra.mxu0 0.0
        %4503 = vmatprep.subr.mxu0 0.0
        %4504 = vmatpush2.msra.mxu0 0.0
        %4505 = vmatprep.subr.mxu0 0.0
        %4506 = vmatpush2.msra.mxu0 0.0
        %4507 = vmatprep.subr.mxu0 0.0
        %4508 = vmatpush2.msra.mxu0 0.0
        %4509 = vmatprep.subr.mxu0 0.0
        %4510 = vmatpush2.msra.mxu0 0.0
        %4511 = vmatprep.subr.mxu0 0.0
        %4512 = vmatpush2.msra.mxu0 0.0
        %4513 = vmatprep.subr.mxu0 0.0
        %4514 = vmatpush2.msra.mxu0 0.0
        %4515 = vmatprep.subr.mxu0 0.0
        %4516 = vmatpush2.msra.mxu0 0.0
        %4517 = vmatprep.subr.mxu0 0.0
        %4518 = vmatpush2.msra.mxu0 0.0
        %4519 = vmatprep.subr.mxu0 0.0
        %4520 = vmatpush2.msra.mxu0 0.0
        %4521 = vmatprep.subr.mxu0 0.0
        %4522 = vmatpush2.msra.mxu0 0.0
        %4523 = vmatprep.subr.mxu0 0.0
        %4524 = vmatpush2.msra.mxu0 0.0
        %4525 = vmatprep.subr.mxu0 0.0
        %4526 = vmatpush2.msra.mxu0 0.0
        %4527 = vmatprep.mubr.f32.mxu0 0.0
        %4528 = vmatmul.mubr.f32.gmra.mxu0 %v4374
        %v4529 = vpop.f32.mrf.mxu0
        %v4530 = vadd.f32 %v4447, %v4529
        %v4531 = vpop.f32.mrf.mxu0
        %v4532 = vadd.f32 %v4449, %v4531
        %4533 = vmatprep.mubr.f32.mxu0 0.0
        %4534 = vmatmul.mubr.f32.gmra.mxu0 %v4376
        %v4535 = vpop.f32.mrf.mxu0
        %v4536 = vadd.f32 %v4453, %v4535
        %v4537 = vpop.f32.mrf.mxu0
        %v4538 = vadd.f32 %v4455, %v4537
        %4539 = vmatprep.mubr.f32.mxu0 0.0
        %4540 = vmatmul.mubr.f32.gmra.mxu0 %v4378
        %v4541 = vpop.f32.mrf.mxu0
        %v4542 = vadd.f32 %v4459, %v4541
        %v4543 = vpop.f32.mrf.mxu0
        %v4544 = vadd.f32 %v4461, %v4543
        %4545 = vdwg.mxu0
        %4546 = vmatprep.subr.mxu0 0.0
        %4547 = vmatpush1.msra.mxu0 %v4203
        %4548 = vmatprep.subr.mxu0 0.0
        %4549 = vmatpush1.msra.mxu0 %v4200
        %4550 = vmatprep.subr.mxu0 0.0
        %4551 = vmatpush1.msra.mxu0 %v4197
        %4552 = vmatprep.subr.mxu0 0.0
        %4553 = vmatpush1.msra.mxu0 %v4194
        %4554 = vmatprep.subr.mxu0 0.0
        %4555 = vmatpush1.msra.mxu0 %v4191
        %4556 = vmatprep.subr.mxu0 0.0
        %4557 = vmatpush1.msra.mxu0 %v4188
        %4558 = vmatprep.subr.mxu0 0.0
        %4559 = vmatpush1.msra.mxu0 %v4185
        %4560 = vmatprep.subr.mxu0 0.0
        %4561 = vmatpush1.msra.mxu0 %v4182
        %4562 = vmatprep.subr.mxu0 0.0
        %4563 = vmatpush1.msra.mxu0 %v4179
        %4564 = vmatprep.subr.mxu0 0.0
        %4565 = vmatpush1.msra.mxu0 %v4176
        %4566 = vmatprep.subr.mxu0 0.0
        %4567 = vmatpush1.msra.mxu0 %v4173
        %4568 = vmatprep.subr.mxu0 0.0
        %4569 = vmatpush1.msra.mxu0 %v4170
        %4570 = vmatprep.subr.mxu0 0.0
        %4571 = vmatpush1.msra.mxu0 %v4167
        %4572 = vmatprep.subr.mxu0 0.0
        %4573 = vmatpush1.msra.mxu0 %v4164
        %4574 = vmatprep.subr.mxu0 0.0
        %4575 = vmatpush1.msra.mxu0 %v4161
        %4576 = vmatprep.subr.mxu0 0.0
        %4577 = vmatpush1.msra.mxu0 %v4158
        %4578 = vmatprep.subr.mxu0 0.0
        %4579 = vmatpush2.msra.mxu0 %v4251
        %4580 = vmatprep.subr.mxu0 0.0
        %4581 = vmatpush2.msra.mxu0 %v4248
        %4582 = vmatprep.subr.mxu0 0.0
        %4583 = vmatpush2.msra.mxu0 %v4245
        %4584 = vmatprep.subr.mxu0 0.0
        %4585 = vmatpush2.msra.mxu0 %v4242
        %4586 = vmatprep.subr.mxu0 0.0
        %4587 = vmatpush2.msra.mxu0 %v4239
        %4588 = vmatprep.subr.mxu0 0.0
        %4589 = vmatpush2.msra.mxu0 %v4236
        %4590 = vmatprep.subr.mxu0 0.0
        %4591 = vmatpush2.msra.mxu0 %v4233
        %4592 = vmatprep.subr.mxu0 0.0
        %4593 = vmatpush2.msra.mxu0 %v4230
        %4594 = vmatprep.subr.mxu0 0.0
        %4595 = vmatpush2.msra.mxu0 %v4227
        %4596 = vmatprep.subr.mxu0 0.0
        %4597 = vmatpush2.msra.mxu0 %v4224
        %4598 = vmatprep.subr.mxu0 0.0
        %4599 = vmatpush2.msra.mxu0 %v4221
        %4600 = vmatprep.subr.mxu0 0.0
        %4601 = vmatpush2.msra.mxu0 %v4218
        %4602 = vmatprep.subr.mxu0 0.0
        %4603 = vmatpush2.msra.mxu0 %v4215
        %4604 = vmatprep.subr.mxu0 0.0
        %4605 = vmatpush2.msra.mxu0 %v4212
        %4606 = vmatprep.subr.mxu0 0.0
        %4607 = vmatpush2.msra.mxu0 %v4209
        %4608 = vmatprep.subr.mxu0 0.0
        %4609 = vmatpush2.msra.mxu0 %v4206
        %4610 = vmatprep.mubr.f32.mxu0 %v4313
        %4611 = vmatmul.mubr.f32.gmra.mxu0 %v4312
        %v4612 = vpop.f32.mrf.mxu0
        %v4613 = vadd.f32 0.0, %v4612
        %v4614 = vpop.f32.mrf.mxu0
        %4615 = vmatprep.mubr.f32.mxu0 %v4348
        %4616 = vmatmul.mubr.f32.gmra.mxu0 %v4347
        %v4617 = vpop.f32.mrf.mxu0
        %v4618 = vadd.f32 0.0, %v4617
        %v4619 = vpop.f32.mrf.mxu0
        %4620 = vmatprep.mubr.f32.mxu0 %v4366
        %4621 = vmatmul.mubr.f32.gmra.mxu0 %v4358
        %v4622 = vpop.f32.mrf.mxu0
        %v4623 = vadd.f32 0.0, %v4622
        %v4624 = vpop.f32.mrf.mxu0
        %4625 = vdwg.mxu0
        %4626 = vmatprep.subr.mxu0 0.0
        %4627 = vmatpush1.msra.mxu0 0.0
        %4628 = vmatprep.subr.mxu0 0.0
        %4629 = vmatpush1.msra.mxu0 0.0
        %4630 = vmatprep.subr.mxu0 0.0
        %4631 = vmatpush1.msra.mxu0 0.0
        %4632 = vmatprep.subr.mxu0 0.0
        %4633 = vmatpush1.msra.mxu0 0.0
        %4634 = vmatprep.subr.mxu0 0.0
        %4635 = vmatpush1.msra.mxu0 0.0
        %4636 = vmatprep.subr.mxu0 0.0
        %4637 = vmatpush1.msra.mxu0 0.0
        %4638 = vmatprep.subr.mxu0 0.0
        %4639 = vmatpush1.msra.mxu0 0.0
        %4640 = vmatprep.subr.mxu0 0.0
        %4641 = vmatpush1.msra.mxu0 0.0
        %4642 = vmatprep.subr.mxu0 0.0
        %4643 = vmatpush1.msra.mxu0 0.0
        %4644 = vmatprep.subr.mxu0 0.0
        %4645 = vmatpush1.msra.mxu0 0.0
        %4646 = vmatprep.subr.mxu0 0.0
        %4647 = vmatpush1.msra.mxu0 %v4269
        %4648 = vmatprep.subr.mxu0 0.0
        %4649 = vmatpush1.msra.mxu0 %v4266
        %4650 = vmatprep.subr.mxu0 0.0
        %4651 = vmatpush1.msra.mxu0 %v4263
        %4652 = vmatprep.subr.mxu0 0.0
        %4653 = vmatpush1.msra.mxu0 %v4260
        %4654 = vmatprep.subr.mxu0 0.0
        %4655 = vmatpush1.msra.mxu0 %v4257
        %4656 = vmatprep.subr.mxu0 0.0
        %4657 = vmatpush1.msra.mxu0 %v4254
        %4658 = vmatprep.subr.mxu0 0.0
        %4659 = vmatpush2.msra.mxu0 0.0
        %4660 = vmatprep.subr.mxu0 0.0
        %4661 = vmatpush2.msra.mxu0 0.0
        %4662 = vmatprep.subr.mxu0 0.0
        %4663 = vmatpush2.msra.mxu0 0.0
        %4664 = vmatprep.subr.mxu0 0.0
        %4665 = vmatpush2.msra.mxu0 0.0
        %4666 = vmatprep.subr.mxu0 0.0
        %4667 = vmatpush2.msra.mxu0 0.0
        %4668 = vmatprep.subr.mxu0 0.0
        %4669 = vmatpush2.msra.mxu0 0.0
        %4670 = vmatprep.subr.mxu0 0.0
        %4671 = vmatpush2.msra.mxu0 0.0
        %4672 = vmatprep.subr.mxu0 0.0
        %4673 = vmatpush2.msra.mxu0 0.0
        %4674 = vmatprep.subr.mxu0 0.0
        %4675 = vmatpush2.msra.mxu0 0.0
        %4676 = vmatprep.subr.mxu0 0.0
        %4677 = vmatpush2.msra.mxu0 0.0
        %4678 = vmatprep.subr.mxu0 0.0
        %4679 = vmatpush2.msra.mxu0 0.0
        %4680 = vmatprep.subr.mxu0 0.0
        %4681 = vmatpush2.msra.mxu0 0.0
        %4682 = vmatprep.subr.mxu0 0.0
        %4683 = vmatpush2.msra.mxu0 0.0
        %4684 = vmatprep.subr.mxu0 0.0
        %4685 = vmatpush2.msra.mxu0 0.0
        %4686 = vmatprep.subr.mxu0 0.0
        %4687 = vmatpush2.msra.mxu0 0.0
        %4688 = vmatprep.subr.mxu0 0.0
        %4689 = vmatpush2.msra.mxu0 0.0
        %4690 = vmatprep.mubr.f32.mxu0 0.0
        %4691 = vmatmul.mubr.f32.gmra.mxu0 %v4374
        %v4692 = vpop.f32.mrf.mxu0
        %v4693 = vadd.f32 %v4613, %v4692
        %v4694 = vpop.f32.mrf.mxu0
        %4695 = vmatprep.mubr.f32.mxu0 0.0
        %4696 = vmatmul.mubr.f32.gmra.mxu0 %v4376
        %v4697 = vpop.f32.mrf.mxu0
        %v4698 = vadd.f32 %v4618, %v4697
        %v4699 = vpop.f32.mrf.mxu0
        %4700 = vmatprep.mubr.f32.mxu0 0.0
        %4701 = vmatmul.mubr.f32.gmra.mxu0 %v4378
        %v4702 = vpop.f32.mrf.mxu0
        %v4703 = vadd.f32 %v4623, %v4702
        %v4704 = vpop.f32.mrf.mxu0
        %4705 = vdwg.mxu0
        %s4706 = scalar_lea.vmem [#allocation9], 912
        %v4707 = vld [vmem:[%s4706] sm:$0xff]
        %v4708 = vld [vmem:[%s4706 + $0x8] sm:$0xff]
        %v4709 = vld [vmem:[%s4706 + $0x10] sm:$0xff]
        %v4710 = vld [vmem:[%s4706 + $0x18] sm:$0xff]
        %v4711 = vld [vmem:[%s4706 + $0x20] sm:$0xff]
        %v4712 = vld [vmem:[%s4706 + $0x28] sm:$0xff]
        %v4713 = vld [vmem:[%s4706 + $0x30] sm:$0xff]
        %v4714 = vld [vmem:[%s4706 + $0x38] sm:$0xff]
        %v4715 = vld [vmem:[%s4706 + $0x40] sm:$0xff]
        %v4716 = vld [vmem:[%s4706 + $0x48] sm:$0xff]
        %v4717 = vld [vmem:[%s4706 + $0x50] sm:$0xff]
        %v4718 = vld [vmem:[%s4706 + $0x58] sm:$0xff]
        %v4719 = vld [vmem:[%s4706 + $0x60] sm:$0xff]
        %v4720 = vld [vmem:[%s4706 + $0x68] sm:$0xff]
        %v4721 = vld [vmem:[%s4706 + $0x70] sm:$0xff]
        %v4722 = vld [vmem:[%s4706 + $0x78] sm:$0xff]
        %v4723 = vld [vmem:[%s4706 + $0x80] sm:$0xff]
        %v4724 = vld [vmem:[%s4706 + $0x88] sm:$0xff]
        %v4725 = vld [vmem:[%s4706 + $0x90] sm:$0xff]
        %v4726 = vld [vmem:[%s4706 + $0x98] sm:$0xff]
        %v4727 = vld [vmem:[%s4706 + $0xa0] sm:$0xff]
        %v4728 = vld [vmem:[%s4706 + $0xa8] sm:$0xff]
        %v4729 = vld [vmem:[%s4706 + $0xb0] sm:$0xff]
        %v4730 = vld [vmem:[%s4706 + $0xb8] sm:$0xff]
        %v4731 = vld [vmem:[%s4706 + $0xc0] sm:$0xff]
        %v4732 = vld [vmem:[%s4706 + $0xc8] sm:$0xff]
        %v4733 = vld [vmem:[%s4706 + $0xd0] sm:$0xff]
        %v4734 = vld [vmem:[%s4706 + $0xd8] sm:$0xff]
        %v4735 = vld [vmem:[%s4706 + $0xe0] sm:$0xff]
        %v4736 = vld [vmem:[%s4706 + $0xe8] sm:$0xff]
        %v4737 = vld [vmem:[%s4706 + $0xf0] sm:$0xff]
        %v4738 = vld [vmem:[%s4706 + $0xf8] sm:$0xff]
        %v4739 = vld [vmem:[%s4706 + $0x100] sm:$0xff]
        %v4740 = vld [vmem:[%s4706 + $0x108] sm:$0xff]
        %v4741 = vld [vmem:[%s4706 + $0x110] sm:$0xff]
        %v4742 = vld [vmem:[%s4706 + $0x118] sm:$0xff]
        %v4743 = vld [vmem:[%s4706 + $0x120] sm:$0xff]
        %v4744 = vld [vmem:[%s4706 + $0x128] sm:$0xff]
        %v4745 = vld [vmem:[%s4706 + $0x130] sm:$0xff]
        %v4746 = vld [vmem:[%s4706 + $0x138] sm:$0xff]
        %v4747 = vld [vmem:[%s4706 + $0x140] sm:$0xff]
        %v4748 = vld [vmem:[%s4706 + $0x148] sm:$0xff]
        %v4749 = vld [vmem:[%s4706 + $0x150] sm:$0xff]
        %v4750 = vld [vmem:[%s4706 + $0x158] sm:$0xff]
        %v4751 = vld [vmem:[%s4706 + $0x160] sm:$0xff]
        %v4752 = vld [vmem:[%s4706 + $0x168] sm:$0xff]
        %v4753 = vld [vmem:[%s4706 + $0x170] sm:$0xff]
        %v4754 = vld [vmem:[%s4706 + $0x178] sm:$0xff]
        %v4755 = vld [vmem:[%s4706 + $0x180] sm:$0xff]
        %v4756 = vld [vmem:[%s4706 + $0x188] sm:$0xff]
        %v4757 = vld [vmem:[%s4706 + $0x190] sm:$0xff]
        %v4758 = vld [vmem:[%s4706 + $0x198] sm:$0xff]
        %v4759 = vld [vmem:[%s4706 + $0x1a0] sm:$0xff]
        %v4760 = vld [vmem:[%s4706 + $0x1a8] sm:$0xff]
        %v4761 = vld [vmem:[%s4706 + $0x1b0] sm:$0xff]
        %v4762 = vld [vmem:[%s4706 + $0x1b8] sm:$0xff]
        %v4763 = vld [vmem:[%s4706 + $0x1c0] sm:$0xff]
        %v4764 = vld [vmem:[%s4706 + $0x1c8] sm:$0xff]
        %v4765 = vld [vmem:[%s4706 + $0x1d0] sm:$0xff]
        %v4766 = vld [vmem:[%s4706 + $0x1d8] sm:$0xff]
        %v4767 = vld [vmem:[%s4706 + $0x1e0] sm:$0xff]
        %v4768 = vld [vmem:[%s4706 + $0x1e8] sm:$0xff]
        %v4769 = vld [vmem:[%s4706 + $0x1f0] sm:$0xff]
        %v4770 = vld [vmem:[%s4706 + $0x1f8] sm:$0xff]
        %v4771 = vld [vmem:[%s4706 + $0x200] sm:$0xff]
        %v4772 = vld [vmem:[%s4706 + $0x208] sm:$0xff]
        %v4773 = vld [vmem:[%s4706 + $0x210] sm:$0xff]
        %v4774 = vld [vmem:[%s4706 + $0x218] sm:$0xff]
        %v4775 = vld [vmem:[%s4706 + $0x220] sm:$0xff]
        %v4776 = vld [vmem:[%s4706 + $0x228] sm:$0xff]
        %v4777 = vld [vmem:[%s4706 + $0x230] sm:$0xff]
        %v4778 = vld [vmem:[%s4706 + $0x238] sm:$0xff]
        %v4779 = vld [vmem:[%s4706 + $0x240] sm:$0xff]
        %v4780 = vld [vmem:[%s4706 + $0x248] sm:$0xff]
        %v4781 = vld [vmem:[%s4706 + $0x250] sm:$0xff]
        %v4782 = vld [vmem:[%s4706 + $0x258] sm:$0xff]
        %v4783 = vld [vmem:[%s4706 + $0x260] sm:$0xff]
        %v4784 = vld [vmem:[%s4706 + $0x268] sm:$0xff]
        %v4785 = vld [vmem:[%s4706 + $0x270] sm:$0xff]
        %v4786 = vld [vmem:[%s4706 + $0x278] sm:$0xff]
        %v4787 = vld [vmem:[%s4706 + $0x280] sm:$0xff]
        %v4788 = vld [vmem:[%s4706 + $0x288] sm:$0xff]
        %v4789 = vld [vmem:[%s4706 + $0x290] sm:$0xff]
        %v4790 = vld [vmem:[%s4706 + $0x298] sm:$0xff]
        %v4791 = vld [vmem:[%s4706 + $0x2a0] sm:$0xff]
        %v4792 = vld [vmem:[%s4706 + $0x2a8] sm:$0xff]
        %v4793 = vld [vmem:[%s4706 + $0x2b0] sm:$0xff]
        %v4794 = vld [vmem:[%s4706 + $0x2b8] sm:$0xff]
        %v4795 = vld [vmem:[%s4706 + $0x2c0] sm:$0xff]
        %v4796 = vld [vmem:[%s4706 + $0x2c8] sm:$0xff]
        %v4797 = vld [vmem:[%s4706 + $0x2d0] sm:$0xff]
        %v4798 = vld [vmem:[%s4706 + $0x2d8] sm:$0xff]
        %v4799 = vld [vmem:[%s4706 + $0x2e0] sm:$0xff]
        %v4800 = vld [vmem:[%s4706 + $0x2e8] sm:$0xff]
        %v4801 = vld [vmem:[%s4706 + $0x2f0] sm:$0xff]
        %v4802 = vld [vmem:[%s4706 + $0x2f8] sm:$0xff]
        %v4803 = vld [vmem:[%s4706 + $0x300] sm:$0xff]
        %v4804 = vld [vmem:[%s4706 + $0x308] sm:$0xff]
        %v4805 = vld [vmem:[%s4706 + $0x310] sm:$0xff]
        %v4806 = vld [vmem:[%s4706 + $0x318] sm:$0xff]
        %v4807 = vld [vmem:[%s4706 + $0x320] sm:$0xff]
        %v4808 = vld [vmem:[%s4706 + $0x328] sm:$0xff]
        %v4809 = vld [vmem:[%s4706 + $0x330] sm:$0xff]
        %v4810 = vld [vmem:[%s4706 + $0x338] sm:$0xff]
        %v4811 = vld [vmem:[%s4706 + $0x340] sm:$0xff]
        %v4812 = vld [vmem:[%s4706 + $0x348] sm:$0xff]
        %v4813 = vld [vmem:[%s4706 + $0x350] sm:$0xff]
        %v4814 = vld [vmem:[%s4706 + $0x358] sm:$0xff]
        %v4815 = vld [vmem:[%s4706 + $0x360] sm:$0xff]
        %v4816 = vld [vmem:[%s4706 + $0x368] sm:$0xff]
        %v4817 = vld [vmem:[%s4706 + $0x370] sm:$0xff]
        %v4818 = vld [vmem:[%s4706 + $0x378] sm:$0xff]
        %v4819 = vld [vmem:[%s4706 + $0x380] sm:$0xff]
        %v4820 = vld [vmem:[%s4706 + $0x388] sm:$0xff]
        %4821 = vmatprep.subr.mxu0 %v4753
        %4822 = vmatpush1.msra.mxu0 %v4752
        %4823 = vmatprep.subr.mxu0 %v4750
        %4824 = vmatpush1.msra.mxu0 %v4749
        %4825 = vmatprep.subr.mxu0 %v4747
        %4826 = vmatpush1.msra.mxu0 %v4746
        %4827 = vmatprep.subr.mxu0 %v4744
        %4828 = vmatpush1.msra.mxu0 %v4743
        %4829 = vmatprep.subr.mxu0 %v4741
        %4830 = vmatpush1.msra.mxu0 %v4740
        %4831 = vmatprep.subr.mxu0 %v4738
        %4832 = vmatpush1.msra.mxu0 %v4737
        %4833 = vmatprep.subr.mxu0 %v4735
        %4834 = vmatpush1.msra.mxu0 %v4734
        %4835 = vmatprep.subr.mxu0 %v4732
        %4836 = vmatpush1.msra.mxu0 %v4731
        %4837 = vmatprep.subr.mxu0 %v4729
        %4838 = vmatpush1.msra.mxu0 %v4728
        %4839 = vmatprep.subr.mxu0 %v4726
        %4840 = vmatpush1.msra.mxu0 %v4725
        %4841 = vmatprep.subr.mxu0 %v4723
        %4842 = vmatpush1.msra.mxu0 %v4722
        %4843 = vmatprep.subr.mxu0 %v4720
        %4844 = vmatpush1.msra.mxu0 %v4719
        %4845 = vmatprep.subr.mxu0 %v4717
        %4846 = vmatpush1.msra.mxu0 %v4716
        %4847 = vmatprep.subr.mxu0 %v4714
        %4848 = vmatpush1.msra.mxu0 %v4713
        %4849 = vmatprep.subr.mxu0 %v4711
        %4850 = vmatpush1.msra.mxu0 %v4710
        %4851 = vmatprep.subr.mxu0 %v4708
        %4852 = vmatpush1.msra.mxu0 %v4707
        %4853 = vmatprep.subr.mxu0 %v4801
        %4854 = vmatpush2.msra.mxu0 %v4800
        %4855 = vmatprep.subr.mxu0 %v4798
        %4856 = vmatpush2.msra.mxu0 %v4797
        %4857 = vmatprep.subr.mxu0 %v4795
        %4858 = vmatpush2.msra.mxu0 %v4794
        %4859 = vmatprep.subr.mxu0 %v4792
        %4860 = vmatpush2.msra.mxu0 %v4791
        %4861 = vmatprep.subr.mxu0 %v4789
        %4862 = vmatpush2.msra.mxu0 %v4788
        %4863 = vmatprep.subr.mxu0 %v4786
        %4864 = vmatpush2.msra.mxu0 %v4785
        %4865 = vmatprep.subr.mxu0 %v4783
        %4866 = vmatpush2.msra.mxu0 %v4782
        %4867 = vmatprep.subr.mxu0 %v4780
        %4868 = vmatpush2.msra.mxu0 %v4779
        %4869 = vmatprep.subr.mxu0 %v4777
        %4870 = vmatpush2.msra.mxu0 %v4776
        %4871 = vmatprep.subr.mxu0 %v4774
        %4872 = vmatpush2.msra.mxu0 %v4773
        %4873 = vmatprep.subr.mxu0 %v4771
        %4874 = vmatpush2.msra.mxu0 %v4770
        %4875 = vmatprep.subr.mxu0 %v4768
        %4876 = vmatpush2.msra.mxu0 %v4767
        %4877 = vmatprep.subr.mxu0 %v4765
        %4878 = vmatpush2.msra.mxu0 %v4764
        %4879 = vmatprep.subr.mxu0 %v4762
        %4880 = vmatpush2.msra.mxu0 %v4761
        %4881 = vmatprep.subr.mxu0 %v4759
        %4882 = vmatpush2.msra.mxu0 %v4758
        %4883 = vmatprep.subr.mxu0 %v4756
        %4884 = vmatpush2.msra.mxu0 %v4755
        %4885 = vmatprep.mubr.f32.mxu0 %v4313
        %4886 = vmatmul.mubr.f32.gmra.mxu0 %v4312
        %v4887 = vpop.f32.mrf.mxu0
        %v4888 = vadd.f32 0.0, %v4887
        %v4889 = vpop.f32.mrf.mxu0
        %v4890 = vadd.f32 0.0, %v4889
        %4891 = vmatprep.mubr.f32.mxu0 %v4348
        %4892 = vmatmul.mubr.f32.gmra.mxu0 %v4347
        %v4893 = vpop.f32.mrf.mxu0
        %v4894 = vadd.f32 0.0, %v4893
        %v4895 = vpop.f32.mrf.mxu0
        %v4896 = vadd.f32 0.0, %v4895
        %4897 = vmatprep.mubr.f32.mxu0 %v4366
        %4898 = vmatmul.mubr.f32.gmra.mxu0 %v4358
        %v4899 = vpop.f32.mrf.mxu0
        %v4900 = vadd.f32 0.0, %v4899
        %v4901 = vpop.f32.mrf.mxu0
        %v4902 = vadd.f32 0.0, %v4901
        %4903 = vdwg.mxu0
        %4904 = vmatprep.subr.mxu0 0.0
        %4905 = vmatpush1.msra.mxu0 0.0
        %4906 = vmatprep.subr.mxu0 0.0
        %4907 = vmatpush1.msra.mxu0 0.0
        %4908 = vmatprep.subr.mxu0 0.0
        %4909 = vmatpush1.msra.mxu0 0.0
        %4910 = vmatprep.subr.mxu0 0.0
        %4911 = vmatpush1.msra.mxu0 0.0
        %4912 = vmatprep.subr.mxu0 0.0
        %4913 = vmatpush1.msra.mxu0 0.0
        %4914 = vmatprep.subr.mxu0 0.0
        %4915 = vmatpush1.msra.mxu0 0.0
        %4916 = vmatprep.subr.mxu0 0.0
        %4917 = vmatpush1.msra.mxu0 0.0
        %4918 = vmatprep.subr.mxu0 0.0
        %4919 = vmatpush1.msra.mxu0 0.0
        %4920 = vmatprep.subr.mxu0 0.0
        %4921 = vmatpush1.msra.mxu0 0.0
        %4922 = vmatprep.subr.mxu0 0.0
        %4923 = vmatpush1.msra.mxu0 0.0
        %4924 = vmatprep.subr.mxu0 %v4819
        %4925 = vmatpush1.msra.mxu0 %v4818
        %4926 = vmatprep.subr.mxu0 %v4816
        %4927 = vmatpush1.msra.mxu0 %v4815
        %4928 = vmatprep.subr.mxu0 %v4813
        %4929 = vmatpush1.msra.mxu0 %v4812
        %4930 = vmatprep.subr.mxu0 %v4810
        %4931 = vmatpush1.msra.mxu0 %v4809
        %4932 = vmatprep.subr.mxu0 %v4807
        %4933 = vmatpush1.msra.mxu0 %v4806
        %4934 = vmatprep.subr.mxu0 %v4804
        %4935 = vmatpush1.msra.mxu0 %v4803
        %4936 = vmatprep.subr.mxu0 0.0
        %4937 = vmatpush2.msra.mxu0 0.0
        %4938 = vmatprep.subr.mxu0 0.0
        %4939 = vmatpush2.msra.mxu0 0.0
        %4940 = vmatprep.subr.mxu0 0.0
        %4941 = vmatpush2.msra.mxu0 0.0
        %4942 = vmatprep.subr.mxu0 0.0
        %4943 = vmatpush2.msra.mxu0 0.0
        %4944 = vmatprep.subr.mxu0 0.0
        %4945 = vmatpush2.msra.mxu0 0.0
        %4946 = vmatprep.subr.mxu0 0.0
        %4947 = vmatpush2.msra.mxu0 0.0
        %4948 = vmatprep.subr.mxu0 0.0
        %4949 = vmatpush2.msra.mxu0 0.0
        %4950 = vmatprep.subr.mxu0 0.0
        %4951 = vmatpush2.msra.mxu0 0.0
        %4952 = vmatprep.subr.mxu0 0.0
        %4953 = vmatpush2.msra.mxu0 0.0
        %4954 = vmatprep.subr.mxu0 0.0
        %4955 = vmatpush2.msra.mxu0 0.0
        %4956 = vmatprep.subr.mxu0 0.0
        %4957 = vmatpush2.msra.mxu0 0.0
        %4958 = vmatprep.subr.mxu0 0.0
        %4959 = vmatpush2.msra.mxu0 0.0
        %4960 = vmatprep.subr.mxu0 0.0
        %4961 = vmatpush2.msra.mxu0 0.0
        %4962 = vmatprep.subr.mxu0 0.0
        %4963 = vmatpush2.msra.mxu0 0.0
        %4964 = vmatprep.subr.mxu0 0.0
        %4965 = vmatpush2.msra.mxu0 0.0
        %4966 = vmatprep.subr.mxu0 0.0
        %4967 = vmatpush2.msra.mxu0 0.0
        %4968 = vmatprep.mubr.f32.mxu0 0.0
        %4969 = vmatmul.mubr.f32.gmra.mxu0 %v4374
        %v4970 = vpop.f32.mrf.mxu0
        %v4971 = vadd.f32 %v4888, %v4970
        %v4972 = vpop.f32.mrf.mxu0
        %v4973 = vadd.f32 %v4890, %v4972
        %4974 = vmatprep.mubr.f32.mxu0 0.0
        %4975 = vmatmul.mubr.f32.gmra.mxu0 %v4376
        %v4976 = vpop.f32.mrf.mxu0
        %v4977 = vadd.f32 %v4894, %v4976
        %v4978 = vpop.f32.mrf.mxu0
        %v4979 = vadd.f32 %v4896, %v4978
        %4980 = vmatprep.mubr.f32.mxu0 0.0
        %4981 = vmatmul.mubr.f32.gmra.mxu0 %v4378
        %v4982 = vpop.f32.mrf.mxu0
        %v4983 = vadd.f32 %v4900, %v4982
        %v4984 = vpop.f32.mrf.mxu0
        %v4985 = vadd.f32 %v4902, %v4984
        %4986 = vdwg.mxu0
        %4987 = vmatprep.subr.mxu0 0.0
        %4988 = vmatpush1.msra.mxu0 %v4754
        %4989 = vmatprep.subr.mxu0 0.0
        %4990 = vmatpush1.msra.mxu0 %v4751
        %4991 = vmatprep.subr.mxu0 0.0
        %4992 = vmatpush1.msra.mxu0 %v4748
        %4993 = vmatprep.subr.mxu0 0.0
        %4994 = vmatpush1.msra.mxu0 %v4745
        %4995 = vmatprep.subr.mxu0 0.0
        %4996 = vmatpush1.msra.mxu0 %v4742
        %4997 = vmatprep.subr.mxu0 0.0
        %4998 = vmatpush1.msra.mxu0 %v4739
        %4999 = vmatprep.subr.mxu0 0.0
        %5000 = vmatpush1.msra.mxu0 %v4736
        %5001 = vmatprep.subr.mxu0 0.0
        %5002 = vmatpush1.msra.mxu0 %v4733
        %5003 = vmatprep.subr.mxu0 0.0
        %5004 = vmatpush1.msra.mxu0 %v4730
        %5005 = vmatprep.subr.mxu0 0.0
        %5006 = vmatpush1.msra.mxu0 %v4727
        %5007 = vmatprep.subr.mxu0 0.0
        %5008 = vmatpush1.msra.mxu0 %v4724
        %5009 = vmatprep.subr.mxu0 0.0
        %5010 = vmatpush1.msra.mxu0 %v4721
        %5011 = vmatprep.subr.mxu0 0.0
        %5012 = vmatpush1.msra.mxu0 %v4718
        %5013 = vmatprep.subr.mxu0 0.0
        %5014 = vmatpush1.msra.mxu0 %v4715
        %5015 = vmatprep.subr.mxu0 0.0
        %5016 = vmatpush1.msra.mxu0 %v4712
        %5017 = vmatprep.subr.mxu0 0.0
        %5018 = vmatpush1.msra.mxu0 %v4709
        %5019 = vmatprep.subr.mxu0 0.0
        %5020 = vmatpush2.msra.mxu0 %v4802
        %5021 = vmatprep.subr.mxu0 0.0
        %5022 = vmatpush2.msra.mxu0 %v4799
        %5023 = vmatprep.subr.mxu0 0.0
        %5024 = vmatpush2.msra.mxu0 %v4796
        %5025 = vmatprep.subr.mxu0 0.0
        %5026 = vmatpush2.msra.mxu0 %v4793
        %5027 = vmatprep.subr.mxu0 0.0
        %5028 = vmatpush2.msra.mxu0 %v4790
        %5029 = vmatprep.subr.mxu0 0.0
        %5030 = vmatpush2.msra.mxu0 %v4787
        %5031 = vmatprep.subr.mxu0 0.0
        %5032 = vmatpush2.msra.mxu0 %v4784
        %5033 = vmatprep.subr.mxu0 0.0
        %5034 = vmatpush2.msra.mxu0 %v4781
        %5035 = vmatprep.subr.mxu0 0.0
        %5036 = vmatpush2.msra.mxu0 %v4778
        %5037 = vmatprep.subr.mxu0 0.0
        %5038 = vmatpush2.msra.mxu0 %v4775
        %5039 = vmatprep.subr.mxu0 0.0
        %5040 = vmatpush2.msra.mxu0 %v4772
        %5041 = vmatprep.subr.mxu0 0.0
        %5042 = vmatpush2.msra.mxu0 %v4769
        %5043 = vmatprep.subr.mxu0 0.0
        %5044 = vmatpush2.msra.mxu0 %v4766
        %5045 = vmatprep.subr.mxu0 0.0
        %5046 = vmatpush2.msra.mxu0 %v4763
        %5047 = vmatprep.subr.mxu0 0.0
        %5048 = vmatpush2.msra.mxu0 %v4760
        %5049 = vmatprep.subr.mxu0 0.0
        %5050 = vmatpush2.msra.mxu0 %v4757
        %5051 = vmatprep.mubr.f32.mxu0 %v4313
        %5052 = vmatmul.mubr.f32.gmra.mxu0 %v4312
        %v5053 = vpop.f32.mrf.mxu0
        %v5054 = vadd.f32 0.0, %v5053
        %v5055 = vpop.f32.mrf.mxu0
        %5056 = vmatprep.mubr.f32.mxu0 %v4348
        %5057 = vmatmul.mubr.f32.gmra.mxu0 %v4347
        %v5058 = vpop.f32.mrf.mxu0
        %v5059 = vadd.f32 0.0, %v5058
        %v5060 = vpop.f32.mrf.mxu0
        %5061 = vmatprep.mubr.f32.mxu0 %v4366
        %5062 = vmatmul.mubr.f32.gmra.mxu0 %v4358
        %v5063 = vpop.f32.mrf.mxu0
        %v5064 = vadd.f32 0.0, %v5063
        %v5065 = vpop.f32.mrf.mxu0
        %5066 = vdwg.mxu0
        %5067 = vmatprep.subr.mxu0 0.0
        %5068 = vmatpush1.msra.mxu0 0.0
        %5069 = vmatprep.subr.mxu0 0.0
        %5070 = vmatpush1.msra.mxu0 0.0
        %5071 = vmatprep.subr.mxu0 0.0
        %5072 = vmatpush1.msra.mxu0 0.0
        %5073 = vmatprep.subr.mxu0 0.0
        %5074 = vmatpush1.msra.mxu0 0.0
        %5075 = vmatprep.subr.mxu0 0.0
        %5076 = vmatpush1.msra.mxu0 0.0
        %5077 = vmatprep.subr.mxu0 0.0
        %5078 = vmatpush1.msra.mxu0 0.0
        %5079 = vmatprep.subr.mxu0 0.0
        %5080 = vmatpush1.msra.mxu0 0.0
        %5081 = vmatprep.subr.mxu0 0.0
        %5082 = vmatpush1.msra.mxu0 0.0
        %5083 = vmatprep.subr.mxu0 0.0
        %5084 = vmatpush1.msra.mxu0 0.0
        %5085 = vmatprep.subr.mxu0 0.0
        %5086 = vmatpush1.msra.mxu0 0.0
        %5087 = vmatprep.subr.mxu0 0.0
        %5088 = vmatpush1.msra.mxu0 %v4820
        %5089 = vmatprep.subr.mxu0 0.0
        %5090 = vmatpush1.msra.mxu0 %v4817
        %5091 = vmatprep.subr.mxu0 0.0
        %5092 = vmatpush1.msra.mxu0 %v4814
        %5093 = vmatprep.subr.mxu0 0.0
        %5094 = vmatpush1.msra.mxu0 %v4811
        %5095 = vmatprep.subr.mxu0 0.0
        %5096 = vmatpush1.msra.mxu0 %v4808
        %5097 = vmatprep.subr.mxu0 0.0
        %5098 = vmatpush1.msra.mxu0 %v4805
        %5099 = vmatprep.subr.mxu0 0.0
        %5100 = vmatpush2.msra.mxu0 0.0
        %5101 = vmatprep.subr.mxu0 0.0
        %5102 = vmatpush2.msra.mxu0 0.0
        %5103 = vmatprep.subr.mxu0 0.0
        %5104 = vmatpush2.msra.mxu0 0.0
        %5105 = vmatprep.subr.mxu0 0.0
        %5106 = vmatpush2.msra.mxu0 0.0
        %5107 = vmatprep.subr.mxu0 0.0
        %5108 = vmatpush2.msra.mxu0 0.0
        %5109 = vmatprep.subr.mxu0 0.0
        %5110 = vmatpush2.msra.mxu0 0.0
        %5111 = vmatprep.subr.mxu0 0.0
        %5112 = vmatpush2.msra.mxu0 0.0
        %5113 = vmatprep.subr.mxu0 0.0
        %5114 = vmatpush2.msra.mxu0 0.0
        %5115 = vmatprep.subr.mxu0 0.0
        %5116 = vmatpush2.msra.mxu0 0.0
        %5117 = vmatprep.subr.mxu0 0.0
        %5118 = vmatpush2.msra.mxu0 0.0
        %5119 = vmatprep.subr.mxu0 0.0
        %5120 = vmatpush2.msra.mxu0 0.0
        %5121 = vmatprep.subr.mxu0 0.0
        %5122 = vmatpush2.msra.mxu0 0.0
        %5123 = vmatprep.subr.mxu0 0.0
        %5124 = vmatpush2.msra.mxu0 0.0
        %5125 = vmatprep.subr.mxu0 0.0
        %5126 = vmatpush2.msra.mxu0 0.0
        %5127 = vmatprep.subr.mxu0 0.0
        %5128 = vmatpush2.msra.mxu0 0.0
        %5129 = vmatprep.subr.mxu0 0.0
        %5130 = vmatpush2.msra.mxu0 0.0
        %5131 = vmatprep.mubr.f32.mxu0 0.0
        %5132 = vmatmul.mubr.f32.gmra.mxu0 %v4374
        %v5133 = vpop.f32.mrf.mxu0
        %v5134 = vadd.f32 %v5054, %v5133
        %v5135 = vpop.f32.mrf.mxu0
        %5136 = vmatprep.mubr.f32.mxu0 0.0
        %5137 = vmatmul.mubr.f32.gmra.mxu0 %v4376
        %v5138 = vpop.f32.mrf.mxu0
        %v5139 = vadd.f32 %v5059, %v5138
        %v5140 = vpop.f32.mrf.mxu0
        %5141 = vmatprep.mubr.f32.mxu0 0.0
        %5142 = vmatmul.mubr.f32.gmra.mxu0 %v4378
        %v5143 = vpop.f32.mrf.mxu0
        %v5144 = vadd.f32 %v5064, %v5143
        %v5145 = vpop.f32.mrf.mxu0
        %5146 = vdwg.mxu0
        %s5147 = scalar_lea.vmem [#allocation9], 1824
        %v5148 = vld [vmem:[%s5147] sm:$0xff]
        %v5149 = vld [vmem:[%s5147 + $0x8] sm:$0xff]
        %v5150 = vld [vmem:[%s5147 + $0x10] sm:$0xff]
        %v5151 = vld [vmem:[%s5147 + $0x18] sm:$0xff]
        %v5152 = vld [vmem:[%s5147 + $0x20] sm:$0xff]
        %v5153 = vld [vmem:[%s5147 + $0x28] sm:$0xff]
        %v5154 = vld [vmem:[%s5147 + $0x30] sm:$0xff]
        %v5155 = vld [vmem:[%s5147 + $0x38] sm:$0xff]
        %v5156 = vld [vmem:[%s5147 + $0x40] sm:$0xff]
        %v5157 = vld [vmem:[%s5147 + $0x48] sm:$0xff]
        %v5158 = vld [vmem:[%s5147 + $0x50] sm:$0xff]
        %v5159 = vld [vmem:[%s5147 + $0x58] sm:$0xff]
        %v5160 = vld [vmem:[%s5147 + $0x60] sm:$0xff]
        %v5161 = vld [vmem:[%s5147 + $0x68] sm:$0xff]
        %v5162 = vld [vmem:[%s5147 + $0x70] sm:$0xff]
        %v5163 = vld [vmem:[%s5147 + $0x78] sm:$0xff]
        %v5164 = vld [vmem:[%s5147 + $0x80] sm:$0xff]
        %v5165 = vld [vmem:[%s5147 + $0x88] sm:$0xff]
        %v5166 = vld [vmem:[%s5147 + $0x90] sm:$0xff]
        %v5167 = vld [vmem:[%s5147 + $0x98] sm:$0xff]
        %v5168 = vld [vmem:[%s5147 + $0xa0] sm:$0xff]
        %v5169 = vld [vmem:[%s5147 + $0xa8] sm:$0xff]
        %v5170 = vld [vmem:[%s5147 + $0xb0] sm:$0xff]
        %v5171 = vld [vmem:[%s5147 + $0xb8] sm:$0xff]
        %v5172 = vld [vmem:[%s5147 + $0xc0] sm:$0xff]
        %v5173 = vld [vmem:[%s5147 + $0xc8] sm:$0xff]
        %v5174 = vld [vmem:[%s5147 + $0xd0] sm:$0xff]
        %v5175 = vld [vmem:[%s5147 + $0xd8] sm:$0xff]
        %v5176 = vld [vmem:[%s5147 + $0xe0] sm:$0xff]
        %v5177 = vld [vmem:[%s5147 + $0xe8] sm:$0xff]
        %v5178 = vld [vmem:[%s5147 + $0xf0] sm:$0xff]
        %v5179 = vld [vmem:[%s5147 + $0xf8] sm:$0xff]
        %v5180 = vld [vmem:[%s5147 + $0x100] sm:$0xff]
        %v5181 = vld [vmem:[%s5147 + $0x108] sm:$0xff]
        %v5182 = vld [vmem:[%s5147 + $0x110] sm:$0xff]
        %v5183 = vld [vmem:[%s5147 + $0x118] sm:$0xff]
        %v5184 = vld [vmem:[%s5147 + $0x120] sm:$0xff]
        %v5185 = vld [vmem:[%s5147 + $0x128] sm:$0xff]
        %v5186 = vld [vmem:[%s5147 + $0x130] sm:$0xff]
        %v5187 = vld [vmem:[%s5147 + $0x138] sm:$0xff]
        %v5188 = vld [vmem:[%s5147 + $0x140] sm:$0xff]
        %v5189 = vld [vmem:[%s5147 + $0x148] sm:$0xff]
        %v5190 = vld [vmem:[%s5147 + $0x150] sm:$0xff]
        %v5191 = vld [vmem:[%s5147 + $0x158] sm:$0xff]
        %v5192 = vld [vmem:[%s5147 + $0x160] sm:$0xff]
        %v5193 = vld [vmem:[%s5147 + $0x168] sm:$0xff]
        %v5194 = vld [vmem:[%s5147 + $0x170] sm:$0xff]
        %v5195 = vld [vmem:[%s5147 + $0x178] sm:$0xff]
        %v5196 = vld [vmem:[%s5147 + $0x180] sm:$0xff]
        %v5197 = vld [vmem:[%s5147 + $0x188] sm:$0xff]
        %v5198 = vld [vmem:[%s5147 + $0x190] sm:$0xff]
        %v5199 = vld [vmem:[%s5147 + $0x198] sm:$0xff]
        %v5200 = vld [vmem:[%s5147 + $0x1a0] sm:$0xff]
        %v5201 = vld [vmem:[%s5147 + $0x1a8] sm:$0xff]
        %v5202 = vld [vmem:[%s5147 + $0x1b0] sm:$0xff]
        %v5203 = vld [vmem:[%s5147 + $0x1b8] sm:$0xff]
        %v5204 = vld [vmem:[%s5147 + $0x1c0] sm:$0xff]
        %v5205 = vld [vmem:[%s5147 + $0x1c8] sm:$0xff]
        %v5206 = vld [vmem:[%s5147 + $0x1d0] sm:$0xff]
        %v5207 = vld [vmem:[%s5147 + $0x1d8] sm:$0xff]
        %v5208 = vld [vmem:[%s5147 + $0x1e0] sm:$0xff]
        %v5209 = vld [vmem:[%s5147 + $0x1e8] sm:$0xff]
        %v5210 = vld [vmem:[%s5147 + $0x1f0] sm:$0xff]
        %v5211 = vld [vmem:[%s5147 + $0x1f8] sm:$0xff]
        %v5212 = vld [vmem:[%s5147 + $0x200] sm:$0xff]
        %v5213 = vld [vmem:[%s5147 + $0x208] sm:$0xff]
        %v5214 = vld [vmem:[%s5147 + $0x210] sm:$0xff]
        %v5215 = vld [vmem:[%s5147 + $0x218] sm:$0xff]
        %v5216 = vld [vmem:[%s5147 + $0x220] sm:$0xff]
        %v5217 = vld [vmem:[%s5147 + $0x228] sm:$0xff]
        %v5218 = vld [vmem:[%s5147 + $0x230] sm:$0xff]
        %v5219 = vld [vmem:[%s5147 + $0x238] sm:$0xff]
        %v5220 = vld [vmem:[%s5147 + $0x240] sm:$0xff]
        %v5221 = vld [vmem:[%s5147 + $0x248] sm:$0xff]
        %v5222 = vld [vmem:[%s5147 + $0x250] sm:$0xff]
        %v5223 = vld [vmem:[%s5147 + $0x258] sm:$0xff]
        %v5224 = vld [vmem:[%s5147 + $0x260] sm:$0xff]
        %v5225 = vld [vmem:[%s5147 + $0x268] sm:$0xff]
        %v5226 = vld [vmem:[%s5147 + $0x270] sm:$0xff]
        %v5227 = vld [vmem:[%s5147 + $0x278] sm:$0xff]
        %v5228 = vld [vmem:[%s5147 + $0x280] sm:$0xff]
        %v5229 = vld [vmem:[%s5147 + $0x288] sm:$0xff]
        %v5230 = vld [vmem:[%s5147 + $0x290] sm:$0xff]
        %v5231 = vld [vmem:[%s5147 + $0x298] sm:$0xff]
        %v5232 = vld [vmem:[%s5147 + $0x2a0] sm:$0xff]
        %v5233 = vld [vmem:[%s5147 + $0x2a8] sm:$0xff]
        %v5234 = vld [vmem:[%s5147 + $0x2b0] sm:$0xff]
        %v5235 = vld [vmem:[%s5147 + $0x2b8] sm:$0xff]
        %v5236 = vld [vmem:[%s5147 + $0x2c0] sm:$0xff]
        %v5237 = vld [vmem:[%s5147 + $0x2c8] sm:$0xff]
        %v5238 = vld [vmem:[%s5147 + $0x2d0] sm:$0xff]
        %v5239 = vld [vmem:[%s5147 + $0x2d8] sm:$0xff]
        %v5240 = vld [vmem:[%s5147 + $0x2e0] sm:$0xff]
        %v5241 = vld [vmem:[%s5147 + $0x2e8] sm:$0xff]
        %v5242 = vld [vmem:[%s5147 + $0x2f0] sm:$0xff]
        %v5243 = vld [vmem:[%s5147 + $0x2f8] sm:$0xff]
        %v5244 = vld [vmem:[%s5147 + $0x300] sm:$0xff]
        %v5245 = vld [vmem:[%s5147 + $0x308] sm:$0xff]
        %v5246 = vld [vmem:[%s5147 + $0x310] sm:$0xff]
        %v5247 = vld [vmem:[%s5147 + $0x318] sm:$0xff]
        %v5248 = vld [vmem:[%s5147 + $0x320] sm:$0xff]
        %v5249 = vld [vmem:[%s5147 + $0x328] sm:$0xff]
        %v5250 = vld [vmem:[%s5147 + $0x330] sm:$0xff]
        %v5251 = vld [vmem:[%s5147 + $0x338] sm:$0xff]
        %v5252 = vld [vmem:[%s5147 + $0x340] sm:$0xff]
        %v5253 = vld [vmem:[%s5147 + $0x348] sm:$0xff]
        %v5254 = vld [vmem:[%s5147 + $0x350] sm:$0xff]
        %v5255 = vld [vmem:[%s5147 + $0x358] sm:$0xff]
        %v5256 = vld [vmem:[%s5147 + $0x360] sm:$0xff]
        %v5257 = vld [vmem:[%s5147 + $0x368] sm:$0xff]
        %v5258 = vld [vmem:[%s5147 + $0x370] sm:$0xff]
        %v5259 = vld [vmem:[%s5147 + $0x378] sm:$0xff]
        %v5260 = vld [vmem:[%s5147 + $0x380] sm:$0xff]
        %v5261 = vld [vmem:[%s5147 + $0x388] sm:$0xff]
        %5262 = vmatprep.subr.mxu0 %v5194
        %5263 = vmatpush1.msra.mxu0 %v5193
        %5264 = vmatprep.subr.mxu0 %v5191
        %5265 = vmatpush1.msra.mxu0 %v5190
        %5266 = vmatprep.subr.mxu0 %v5188
        %5267 = vmatpush1.msra.mxu0 %v5187
        %5268 = vmatprep.subr.mxu0 %v5185
        %5269 = vmatpush1.msra.mxu0 %v5184
        %5270 = vmatprep.subr.mxu0 %v5182
        %5271 = vmatpush1.msra.mxu0 %v5181
        %5272 = vmatprep.subr.mxu0 %v5179
        %5273 = vmatpush1.msra.mxu0 %v5178
        %5274 = vmatprep.subr.mxu0 %v5176
        %5275 = vmatpush1.msra.mxu0 %v5175
        %5276 = vmatprep.subr.mxu0 %v5173
        %5277 = vmatpush1.msra.mxu0 %v5172
        %5278 = vmatprep.subr.mxu0 %v5170
        %5279 = vmatpush1.msra.mxu0 %v5169
        %5280 = vmatprep.subr.mxu0 %v5167
        %5281 = vmatpush1.msra.mxu0 %v5166
        %5282 = vmatprep.subr.mxu0 %v5164
        %5283 = vmatpush1.msra.mxu0 %v5163
        %5284 = vmatprep.subr.mxu0 %v5161
        %5285 = vmatpush1.msra.mxu0 %v5160
        %5286 = vmatprep.subr.mxu0 %v5158
        %5287 = vmatpush1.msra.mxu0 %v5157
        %5288 = vmatprep.subr.mxu0 %v5155
        %5289 = vmatpush1.msra.mxu0 %v5154
        %5290 = vmatprep.subr.mxu0 %v5152
        %5291 = vmatpush1.msra.mxu0 %v5151
        %5292 = vmatprep.subr.mxu0 %v5149
        %5293 = vmatpush1.msra.mxu0 %v5148
        %5294 = vmatprep.subr.mxu0 %v5242
        %5295 = vmatpush2.msra.mxu0 %v5241
        %5296 = vmatprep.subr.mxu0 %v5239
        %5297 = vmatpush2.msra.mxu0 %v5238
        %5298 = vmatprep.subr.mxu0 %v5236
        %5299 = vmatpush2.msra.mxu0 %v5235
        %5300 = vmatprep.subr.mxu0 %v5233
        %5301 = vmatpush2.msra.mxu0 %v5232
        %5302 = vmatprep.subr.mxu0 %v5230
        %5303 = vmatpush2.msra.mxu0 %v5229
        %5304 = vmatprep.subr.mxu0 %v5227
        %5305 = vmatpush2.msra.mxu0 %v5226
        %5306 = vmatprep.subr.mxu0 %v5224
        %5307 = vmatpush2.msra.mxu0 %v5223
        %5308 = vmatprep.subr.mxu0 %v5221
        %5309 = vmatpush2.msra.mxu0 %v5220
        %5310 = vmatprep.subr.mxu0 %v5218
        %5311 = vmatpush2.msra.mxu0 %v5217
        %5312 = vmatprep.subr.mxu0 %v5215
        %5313 = vmatpush2.msra.mxu0 %v5214
        %5314 = vmatprep.subr.mxu0 %v5212
        %5315 = vmatpush2.msra.mxu0 %v5211
        %5316 = vmatprep.subr.mxu0 %v5209
        %5317 = vmatpush2.msra.mxu0 %v5208
        %5318 = vmatprep.subr.mxu0 %v5206
        %5319 = vmatpush2.msra.mxu0 %v5205
        %5320 = vmatprep.subr.mxu0 %v5203
        %5321 = vmatpush2.msra.mxu0 %v5202
        %5322 = vmatprep.subr.mxu0 %v5200
        %5323 = vmatpush2.msra.mxu0 %v5199
        %5324 = vmatprep.subr.mxu0 %v5197
        %5325 = vmatpush2.msra.mxu0 %v5196
        %5326 = vmatprep.mubr.f32.mxu0 %v4313
        %5327 = vmatmul.mubr.f32.gmra.mxu0 %v4312
        %v5328 = vpop.f32.mrf.mxu0
        %v5329 = vadd.f32 0.0, %v5328
        %v5330 = vpop.f32.mrf.mxu0
        %v5331 = vadd.f32 0.0, %v5330
        %5332 = vmatprep.mubr.f32.mxu0 %v4348
        %5333 = vmatmul.mubr.f32.gmra.mxu0 %v4347
        %v5334 = vpop.f32.mrf.mxu0
        %v5335 = vadd.f32 0.0, %v5334
        %v5336 = vpop.f32.mrf.mxu0
        %v5337 = vadd.f32 0.0, %v5336
        %5338 = vmatprep.mubr.f32.mxu0 %v4366
        %5339 = vmatmul.mubr.f32.gmra.mxu0 %v4358
        %v5340 = vpop.f32.mrf.mxu0
        %v5341 = vadd.f32 0.0, %v5340
        %v5342 = vpop.f32.mrf.mxu0
        %v5343 = vadd.f32 0.0, %v5342
        %5344 = vdwg.mxu0
        %5345 = vmatprep.subr.mxu0 0.0
        %5346 = vmatpush1.msra.mxu0 0.0
        %5347 = vmatprep.subr.mxu0 0.0
        %5348 = vmatpush1.msra.mxu0 0.0
        %5349 = vmatprep.subr.mxu0 0.0
        %5350 = vmatpush1.msra.mxu0 0.0
        %5351 = vmatprep.subr.mxu0 0.0
        %5352 = vmatpush1.msra.mxu0 0.0
        %5353 = vmatprep.subr.mxu0 0.0
        %5354 = vmatpush1.msra.mxu0 0.0
        %5355 = vmatprep.subr.mxu0 0.0
        %5356 = vmatpush1.msra.mxu0 0.0
        %5357 = vmatprep.subr.mxu0 0.0
        %5358 = vmatpush1.msra.mxu0 0.0
        %5359 = vmatprep.subr.mxu0 0.0
        %5360 = vmatpush1.msra.mxu0 0.0
        %5361 = vmatprep.subr.mxu0 0.0
        %5362 = vmatpush1.msra.mxu0 0.0
        %5363 = vmatprep.subr.mxu0 0.0
        %5364 = vmatpush1.msra.mxu0 0.0
        %5365 = vmatprep.subr.mxu0 %v5260
        %5366 = vmatpush1.msra.mxu0 %v5259
        %5367 = vmatprep.subr.mxu0 %v5257
        %5368 = vmatpush1.msra.mxu0 %v5256
        %5369 = vmatprep.subr.mxu0 %v5254
        %5370 = vmatpush1.msra.mxu0 %v5253
        %5371 = vmatprep.subr.mxu0 %v5251
        %5372 = vmatpush1.msra.mxu0 %v5250
        %5373 = vmatprep.subr.mxu0 %v5248
        %5374 = vmatpush1.msra.mxu0 %v5247
        %5375 = vmatprep.subr.mxu0 %v5245
        %5376 = vmatpush1.msra.mxu0 %v5244
        %5377 = vmatprep.subr.mxu0 0.0
        %5378 = vmatpush2.msra.mxu0 0.0
        %5379 = vmatprep.subr.mxu0 0.0
        %5380 = vmatpush2.msra.mxu0 0.0
        %5381 = vmatprep.subr.mxu0 0.0
        %5382 = vmatpush2.msra.mxu0 0.0
        %5383 = vmatprep.subr.mxu0 0.0
        %5384 = vmatpush2.msra.mxu0 0.0
        %5385 = vmatprep.subr.mxu0 0.0
        %5386 = vmatpush2.msra.mxu0 0.0
        %5387 = vmatprep.subr.mxu0 0.0
        %5388 = vmatpush2.msra.mxu0 0.0
        %5389 = vmatprep.subr.mxu0 0.0
        %5390 = vmatpush2.msra.mxu0 0.0
        %5391 = vmatprep.subr.mxu0 0.0
        %5392 = vmatpush2.msra.mxu0 0.0
        %5393 = vmatprep.subr.mxu0 0.0
        %5394 = vmatpush2.msra.mxu0 0.0
        %5395 = vmatprep.subr.mxu0 0.0
        %5396 = vmatpush2.msra.mxu0 0.0
        %5397 = vmatprep.subr.mxu0 0.0
        %5398 = vmatpush2.msra.mxu0 0.0
        %5399 = vmatprep.subr.mxu0 0.0
        %5400 = vmatpush2.msra.mxu0 0.0
        %5401 = vmatprep.subr.mxu0 0.0
        %5402 = vmatpush2.msra.mxu0 0.0
        %5403 = vmatprep.subr.mxu0 0.0
        %5404 = vmatpush2.msra.mxu0 0.0
        %5405 = vmatprep.subr.mxu0 0.0
        %5406 = vmatpush2.msra.mxu0 0.0
        %5407 = vmatprep.subr.mxu0 0.0
        %5408 = vmatpush2.msra.mxu0 0.0
        %5409 = vmatprep.mubr.f32.mxu0 0.0
        %5410 = vmatmul.mubr.f32.gmra.mxu0 %v4374
        %v5411 = vpop.f32.mrf.mxu0
        %v5412 = vadd.f32 %v5329, %v5411
        %v5413 = vpop.f32.mrf.mxu0
        %v5414 = vadd.f32 %v5331, %v5413
        %5415 = vmatprep.mubr.f32.mxu0 0.0
        %5416 = vmatmul.mubr.f32.gmra.mxu0 %v4376
        %v5417 = vpop.f32.mrf.mxu0
        %v5418 = vadd.f32 %v5335, %v5417
        %v5419 = vpop.f32.mrf.mxu0
        %v5420 = vadd.f32 %v5337, %v5419
        %5421 = vmatprep.mubr.f32.mxu0 0.0
        %5422 = vmatmul.mubr.f32.gmra.mxu0 %v4378
        %v5423 = vpop.f32.mrf.mxu0
        %v5424 = vadd.f32 %v5341, %v5423
        %v5425 = vpop.f32.mrf.mxu0
        %v5426 = vadd.f32 %v5343, %v5425
        %5427 = vdwg.mxu0
        %5428 = vmatprep.subr.mxu0 0.0
        %5429 = vmatpush1.msra.mxu0 %v5195
        %5430 = vmatprep.subr.mxu0 0.0
        %5431 = vmatpush1.msra.mxu0 %v5192
        %5432 = vmatprep.subr.mxu0 0.0
        %5433 = vmatpush1.msra.mxu0 %v5189
        %5434 = vmatprep.subr.mxu0 0.0
        %5435 = vmatpush1.msra.mxu0 %v5186
        %5436 = vmatprep.subr.mxu0 0.0
        %5437 = vmatpush1.msra.mxu0 %v5183
        %5438 = vmatprep.subr.mxu0 0.0
        %5439 = vmatpush1.msra.mxu0 %v5180
        %5440 = vmatprep.subr.mxu0 0.0
        %5441 = vmatpush1.msra.mxu0 %v5177
        %5442 = vmatprep.subr.mxu0 0.0
        %5443 = vmatpush1.msra.mxu0 %v5174
        %5444 = vmatprep.subr.mxu0 0.0
        %5445 = vmatpush1.msra.mxu0 %v5171
        %5446 = vmatprep.subr.mxu0 0.0
        %5447 = vmatpush1.msra.mxu0 %v5168
        %5448 = vmatprep.subr.mxu0 0.0
        %5449 = vmatpush1.msra.mxu0 %v5165
        %5450 = vmatprep.subr.mxu0 0.0
        %5451 = vmatpush1.msra.mxu0 %v5162
        %5452 = vmatprep.subr.mxu0 0.0
        %5453 = vmatpush1.msra.mxu0 %v5159
        %5454 = vmatprep.subr.mxu0 0.0
        %5455 = vmatpush1.msra.mxu0 %v5156
        %5456 = vmatprep.subr.mxu0 0.0
        %5457 = vmatpush1.msra.mxu0 %v5153
        %5458 = vmatprep.subr.mxu0 0.0
        %5459 = vmatpush1.msra.mxu0 %v5150
        %5460 = vmatprep.subr.mxu0 0.0
        %5461 = vmatpush2.msra.mxu0 %v5243
        %5462 = vmatprep.subr.mxu0 0.0
        %5463 = vmatpush2.msra.mxu0 %v5240
        %5464 = vmatprep.subr.mxu0 0.0
        %5465 = vmatpush2.msra.mxu0 %v5237
        %5466 = vmatprep.subr.mxu0 0.0
        %5467 = vmatpush2.msra.mxu0 %v5234
        %5468 = vmatprep.subr.mxu0 0.0
        %5469 = vmatpush2.msra.mxu0 %v5231
        %5470 = vmatprep.subr.mxu0 0.0
        %5471 = vmatpush2.msra.mxu0 %v5228
        %5472 = vmatprep.subr.mxu0 0.0
        %5473 = vmatpush2.msra.mxu0 %v5225
        %5474 = vmatprep.subr.mxu0 0.0
        %5475 = vmatpush2.msra.mxu0 %v5222
        %5476 = vmatprep.subr.mxu0 0.0
        %5477 = vmatpush2.msra.mxu0 %v5219
        %5478 = vmatprep.subr.mxu0 0.0
        %5479 = vmatpush2.msra.mxu0 %v5216
        %5480 = vmatprep.subr.mxu0 0.0
        %5481 = vmatpush2.msra.mxu0 %v5213
        %5482 = vmatprep.subr.mxu0 0.0
        %5483 = vmatpush2.msra.mxu0 %v5210
        %5484 = vmatprep.subr.mxu0 0.0
        %5485 = vmatpush2.msra.mxu0 %v5207
        %5486 = vmatprep.subr.mxu0 0.0
        %5487 = vmatpush2.msra.mxu0 %v5204
        %5488 = vmatprep.subr.mxu0 0.0
        %5489 = vmatpush2.msra.mxu0 %v5201
        %5490 = vmatprep.subr.mxu0 0.0
        %5491 = vmatpush2.msra.mxu0 %v5198
        %5492 = vmatprep.mubr.f32.mxu0 %v4313
        %5493 = vmatmul.mubr.f32.gmra.mxu0 %v4312
        %v5494 = vpop.f32.mrf.mxu0
        %v5495 = vadd.f32 0.0, %v5494
        %v5496 = vpop.f32.mrf.mxu0
        %5497 = vmatprep.mubr.f32.mxu0 %v4348
        %5498 = vmatmul.mubr.f32.gmra.mxu0 %v4347
        %v5499 = vpop.f32.mrf.mxu0
        %v5500 = vadd.f32 0.0, %v5499
        %v5501 = vpop.f32.mrf.mxu0
        %5502 = vmatprep.mubr.f32.mxu0 %v4366
        %5503 = vmatmul.mubr.f32.gmra.mxu0 %v4358
        %v5504 = vpop.f32.mrf.mxu0
        %v5505 = vadd.f32 0.0, %v5504
        %v5506 = vpop.f32.mrf.mxu0
        %5507 = vdwg.mxu0
        %5508 = vmatprep.subr.mxu0 0.0
        %5509 = vmatpush1.msra.mxu0 0.0
        %5510 = vmatprep.subr.mxu0 0.0
        %5511 = vmatpush1.msra.mxu0 0.0
        %5512 = vmatprep.subr.mxu0 0.0
        %5513 = vmatpush1.msra.mxu0 0.0
        %5514 = vmatprep.subr.mxu0 0.0
        %5515 = vmatpush1.msra.mxu0 0.0
        %5516 = vmatprep.subr.mxu0 0.0
        %5517 = vmatpush1.msra.mxu0 0.0
        %5518 = vmatprep.subr.mxu0 0.0
        %5519 = vmatpush1.msra.mxu0 0.0
        %5520 = vmatprep.subr.mxu0 0.0
        %5521 = vmatpush1.msra.mxu0 0.0
        %5522 = vmatprep.subr.mxu0 0.0
        %5523 = vmatpush1.msra.mxu0 0.0
        %5524 = vmatprep.subr.mxu0 0.0
        %5525 = vmatpush1.msra.mxu0 0.0
        %5526 = vmatprep.subr.mxu0 0.0
        %5527 = vmatpush1.msra.mxu0 0.0
        %5528 = vmatprep.subr.mxu0 0.0
        %5529 = vmatpush1.msra.mxu0 %v5261
        %5530 = vmatprep.subr.mxu0 0.0
        %5531 = vmatpush1.msra.mxu0 %v5258
        %5532 = vmatprep.subr.mxu0 0.0
        %5533 = vmatpush1.msra.mxu0 %v5255
        %5534 = vmatprep.subr.mxu0 0.0
        %5535 = vmatpush1.msra.mxu0 %v5252
        %5536 = vmatprep.subr.mxu0 0.0
        %5537 = vmatpush1.msra.mxu0 %v5249
        %5538 = vmatprep.subr.mxu0 0.0
        %5539 = vmatpush1.msra.mxu0 %v5246
        %5540 = vmatprep.subr.mxu0 0.0
        %5541 = vmatpush2.msra.mxu0 0.0
        %5542 = vmatprep.subr.mxu0 0.0
        %5543 = vmatpush2.msra.mxu0 0.0
        %5544 = vmatprep.subr.mxu0 0.0
        %5545 = vmatpush2.msra.mxu0 0.0
        %5546 = vmatprep.subr.mxu0 0.0
        %5547 = vmatpush2.msra.mxu0 0.0
        %5548 = vmatprep.subr.mxu0 0.0
        %5549 = vmatpush2.msra.mxu0 0.0
        %5550 = vmatprep.subr.mxu0 0.0
        %5551 = vmatpush2.msra.mxu0 0.0
        %5552 = vmatprep.subr.mxu0 0.0
        %5553 = vmatpush2.msra.mxu0 0.0
        %5554 = vmatprep.subr.mxu0 0.0
        %5555 = vmatpush2.msra.mxu0 0.0
        %5556 = vmatprep.subr.mxu0 0.0
        %5557 = vmatpush2.msra.mxu0 0.0
        %5558 = vmatprep.subr.mxu0 0.0
        %5559 = vmatpush2.msra.mxu0 0.0
        %5560 = vmatprep.subr.mxu0 0.0
        %5561 = vmatpush2.msra.mxu0 0.0
        %5562 = vmatprep.subr.mxu0 0.0
        %5563 = vmatpush2.msra.mxu0 0.0
        %5564 = vmatprep.subr.mxu0 0.0
        %5565 = vmatpush2.msra.mxu0 0.0
        %5566 = vmatprep.subr.mxu0 0.0
        %5567 = vmatpush2.msra.mxu0 0.0
        %5568 = vmatprep.subr.mxu0 0.0
        %5569 = vmatpush2.msra.mxu0 0.0
        %5570 = vmatprep.subr.mxu0 0.0
        %5571 = vmatpush2.msra.mxu0 0.0
        %5572 = vmatprep.mubr.f32.mxu0 0.0
        %5573 = vmatmul.mubr.f32.gmra.mxu0 %v4374
        %v5574 = vpop.f32.mrf.mxu0
        %v5575 = vadd.f32 %v5495, %v5574
        %v5576 = vpop.f32.mrf.mxu0
        %5577 = vmatprep.mubr.f32.mxu0 0.0
        %5578 = vmatmul.mubr.f32.gmra.mxu0 %v4376
        %v5579 = vpop.f32.mrf.mxu0
        %v5580 = vadd.f32 %v5500, %v5579
        %v5581 = vpop.f32.mrf.mxu0
        %5582 = vmatprep.mubr.f32.mxu0 0.0
        %5583 = vmatmul.mubr.f32.gmra.mxu0 %v4378
        %v5584 = vpop.f32.mrf.mxu0
        %v5585 = vadd.f32 %v5505, %v5584
        %v5586 = vpop.f32.mrf.mxu0
        %5587 = vdwg.mxu0
        %vm5588 = vcmask 1042432
        %v5589 = vsel %vm5588, %v4542, 0.0
        %v5590 = vsel %vm5588, %v4544, 0.0
        %v5591 = vsel %vm5588, %v4703, 0.0
        %v5601 = vrot.slane %v5412, 7
        %v5602 = vrot.slane %v5414, 7
        %v5603 = vrot.slane %v5575, 7
        %v5604 = vrot.slane %v5418, 7
        %v5605 = vsel %vm1172, %v5601, %v5604
        %v5606 = vrot.slane %v5420, 7
        %v5607 = vsel %vm1172, %v5602, %v5606
        %v5608 = vrot.slane %v5580, 7
        %v5609 = vsel %vm1172, %v5603, %v5608
        %v5610 = vrot.slane %v5424, 7
        %v5611 = vsel %vm1172, %v5604, %v5610
        %v5612 = vrot.slane %v5426, 7
        %v5613 = vsel %vm1172, %v5606, %v5612
        %v5614 = vrot.slane %v5585, 7
        %v5615 = vsel %vm1172, %v5608, %v5614
        %v5625 = vsel %vm1172, 0.0, %v5601
        %v5626 = vsel %vm1172, 0.0, %v5602
        %v5627 = vsel %vm1172, 0.0, %v5603
        %v5628 = vadd.f32 %v4530, %v5625
        %v5629 = vadd.f32 %v4532, %v5626
        %v5630 = vadd.f32 %v4693, %v5627
        %v5631 = vadd.f32 %v4536, %v5605
        %v5632 = vadd.f32 %v4538, %v5607
        %v5633 = vadd.f32 %v4698, %v5609
        %v5634 = vadd.f32 %v5589, %v5611
        %v5635 = vadd.f32 %v5590, %v5613
        %v5636 = vadd.f32 %v5591, %v5615
        %v5637 = vsel %vm5588, %v4983, 0.0
        %v5638 = vsel %vm5588, %v4985, 0.0
        %v5639 = vsel %vm5588, %v5144, 0.0
        %v5649 = vcombine.low %v5628, %v5629
        %v5650 = vcombine.high %v5628, %v5629
        %v5651 = vcombine.high %v5630, %v5630
        %v5653 = vunpack.c.l.s4 1966171168
        %v5654 = vunpack.c.0.s8 %v5653
        %v5655 = vlaneseq
        %v5656 = vshrl.u32 %v5655, 7
        %v5657 = vsub.s32 %v5654, %v5656
        %v5658 = vrot.slane %v5649, %v5657
        %v5660 = vunpack.c.l.s4 1966171168
        %v5661 = vunpack.c.0.s8 %v5660
        %v5662 = vlaneseq
        %v5663 = vshrl.u32 %v5662, 7
        %v5664 = vsub.s32 %v5661, %v5663
        %v5665 = vrot.slane %v5650, %v5664
        %v5667 = vunpack.c.l.s4 1966171168
        %v5668 = vunpack.c.0.s8 %v5667
        %v5669 = vlaneseq
        %v5670 = vshrl.u32 %v5669, 7
        %v5671 = vsub.s32 %v5668, %v5670
        %v5672 = vrot.slane %v5630, %v5671
        %v5674 = vunpack.c.l.s4 1966171168
        %v5675 = vunpack.c.0.s8 %v5674
        %v5676 = vlaneseq
        %v5677 = vshrl.u32 %v5676, 7
        %v5678 = vsub.s32 %v5675, %v5677
        %v5679 = vrot.slane %v5651, %v5678
        %v5680 = vcombine.low %v5658, %v5672
        %v5681 = vcombine.high %v5658, %v5672
        %v5682 = vcombine.low %v5665, %v5679
        %v5683 = vcombine.high %v5665, %v5679
        %v5685 = vunpack.c.l.s4 1966171168
        %v5686 = vunpack.c.0.s8 %v5685
        %v5687 = vlaneseq
        %v5688 = vshrl.u32 %v5687, 7
        %v5689 = vsub.s32 %v5686, %v5688
        %v5690 = vrot.slane %v5680, %v5689
        %v5692 = vunpack.c.l.s4 1966171168
        %v5693 = vunpack.c.0.s8 %v5692
        %v5694 = vlaneseq
        %v5695 = vshrl.u32 %v5694, 7
        %v5696 = vsub.s32 %v5693, %v5695
        %v5697 = vrot.slane %v5682, %v5696
        %v5699 = vunpack.c.l.s4 1966171168
        %v5700 = vunpack.c.0.s8 %v5699
        %v5701 = vlaneseq
        %v5702 = vshrl.u32 %v5701, 7
        %v5703 = vsub.s32 %v5700, %v5702
        %v5704 = vrot.slane %v5681, %v5703
        %v5706 = vunpack.c.l.s4 1966171168
        %v5707 = vunpack.c.0.s8 %v5706
        %v5708 = vlaneseq
        %v5709 = vshrl.u32 %v5708, 7
        %v5710 = vsub.s32 %v5707, %v5709
        %v5711 = vrot.slane %v5683, %v5710
        %v5712 = vcombine.high %v5690, %v5690
        %v5713 = vcombine.high %v5697, %v5697
        %v5714 = vcombine.high %v5704, %v5704
        %v5715 = vcombine.high %v5711, %v5711
        %v5716 = vcombine.low %v5631, %v5632
        %v5717 = vcombine.high %v5631, %v5632
        %v5718 = vcombine.high %v5633, %v5633
        %v5720 = vunpack.c.l.s4 1966171168
        %v5721 = vunpack.c.0.s8 %v5720
        %v5722 = vlaneseq
        %v5723 = vshrl.u32 %v5722, 7
        %v5724 = vsub.s32 %v5721, %v5723
        %v5725 = vrot.slane %v5716, %v5724
        %v5727 = vunpack.c.l.s4 1966171168
        %v5728 = vunpack.c.0.s8 %v5727
        %v5729 = vlaneseq
        %v5730 = vshrl.u32 %v5729, 7
        %v5731 = vsub.s32 %v5728, %v5730
        %v5732 = vrot.slane %v5717, %v5731
        %v5734 = vunpack.c.l.s4 1966171168
        %v5735 = vunpack.c.0.s8 %v5734
        %v5736 = vlaneseq
        %v5737 = vshrl.u32 %v5736, 7
        %v5738 = vsub.s32 %v5735, %v5737
        %v5739 = vrot.slane %v5633, %v5738
        %v5741 = vunpack.c.l.s4 1966171168
        %v5742 = vunpack.c.0.s8 %v5741
        %v5743 = vlaneseq
        %v5744 = vshrl.u32 %v5743, 7
        %v5745 = vsub.s32 %v5742, %v5744
        %v5746 = vrot.slane %v5718, %v5745
        %v5747 = vcombine.low %v5725, %v5739
        %v5748 = vcombine.high %v5725, %v5739
        %v5749 = vcombine.low %v5732, %v5746
        %v5750 = vcombine.high %v5732, %v5746
        %v5752 = vunpack.c.l.s4 1966171168
        %v5753 = vunpack.c.0.s8 %v5752
        %v5754 = vlaneseq
        %v5755 = vshrl.u32 %v5754, 7
        %v5756 = vsub.s32 %v5753, %v5755
        %v5757 = vrot.slane %v5747, %v5756
        %v5759 = vunpack.c.l.s4 1966171168
        %v5760 = vunpack.c.0.s8 %v5759
        %v5761 = vlaneseq
        %v5762 = vshrl.u32 %v5761, 7
        %v5763 = vsub.s32 %v5760, %v5762
        %v5764 = vrot.slane %v5749, %v5763
        %v5766 = vunpack.c.l.s4 1966171168
        %v5767 = vunpack.c.0.s8 %v5766
        %v5768 = vlaneseq
        %v5769 = vshrl.u32 %v5768, 7
        %v5770 = vsub.s32 %v5767, %v5769
        %v5771 = vrot.slane %v5748, %v5770
        %v5773 = vunpack.c.l.s4 1966171168
        %v5774 = vunpack.c.0.s8 %v5773
        %v5775 = vlaneseq
        %v5776 = vshrl.u32 %v5775, 7
        %v5777 = vsub.s32 %v5774, %v5776
        %v5778 = vrot.slane %v5750, %v5777
        %v5779 = vcombine.high %v5757, %v5757
        %v5780 = vcombine.high %v5764, %v5764
        %v5781 = vcombine.high %v5771, %v5771
        %v5782 = vcombine.high %v5778, %v5778
        %v5783 = vcombine.low %v5634, %v5635
        %v5785 = vunpack.c.l.s4 1966171168
        %v5786 = vunpack.c.0.s8 %v5785
        %v5787 = vlaneseq
        %v5788 = vshrl.u32 %v5787, 7
        %v5789 = vsub.s32 %v5786, %v5788
        %v5790 = vrot.slane %v5783, %v5789
        %v5792 = vunpack.c.l.s4 1966171168
        %v5793 = vunpack.c.0.s8 %v5792
        %v5794 = vlaneseq
        %v5795 = vshrl.u32 %v5794, 7
        %v5796 = vsub.s32 %v5793, %v5795
        %v5797 = vrot.slane %v5636, %v5796
        %v5798 = vcombine.low %v5790, %v5797
        %v5799 = vcombine.high %v5790, %v5797
        %v5801 = vunpack.c.l.s4 1966171168
        %v5802 = vunpack.c.0.s8 %v5801
        %v5803 = vlaneseq
        %v5804 = vshrl.u32 %v5803, 7
        %v5805 = vsub.s32 %v5802, %v5804
        %v5806 = vrot.slane %v5798, %v5805
        %v5808 = vunpack.c.l.s4 1966171168
        %v5809 = vunpack.c.0.s8 %v5808
        %v5810 = vlaneseq
        %v5811 = vshrl.u32 %v5810, 7
        %v5812 = vsub.s32 %v5809, %v5811
        %v5813 = vrot.slane %v5799, %v5812
        %v5814 = vcombine.high %v5806, %v5806
        %v5815 = vcombine.high %v5813, %v5813
        %v5825 = vcombine.low %v4971, %v4973
        %v5826 = vcombine.high %v4971, %v4973
        %v5827 = vcombine.high %v5134, %v5134
        %v5829 = vunpack.c.l.s4 1966171168
        %v5830 = vunpack.c.0.s8 %v5829
        %v5831 = vlaneseq
        %v5832 = vshrl.u32 %v5831, 7
        %v5833 = vsub.s32 %v5830, %v5832
        %v5834 = vrot.slane %v5825, %v5833
        %v5836 = vunpack.c.l.s4 1966171168
        %v5837 = vunpack.c.0.s8 %v5836
        %v5838 = vlaneseq
        %v5839 = vshrl.u32 %v5838, 7
        %v5840 = vsub.s32 %v5837, %v5839
        %v5841 = vrot.slane %v5826, %v5840
        %v5843 = vunpack.c.l.s4 1966171168
        %v5844 = vunpack.c.0.s8 %v5843
        %v5845 = vlaneseq
        %v5846 = vshrl.u32 %v5845, 7
        %v5847 = vsub.s32 %v5844, %v5846
        %v5848 = vrot.slane %v5134, %v5847
        %v5850 = vunpack.c.l.s4 1966171168
        %v5851 = vunpack.c.0.s8 %v5850
        %v5852 = vlaneseq
        %v5853 = vshrl.u32 %v5852, 7
        %v5854 = vsub.s32 %v5851, %v5853
        %v5855 = vrot.slane %v5827, %v5854
        %v5856 = vcombine.low %v5834, %v5848
        %v5857 = vcombine.high %v5834, %v5848
        %v5858 = vcombine.low %v5841, %v5855
        %v5859 = vcombine.high %v5841, %v5855
        %v5861 = vunpack.c.l.s4 1966171168
        %v5862 = vunpack.c.0.s8 %v5861
        %v5863 = vlaneseq
        %v5864 = vshrl.u32 %v5863, 7
        %v5865 = vsub.s32 %v5862, %v5864
        %v5866 = vrot.slane %v5856, %v5865
        %v5868 = vunpack.c.l.s4 1966171168
        %v5869 = vunpack.c.0.s8 %v5868
        %v5870 = vlaneseq
        %v5871 = vshrl.u32 %v5870, 7
        %v5872 = vsub.s32 %v5869, %v5871
        %v5873 = vrot.slane %v5858, %v5872
        %v5875 = vunpack.c.l.s4 1966171168
        %v5876 = vunpack.c.0.s8 %v5875
        %v5877 = vlaneseq
        %v5878 = vshrl.u32 %v5877, 7
        %v5879 = vsub.s32 %v5876, %v5878
        %v5880 = vrot.slane %v5857, %v5879
        %v5882 = vunpack.c.l.s4 1966171168
        %v5883 = vunpack.c.0.s8 %v5882
        %v5884 = vlaneseq
        %v5885 = vshrl.u32 %v5884, 7
        %v5886 = vsub.s32 %v5883, %v5885
        %v5887 = vrot.slane %v5859, %v5886
        %v5888 = vcombine.high %v5866, %v5866
        %v5889 = vcombine.high %v5873, %v5873
        %v5890 = vcombine.high %v5880, %v5880
        %v5891 = vcombine.high %v5887, %v5887
        %v5892 = vcombine.low %v4977, %v4979
        %v5893 = vcombine.high %v4977, %v4979
        %v5894 = vcombine.high %v5139, %v5139
        %v5896 = vunpack.c.l.s4 1966171168
        %v5897 = vunpack.c.0.s8 %v5896
        %v5898 = vlaneseq
        %v5899 = vshrl.u32 %v5898, 7
        %v5900 = vsub.s32 %v5897, %v5899
        %v5901 = vrot.slane %v5892, %v5900
        %v5903 = vunpack.c.l.s4 1966171168
        %v5904 = vunpack.c.0.s8 %v5903
        %v5905 = vlaneseq
        %v5906 = vshrl.u32 %v5905, 7
        %v5907 = vsub.s32 %v5904, %v5906
        %v5908 = vrot.slane %v5893, %v5907
        %v5910 = vunpack.c.l.s4 1966171168
        %v5911 = vunpack.c.0.s8 %v5910
        %v5912 = vlaneseq
        %v5913 = vshrl.u32 %v5912, 7
        %v5914 = vsub.s32 %v5911, %v5913
        %v5915 = vrot.slane %v5139, %v5914
        %v5917 = vunpack.c.l.s4 1966171168
        %v5918 = vunpack.c.0.s8 %v5917
        %v5919 = vlaneseq
        %v5920 = vshrl.u32 %v5919, 7
        %v5921 = vsub.s32 %v5918, %v5920
        %v5922 = vrot.slane %v5894, %v5921
        %v5923 = vcombine.low %v5901, %v5915
        %v5924 = vcombine.high %v5901, %v5915
        %v5925 = vcombine.low %v5908, %v5922
        %v5926 = vcombine.high %v5908, %v5922
        %v5928 = vunpack.c.l.s4 1966171168
        %v5929 = vunpack.c.0.s8 %v5928
        %v5930 = vlaneseq
        %v5931 = vshrl.u32 %v5930, 7
        %v5932 = vsub.s32 %v5929, %v5931
        %v5933 = vrot.slane %v5923, %v5932
        %v5935 = vunpack.c.l.s4 1966171168
        %v5936 = vunpack.c.0.s8 %v5935
        %v5937 = vlaneseq
        %v5938 = vshrl.u32 %v5937, 7
        %v5939 = vsub.s32 %v5936, %v5938
        %v5940 = vrot.slane %v5925, %v5939
        %v5942 = vunpack.c.l.s4 1966171168
        %v5943 = vunpack.c.0.s8 %v5942
        %v5944 = vlaneseq
        %v5945 = vshrl.u32 %v5944, 7
        %v5946 = vsub.s32 %v5943, %v5945
        %v5947 = vrot.slane %v5924, %v5946
        %v5949 = vunpack.c.l.s4 1966171168
        %v5950 = vunpack.c.0.s8 %v5949
        %v5951 = vlaneseq
        %v5952 = vshrl.u32 %v5951, 7
        %v5953 = vsub.s32 %v5950, %v5952
        %v5954 = vrot.slane %v5926, %v5953
        %v5955 = vcombine.high %v5933, %v5933
        %v5956 = vcombine.high %v5940, %v5940
        %v5957 = vcombine.high %v5947, %v5947
        %v5958 = vcombine.high %v5954, %v5954
        %v5959 = vcombine.low %v5637, %v5638
        %v5961 = vunpack.c.l.s4 1966171168
        %v5962 = vunpack.c.0.s8 %v5961
        %v5963 = vlaneseq
        %v5964 = vshrl.u32 %v5963, 7
        %v5965 = vsub.s32 %v5962, %v5964
        %v5966 = vrot.slane %v5959, %v5965
        %v5968 = vunpack.c.l.s4 1966171168
        %v5969 = vunpack.c.0.s8 %v5968
        %v5970 = vlaneseq
        %v5971 = vshrl.u32 %v5970, 7
        %v5972 = vsub.s32 %v5969, %v5971
        %v5973 = vrot.slane %v5639, %v5972
        %v5974 = vcombine.low %v5966, %v5973
        %v5975 = vcombine.high %v5966, %v5973
        %v5977 = vunpack.c.l.s4 1966171168
        %v5978 = vunpack.c.0.s8 %v5977
        %v5979 = vlaneseq
        %v5980 = vshrl.u32 %v5979, 7
        %v5981 = vsub.s32 %v5978, %v5980
        %v5982 = vrot.slane %v5974, %v5981
        %v5984 = vunpack.c.l.s4 1966171168
        %v5985 = vunpack.c.0.s8 %v5984
        %v5986 = vlaneseq
        %v5987 = vshrl.u32 %v5986, 7
        %v5988 = vsub.s32 %v5985, %v5987
        %v5989 = vrot.slane %v5975, %v5988
        %v5990 = vcombine.high %v5982, %v5982
        %v5991 = vcombine.high %v5989, %v5989
        %v5992 = vlaneseq
        %v5993 = vshrl.u32 %v5992, 7
        %v5994 = vsub.s32 0, %v5993
        %v5995 = vrot.slane %v5690, %v5994
        %v5996 = vlaneseq
        %v5997 = vshrl.u32 %v5996, 7
        %v5998 = vsub.s32 1, %v5997
        %v5999 = vrot.slane %v5690, %v5998
        %v6000 = vlaneseq
        %v6001 = vshrl.u32 %v6000, 7
        %v6002 = vsub.s32 2, %v6001
        %v6003 = vrot.slane %v5690, %v6002
        %v6004 = vlaneseq
        %v6005 = vshrl.u32 %v6004, 7
        %v6006 = vsub.s32 0, %v6005
        %v6007 = vrot.slane %v5704, %v6006
        %v6008 = vlaneseq
        %v6009 = vshrl.u32 %v6008, 7
        %v6010 = vsub.s32 1, %v6009
        %v6011 = vrot.slane %v5704, %v6010
        %v6012 = vlaneseq
        %v6013 = vshrl.u32 %v6012, 7
        %v6014 = vsub.s32 2, %v6013
        %v6015 = vrot.slane %v5704, %v6014
        %v6016 = vlaneseq
        %v6017 = vshrl.u32 %v6016, 7
        %v6018 = vsub.s32 0, %v6017
        %v6019 = vrot.slane %v5712, %v6018
        %v6020 = vlaneseq
        %v6021 = vshrl.u32 %v6020, 7
        %v6022 = vsub.s32 1, %v6021
        %v6023 = vrot.slane %v5712, %v6022
        %v6024 = vlaneseq
        %v6025 = vshrl.u32 %v6024, 7
        %v6026 = vsub.s32 2, %v6025
        %v6027 = vrot.slane %v5712, %v6026
        %v6028 = vlaneseq
        %v6029 = vshrl.u32 %v6028, 7
        %v6030 = vsub.s32 0, %v6029
        %v6031 = vrot.slane %v5714, %v6030
        %v6032 = vlaneseq
        %v6033 = vshrl.u32 %v6032, 7
        %v6034 = vsub.s32 1, %v6033
        %v6035 = vrot.slane %v5714, %v6034
        %v6036 = vlaneseq
        %v6037 = vshrl.u32 %v6036, 7
        %v6038 = vsub.s32 2, %v6037
        %v6039 = vrot.slane %v5714, %v6038
        %v6040 = vlaneseq
        %v6041 = vshrl.u32 %v6040, 7
        %v6042 = vsub.s32 0, %v6041
        %v6043 = vrot.slane %v5697, %v6042
        %v6044 = vlaneseq
        %v6045 = vshrl.u32 %v6044, 7
        %v6046 = vsub.s32 1, %v6045
        %v6047 = vrot.slane %v5697, %v6046
        %v6048 = vlaneseq
        %v6049 = vshrl.u32 %v6048, 7
        %v6050 = vsub.s32 2, %v6049
        %v6051 = vrot.slane %v5697, %v6050
        %v6052 = vlaneseq
        %v6053 = vshrl.u32 %v6052, 7
        %v6054 = vsub.s32 0, %v6053
        %v6055 = vrot.slane %v5711, %v6054
        %v6056 = vlaneseq
        %v6057 = vshrl.u32 %v6056, 7
        %v6058 = vsub.s32 1, %v6057
        %v6059 = vrot.slane %v5711, %v6058
        %v6060 = vlaneseq
        %v6061 = vshrl.u32 %v6060, 7
        %v6062 = vsub.s32 2, %v6061
        %v6063 = vrot.slane %v5711, %v6062
        %v6064 = vlaneseq
        %v6065 = vshrl.u32 %v6064, 7
        %v6066 = vsub.s32 0, %v6065
        %v6067 = vrot.slane %v5713, %v6066
        %v6068 = vlaneseq
        %v6069 = vshrl.u32 %v6068, 7
        %v6070 = vsub.s32 1, %v6069
        %v6071 = vrot.slane %v5713, %v6070
        %v6072 = vlaneseq
        %v6073 = vshrl.u32 %v6072, 7
        %v6074 = vsub.s32 2, %v6073
        %v6075 = vrot.slane %v5713, %v6074
        %v6076 = vlaneseq
        %v6077 = vshrl.u32 %v6076, 7
        %v6078 = vsub.s32 0, %v6077
        %v6079 = vrot.slane %v5715, %v6078
        %v6080 = vlaneseq
        %v6081 = vshrl.u32 %v6080, 7
        %v6082 = vsub.s32 1, %v6081
        %v6083 = vrot.slane %v5715, %v6082
        %v6084 = vlaneseq
        %v6085 = vshrl.u32 %v6084, 7
        %v6086 = vsub.s32 2, %v6085
        %v6087 = vrot.slane %v5715, %v6086
        %v6088 = vlaneseq
        %v6089 = vshrl.u32 %v6088, 7
        %v6090 = vsub.s32 0, %v6089
        %v6091 = vrot.slane %v5757, %v6090
        %v6092 = vlaneseq
        %v6093 = vshrl.u32 %v6092, 7
        %v6094 = vsub.s32 1, %v6093
        %v6095 = vrot.slane %v5757, %v6094
        %v6096 = vlaneseq
        %v6097 = vshrl.u32 %v6096, 7
        %v6098 = vsub.s32 2, %v6097
        %v6099 = vrot.slane %v5757, %v6098
        %v6100 = vlaneseq
        %v6101 = vshrl.u32 %v6100, 7
        %v6102 = vsub.s32 0, %v6101
        %v6103 = vrot.slane %v5771, %v6102
        %v6104 = vlaneseq
        %v6105 = vshrl.u32 %v6104, 7
        %v6106 = vsub.s32 1, %v6105
        %v6107 = vrot.slane %v5771, %v6106
        %v6108 = vlaneseq
        %v6109 = vshrl.u32 %v6108, 7
        %v6110 = vsub.s32 2, %v6109
        %v6111 = vrot.slane %v5771, %v6110
        %v6112 = vlaneseq
        %v6113 = vshrl.u32 %v6112, 7
        %v6114 = vsub.s32 0, %v6113
        %v6115 = vrot.slane %v5779, %v6114
        %v6116 = vlaneseq
        %v6117 = vshrl.u32 %v6116, 7
        %v6118 = vsub.s32 1, %v6117
        %v6119 = vrot.slane %v5779, %v6118
        %v6120 = vlaneseq
        %v6121 = vshrl.u32 %v6120, 7
        %v6122 = vsub.s32 2, %v6121
        %v6123 = vrot.slane %v5779, %v6122
        %v6124 = vlaneseq
        %v6125 = vshrl.u32 %v6124, 7
        %v6126 = vsub.s32 0, %v6125
        %v6127 = vrot.slane %v5781, %v6126
        %v6128 = vlaneseq
        %v6129 = vshrl.u32 %v6128, 7
        %v6130 = vsub.s32 1, %v6129
        %v6131 = vrot.slane %v5781, %v6130
        %v6132 = vlaneseq
        %v6133 = vshrl.u32 %v6132, 7
        %v6134 = vsub.s32 2, %v6133
        %v6135 = vrot.slane %v5781, %v6134
        %v6136 = vlaneseq
        %v6137 = vshrl.u32 %v6136, 7
        %v6138 = vsub.s32 0, %v6137
        %v6139 = vrot.slane %v5764, %v6138
        %v6140 = vlaneseq
        %v6141 = vshrl.u32 %v6140, 7
        %v6142 = vsub.s32 1, %v6141
        %v6143 = vrot.slane %v5764, %v6142
        %v6144 = vlaneseq
        %v6145 = vshrl.u32 %v6144, 7
        %v6146 = vsub.s32 2, %v6145
        %v6147 = vrot.slane %v5764, %v6146
        %v6148 = vlaneseq
        %v6149 = vshrl.u32 %v6148, 7
        %v6150 = vsub.s32 0, %v6149
        %v6151 = vrot.slane %v5778, %v6150
        %v6152 = vlaneseq
        %v6153 = vshrl.u32 %v6152, 7
        %v6154 = vsub.s32 1, %v6153
        %v6155 = vrot.slane %v5778, %v6154
        %v6156 = vlaneseq
        %v6157 = vshrl.u32 %v6156, 7
        %v6158 = vsub.s32 2, %v6157
        %v6159 = vrot.slane %v5778, %v6158
        %v6160 = vlaneseq
        %v6161 = vshrl.u32 %v6160, 7
        %v6162 = vsub.s32 0, %v6161
        %v6163 = vrot.slane %v5780, %v6162
        %v6164 = vlaneseq
        %v6165 = vshrl.u32 %v6164, 7
        %v6166 = vsub.s32 1, %v6165
        %v6167 = vrot.slane %v5780, %v6166
        %v6168 = vlaneseq
        %v6169 = vshrl.u32 %v6168, 7
        %v6170 = vsub.s32 2, %v6169
        %v6171 = vrot.slane %v5780, %v6170
        %v6172 = vlaneseq
        %v6173 = vshrl.u32 %v6172, 7
        %v6174 = vsub.s32 0, %v6173
        %v6175 = vrot.slane %v5782, %v6174
        %v6176 = vlaneseq
        %v6177 = vshrl.u32 %v6176, 7
        %v6178 = vsub.s32 1, %v6177
        %v6179 = vrot.slane %v5782, %v6178
        %v6180 = vlaneseq
        %v6181 = vshrl.u32 %v6180, 7
        %v6182 = vsub.s32 2, %v6181
        %v6183 = vrot.slane %v5782, %v6182
        %v6184 = vlaneseq
        %v6185 = vshrl.u32 %v6184, 7
        %v6186 = vsub.s32 0, %v6185
        %v6187 = vrot.slane %v5806, %v6186
        %v6188 = vlaneseq
        %v6189 = vshrl.u32 %v6188, 7
        %v6190 = vsub.s32 1, %v6189
        %v6191 = vrot.slane %v5806, %v6190
        %v6192 = vlaneseq
        %v6193 = vshrl.u32 %v6192, 7
        %v6194 = vsub.s32 2, %v6193
        %v6195 = vrot.slane %v5806, %v6194
        %v6196 = vlaneseq
        %v6197 = vshrl.u32 %v6196, 7
        %v6198 = vsub.s32 0, %v6197
        %v6199 = vrot.slane %v5813, %v6198
        %v6200 = vlaneseq
        %v6201 = vshrl.u32 %v6200, 7
        %v6202 = vsub.s32 1, %v6201
        %v6203 = vrot.slane %v5813, %v6202
        %v6204 = vlaneseq
        %v6205 = vshrl.u32 %v6204, 7
        %v6206 = vsub.s32 2, %v6205
        %v6207 = vrot.slane %v5813, %v6206
        %v6208 = vlaneseq
        %v6209 = vshrl.u32 %v6208, 7
        %v6210 = vsub.s32 0, %v6209
        %v6211 = vrot.slane %v5814, %v6210
        %v6212 = vlaneseq
        %v6213 = vshrl.u32 %v6212, 7
        %v6214 = vsub.s32 1, %v6213
        %v6215 = vrot.slane %v5814, %v6214
        %v6216 = vlaneseq
        %v6217 = vshrl.u32 %v6216, 7
        %v6218 = vsub.s32 2, %v6217
        %v6219 = vrot.slane %v5814, %v6218
        %v6220 = vlaneseq
        %v6221 = vshrl.u32 %v6220, 7
        %v6222 = vsub.s32 0, %v6221
        %v6223 = vrot.slane %v5815, %v6222
        %v6224 = vlaneseq
        %v6225 = vshrl.u32 %v6224, 7
        %v6226 = vsub.s32 1, %v6225
        %v6227 = vrot.slane %v5815, %v6226
        %v6228 = vlaneseq
        %v6229 = vshrl.u32 %v6228, 7
        %v6230 = vsub.s32 2, %v6229
        %v6231 = vrot.slane %v5815, %v6230
        %v6292 = vlaneseq
        %v6293 = vshrl.u32 %v6292, 7
        %v6294 = vsub.s32 0, %v6293
        %v6295 = vrot.slane %v5866, %v6294
        %v6296 = vlaneseq
        %v6297 = vshrl.u32 %v6296, 7
        %v6298 = vsub.s32 1, %v6297
        %v6299 = vrot.slane %v5866, %v6298
        %v6300 = vlaneseq
        %v6301 = vshrl.u32 %v6300, 7
        %v6302 = vsub.s32 2, %v6301
        %v6303 = vrot.slane %v5866, %v6302
        %v6304 = vlaneseq
        %v6305 = vshrl.u32 %v6304, 7
        %v6306 = vsub.s32 0, %v6305
        %v6307 = vrot.slane %v5880, %v6306
        %v6308 = vlaneseq
        %v6309 = vshrl.u32 %v6308, 7
        %v6310 = vsub.s32 1, %v6309
        %v6311 = vrot.slane %v5880, %v6310
        %v6312 = vlaneseq
        %v6313 = vshrl.u32 %v6312, 7
        %v6314 = vsub.s32 2, %v6313
        %v6315 = vrot.slane %v5880, %v6314
        %v6316 = vlaneseq
        %v6317 = vshrl.u32 %v6316, 7
        %v6318 = vsub.s32 0, %v6317
        %v6319 = vrot.slane %v5888, %v6318
        %v6320 = vlaneseq
        %v6321 = vshrl.u32 %v6320, 7
        %v6322 = vsub.s32 1, %v6321
        %v6323 = vrot.slane %v5888, %v6322
        %v6324 = vlaneseq
        %v6325 = vshrl.u32 %v6324, 7
        %v6326 = vsub.s32 2, %v6325
        %v6327 = vrot.slane %v5888, %v6326
        %v6328 = vlaneseq
        %v6329 = vshrl.u32 %v6328, 7
        %v6330 = vsub.s32 0, %v6329
        %v6331 = vrot.slane %v5890, %v6330
        %v6332 = vlaneseq
        %v6333 = vshrl.u32 %v6332, 7
        %v6334 = vsub.s32 1, %v6333
        %v6335 = vrot.slane %v5890, %v6334
        %v6336 = vlaneseq
        %v6337 = vshrl.u32 %v6336, 7
        %v6338 = vsub.s32 2, %v6337
        %v6339 = vrot.slane %v5890, %v6338
        %v6340 = vlaneseq
        %v6341 = vshrl.u32 %v6340, 7
        %v6342 = vsub.s32 0, %v6341
        %v6343 = vrot.slane %v5873, %v6342
        %v6344 = vlaneseq
        %v6345 = vshrl.u32 %v6344, 7
        %v6346 = vsub.s32 1, %v6345
        %v6347 = vrot.slane %v5873, %v6346
        %v6348 = vlaneseq
        %v6349 = vshrl.u32 %v6348, 7
        %v6350 = vsub.s32 2, %v6349
        %v6351 = vrot.slane %v5873, %v6350
        %v6352 = vlaneseq
        %v6353 = vshrl.u32 %v6352, 7
        %v6354 = vsub.s32 0, %v6353
        %v6355 = vrot.slane %v5887, %v6354
        %v6356 = vlaneseq
        %v6357 = vshrl.u32 %v6356, 7
        %v6358 = vsub.s32 1, %v6357
        %v6359 = vrot.slane %v5887, %v6358
        %v6360 = vlaneseq
        %v6361 = vshrl.u32 %v6360, 7
        %v6362 = vsub.s32 2, %v6361
        %v6363 = vrot.slane %v5887, %v6362
        %v6364 = vlaneseq
        %v6365 = vshrl.u32 %v6364, 7
        %v6366 = vsub.s32 0, %v6365
        %v6367 = vrot.slane %v5889, %v6366
        %v6368 = vlaneseq
        %v6369 = vshrl.u32 %v6368, 7
        %v6370 = vsub.s32 1, %v6369
        %v6371 = vrot.slane %v5889, %v6370
        %v6372 = vlaneseq
        %v6373 = vshrl.u32 %v6372, 7
        %v6374 = vsub.s32 2, %v6373
        %v6375 = vrot.slane %v5889, %v6374
        %v6376 = vlaneseq
        %v6377 = vshrl.u32 %v6376, 7
        %v6378 = vsub.s32 0, %v6377
        %v6379 = vrot.slane %v5891, %v6378
        %v6380 = vlaneseq
        %v6381 = vshrl.u32 %v6380, 7
        %v6382 = vsub.s32 1, %v6381
        %v6383 = vrot.slane %v5891, %v6382
        %v6384 = vlaneseq
        %v6385 = vshrl.u32 %v6384, 7
        %v6386 = vsub.s32 2, %v6385
        %v6387 = vrot.slane %v5891, %v6386
        %v6388 = vlaneseq
        %v6389 = vshrl.u32 %v6388, 7
        %v6390 = vsub.s32 0, %v6389
        %v6391 = vrot.slane %v5933, %v6390
        %v6392 = vlaneseq
        %v6393 = vshrl.u32 %v6392, 7
        %v6394 = vsub.s32 1, %v6393
        %v6395 = vrot.slane %v5933, %v6394
        %v6396 = vlaneseq
        %v6397 = vshrl.u32 %v6396, 7
        %v6398 = vsub.s32 2, %v6397
        %v6399 = vrot.slane %v5933, %v6398
        %v6400 = vlaneseq
        %v6401 = vshrl.u32 %v6400, 7
        %v6402 = vsub.s32 0, %v6401
        %v6403 = vrot.slane %v5947, %v6402
        %v6404 = vlaneseq
        %v6405 = vshrl.u32 %v6404, 7
        %v6406 = vsub.s32 1, %v6405
        %v6407 = vrot.slane %v5947, %v6406
        %v6408 = vlaneseq
        %v6409 = vshrl.u32 %v6408, 7
        %v6410 = vsub.s32 2, %v6409
        %v6411 = vrot.slane %v5947, %v6410
        %v6412 = vlaneseq
        %v6413 = vshrl.u32 %v6412, 7
        %v6414 = vsub.s32 0, %v6413
        %v6415 = vrot.slane %v5955, %v6414
        %v6416 = vlaneseq
        %v6417 = vshrl.u32 %v6416, 7
        %v6418 = vsub.s32 1, %v6417
        %v6419 = vrot.slane %v5955, %v6418
        %v6420 = vlaneseq
        %v6421 = vshrl.u32 %v6420, 7
        %v6422 = vsub.s32 2, %v6421
        %v6423 = vrot.slane %v5955, %v6422
        %v6424 = vlaneseq
        %v6425 = vshrl.u32 %v6424, 7
        %v6426 = vsub.s32 0, %v6425
        %v6427 = vrot.slane %v5957, %v6426
        %v6428 = vlaneseq
        %v6429 = vshrl.u32 %v6428, 7
        %v6430 = vsub.s32 1, %v6429
        %v6431 = vrot.slane %v5957, %v6430
        %v6432 = vlaneseq
        %v6433 = vshrl.u32 %v6432, 7
        %v6434 = vsub.s32 2, %v6433
        %v6435 = vrot.slane %v5957, %v6434
        %v6436 = vlaneseq
        %v6437 = vshrl.u32 %v6436, 7
        %v6438 = vsub.s32 0, %v6437
        %v6439 = vrot.slane %v5940, %v6438
        %v6440 = vlaneseq
        %v6441 = vshrl.u32 %v6440, 7
        %v6442 = vsub.s32 1, %v6441
        %v6443 = vrot.slane %v5940, %v6442
        %v6444 = vlaneseq
        %v6445 = vshrl.u32 %v6444, 7
        %v6446 = vsub.s32 2, %v6445
        %v6447 = vrot.slane %v5940, %v6446
        %v6448 = vlaneseq
        %v6449 = vshrl.u32 %v6448, 7
        %v6450 = vsub.s32 0, %v6449
        %v6451 = vrot.slane %v5954, %v6450
        %v6452 = vlaneseq
        %v6453 = vshrl.u32 %v6452, 7
        %v6454 = vsub.s32 1, %v6453
        %v6455 = vrot.slane %v5954, %v6454
        %v6456 = vlaneseq
        %v6457 = vshrl.u32 %v6456, 7
        %v6458 = vsub.s32 2, %v6457
        %v6459 = vrot.slane %v5954, %v6458
        %v6460 = vlaneseq
        %v6461 = vshrl.u32 %v6460, 7
        %v6462 = vsub.s32 0, %v6461
        %v6463 = vrot.slane %v5956, %v6462
        %v6464 = vlaneseq
        %v6465 = vshrl.u32 %v6464, 7
        %v6466 = vsub.s32 1, %v6465
        %v6467 = vrot.slane %v5956, %v6466
        %v6468 = vlaneseq
        %v6469 = vshrl.u32 %v6468, 7
        %v6470 = vsub.s32 2, %v6469
        %v6471 = vrot.slane %v5956, %v6470
        %v6472 = vlaneseq
        %v6473 = vshrl.u32 %v6472, 7
        %v6474 = vsub.s32 0, %v6473
        %v6475 = vrot.slane %v5958, %v6474
        %v6476 = vlaneseq
        %v6477 = vshrl.u32 %v6476, 7
        %v6478 = vsub.s32 1, %v6477
        %v6479 = vrot.slane %v5958, %v6478
        %v6480 = vlaneseq
        %v6481 = vshrl.u32 %v6480, 7
        %v6482 = vsub.s32 2, %v6481
        %v6483 = vrot.slane %v5958, %v6482
        %v6484 = vlaneseq
        %v6485 = vshrl.u32 %v6484, 7
        %v6486 = vsub.s32 0, %v6485
        %v6487 = vrot.slane %v5982, %v6486
        %v6488 = vlaneseq
        %v6489 = vshrl.u32 %v6488, 7
        %v6490 = vsub.s32 1, %v6489
        %v6491 = vrot.slane %v5982, %v6490
        %v6492 = vlaneseq
        %v6493 = vshrl.u32 %v6492, 7
        %v6494 = vsub.s32 2, %v6493
        %v6495 = vrot.slane %v5982, %v6494
        %v6496 = vlaneseq
        %v6497 = vshrl.u32 %v6496, 7
        %v6498 = vsub.s32 0, %v6497
        %v6499 = vrot.slane %v5989, %v6498
        %v6500 = vlaneseq
        %v6501 = vshrl.u32 %v6500, 7
        %v6502 = vsub.s32 1, %v6501
        %v6503 = vrot.slane %v5989, %v6502
        %v6504 = vlaneseq
        %v6505 = vshrl.u32 %v6504, 7
        %v6506 = vsub.s32 2, %v6505
        %v6507 = vrot.slane %v5989, %v6506
        %v6508 = vlaneseq
        %v6509 = vshrl.u32 %v6508, 7
        %v6510 = vsub.s32 0, %v6509
        %v6511 = vrot.slane %v5990, %v6510
        %v6512 = vlaneseq
        %v6513 = vshrl.u32 %v6512, 7
        %v6514 = vsub.s32 1, %v6513
        %v6515 = vrot.slane %v5990, %v6514
        %v6516 = vlaneseq
        %v6517 = vshrl.u32 %v6516, 7
        %v6518 = vsub.s32 2, %v6517
        %v6519 = vrot.slane %v5990, %v6518
        %v6520 = vlaneseq
        %v6521 = vshrl.u32 %v6520, 7
        %v6522 = vsub.s32 0, %v6521
        %v6523 = vrot.slane %v5991, %v6522
        %v6524 = vlaneseq
        %v6525 = vshrl.u32 %v6524, 7
        %v6526 = vsub.s32 1, %v6525
        %v6527 = vrot.slane %v5991, %v6526
        %v6528 = vlaneseq
        %v6529 = vshrl.u32 %v6528, 7
        %v6530 = vsub.s32 2, %v6529
        %v6531 = vrot.slane %v5991, %v6530
        %v6592 = vsel %vm1172, %v5995, %v6295
        %v6593 = vsel %vm1172, %v5999, %v6299
        %v6594 = vsel %vm1172, %v6003, %v6303
        %v6595 = vsel %vm1172, %v6007, %v6307
        %v6596 = vsel %vm1172, %v6011, %v6311
        %v6597 = vsel %vm1172, %v6015, %v6315
        %v6598 = vsel %vm1172, %v6019, %v6319
        %v6599 = vsel %vm1172, %v6023, %v6323
        %v6600 = vsel %vm1172, %v6027, %v6327
        %v6601 = vsel %vm1172, %v6031, %v6331
        %v6602 = vsel %vm1172, %v6035, %v6335
        %v6603 = vsel %vm1172, %v6039, %v6339
        %v6604 = vsel %vm1172, %v6043, %v6343
        %v6605 = vsel %vm1172, %v6047, %v6347
        %v6606 = vsel %vm1172, %v6051, %v6351
        %v6607 = vsel %vm1172, %v6055, %v6355
        %v6608 = vsel %vm1172, %v6059, %v6359
        %v6609 = vsel %vm1172, %v6063, %v6363
        %v6610 = vsel %vm1172, %v6067, %v6367
        %v6611 = vsel %vm1172, %v6071, %v6371
        %v6612 = vsel %vm1172, %v6075, %v6375
        %v6613 = vsel %vm1172, %v6079, %v6379
        %v6614 = vsel %vm1172, %v6083, %v6383
        %v6615 = vsel %vm1172, %v6087, %v6387
        %v6616 = vsel %vm1172, %v6091, %v6391
        %v6617 = vsel %vm1172, %v6095, %v6395
        %v6618 = vsel %vm1172, %v6099, %v6399
        %v6619 = vsel %vm1172, %v6103, %v6403
        %v6620 = vsel %vm1172, %v6107, %v6407
        %v6621 = vsel %vm1172, %v6111, %v6411
        %v6622 = vsel %vm1172, %v6115, %v6415
        %v6623 = vsel %vm1172, %v6119, %v6419
        %v6624 = vsel %vm1172, %v6123, %v6423
        %v6625 = vsel %vm1172, %v6127, %v6427
        %v6626 = vsel %vm1172, %v6131, %v6431
        %v6627 = vsel %vm1172, %v6135, %v6435
        %v6628 = vsel %vm1172, %v6139, %v6439
        %v6629 = vsel %vm1172, %v6143, %v6443
        %v6630 = vsel %vm1172, %v6147, %v6447
        %v6631 = vsel %vm1172, %v6151, %v6451
        %v6632 = vsel %vm1172, %v6155, %v6455
        %v6633 = vsel %vm1172, %v6159, %v6459
        %v6634 = vsel %vm1172, %v6163, %v6463
        %v6635 = vsel %vm1172, %v6167, %v6467
        %v6636 = vsel %vm1172, %v6171, %v6471
        %v6637 = vsel %vm1172, %v6175, %v6475
        %v6638 = vsel %vm1172, %v6179, %v6479
        %v6639 = vsel %vm1172, %v6183, %v6483
        %v6640 = vsel %vm1172, %v6187, %v6487
        %v6641 = vsel %vm1172, %v6191, %v6491
        %v6642 = vsel %vm1172, %v6195, %v6495
        %v6643 = vsel %vm1172, %v6199, %v6499
        %v6644 = vsel %vm1172, %v6203, %v6503
        %v6645 = vsel %vm1172, %v6207, %v6507
        %v6646 = vsel %vm1172, %v6211, %v6511
        %v6647 = vsel %vm1172, %v6215, %v6515
        %v6648 = vsel %vm1172, %v6219, %v6519
        %v6649 = vsel %vm1172, %v6223, %v6523
        %v6650 = vsel %vm1172, %v6227, %v6527
        %v6651 = vsel %vm1172, %v6231, %v6531
        %v6712 = vcombine.low %v6592, %v6593
        %v6714 = vunpack.c.l.s4 1983009808
        %v6715 = vunpack.c.0.s8 %v6714
        %v6716 = vlaneseq
        %v6717 = vshrl.u32 %v6716, 7
        %v6718 = vsub.s32 %v6715, %v6717
        %v6719 = vrot.slane %v6712, %v6718
        %v6721 = vunpack.c.l.s4 1983009808
        %v6722 = vunpack.c.0.s8 %v6721
        %v6723 = vlaneseq
        %v6724 = vshrl.u32 %v6723, 7
        %v6725 = vsub.s32 %v6722, %v6724
        %v6726 = vrot.slane %v6594, %v6725
        %v6727 = vcombine.low %v6719, %v6726
        %v6728 = vcombine.low %v6595, %v6596
        %v6730 = vunpack.c.l.s4 1983009808
        %v6731 = vunpack.c.0.s8 %v6730
        %v6732 = vlaneseq
        %v6733 = vshrl.u32 %v6732, 7
        %v6734 = vsub.s32 %v6731, %v6733
        %v6735 = vrot.slane %v6728, %v6734
        %v6737 = vunpack.c.l.s4 1983009808
        %v6738 = vunpack.c.0.s8 %v6737
        %v6739 = vlaneseq
        %v6740 = vshrl.u32 %v6739, 7
        %v6741 = vsub.s32 %v6738, %v6740
        %v6742 = vrot.slane %v6597, %v6741
        %v6743 = vcombine.low %v6735, %v6742
        %v6744 = vcombine.low %v6598, %v6599
        %v6746 = vunpack.c.l.s4 1983009808
        %v6747 = vunpack.c.0.s8 %v6746
        %v6748 = vlaneseq
        %v6749 = vshrl.u32 %v6748, 7
        %v6750 = vsub.s32 %v6747, %v6749
        %v6751 = vrot.slane %v6744, %v6750
        %v6753 = vunpack.c.l.s4 1983009808
        %v6754 = vunpack.c.0.s8 %v6753
        %v6755 = vlaneseq
        %v6756 = vshrl.u32 %v6755, 7
        %v6757 = vsub.s32 %v6754, %v6756
        %v6758 = vrot.slane %v6600, %v6757
        %v6759 = vcombine.low %v6751, %v6758
        %v6760 = vcombine.low %v6601, %v6602
        %v6762 = vunpack.c.l.s4 1983009808
        %v6763 = vunpack.c.0.s8 %v6762
        %v6764 = vlaneseq
        %v6765 = vshrl.u32 %v6764, 7
        %v6766 = vsub.s32 %v6763, %v6765
        %v6767 = vrot.slane %v6760, %v6766
        %v6769 = vunpack.c.l.s4 1983009808
        %v6770 = vunpack.c.0.s8 %v6769
        %v6771 = vlaneseq
        %v6772 = vshrl.u32 %v6771, 7
        %v6773 = vsub.s32 %v6770, %v6772
        %v6774 = vrot.slane %v6603, %v6773
        %v6775 = vcombine.low %v6767, %v6774
        %v6776 = vcombine.low %v6604, %v6605
        %v6778 = vunpack.c.l.s4 1983009808
        %v6779 = vunpack.c.0.s8 %v6778
        %v6780 = vlaneseq
        %v6781 = vshrl.u32 %v6780, 7
        %v6782 = vsub.s32 %v6779, %v6781
        %v6783 = vrot.slane %v6776, %v6782
        %v6785 = vunpack.c.l.s4 1983009808
        %v6786 = vunpack.c.0.s8 %v6785
        %v6787 = vlaneseq
        %v6788 = vshrl.u32 %v6787, 7
        %v6789 = vsub.s32 %v6786, %v6788
        %v6790 = vrot.slane %v6606, %v6789
        %v6791 = vcombine.low %v6783, %v6790
        %v6792 = vcombine.low %v6607, %v6608
        %v6794 = vunpack.c.l.s4 1983009808
        %v6795 = vunpack.c.0.s8 %v6794
        %v6796 = vlaneseq
        %v6797 = vshrl.u32 %v6796, 7
        %v6798 = vsub.s32 %v6795, %v6797
        %v6799 = vrot.slane %v6792, %v6798
        %v6801 = vunpack.c.l.s4 1983009808
        %v6802 = vunpack.c.0.s8 %v6801
        %v6803 = vlaneseq
        %v6804 = vshrl.u32 %v6803, 7
        %v6805 = vsub.s32 %v6802, %v6804
        %v6806 = vrot.slane %v6609, %v6805
        %v6807 = vcombine.low %v6799, %v6806
        %v6808 = vcombine.low %v6610, %v6611
        %v6810 = vunpack.c.l.s4 1983009808
        %v6811 = vunpack.c.0.s8 %v6810
        %v6812 = vlaneseq
        %v6813 = vshrl.u32 %v6812, 7
        %v6814 = vsub.s32 %v6811, %v6813
        %v6815 = vrot.slane %v6808, %v6814
        %v6817 = vunpack.c.l.s4 1983009808
        %v6818 = vunpack.c.0.s8 %v6817
        %v6819 = vlaneseq
        %v6820 = vshrl.u32 %v6819, 7
        %v6821 = vsub.s32 %v6818, %v6820
        %v6822 = vrot.slane %v6612, %v6821
        %v6823 = vcombine.low %v6815, %v6822
        %v6824 = vcombine.low %v6613, %v6614
        %v6826 = vunpack.c.l.s4 1983009808
        %v6827 = vunpack.c.0.s8 %v6826
        %v6828 = vlaneseq
        %v6829 = vshrl.u32 %v6828, 7
        %v6830 = vsub.s32 %v6827, %v6829
        %v6831 = vrot.slane %v6824, %v6830
        %v6833 = vunpack.c.l.s4 1983009808
        %v6834 = vunpack.c.0.s8 %v6833
        %v6835 = vlaneseq
        %v6836 = vshrl.u32 %v6835, 7
        %v6837 = vsub.s32 %v6834, %v6836
        %v6838 = vrot.slane %v6615, %v6837
        %v6839 = vcombine.low %v6831, %v6838
        %v6840 = vcombine.low %v6616, %v6617
        %v6842 = vunpack.c.l.s4 1983009808
        %v6843 = vunpack.c.0.s8 %v6842
        %v6844 = vlaneseq
        %v6845 = vshrl.u32 %v6844, 7
        %v6846 = vsub.s32 %v6843, %v6845
        %v6847 = vrot.slane %v6840, %v6846
        %v6849 = vunpack.c.l.s4 1983009808
        %v6850 = vunpack.c.0.s8 %v6849
        %v6851 = vlaneseq
        %v6852 = vshrl.u32 %v6851, 7
        %v6853 = vsub.s32 %v6850, %v6852
        %v6854 = vrot.slane %v6618, %v6853
        %v6855 = vcombine.low %v6847, %v6854
        %v6856 = vcombine.low %v6619, %v6620
        %v6858 = vunpack.c.l.s4 1983009808
        %v6859 = vunpack.c.0.s8 %v6858
        %v6860 = vlaneseq
        %v6861 = vshrl.u32 %v6860, 7
        %v6862 = vsub.s32 %v6859, %v6861
        %v6863 = vrot.slane %v6856, %v6862
        %v6865 = vunpack.c.l.s4 1983009808
        %v6866 = vunpack.c.0.s8 %v6865
        %v6867 = vlaneseq
        %v6868 = vshrl.u32 %v6867, 7
        %v6869 = vsub.s32 %v6866, %v6868
        %v6870 = vrot.slane %v6621, %v6869
        %v6871 = vcombine.low %v6863, %v6870
        %v6872 = vcombine.low %v6622, %v6623
        %v6874 = vunpack.c.l.s4 1983009808
        %v6875 = vunpack.c.0.s8 %v6874
        %v6876 = vlaneseq
        %v6877 = vshrl.u32 %v6876, 7
        %v6878 = vsub.s32 %v6875, %v6877
        %v6879 = vrot.slane %v6872, %v6878
        %v6881 = vunpack.c.l.s4 1983009808
        %v6882 = vunpack.c.0.s8 %v6881
        %v6883 = vlaneseq
        %v6884 = vshrl.u32 %v6883, 7
        %v6885 = vsub.s32 %v6882, %v6884
        %v6886 = vrot.slane %v6624, %v6885
        %v6887 = vcombine.low %v6879, %v6886
        %v6888 = vcombine.low %v6625, %v6626
        %v6890 = vunpack.c.l.s4 1983009808
        %v6891 = vunpack.c.0.s8 %v6890
        %v6892 = vlaneseq
        %v6893 = vshrl.u32 %v6892, 7
        %v6894 = vsub.s32 %v6891, %v6893
        %v6895 = vrot.slane %v6888, %v6894
        %v6897 = vunpack.c.l.s4 1983009808
        %v6898 = vunpack.c.0.s8 %v6897
        %v6899 = vlaneseq
        %v6900 = vshrl.u32 %v6899, 7
        %v6901 = vsub.s32 %v6898, %v6900
        %v6902 = vrot.slane %v6627, %v6901
        %v6903 = vcombine.low %v6895, %v6902
        %v6904 = vcombine.low %v6628, %v6629
        %v6906 = vunpack.c.l.s4 1983009808
        %v6907 = vunpack.c.0.s8 %v6906
        %v6908 = vlaneseq
        %v6909 = vshrl.u32 %v6908, 7
        %v6910 = vsub.s32 %v6907, %v6909
        %v6911 = vrot.slane %v6904, %v6910
        %v6913 = vunpack.c.l.s4 1983009808
        %v6914 = vunpack.c.0.s8 %v6913
        %v6915 = vlaneseq
        %v6916 = vshrl.u32 %v6915, 7
        %v6917 = vsub.s32 %v6914, %v6916
        %v6918 = vrot.slane %v6630, %v6917
        %v6919 = vcombine.low %v6911, %v6918
        %v6920 = vcombine.low %v6631, %v6632
        %v6922 = vunpack.c.l.s4 1983009808
        %v6923 = vunpack.c.0.s8 %v6922
        %v6924 = vlaneseq
        %v6925 = vshrl.u32 %v6924, 7
        %v6926 = vsub.s32 %v6923, %v6925
        %v6927 = vrot.slane %v6920, %v6926
        %v6929 = vunpack.c.l.s4 1983009808
        %v6930 = vunpack.c.0.s8 %v6929
        %v6931 = vlaneseq
        %v6932 = vshrl.u32 %v6931, 7
        %v6933 = vsub.s32 %v6930, %v6932
        %v6934 = vrot.slane %v6633, %v6933
        %v6935 = vcombine.low %v6927, %v6934
        %v6936 = vcombine.low %v6634, %v6635
        %v6938 = vunpack.c.l.s4 1983009808
        %v6939 = vunpack.c.0.s8 %v6938
        %v6940 = vlaneseq
        %v6941 = vshrl.u32 %v6940, 7
        %v6942 = vsub.s32 %v6939, %v6941
        %v6943 = vrot.slane %v6936, %v6942
        %v6945 = vunpack.c.l.s4 1983009808
        %v6946 = vunpack.c.0.s8 %v6945
        %v6947 = vlaneseq
        %v6948 = vshrl.u32 %v6947, 7
        %v6949 = vsub.s32 %v6946, %v6948
        %v6950 = vrot.slane %v6636, %v6949
        %v6951 = vcombine.low %v6943, %v6950
        %v6952 = vcombine.low %v6637, %v6638
        %v6954 = vunpack.c.l.s4 1983009808
        %v6955 = vunpack.c.0.s8 %v6954
        %v6956 = vlaneseq
        %v6957 = vshrl.u32 %v6956, 7
        %v6958 = vsub.s32 %v6955, %v6957
        %v6959 = vrot.slane %v6952, %v6958
        %v6961 = vunpack.c.l.s4 1983009808
        %v6962 = vunpack.c.0.s8 %v6961
        %v6963 = vlaneseq
        %v6964 = vshrl.u32 %v6963, 7
        %v6965 = vsub.s32 %v6962, %v6964
        %v6966 = vrot.slane %v6639, %v6965
        %v6967 = vcombine.low %v6959, %v6966
        %v6968 = vcombine.low %v6640, %v6641
        %v6970 = vunpack.c.l.s4 1983009808
        %v6971 = vunpack.c.0.s8 %v6970
        %v6972 = vlaneseq
        %v6973 = vshrl.u32 %v6972, 7
        %v6974 = vsub.s32 %v6971, %v6973
        %v6975 = vrot.slane %v6968, %v6974
        %v6977 = vunpack.c.l.s4 1983009808
        %v6978 = vunpack.c.0.s8 %v6977
        %v6979 = vlaneseq
        %v6980 = vshrl.u32 %v6979, 7
        %v6981 = vsub.s32 %v6978, %v6980
        %v6982 = vrot.slane %v6642, %v6981
        %v6983 = vcombine.low %v6975, %v6982
        %v6984 = vcombine.low %v6643, %v6644
        %v6986 = vunpack.c.l.s4 1983009808
        %v6987 = vunpack.c.0.s8 %v6986
        %v6988 = vlaneseq
        %v6989 = vshrl.u32 %v6988, 7
        %v6990 = vsub.s32 %v6987, %v6989
        %v6991 = vrot.slane %v6984, %v6990
        %v6993 = vunpack.c.l.s4 1983009808
        %v6994 = vunpack.c.0.s8 %v6993
        %v6995 = vlaneseq
        %v6996 = vshrl.u32 %v6995, 7
        %v6997 = vsub.s32 %v6994, %v6996
        %v6998 = vrot.slane %v6645, %v6997
        %v6999 = vcombine.low %v6991, %v6998
        %v7000 = vcombine.low %v6646, %v6647
        %v7002 = vunpack.c.l.s4 1983009808
        %v7003 = vunpack.c.0.s8 %v7002
        %v7004 = vlaneseq
        %v7005 = vshrl.u32 %v7004, 7
        %v7006 = vsub.s32 %v7003, %v7005
        %v7007 = vrot.slane %v7000, %v7006
        %v7009 = vunpack.c.l.s4 1983009808
        %v7010 = vunpack.c.0.s8 %v7009
        %v7011 = vlaneseq
        %v7012 = vshrl.u32 %v7011, 7
        %v7013 = vsub.s32 %v7010, %v7012
        %v7014 = vrot.slane %v6648, %v7013
        %v7015 = vcombine.low %v7007, %v7014
        %v7016 = vcombine.low %v6649, %v6650
        %v7018 = vunpack.c.l.s4 1983009808
        %v7019 = vunpack.c.0.s8 %v7018
        %v7020 = vlaneseq
        %v7021 = vshrl.u32 %v7020, 7
        %v7022 = vsub.s32 %v7019, %v7021
        %v7023 = vrot.slane %v7016, %v7022
        %v7025 = vunpack.c.l.s4 1983009808
        %v7026 = vunpack.c.0.s8 %v7025
        %v7027 = vlaneseq
        %v7028 = vshrl.u32 %v7027, 7
        %v7029 = vsub.s32 %v7026, %v7028
        %v7030 = vrot.slane %v6651, %v7029
        %v7031 = vcombine.low %v7023, %v7030
        %v7052 = vld [vmem:[#allocation10] sm:$0x77]
        %v7053 = vld [vmem:[#allocation10 + $0x8] sm:$0x7]
        %v7056 = vlaneseq
        %v7057 = vshrl.u32 %v7056, 7
        %v7058 = vsub.s32 0, %v7057
        %v7059 = vrot.slane %v7052, %v7058
        %v7060 = vlaneseq
        %v7061 = vshrl.u32 %v7060, 7
        %v7062 = vsub.s32 4, %v7061
        %v7063 = vrot.slane %v7052, %v7062
        %v7064 = vlaneseq
        %v7065 = vshrl.u32 %v7064, 7
        %v7066 = vsub.s32 0, %v7065
        %v7067 = vrot.slane %v7053, %v7066
        %v7071 = vlaneseq
        %v7072 = vshrl.u32 %v7071, 7
        %v7073 = vsub.s32 0, %v7072
        %v7074 = vrot.slane %v7059, %v7073
        %v7075 = vlaneseq
        %v7076 = vshrl.u32 %v7075, 7
        %v7077 = vsub.s32 0, %v7076
        %v7078 = vrot.slane %v7063, %v7077
        %v7079 = vlaneseq
        %v7080 = vshrl.u32 %v7079, 7
        %v7081 = vsub.s32 0, %v7080
        %v7082 = vrot.slane %v7067, %v7081
        %v7086 = vcombine.low %v7074, %v7078
        %v7087 = vcombine.high %v7074, %v7078
        %v7088 = vcombine.high %v7082, %v7082
        %v7090 = vunpack.c.l.s4 1983009808
        %v7091 = vunpack.c.0.s8 %v7090
        %v7092 = vlaneseq
        %v7093 = vshrl.u32 %v7092, 7
        %v7094 = vsub.s32 %v7091, %v7093
        %v7095 = vrot.slane %v7086, %v7094
        %v7097 = vunpack.c.l.s4 1983009808
        %v7098 = vunpack.c.0.s8 %v7097
        %v7099 = vlaneseq
        %v7100 = vshrl.u32 %v7099, 7
        %v7101 = vsub.s32 %v7098, %v7100
        %v7102 = vrot.slane %v7087, %v7101
        %v7104 = vunpack.c.l.s4 1983009808
        %v7105 = vunpack.c.0.s8 %v7104
        %v7106 = vlaneseq
        %v7107 = vshrl.u32 %v7106, 7
        %v7108 = vsub.s32 %v7105, %v7107
        %v7109 = vrot.slane %v7082, %v7108
        %v7111 = vunpack.c.l.s4 1983009808
        %v7112 = vunpack.c.0.s8 %v7111
        %v7113 = vlaneseq
        %v7114 = vshrl.u32 %v7113, 7
        %v7115 = vsub.s32 %v7112, %v7114
        %v7116 = vrot.slane %v7088, %v7115
        %v7117 = vcombine.low %v7095, %v7109
        %v7118 = vcombine.high %v7095, %v7109
        %v7119 = vcombine.low %v7102, %v7116
        %v7120 = vcombine.high %v7102, %v7116
        %v7125 = vadd.f32 %v6727, %v7117
        %v7126 = vadd.f32 %v6743, %v7118
        %v7127 = vadd.f32 %v6759, %v7119
        %v7128 = vadd.f32 %v6775, %v7120
        %v7129 = vadd.f32 %v6791, %v7117
        %v7130 = vadd.f32 %v6807, %v7118
        %v7131 = vadd.f32 %v6823, %v7119
        %v7132 = vadd.f32 %v6839, %v7120
        %v7133 = vadd.f32 %v6855, %v7117
        %v7134 = vadd.f32 %v6871, %v7118
        %v7135 = vadd.f32 %v6887, %v7119
        %v7136 = vadd.f32 %v6903, %v7120
        %v7137 = vadd.f32 %v6919, %v7117
        %v7138 = vadd.f32 %v6935, %v7118
        %v7139 = vadd.f32 %v6951, %v7119
        %v7140 = vadd.f32 %v6967, %v7120
        %v7141 = vadd.f32 %v6983, %v7117
        %v7142 = vadd.f32 %v6999, %v7118
        %v7143 = vadd.f32 %v7015, %v7119
        %v7144 = vadd.f32 %v7031, %v7120
        %vm7145 = vcmp.ge.f32.partialorder %v7125, 0.0
        %vm7146 = vcmp.ge.f32.partialorder %v7126, 0.0
        %vm7147 = vcmp.ge.f32.partialorder %v7127, 0.0
        %vm7148 = vcmp.ge.f32.partialorder %v7128, 0.0
        %vm7149 = vcmp.ge.f32.partialorder %v7129, 0.0
        %vm7150 = vcmp.ge.f32.partialorder %v7130, 0.0
        %vm7151 = vcmp.ge.f32.partialorder %v7131, 0.0
        %vm7152 = vcmp.ge.f32.partialorder %v7132, 0.0
        %vm7153 = vcmp.ge.f32.partialorder %v7133, 0.0
        %vm7154 = vcmp.ge.f32.partialorder %v7134, 0.0
        %vm7155 = vcmp.ge.f32.partialorder %v7135, 0.0
        %vm7156 = vcmp.ge.f32.partialorder %v7136, 0.0
        %vm7157 = vcmp.ge.f32.partialorder %v7137, 0.0
        %vm7158 = vcmp.ge.f32.partialorder %v7138, 0.0
        %vm7159 = vcmp.ge.f32.partialorder %v7139, 0.0
        %vm7160 = vcmp.ge.f32.partialorder %v7140, 0.0
        %vm7161 = vcmp.ge.f32.partialorder %v7141, 0.0
        %vm7162 = vcmp.ge.f32.partialorder %v7142, 0.0
        %vm7163 = vcmp.ge.f32.partialorder %v7143, 0.0
        %vm7164 = vcmp.ge.f32.partialorder %v7144, 0.0
        %v7165 = vmul.f32 %v7125, 0.3
        %v7166 = vmul.f32 %v7126, 0.3
        %v7167 = vmul.f32 %v7127, 0.3
        %v7168 = vmul.f32 %v7128, 0.3
        %v7169 = vmul.f32 %v7129, 0.3
        %v7170 = vmul.f32 %v7130, 0.3
        %v7171 = vmul.f32 %v7131, 0.3
        %v7172 = vmul.f32 %v7132, 0.3
        %v7173 = vmul.f32 %v7133, 0.3
        %v7174 = vmul.f32 %v7134, 0.3
        %v7175 = vmul.f32 %v7135, 0.3
        %v7176 = vmul.f32 %v7136, 0.3
        %v7177 = vmul.f32 %v7137, 0.3
        %v7178 = vmul.f32 %v7138, 0.3
        %v7179 = vmul.f32 %v7139, 0.3
        %v7180 = vmul.f32 %v7140, 0.3
        %v7181 = vmul.f32 %v7141, 0.3
        %v7182 = vmul.f32 %v7142, 0.3
        %v7183 = vmul.f32 %v7143, 0.3
        %v7184 = vmul.f32 %v7144, 0.3
        %v7185 = vsel %vm7145, %v7125, %v7165
        %v7186 = vsel %vm7146, %v7126, %v7166
        %v7187 = vsel %vm7147, %v7127, %v7167
        %v7188 = vsel %vm7148, %v7128, %v7168
        %v7189 = vsel %vm7149, %v7129, %v7169
        %v7190 = vsel %vm7150, %v7130, %v7170
        %v7191 = vsel %vm7151, %v7131, %v7171
        %v7192 = vsel %vm7152, %v7132, %v7172
        %v7193 = vsel %vm7153, %v7133, %v7173
        %v7194 = vsel %vm7154, %v7134, %v7174
        %v7195 = vsel %vm7155, %v7135, %v7175
        %v7196 = vsel %vm7156, %v7136, %v7176
        %v7197 = vsel %vm7157, %v7137, %v7177
        %v7198 = vsel %vm7158, %v7138, %v7178
        %v7199 = vsel %vm7159, %v7139, %v7179
        %v7200 = vsel %vm7160, %v7140, %v7180
        %v7201 = vsel %vm7161, %v7141, %v7181
        %v7202 = vsel %vm7162, %v7142, %v7182
        %v7203 = vsel %vm7163, %v7143, %v7183
        %v7204 = vsel %vm7164, %v7144, %v7184
        %v7205 = vlaneseq
        %v7206 = vshrl.u32 %v7205, 7
        %v7207 = vsub.s32 1, %v7206
        %v7208 = vrot.slane %v7052, %v7207
        %v7209 = vlaneseq
        %v7210 = vshrl.u32 %v7209, 7
        %v7211 = vsub.s32 5, %v7210
        %v7212 = vrot.slane %v7052, %v7211
        %v7213 = vlaneseq
        %v7214 = vshrl.u32 %v7213, 7
        %v7215 = vsub.s32 1, %v7214
        %v7216 = vrot.slane %v7053, %v7215
        %v7220 = vlaneseq
        %v7221 = vshrl.u32 %v7220, 7
        %v7222 = vsub.s32 1, %v7221
        %v7223 = vrot.slane %v7208, %v7222
        %v7224 = vlaneseq
        %v7225 = vshrl.u32 %v7224, 7
        %v7226 = vsub.s32 1, %v7225
        %v7227 = vrot.slane %v7212, %v7226
        %v7228 = vlaneseq
        %v7229 = vshrl.u32 %v7228, 7
        %v7230 = vsub.s32 1, %v7229
        %v7231 = vrot.slane %v7216, %v7230
        %v7235 = vcombine.low %v7223, %v7227
        %v7236 = vcombine.high %v7223, %v7227
        %v7237 = vcombine.high %v7231, %v7231
        %v7239 = vunpack.c.l.s4 1983009808
        %v7240 = vunpack.c.0.s8 %v7239
        %v7241 = vlaneseq
        %v7242 = vshrl.u32 %v7241, 7
        %v7243 = vsub.s32 %v7240, %v7242
        %v7244 = vrot.slane %v7235, %v7243
        %v7246 = vunpack.c.l.s4 1983009808
        %v7247 = vunpack.c.0.s8 %v7246
        %v7248 = vlaneseq
        %v7249 = vshrl.u32 %v7248, 7
        %v7250 = vsub.s32 %v7247, %v7249
        %v7251 = vrot.slane %v7236, %v7250
        %v7253 = vunpack.c.l.s4 1983009808
        %v7254 = vunpack.c.0.s8 %v7253
        %v7255 = vlaneseq
        %v7256 = vshrl.u32 %v7255, 7
        %v7257 = vsub.s32 %v7254, %v7256
        %v7258 = vrot.slane %v7231, %v7257
        %v7260 = vunpack.c.l.s4 1983009808
        %v7261 = vunpack.c.0.s8 %v7260
        %v7262 = vlaneseq
        %v7263 = vshrl.u32 %v7262, 7
        %v7264 = vsub.s32 %v7261, %v7263
        %v7265 = vrot.slane %v7237, %v7264
        %v7266 = vcombine.low %v7244, %v7258
        %v7267 = vcombine.high %v7244, %v7258
        %v7268 = vcombine.low %v7251, %v7265
        %v7269 = vcombine.high %v7251, %v7265
        %v7274 = vmul.f32 %v7185, %v7266
        %v7275 = vmul.f32 %v7186, %v7267
        %v7276 = vmul.f32 %v7187, %v7268
        %v7277 = vmul.f32 %v7188, %v7269
        %v7278 = vmul.f32 %v7189, %v7266
        %v7279 = vmul.f32 %v7190, %v7267
        %v7280 = vmul.f32 %v7191, %v7268
        %v7281 = vmul.f32 %v7192, %v7269
        %v7282 = vmul.f32 %v7193, %v7266
        %v7283 = vmul.f32 %v7194, %v7267
        %v7284 = vmul.f32 %v7195, %v7268
        %v7285 = vmul.f32 %v7196, %v7269
        %v7286 = vmul.f32 %v7197, %v7266
        %v7287 = vmul.f32 %v7198, %v7267
        %v7288 = vmul.f32 %v7199, %v7268
        %v7289 = vmul.f32 %v7200, %v7269
        %v7290 = vmul.f32 %v7201, %v7266
        %v7291 = vmul.f32 %v7202, %v7267
        %v7292 = vmul.f32 %v7203, %v7268
        %v7293 = vmul.f32 %v7204, %v7269
        %v7294 = vlaneseq
        %v7295 = vshrl.u32 %v7294, 7
        %v7296 = vsub.s32 2, %v7295
        %v7297 = vrot.slane %v7052, %v7296
        %v7298 = vlaneseq
        %v7299 = vshrl.u32 %v7298, 7
        %v7300 = vsub.s32 6, %v7299
        %v7301 = vrot.slane %v7052, %v7300
        %v7302 = vlaneseq
        %v7303 = vshrl.u32 %v7302, 7
        %v7304 = vsub.s32 2, %v7303
        %v7305 = vrot.slane %v7053, %v7304
        %v7309 = vlaneseq
        %v7310 = vshrl.u32 %v7309, 7
        %v7311 = vsub.s32 2, %v7310
        %v7312 = vrot.slane %v7297, %v7311
        %v7313 = vlaneseq
        %v7314 = vshrl.u32 %v7313, 7
        %v7315 = vsub.s32 2, %v7314
        %v7316 = vrot.slane %v7301, %v7315
        %v7317 = vlaneseq
        %v7318 = vshrl.u32 %v7317, 7
        %v7319 = vsub.s32 2, %v7318
        %v7320 = vrot.slane %v7305, %v7319
        %v7324 = vcombine.low %v7312, %v7316
        %v7325 = vcombine.high %v7312, %v7316
        %v7326 = vcombine.high %v7320, %v7320
        %v7328 = vunpack.c.l.s4 1983009808
        %v7329 = vunpack.c.0.s8 %v7328
        %v7330 = vlaneseq
        %v7331 = vshrl.u32 %v7330, 7
        %v7332 = vsub.s32 %v7329, %v7331
        %v7333 = vrot.slane %v7324, %v7332
        %v7335 = vunpack.c.l.s4 1983009808
        %v7336 = vunpack.c.0.s8 %v7335
        %v7337 = vlaneseq
        %v7338 = vshrl.u32 %v7337, 7
        %v7339 = vsub.s32 %v7336, %v7338
        %v7340 = vrot.slane %v7325, %v7339
        %v7342 = vunpack.c.l.s4 1983009808
        %v7343 = vunpack.c.0.s8 %v7342
        %v7344 = vlaneseq
        %v7345 = vshrl.u32 %v7344, 7
        %v7346 = vsub.s32 %v7343, %v7345
        %v7347 = vrot.slane %v7320, %v7346
        %v7349 = vunpack.c.l.s4 1983009808
        %v7350 = vunpack.c.0.s8 %v7349
        %v7351 = vlaneseq
        %v7352 = vshrl.u32 %v7351, 7
        %v7353 = vsub.s32 %v7350, %v7352
        %v7354 = vrot.slane %v7326, %v7353
        %v7355 = vcombine.low %v7333, %v7347
        %v7356 = vcombine.high %v7333, %v7347
        %v7357 = vcombine.low %v7340, %v7354
        %v7358 = vcombine.high %v7340, %v7354
        %v7363 = vadd.f32 %v7274, %v7355
        %v7364 = vadd.f32 %v7275, %v7356
        %v7365 = vadd.f32 %v7276, %v7357
        %v7366 = vadd.f32 %v7277, %v7358
        %v7367 = vadd.f32 %v7278, %v7355
        %v7368 = vadd.f32 %v7279, %v7356
        %v7369 = vadd.f32 %v7280, %v7357
        %v7370 = vadd.f32 %v7281, %v7358
        %v7371 = vadd.f32 %v7282, %v7355
        %v7372 = vadd.f32 %v7283, %v7356
        %v7373 = vadd.f32 %v7284, %v7357
        %v7374 = vadd.f32 %v7285, %v7358
        %v7375 = vadd.f32 %v7286, %v7355
        %v7376 = vadd.f32 %v7287, %v7356
        %v7377 = vadd.f32 %v7288, %v7357
        %v7378 = vadd.f32 %v7289, %v7358
        %v7379 = vadd.f32 %v7290, %v7355
        %v7380 = vadd.f32 %v7291, %v7356
        %v7381 = vadd.f32 %v7292, %v7357
        %v7382 = vadd.f32 %v7293, %v7358
        %v7383 = vld [vmem:[#allocation12] sm:$0xff]
        %v7384 = vld [vmem:[#allocation12 + $0x8] sm:$0xff]
        %v7385 = vld [vmem:[#allocation12 + $0x10] sm:$0xff]
        %v7386 = vld [vmem:[#allocation12 + $0x18] sm:$0xff]
        %v7387 = vld [vmem:[#allocation12 + $0x20] sm:$0xff]
        %v7388 = vld [vmem:[#allocation12 + $0x28] sm:$0xff]
        %v7389 = vld [vmem:[#allocation12 + $0x30] sm:$0xff]
        %v7390 = vld [vmem:[#allocation12 + $0x38] sm:$0xff]
        %v7391 = vld [vmem:[#allocation12 + $0x40] sm:$0xff]
        %v7392 = vld [vmem:[#allocation12 + $0x48] sm:$0xff]
        %v7393 = vld [vmem:[#allocation12 + $0x50] sm:$0xff]
        %v7394 = vld [vmem:[#allocation12 + $0x58] sm:$0xff]
        %v7395 = vld [vmem:[#allocation12 + $0x60] sm:$0xff]
        %v7396 = vld [vmem:[#allocation12 + $0x68] sm:$0xff]
        %v7397 = vld [vmem:[#allocation12 + $0x70] sm:$0xff]
        %v7398 = vld [vmem:[#allocation12 + $0x78] sm:$0xff]
        %v7399 = vld [vmem:[#allocation12 + $0x80] sm:$0xff]
        %v7400 = vld [vmem:[#allocation12 + $0x88] sm:$0xff]
        %v7401 = vld [vmem:[#allocation12 + $0x90] sm:$0xff]
        %v7402 = vld [vmem:[#allocation12 + $0x98] sm:$0xff]
        %v7403 = vld [vmem:[#allocation12 + $0xa0] sm:$0xff]
        %v7404 = vld [vmem:[#allocation12 + $0xa8] sm:$0xff]
        %v7405 = vld [vmem:[#allocation12 + $0xb0] sm:$0xff]
        %v7406 = vld [vmem:[#allocation12 + $0xb8] sm:$0xff]
        %v7407 = vld [vmem:[#allocation12 + $0xc0] sm:$0xff]
        %v7408 = vld [vmem:[#allocation12 + $0xc8] sm:$0xff]
        %v7409 = vld [vmem:[#allocation12 + $0xd0] sm:$0xff]
        %v7410 = vld [vmem:[#allocation12 + $0xd8] sm:$0xff]
        %v7411 = vld [vmem:[#allocation12 + $0xe0] sm:$0xff]
        %v7412 = vld [vmem:[#allocation12 + $0xe8] sm:$0xff]
        %v7413 = vld [vmem:[#allocation12 + $0xf0] sm:$0xff]
        %v7414 = vld [vmem:[#allocation12 + $0xf8] sm:$0xff]
        %v7415 = vld [vmem:[#allocation12 + $0x100] sm:$0xff]
        %v7416 = vld [vmem:[#allocation12 + $0x108] sm:$0xff]
        %v7417 = vld [vmem:[#allocation12 + $0x110] sm:$0xff]
        %v7418 = vld [vmem:[#allocation12 + $0x118] sm:$0xff]
        %v7419 = vld [vmem:[#allocation12 + $0x120] sm:$0xff]
        %v7420 = vld [vmem:[#allocation12 + $0x128] sm:$0xff]
        %v7421 = vld [vmem:[#allocation12 + $0x130] sm:$0xff]
        %v7422 = vld [vmem:[#allocation12 + $0x138] sm:$0xff]
        %v7423 = vld [vmem:[#allocation12 + $0x140] sm:$0xff]
        %v7424 = vld [vmem:[#allocation12 + $0x148] sm:$0xff]
        %v7425 = vld [vmem:[#allocation12 + $0x150] sm:$0xff]
        %v7426 = vld [vmem:[#allocation12 + $0x158] sm:$0xff]
        %v7427 = vld [vmem:[#allocation12 + $0x160] sm:$0xff]
        %v7428 = vld [vmem:[#allocation12 + $0x168] sm:$0xff]
        %v7429 = vld [vmem:[#allocation12 + $0x170] sm:$0xff]
        %v7430 = vld [vmem:[#allocation12 + $0x178] sm:$0xff]
        %v7431 = vld [vmem:[#allocation12 + $0x180] sm:$0xff]
        %v7432 = vld [vmem:[#allocation12 + $0x188] sm:$0xff]
        %v7433 = vld [vmem:[#allocation12 + $0x190] sm:$0xff]
        %v7434 = vld [vmem:[#allocation12 + $0x198] sm:$0xff]
        %v7435 = vld [vmem:[#allocation12 + $0x1a0] sm:$0xff]
        %v7436 = vld [vmem:[#allocation12 + $0x1a8] sm:$0xff]
        %v7437 = vld [vmem:[#allocation12 + $0x1b0] sm:$0xff]
        %v7438 = vld [vmem:[#allocation12 + $0x1b8] sm:$0xff]
        %v7439 = vld [vmem:[#allocation12 + $0x1c0] sm:$0xff]
        %v7440 = vld [vmem:[#allocation12 + $0x1c8] sm:$0xff]
        %v7441 = vld [vmem:[#allocation12 + $0x1d0] sm:$0xff]
        %v7442 = vld [vmem:[#allocation12 + $0x1d8] sm:$0xff]
        %v7443 = vld [vmem:[#allocation12 + $0x1e0] sm:$0xff]
        %v7444 = vld [vmem:[#allocation12 + $0x1e8] sm:$0xff]
        %v7445 = vld [vmem:[#allocation12 + $0x1f0] sm:$0xff]
        %v7446 = vld [vmem:[#allocation12 + $0x1f8] sm:$0xff]
        %v7447 = vld [vmem:[#allocation12 + $0x200] sm:$0xff]
        %v7448 = vld [vmem:[#allocation12 + $0x208] sm:$0xff]
        %v7449 = vld [vmem:[#allocation12 + $0x210] sm:$0xff]
        %v7450 = vld [vmem:[#allocation12 + $0x218] sm:$0xff]
        %v7451 = vld [vmem:[#allocation12 + $0x220] sm:$0xff]
        %v7452 = vld [vmem:[#allocation12 + $0x228] sm:$0xff]
        %v7453 = vld [vmem:[#allocation12 + $0x230] sm:$0xff]
        %v7454 = vld [vmem:[#allocation12 + $0x238] sm:$0xff]
        %v7455 = vld [vmem:[#allocation12 + $0x240] sm:$0xff]
        %v7456 = vld [vmem:[#allocation12 + $0x248] sm:$0xff]
        %v7457 = vld [vmem:[#allocation12 + $0x250] sm:$0xff]
        %v7458 = vld [vmem:[#allocation12 + $0x258] sm:$0xff]
        %v7459 = vld [vmem:[#allocation12 + $0x260] sm:$0xff]
        %v7460 = vld [vmem:[#allocation12 + $0x268] sm:$0xff]
        %v7481 = vcombine.low %v7363, %v7364
        %v7482 = vcombine.high %v7363, %v7364
        %v7483 = vcombine.low %v7365, %v7366
        %v7484 = vcombine.high %v7365, %v7366
        %v7486 = vunpack.c.l.s4 1983009808
        %v7487 = vunpack.c.0.s8 %v7486
        %v7488 = vlaneseq
        %v7489 = vshrl.u32 %v7488, 7
        %v7490 = vsub.s32 %v7487, %v7489
        %v7491 = vrot.slane %v7481, %v7490
        %v7493 = vunpack.c.l.s4 1983009808
        %v7494 = vunpack.c.0.s8 %v7493
        %v7495 = vlaneseq
        %v7496 = vshrl.u32 %v7495, 7
        %v7497 = vsub.s32 %v7494, %v7496
        %v7498 = vrot.slane %v7482, %v7497
        %v7500 = vunpack.c.l.s4 1983009808
        %v7501 = vunpack.c.0.s8 %v7500
        %v7502 = vlaneseq
        %v7503 = vshrl.u32 %v7502, 7
        %v7504 = vsub.s32 %v7501, %v7503
        %v7505 = vrot.slane %v7483, %v7504
        %v7507 = vunpack.c.l.s4 1983009808
        %v7508 = vunpack.c.0.s8 %v7507
        %v7509 = vlaneseq
        %v7510 = vshrl.u32 %v7509, 7
        %v7511 = vsub.s32 %v7508, %v7510
        %v7512 = vrot.slane %v7484, %v7511
        %v7513 = vcombine.low %v7491, %v7505
        %v7514 = vcombine.high %v7491, %v7505
        %v7515 = vcombine.low %v7498, %v7512
        %v7516 = vcombine.low %v7367, %v7368
        %v7517 = vcombine.high %v7367, %v7368
        %v7518 = vcombine.low %v7369, %v7370
        %v7519 = vcombine.high %v7369, %v7370
        %v7521 = vunpack.c.l.s4 1983009808
        %v7522 = vunpack.c.0.s8 %v7521
        %v7523 = vlaneseq
        %v7524 = vshrl.u32 %v7523, 7
        %v7525 = vsub.s32 %v7522, %v7524
        %v7526 = vrot.slane %v7516, %v7525
        %v7528 = vunpack.c.l.s4 1983009808
        %v7529 = vunpack.c.0.s8 %v7528
        %v7530 = vlaneseq
        %v7531 = vshrl.u32 %v7530, 7
        %v7532 = vsub.s32 %v7529, %v7531
        %v7533 = vrot.slane %v7517, %v7532
        %v7535 = vunpack.c.l.s4 1983009808
        %v7536 = vunpack.c.0.s8 %v7535
        %v7537 = vlaneseq
        %v7538 = vshrl.u32 %v7537, 7
        %v7539 = vsub.s32 %v7536, %v7538
        %v7540 = vrot.slane %v7518, %v7539
        %v7542 = vunpack.c.l.s4 1983009808
        %v7543 = vunpack.c.0.s8 %v7542
        %v7544 = vlaneseq
        %v7545 = vshrl.u32 %v7544, 7
        %v7546 = vsub.s32 %v7543, %v7545
        %v7547 = vrot.slane %v7519, %v7546
        %v7548 = vcombine.low %v7526, %v7540
        %v7549 = vcombine.high %v7526, %v7540
        %v7550 = vcombine.low %v7533, %v7547
        %v7551 = vcombine.low %v7371, %v7372
        %v7552 = vcombine.high %v7371, %v7372
        %v7553 = vcombine.low %v7373, %v7374
        %v7554 = vcombine.high %v7373, %v7374
        %v7556 = vunpack.c.l.s4 1983009808
        %v7557 = vunpack.c.0.s8 %v7556
        %v7558 = vlaneseq
        %v7559 = vshrl.u32 %v7558, 7
        %v7560 = vsub.s32 %v7557, %v7559
        %v7561 = vrot.slane %v7551, %v7560
        %v7563 = vunpack.c.l.s4 1983009808
        %v7564 = vunpack.c.0.s8 %v7563
        %v7565 = vlaneseq
        %v7566 = vshrl.u32 %v7565, 7
        %v7567 = vsub.s32 %v7564, %v7566
        %v7568 = vrot.slane %v7552, %v7567
        %v7570 = vunpack.c.l.s4 1983009808
        %v7571 = vunpack.c.0.s8 %v7570
        %v7572 = vlaneseq
        %v7573 = vshrl.u32 %v7572, 7
        %v7574 = vsub.s32 %v7571, %v7573
        %v7575 = vrot.slane %v7553, %v7574
        %v7577 = vunpack.c.l.s4 1983009808
        %v7578 = vunpack.c.0.s8 %v7577
        %v7579 = vlaneseq
        %v7580 = vshrl.u32 %v7579, 7
        %v7581 = vsub.s32 %v7578, %v7580
        %v7582 = vrot.slane %v7554, %v7581
        %v7583 = vcombine.low %v7561, %v7575
        %v7584 = vcombine.high %v7561, %v7575
        %v7585 = vcombine.low %v7568, %v7582
        %v7586 = vcombine.low %v7375, %v7376
        %v7587 = vcombine.high %v7375, %v7376
        %v7588 = vcombine.low %v7377, %v7378
        %v7589 = vcombine.high %v7377, %v7378
        %v7591 = vunpack.c.l.s4 1983009808
        %v7592 = vunpack.c.0.s8 %v7591
        %v7593 = vlaneseq
        %v7594 = vshrl.u32 %v7593, 7
        %v7595 = vsub.s32 %v7592, %v7594
        %v7596 = vrot.slane %v7586, %v7595
        %v7598 = vunpack.c.l.s4 1983009808
        %v7599 = vunpack.c.0.s8 %v7598
        %v7600 = vlaneseq
        %v7601 = vshrl.u32 %v7600, 7
        %v7602 = vsub.s32 %v7599, %v7601
        %v7603 = vrot.slane %v7587, %v7602
        %v7605 = vunpack.c.l.s4 1983009808
        %v7606 = vunpack.c.0.s8 %v7605
        %v7607 = vlaneseq
        %v7608 = vshrl.u32 %v7607, 7
        %v7609 = vsub.s32 %v7606, %v7608
        %v7610 = vrot.slane %v7588, %v7609
        %v7612 = vunpack.c.l.s4 1983009808
        %v7613 = vunpack.c.0.s8 %v7612
        %v7614 = vlaneseq
        %v7615 = vshrl.u32 %v7614, 7
        %v7616 = vsub.s32 %v7613, %v7615
        %v7617 = vrot.slane %v7589, %v7616
        %v7618 = vcombine.low %v7596, %v7610
        %v7619 = vcombine.high %v7596, %v7610
        %v7620 = vcombine.low %v7603, %v7617
        %v7621 = vcombine.low %v7379, %v7380
        %v7622 = vcombine.high %v7379, %v7380
        %v7623 = vcombine.low %v7381, %v7382
        %v7624 = vcombine.high %v7381, %v7382
        %v7626 = vunpack.c.l.s4 1983009808
        %v7627 = vunpack.c.0.s8 %v7626
        %v7628 = vlaneseq
        %v7629 = vshrl.u32 %v7628, 7
        %v7630 = vsub.s32 %v7627, %v7629
        %v7631 = vrot.slane %v7621, %v7630
        %v7633 = vunpack.c.l.s4 1983009808
        %v7634 = vunpack.c.0.s8 %v7633
        %v7635 = vlaneseq
        %v7636 = vshrl.u32 %v7635, 7
        %v7637 = vsub.s32 %v7634, %v7636
        %v7638 = vrot.slane %v7622, %v7637
        %v7640 = vunpack.c.l.s4 1983009808
        %v7641 = vunpack.c.0.s8 %v7640
        %v7642 = vlaneseq
        %v7643 = vshrl.u32 %v7642, 7
        %v7644 = vsub.s32 %v7641, %v7643
        %v7645 = vrot.slane %v7623, %v7644
        %v7647 = vunpack.c.l.s4 1983009808
        %v7648 = vunpack.c.0.s8 %v7647
        %v7649 = vlaneseq
        %v7650 = vshrl.u32 %v7649, 7
        %v7651 = vsub.s32 %v7648, %v7650
        %v7652 = vrot.slane %v7624, %v7651
        %v7653 = vcombine.low %v7631, %v7645
        %v7654 = vcombine.high %v7631, %v7645
        %v7655 = vcombine.low %v7638, %v7652
        %vm7666 = vcmask 457728
        %v7667 = vsel %vm7666, %v7515, 0
        %v7669 = vsel %vm7666, %v7550, 0
        %v7671 = vsel %vm7666, %v7585, 0
        %v7673 = vsel %vm7666, %v7620, 0
        %v7675 = vsel %vm7666, %v7655, 0
        %7677 = vmatprep.subr.mxu0 %v7414
        %7678 = vmatpush1.msra.mxu0 %v7413
        %7679 = vmatprep.subr.mxu0 %v7412
        %7680 = vmatpush1.msra.mxu0 %v7411
        %7681 = vmatprep.subr.mxu0 %v7410
        %7682 = vmatpush1.msra.mxu0 %v7409
        %7683 = vmatprep.subr.mxu0 %v7408
        %7684 = vmatpush1.msra.mxu0 %v7407
        %7685 = vmatprep.subr.mxu0 %v7406
        %7686 = vmatpush1.msra.mxu0 %v7405
        %7687 = vmatprep.subr.mxu0 %v7404
        %7688 = vmatpush1.msra.mxu0 %v7403
        %7689 = vmatprep.subr.mxu0 %v7402
        %7690 = vmatpush1.msra.mxu0 %v7401
        %7691 = vmatprep.subr.mxu0 %v7400
        %7692 = vmatpush1.msra.mxu0 %v7399
        %7693 = vmatprep.subr.mxu0 %v7398
        %7694 = vmatpush1.msra.mxu0 %v7397
        %7695 = vmatprep.subr.mxu0 %v7396
        %7696 = vmatpush1.msra.mxu0 %v7395
        %7697 = vmatprep.subr.mxu0 %v7394
        %7698 = vmatpush1.msra.mxu0 %v7393
        %7699 = vmatprep.subr.mxu0 %v7392
        %7700 = vmatpush1.msra.mxu0 %v7391
        %7701 = vmatprep.subr.mxu0 %v7390
        %7702 = vmatpush1.msra.mxu0 %v7389
        %7703 = vmatprep.subr.mxu0 %v7388
        %7704 = vmatpush1.msra.mxu0 %v7387
        %7705 = vmatprep.subr.mxu0 %v7386
        %7706 = vmatpush1.msra.mxu0 %v7385
        %7707 = vmatprep.subr.mxu0 %v7384
        %7708 = vmatpush1.msra.mxu0 %v7383
        %7709 = vmatprep.subr.mxu0 %v7446
        %7710 = vmatpush2.msra.mxu0 %v7445
        %7711 = vmatprep.subr.mxu0 %v7444
        %7712 = vmatpush2.msra.mxu0 %v7443
        %7713 = vmatprep.subr.mxu0 %v7442
        %7714 = vmatpush2.msra.mxu0 %v7441
        %7715 = vmatprep.subr.mxu0 %v7440
        %7716 = vmatpush2.msra.mxu0 %v7439
        %7717 = vmatprep.subr.mxu0 %v7438
        %7718 = vmatpush2.msra.mxu0 %v7437
        %7719 = vmatprep.subr.mxu0 %v7436
        %7720 = vmatpush2.msra.mxu0 %v7435
        %7721 = vmatprep.subr.mxu0 %v7434
        %7722 = vmatpush2.msra.mxu0 %v7433
        %7723 = vmatprep.subr.mxu0 %v7432
        %7724 = vmatpush2.msra.mxu0 %v7431
        %7725 = vmatprep.subr.mxu0 %v7430
        %7726 = vmatpush2.msra.mxu0 %v7429
        %7727 = vmatprep.subr.mxu0 %v7428
        %7728 = vmatpush2.msra.mxu0 %v7427
        %7729 = vmatprep.subr.mxu0 %v7426
        %7730 = vmatpush2.msra.mxu0 %v7425
        %7731 = vmatprep.subr.mxu0 %v7424
        %7732 = vmatpush2.msra.mxu0 %v7423
        %7733 = vmatprep.subr.mxu0 %v7422
        %7734 = vmatpush2.msra.mxu0 %v7421
        %7735 = vmatprep.subr.mxu0 %v7420
        %7736 = vmatpush2.msra.mxu0 %v7419
        %7737 = vmatprep.subr.mxu0 %v7418
        %7738 = vmatpush2.msra.mxu0 %v7417
        %7739 = vmatprep.subr.mxu0 %v7416
        %7740 = vmatpush2.msra.mxu0 %v7415
        %7741 = vmatprep.mubr.f32.mxu0 %v7514
        %7742 = vmatmul.mubr.f32.gmra.mxu0 %v7513
        %v7743 = vpop.f32.mrf.mxu0
        %v7744 = vadd.f32 0.0, %v7743
        %v7745 = vpop.f32.mrf.mxu0
        %v7746 = vadd.f32 0.0, %v7745
        %7747 = vmatprep.mubr.f32.mxu0 %v7549
        %7748 = vmatmul.mubr.f32.gmra.mxu0 %v7548
        %v7749 = vpop.f32.mrf.mxu0
        %v7750 = vadd.f32 0.0, %v7749
        %v7751 = vpop.f32.mrf.mxu0
        %v7752 = vadd.f32 0.0, %v7751
        %7753 = vmatprep.mubr.f32.mxu0 %v7584
        %7754 = vmatmul.mubr.f32.gmra.mxu0 %v7583
        %v7755 = vpop.f32.mrf.mxu0
        %v7756 = vadd.f32 0.0, %v7755
        %v7757 = vpop.f32.mrf.mxu0
        %v7758 = vadd.f32 0.0, %v7757
        %7759 = vmatprep.mubr.f32.mxu0 %v7619
        %7760 = vmatmul.mubr.f32.gmra.mxu0 %v7618
        %v7761 = vpop.f32.mrf.mxu0
        %v7762 = vadd.f32 0.0, %v7761
        %v7763 = vpop.f32.mrf.mxu0
        %v7764 = vadd.f32 0.0, %v7763
        %7765 = vmatprep.mubr.f32.mxu0 %v7654
        %7766 = vmatmul.mubr.f32.gmra.mxu0 %v7653
        %v7767 = vpop.f32.mrf.mxu0
        %v7768 = vadd.f32 0.0, %v7767
        %v7769 = vpop.f32.mrf.mxu0
        %v7770 = vadd.f32 0.0, %v7769
        %7771 = vdwg.mxu0
        %7772 = vmatprep.subr.mxu0 0.0
        %7773 = vmatpush1.msra.mxu0 0.0
        %7774 = vmatprep.subr.mxu0 0.0
        %7775 = vmatpush1.msra.mxu0 0.0
        %7776 = vmatprep.subr.mxu0 0.0
        %7777 = vmatpush1.msra.mxu0 0.0
        %7778 = vmatprep.subr.mxu0 0.0
        %7779 = vmatpush1.msra.mxu0 0.0
        %7780 = vmatprep.subr.mxu0 0.0
        %7781 = vmatpush1.msra.mxu0 0.0
        %7782 = vmatprep.subr.mxu0 0.0
        %7783 = vmatpush1.msra.mxu0 0.0
        %7784 = vmatprep.subr.mxu0 0.0
        %7785 = vmatpush1.msra.mxu0 0.0
        %7786 = vmatprep.subr.mxu0 0.0
        %7787 = vmatpush1.msra.mxu0 0.0
        %7788 = vmatprep.subr.mxu0 0.0
        %7789 = vmatpush1.msra.mxu0 0.0
        %7790 = vmatprep.subr.mxu0 %v7460
        %7791 = vmatpush1.msra.mxu0 %v7459
        %7792 = vmatprep.subr.mxu0 %v7458
        %7793 = vmatpush1.msra.mxu0 %v7457
        %7794 = vmatprep.subr.mxu0 %v7456
        %7795 = vmatpush1.msra.mxu0 %v7455
        %7796 = vmatprep.subr.mxu0 %v7454
        %7797 = vmatpush1.msra.mxu0 %v7453
        %7798 = vmatprep.subr.mxu0 %v7452
        %7799 = vmatpush1.msra.mxu0 %v7451
        %7800 = vmatprep.subr.mxu0 %v7450
        %7801 = vmatpush1.msra.mxu0 %v7449
        %7802 = vmatprep.subr.mxu0 %v7448
        %7803 = vmatpush1.msra.mxu0 %v7447
        %7804 = vmatprep.subr.mxu0 0.0
        %7805 = vmatpush2.msra.mxu0 0.0
        %7806 = vmatprep.subr.mxu0 0.0
        %7807 = vmatpush2.msra.mxu0 0.0
        %7808 = vmatprep.subr.mxu0 0.0
        %7809 = vmatpush2.msra.mxu0 0.0
        %7810 = vmatprep.subr.mxu0 0.0
        %7811 = vmatpush2.msra.mxu0 0.0
        %7812 = vmatprep.subr.mxu0 0.0
        %7813 = vmatpush2.msra.mxu0 0.0
        %7814 = vmatprep.subr.mxu0 0.0
        %7815 = vmatpush2.msra.mxu0 0.0
        %7816 = vmatprep.subr.mxu0 0.0
        %7817 = vmatpush2.msra.mxu0 0.0
        %7818 = vmatprep.subr.mxu0 0.0
        %7819 = vmatpush2.msra.mxu0 0.0
        %7820 = vmatprep.subr.mxu0 0.0
        %7821 = vmatpush2.msra.mxu0 0.0
        %7822 = vmatprep.subr.mxu0 0.0
        %7823 = vmatpush2.msra.mxu0 0.0
        %7824 = vmatprep.subr.mxu0 0.0
        %7825 = vmatpush2.msra.mxu0 0.0
        %7826 = vmatprep.subr.mxu0 0.0
        %7827 = vmatpush2.msra.mxu0 0.0
        %7828 = vmatprep.subr.mxu0 0.0
        %7829 = vmatpush2.msra.mxu0 0.0
        %7830 = vmatprep.subr.mxu0 0.0
        %7831 = vmatpush2.msra.mxu0 0.0
        %7832 = vmatprep.subr.mxu0 0.0
        %7833 = vmatpush2.msra.mxu0 0.0
        %7834 = vmatprep.subr.mxu0 0.0
        %7835 = vmatpush2.msra.mxu0 0.0
        %7836 = vmatprep.mubr.f32.mxu0 0.0
        %7837 = vmatmul.mubr.f32.gmra.mxu0 %v7667
        %v7838 = vpop.f32.mrf.mxu0
        %v7839 = vadd.f32 %v7744, %v7838
        %v7840 = vpop.f32.mrf.mxu0
        %v7841 = vadd.f32 %v7746, %v7840
        %7842 = vmatprep.mubr.f32.mxu0 0.0
        %7843 = vmatmul.mubr.f32.gmra.mxu0 %v7669
        %v7844 = vpop.f32.mrf.mxu0
        %v7845 = vadd.f32 %v7750, %v7844
        %v7846 = vpop.f32.mrf.mxu0
        %v7847 = vadd.f32 %v7752, %v7846
        %7848 = vmatprep.mubr.f32.mxu0 0.0
        %7849 = vmatmul.mubr.f32.gmra.mxu0 %v7671
        %v7850 = vpop.f32.mrf.mxu0
        %v7851 = vadd.f32 %v7756, %v7850
        %v7852 = vpop.f32.mrf.mxu0
        %v7853 = vadd.f32 %v7758, %v7852
        %7854 = vmatprep.mubr.f32.mxu0 0.0
        %7855 = vmatmul.mubr.f32.gmra.mxu0 %v7673
        %v7856 = vpop.f32.mrf.mxu0
        %v7857 = vadd.f32 %v7762, %v7856
        %v7858 = vpop.f32.mrf.mxu0
        %v7859 = vadd.f32 %v7764, %v7858
        %7860 = vmatprep.mubr.f32.mxu0 0.0
        %7861 = vmatmul.mubr.f32.gmra.mxu0 %v7675
        %v7862 = vpop.f32.mrf.mxu0
        %v7863 = vadd.f32 %v7768, %v7862
        %v7864 = vpop.f32.mrf.mxu0
        %v7865 = vadd.f32 %v7770, %v7864
        %7866 = vdwg.mxu0
        %s7867 = scalar_lea.vmem [#allocation12], 624
        %v7868 = vld [vmem:[%s7867] sm:$0xff]
        %v7869 = vld [vmem:[%s7867 + $0x8] sm:$0xff]
        %v7870 = vld [vmem:[%s7867 + $0x10] sm:$0xff]
        %v7871 = vld [vmem:[%s7867 + $0x18] sm:$0xff]
        %v7872 = vld [vmem:[%s7867 + $0x20] sm:$0xff]
        %v7873 = vld [vmem:[%s7867 + $0x28] sm:$0xff]
        %v7874 = vld [vmem:[%s7867 + $0x30] sm:$0xff]
        %v7875 = vld [vmem:[%s7867 + $0x38] sm:$0xff]
        %v7876 = vld [vmem:[%s7867 + $0x40] sm:$0xff]
        %v7877 = vld [vmem:[%s7867 + $0x48] sm:$0xff]
        %v7878 = vld [vmem:[%s7867 + $0x50] sm:$0xff]
        %v7879 = vld [vmem:[%s7867 + $0x58] sm:$0xff]
        %v7880 = vld [vmem:[%s7867 + $0x60] sm:$0xff]
        %v7881 = vld [vmem:[%s7867 + $0x68] sm:$0xff]
        %v7882 = vld [vmem:[%s7867 + $0x70] sm:$0xff]
        %v7883 = vld [vmem:[%s7867 + $0x78] sm:$0xff]
        %v7884 = vld [vmem:[%s7867 + $0x80] sm:$0xff]
        %v7885 = vld [vmem:[%s7867 + $0x88] sm:$0xff]
        %v7886 = vld [vmem:[%s7867 + $0x90] sm:$0xff]
        %v7887 = vld [vmem:[%s7867 + $0x98] sm:$0xff]
        %v7888 = vld [vmem:[%s7867 + $0xa0] sm:$0xff]
        %v7889 = vld [vmem:[%s7867 + $0xa8] sm:$0xff]
        %v7890 = vld [vmem:[%s7867 + $0xb0] sm:$0xff]
        %v7891 = vld [vmem:[%s7867 + $0xb8] sm:$0xff]
        %v7892 = vld [vmem:[%s7867 + $0xc0] sm:$0xff]
        %v7893 = vld [vmem:[%s7867 + $0xc8] sm:$0xff]
        %v7894 = vld [vmem:[%s7867 + $0xd0] sm:$0xff]
        %v7895 = vld [vmem:[%s7867 + $0xd8] sm:$0xff]
        %v7896 = vld [vmem:[%s7867 + $0xe0] sm:$0xff]
        %v7897 = vld [vmem:[%s7867 + $0xe8] sm:$0xff]
        %v7898 = vld [vmem:[%s7867 + $0xf0] sm:$0xff]
        %v7899 = vld [vmem:[%s7867 + $0xf8] sm:$0xff]
        %v7900 = vld [vmem:[%s7867 + $0x100] sm:$0xff]
        %v7901 = vld [vmem:[%s7867 + $0x108] sm:$0xff]
        %v7902 = vld [vmem:[%s7867 + $0x110] sm:$0xff]
        %v7903 = vld [vmem:[%s7867 + $0x118] sm:$0xff]
        %v7904 = vld [vmem:[%s7867 + $0x120] sm:$0xff]
        %v7905 = vld [vmem:[%s7867 + $0x128] sm:$0xff]
        %v7906 = vld [vmem:[%s7867 + $0x130] sm:$0xff]
        %v7907 = vld [vmem:[%s7867 + $0x138] sm:$0xff]
        %v7908 = vld [vmem:[%s7867 + $0x140] sm:$0xff]
        %v7909 = vld [vmem:[%s7867 + $0x148] sm:$0xff]
        %v7910 = vld [vmem:[%s7867 + $0x150] sm:$0xff]
        %v7911 = vld [vmem:[%s7867 + $0x158] sm:$0xff]
        %v7912 = vld [vmem:[%s7867 + $0x160] sm:$0xff]
        %v7913 = vld [vmem:[%s7867 + $0x168] sm:$0xff]
        %v7914 = vld [vmem:[%s7867 + $0x170] sm:$0xff]
        %v7915 = vld [vmem:[%s7867 + $0x178] sm:$0xff]
        %v7916 = vld [vmem:[%s7867 + $0x180] sm:$0xff]
        %v7917 = vld [vmem:[%s7867 + $0x188] sm:$0xff]
        %v7918 = vld [vmem:[%s7867 + $0x190] sm:$0xff]
        %v7919 = vld [vmem:[%s7867 + $0x198] sm:$0xff]
        %v7920 = vld [vmem:[%s7867 + $0x1a0] sm:$0xff]
        %v7921 = vld [vmem:[%s7867 + $0x1a8] sm:$0xff]
        %v7922 = vld [vmem:[%s7867 + $0x1b0] sm:$0xff]
        %v7923 = vld [vmem:[%s7867 + $0x1b8] sm:$0xff]
        %v7924 = vld [vmem:[%s7867 + $0x1c0] sm:$0xff]
        %v7925 = vld [vmem:[%s7867 + $0x1c8] sm:$0xff]
        %v7926 = vld [vmem:[%s7867 + $0x1d0] sm:$0xff]
        %v7927 = vld [vmem:[%s7867 + $0x1d8] sm:$0xff]
        %v7928 = vld [vmem:[%s7867 + $0x1e0] sm:$0xff]
        %v7929 = vld [vmem:[%s7867 + $0x1e8] sm:$0xff]
        %v7930 = vld [vmem:[%s7867 + $0x1f0] sm:$0xff]
        %v7931 = vld [vmem:[%s7867 + $0x1f8] sm:$0xff]
        %v7932 = vld [vmem:[%s7867 + $0x200] sm:$0xff]
        %v7933 = vld [vmem:[%s7867 + $0x208] sm:$0xff]
        %v7934 = vld [vmem:[%s7867 + $0x210] sm:$0xff]
        %v7935 = vld [vmem:[%s7867 + $0x218] sm:$0xff]
        %v7936 = vld [vmem:[%s7867 + $0x220] sm:$0xff]
        %v7937 = vld [vmem:[%s7867 + $0x228] sm:$0xff]
        %v7938 = vld [vmem:[%s7867 + $0x230] sm:$0xff]
        %v7939 = vld [vmem:[%s7867 + $0x238] sm:$0xff]
        %v7940 = vld [vmem:[%s7867 + $0x240] sm:$0xff]
        %v7941 = vld [vmem:[%s7867 + $0x248] sm:$0xff]
        %v7942 = vld [vmem:[%s7867 + $0x250] sm:$0xff]
        %v7943 = vld [vmem:[%s7867 + $0x258] sm:$0xff]
        %v7944 = vld [vmem:[%s7867 + $0x260] sm:$0xff]
        %v7945 = vld [vmem:[%s7867 + $0x268] sm:$0xff]
        %7946 = vmatprep.subr.mxu0 %v7899
        %7947 = vmatpush1.msra.mxu0 %v7898
        %7948 = vmatprep.subr.mxu0 %v7897
        %7949 = vmatpush1.msra.mxu0 %v7896
        %7950 = vmatprep.subr.mxu0 %v7895
        %7951 = vmatpush1.msra.mxu0 %v7894
        %7952 = vmatprep.subr.mxu0 %v7893
        %7953 = vmatpush1.msra.mxu0 %v7892
        %7954 = vmatprep.subr.mxu0 %v7891
        %7955 = vmatpush1.msra.mxu0 %v7890
        %7956 = vmatprep.subr.mxu0 %v7889
        %7957 = vmatpush1.msra.mxu0 %v7888
        %7958 = vmatprep.subr.mxu0 %v7887
        %7959 = vmatpush1.msra.mxu0 %v7886
        %7960 = vmatprep.subr.mxu0 %v7885
        %7961 = vmatpush1.msra.mxu0 %v7884
        %7962 = vmatprep.subr.mxu0 %v7883
        %7963 = vmatpush1.msra.mxu0 %v7882
        %7964 = vmatprep.subr.mxu0 %v7881
        %7965 = vmatpush1.msra.mxu0 %v7880
        %7966 = vmatprep.subr.mxu0 %v7879
        %7967 = vmatpush1.msra.mxu0 %v7878
        %7968 = vmatprep.subr.mxu0 %v7877
        %7969 = vmatpush1.msra.mxu0 %v7876
        %7970 = vmatprep.subr.mxu0 %v7875
        %7971 = vmatpush1.msra.mxu0 %v7874
        %7972 = vmatprep.subr.mxu0 %v7873
        %7973 = vmatpush1.msra.mxu0 %v7872
        %7974 = vmatprep.subr.mxu0 %v7871
        %7975 = vmatpush1.msra.mxu0 %v7870
        %7976 = vmatprep.subr.mxu0 %v7869
        %7977 = vmatpush1.msra.mxu0 %v7868
        %7978 = vmatprep.subr.mxu0 %v7931
        %7979 = vmatpush2.msra.mxu0 %v7930
        %7980 = vmatprep.subr.mxu0 %v7929
        %7981 = vmatpush2.msra.mxu0 %v7928
        %7982 = vmatprep.subr.mxu0 %v7927
        %7983 = vmatpush2.msra.mxu0 %v7926
        %7984 = vmatprep.subr.mxu0 %v7925
        %7985 = vmatpush2.msra.mxu0 %v7924
        %7986 = vmatprep.subr.mxu0 %v7923
        %7987 = vmatpush2.msra.mxu0 %v7922
        %7988 = vmatprep.subr.mxu0 %v7921
        %7989 = vmatpush2.msra.mxu0 %v7920
        %7990 = vmatprep.subr.mxu0 %v7919
        %7991 = vmatpush2.msra.mxu0 %v7918
        %7992 = vmatprep.subr.mxu0 %v7917
        %7993 = vmatpush2.msra.mxu0 %v7916
        %7994 = vmatprep.subr.mxu0 %v7915
        %7995 = vmatpush2.msra.mxu0 %v7914
        %7996 = vmatprep.subr.mxu0 %v7913
        %7997 = vmatpush2.msra.mxu0 %v7912
        %7998 = vmatprep.subr.mxu0 %v7911
        %7999 = vmatpush2.msra.mxu0 %v7910
        %8000 = vmatprep.subr.mxu0 %v7909
        %8001 = vmatpush2.msra.mxu0 %v7908
        %8002 = vmatprep.subr.mxu0 %v7907
        %8003 = vmatpush2.msra.mxu0 %v7906
        %8004 = vmatprep.subr.mxu0 %v7905
        %8005 = vmatpush2.msra.mxu0 %v7904
        %8006 = vmatprep.subr.mxu0 %v7903
        %8007 = vmatpush2.msra.mxu0 %v7902
        %8008 = vmatprep.subr.mxu0 %v7901
        %8009 = vmatpush2.msra.mxu0 %v7900
        %8010 = vmatprep.mubr.f32.mxu0 %v7514
        %8011 = vmatmul.mubr.f32.gmra.mxu0 %v7513
        %v8012 = vpop.f32.mrf.mxu0
        %v8013 = vadd.f32 0.0, %v8012
        %v8014 = vpop.f32.mrf.mxu0
        %v8015 = vadd.f32 0.0, %v8014
        %8016 = vmatprep.mubr.f32.mxu0 %v7549
        %8017 = vmatmul.mubr.f32.gmra.mxu0 %v7548
        %v8018 = vpop.f32.mrf.mxu0
        %v8019 = vadd.f32 0.0, %v8018
        %v8020 = vpop.f32.mrf.mxu0
        %v8021 = vadd.f32 0.0, %v8020
        %8022 = vmatprep.mubr.f32.mxu0 %v7584
        %8023 = vmatmul.mubr.f32.gmra.mxu0 %v7583
        %v8024 = vpop.f32.mrf.mxu0
        %v8025 = vadd.f32 0.0, %v8024
        %v8026 = vpop.f32.mrf.mxu0
        %v8027 = vadd.f32 0.0, %v8026
        %8028 = vmatprep.mubr.f32.mxu0 %v7619
        %8029 = vmatmul.mubr.f32.gmra.mxu0 %v7618
        %v8030 = vpop.f32.mrf.mxu0
        %v8031 = vadd.f32 0.0, %v8030
        %v8032 = vpop.f32.mrf.mxu0
        %v8033 = vadd.f32 0.0, %v8032
        %8034 = vmatprep.mubr.f32.mxu0 %v7654
        %8035 = vmatmul.mubr.f32.gmra.mxu0 %v7653
        %v8036 = vpop.f32.mrf.mxu0
        %v8037 = vadd.f32 0.0, %v8036
        %v8038 = vpop.f32.mrf.mxu0
        %v8039 = vadd.f32 0.0, %v8038
        %8040 = vdwg.mxu0
        %8041 = vmatprep.subr.mxu0 0.0
        %8042 = vmatpush1.msra.mxu0 0.0
        %8043 = vmatprep.subr.mxu0 0.0
        %8044 = vmatpush1.msra.mxu0 0.0
        %8045 = vmatprep.subr.mxu0 0.0
        %8046 = vmatpush1.msra.mxu0 0.0
        %8047 = vmatprep.subr.mxu0 0.0
        %8048 = vmatpush1.msra.mxu0 0.0
        %8049 = vmatprep.subr.mxu0 0.0
        %8050 = vmatpush1.msra.mxu0 0.0
        %8051 = vmatprep.subr.mxu0 0.0
        %8052 = vmatpush1.msra.mxu0 0.0
        %8053 = vmatprep.subr.mxu0 0.0
        %8054 = vmatpush1.msra.mxu0 0.0
        %8055 = vmatprep.subr.mxu0 0.0
        %8056 = vmatpush1.msra.mxu0 0.0
        %8057 = vmatprep.subr.mxu0 0.0
        %8058 = vmatpush1.msra.mxu0 0.0
        %8059 = vmatprep.subr.mxu0 %v7945
        %8060 = vmatpush1.msra.mxu0 %v7944
        %8061 = vmatprep.subr.mxu0 %v7943
        %8062 = vmatpush1.msra.mxu0 %v7942
        %8063 = vmatprep.subr.mxu0 %v7941
        %8064 = vmatpush1.msra.mxu0 %v7940
        %8065 = vmatprep.subr.mxu0 %v7939
        %8066 = vmatpush1.msra.mxu0 %v7938
        %8067 = vmatprep.subr.mxu0 %v7937
        %8068 = vmatpush1.msra.mxu0 %v7936
        %8069 = vmatprep.subr.mxu0 %v7935
        %8070 = vmatpush1.msra.mxu0 %v7934
        %8071 = vmatprep.subr.mxu0 %v7933
        %8072 = vmatpush1.msra.mxu0 %v7932
        %8073 = vmatprep.subr.mxu0 0.0
        %8074 = vmatpush2.msra.mxu0 0.0
        %8075 = vmatprep.subr.mxu0 0.0
        %8076 = vmatpush2.msra.mxu0 0.0
        %8077 = vmatprep.subr.mxu0 0.0
        %8078 = vmatpush2.msra.mxu0 0.0
        %8079 = vmatprep.subr.mxu0 0.0
        %8080 = vmatpush2.msra.mxu0 0.0
        %8081 = vmatprep.subr.mxu0 0.0
        %8082 = vmatpush2.msra.mxu0 0.0
        %8083 = vmatprep.subr.mxu0 0.0
        %8084 = vmatpush2.msra.mxu0 0.0
        %8085 = vmatprep.subr.mxu0 0.0
        %8086 = vmatpush2.msra.mxu0 0.0
        %8087 = vmatprep.subr.mxu0 0.0
        %8088 = vmatpush2.msra.mxu0 0.0
        %8089 = vmatprep.subr.mxu0 0.0
        %8090 = vmatpush2.msra.mxu0 0.0
        %8091 = vmatprep.subr.mxu0 0.0
        %8092 = vmatpush2.msra.mxu0 0.0
        %8093 = vmatprep.subr.mxu0 0.0
        %8094 = vmatpush2.msra.mxu0 0.0
        %8095 = vmatprep.subr.mxu0 0.0
        %8096 = vmatpush2.msra.mxu0 0.0
        %8097 = vmatprep.subr.mxu0 0.0
        %8098 = vmatpush2.msra.mxu0 0.0
        %8099 = vmatprep.subr.mxu0 0.0
        %8100 = vmatpush2.msra.mxu0 0.0
        %8101 = vmatprep.subr.mxu0 0.0
        %8102 = vmatpush2.msra.mxu0 0.0
        %8103 = vmatprep.subr.mxu0 0.0
        %8104 = vmatpush2.msra.mxu0 0.0
        %8105 = vmatprep.mubr.f32.mxu0 0.0
        %8106 = vmatmul.mubr.f32.gmra.mxu0 %v7667
        %v8107 = vpop.f32.mrf.mxu0
        %v8108 = vadd.f32 %v8013, %v8107
        %v8109 = vpop.f32.mrf.mxu0
        %v8110 = vadd.f32 %v8015, %v8109
        %8111 = vmatprep.mubr.f32.mxu0 0.0
        %8112 = vmatmul.mubr.f32.gmra.mxu0 %v7669
        %v8113 = vpop.f32.mrf.mxu0
        %v8114 = vadd.f32 %v8019, %v8113
        %v8115 = vpop.f32.mrf.mxu0
        %v8116 = vadd.f32 %v8021, %v8115
        %8117 = vmatprep.mubr.f32.mxu0 0.0
        %8118 = vmatmul.mubr.f32.gmra.mxu0 %v7671
        %v8119 = vpop.f32.mrf.mxu0
        %v8120 = vadd.f32 %v8025, %v8119
        %v8121 = vpop.f32.mrf.mxu0
        %v8122 = vadd.f32 %v8027, %v8121
        %8123 = vmatprep.mubr.f32.mxu0 0.0
        %8124 = vmatmul.mubr.f32.gmra.mxu0 %v7673
        %v8125 = vpop.f32.mrf.mxu0
        %v8126 = vadd.f32 %v8031, %v8125
        %v8127 = vpop.f32.mrf.mxu0
        %v8128 = vadd.f32 %v8033, %v8127
        %8129 = vmatprep.mubr.f32.mxu0 0.0
        %8130 = vmatmul.mubr.f32.gmra.mxu0 %v7675
        %v8131 = vpop.f32.mrf.mxu0
        %v8132 = vadd.f32 %v8037, %v8131
        %v8133 = vpop.f32.mrf.mxu0
        %v8134 = vadd.f32 %v8039, %v8133
        %8135 = vdwg.mxu0
        %s8136 = scalar_lea.vmem [#allocation12], 1248
        %v8137 = vld [vmem:[%s8136] sm:$0xff]
        %v8138 = vld [vmem:[%s8136 + $0x8] sm:$0xff]
        %v8139 = vld [vmem:[%s8136 + $0x10] sm:$0xff]
        %v8140 = vld [vmem:[%s8136 + $0x18] sm:$0xff]
        %v8141 = vld [vmem:[%s8136 + $0x20] sm:$0xff]
        %v8142 = vld [vmem:[%s8136 + $0x28] sm:$0xff]
        %v8143 = vld [vmem:[%s8136 + $0x30] sm:$0xff]
        %v8144 = vld [vmem:[%s8136 + $0x38] sm:$0xff]
        %v8145 = vld [vmem:[%s8136 + $0x40] sm:$0xff]
        %v8146 = vld [vmem:[%s8136 + $0x48] sm:$0xff]
        %v8147 = vld [vmem:[%s8136 + $0x50] sm:$0xff]
        %v8148 = vld [vmem:[%s8136 + $0x58] sm:$0xff]
        %v8149 = vld [vmem:[%s8136 + $0x60] sm:$0xff]
        %v8150 = vld [vmem:[%s8136 + $0x68] sm:$0xff]
        %v8151 = vld [vmem:[%s8136 + $0x70] sm:$0xff]
        %v8152 = vld [vmem:[%s8136 + $0x78] sm:$0xff]
        %v8153 = vld [vmem:[%s8136 + $0x80] sm:$0xff]
        %v8154 = vld [vmem:[%s8136 + $0x88] sm:$0xff]
        %v8155 = vld [vmem:[%s8136 + $0x90] sm:$0xff]
        %v8156 = vld [vmem:[%s8136 + $0x98] sm:$0xff]
        %v8157 = vld [vmem:[%s8136 + $0xa0] sm:$0xff]
        %v8158 = vld [vmem:[%s8136 + $0xa8] sm:$0xff]
        %v8159 = vld [vmem:[%s8136 + $0xb0] sm:$0xff]
        %v8160 = vld [vmem:[%s8136 + $0xb8] sm:$0xff]
        %v8161 = vld [vmem:[%s8136 + $0xc0] sm:$0xff]
        %v8162 = vld [vmem:[%s8136 + $0xc8] sm:$0xff]
        %v8163 = vld [vmem:[%s8136 + $0xd0] sm:$0xff]
        %v8164 = vld [vmem:[%s8136 + $0xd8] sm:$0xff]
        %v8165 = vld [vmem:[%s8136 + $0xe0] sm:$0xff]
        %v8166 = vld [vmem:[%s8136 + $0xe8] sm:$0xff]
        %v8167 = vld [vmem:[%s8136 + $0xf0] sm:$0xff]
        %v8168 = vld [vmem:[%s8136 + $0xf8] sm:$0xff]
        %v8169 = vld [vmem:[%s8136 + $0x100] sm:$0xff]
        %v8170 = vld [vmem:[%s8136 + $0x108] sm:$0xff]
        %v8171 = vld [vmem:[%s8136 + $0x110] sm:$0xff]
        %v8172 = vld [vmem:[%s8136 + $0x118] sm:$0xff]
        %v8173 = vld [vmem:[%s8136 + $0x120] sm:$0xff]
        %v8174 = vld [vmem:[%s8136 + $0x128] sm:$0xff]
        %v8175 = vld [vmem:[%s8136 + $0x130] sm:$0xff]
        %v8176 = vld [vmem:[%s8136 + $0x138] sm:$0xff]
        %v8177 = vld [vmem:[%s8136 + $0x140] sm:$0xff]
        %v8178 = vld [vmem:[%s8136 + $0x148] sm:$0xff]
        %v8179 = vld [vmem:[%s8136 + $0x150] sm:$0xff]
        %v8180 = vld [vmem:[%s8136 + $0x158] sm:$0xff]
        %v8181 = vld [vmem:[%s8136 + $0x160] sm:$0xff]
        %v8182 = vld [vmem:[%s8136 + $0x168] sm:$0xff]
        %v8183 = vld [vmem:[%s8136 + $0x170] sm:$0xff]
        %v8184 = vld [vmem:[%s8136 + $0x178] sm:$0xff]
        %v8185 = vld [vmem:[%s8136 + $0x180] sm:$0xff]
        %v8186 = vld [vmem:[%s8136 + $0x188] sm:$0xff]
        %v8187 = vld [vmem:[%s8136 + $0x190] sm:$0xff]
        %v8188 = vld [vmem:[%s8136 + $0x198] sm:$0xff]
        %v8189 = vld [vmem:[%s8136 + $0x1a0] sm:$0xff]
        %v8190 = vld [vmem:[%s8136 + $0x1a8] sm:$0xff]
        %v8191 = vld [vmem:[%s8136 + $0x1b0] sm:$0xff]
        %v8192 = vld [vmem:[%s8136 + $0x1b8] sm:$0xff]
        %v8193 = vld [vmem:[%s8136 + $0x1c0] sm:$0xff]
        %v8194 = vld [vmem:[%s8136 + $0x1c8] sm:$0xff]
        %v8195 = vld [vmem:[%s8136 + $0x1d0] sm:$0xff]
        %v8196 = vld [vmem:[%s8136 + $0x1d8] sm:$0xff]
        %v8197 = vld [vmem:[%s8136 + $0x1e0] sm:$0xff]
        %v8198 = vld [vmem:[%s8136 + $0x1e8] sm:$0xff]
        %v8199 = vld [vmem:[%s8136 + $0x1f0] sm:$0xff]
        %v8200 = vld [vmem:[%s8136 + $0x1f8] sm:$0xff]
        %v8201 = vld [vmem:[%s8136 + $0x200] sm:$0xff]
        %v8202 = vld [vmem:[%s8136 + $0x208] sm:$0xff]
        %v8203 = vld [vmem:[%s8136 + $0x210] sm:$0xff]
        %v8204 = vld [vmem:[%s8136 + $0x218] sm:$0xff]
        %v8205 = vld [vmem:[%s8136 + $0x220] sm:$0xff]
        %v8206 = vld [vmem:[%s8136 + $0x228] sm:$0xff]
        %v8207 = vld [vmem:[%s8136 + $0x230] sm:$0xff]
        %v8208 = vld [vmem:[%s8136 + $0x238] sm:$0xff]
        %v8209 = vld [vmem:[%s8136 + $0x240] sm:$0xff]
        %v8210 = vld [vmem:[%s8136 + $0x248] sm:$0xff]
        %v8211 = vld [vmem:[%s8136 + $0x250] sm:$0xff]
        %v8212 = vld [vmem:[%s8136 + $0x258] sm:$0xff]
        %v8213 = vld [vmem:[%s8136 + $0x260] sm:$0xff]
        %v8214 = vld [vmem:[%s8136 + $0x268] sm:$0xff]
        %8215 = vmatprep.subr.mxu0 %v8168
        %8216 = vmatpush1.msra.mxu0 %v8167
        %8217 = vmatprep.subr.mxu0 %v8166
        %8218 = vmatpush1.msra.mxu0 %v8165
        %8219 = vmatprep.subr.mxu0 %v8164
        %8220 = vmatpush1.msra.mxu0 %v8163
        %8221 = vmatprep.subr.mxu0 %v8162
        %8222 = vmatpush1.msra.mxu0 %v8161
        %8223 = vmatprep.subr.mxu0 %v8160
        %8224 = vmatpush1.msra.mxu0 %v8159
        %8225 = vmatprep.subr.mxu0 %v8158
        %8226 = vmatpush1.msra.mxu0 %v8157
        %8227 = vmatprep.subr.mxu0 %v8156
        %8228 = vmatpush1.msra.mxu0 %v8155
        %8229 = vmatprep.subr.mxu0 %v8154
        %8230 = vmatpush1.msra.mxu0 %v8153
        %8231 = vmatprep.subr.mxu0 %v8152
        %8232 = vmatpush1.msra.mxu0 %v8151
        %8233 = vmatprep.subr.mxu0 %v8150
        %8234 = vmatpush1.msra.mxu0 %v8149
        %8235 = vmatprep.subr.mxu0 %v8148
        %8236 = vmatpush1.msra.mxu0 %v8147
        %8237 = vmatprep.subr.mxu0 %v8146
        %8238 = vmatpush1.msra.mxu0 %v8145
        %8239 = vmatprep.subr.mxu0 %v8144
        %8240 = vmatpush1.msra.mxu0 %v8143
        %8241 = vmatprep.subr.mxu0 %v8142
        %8242 = vmatpush1.msra.mxu0 %v8141
        %8243 = vmatprep.subr.mxu0 %v8140
        %8244 = vmatpush1.msra.mxu0 %v8139
        %8245 = vmatprep.subr.mxu0 %v8138
        %8246 = vmatpush1.msra.mxu0 %v8137
        %8247 = vmatprep.subr.mxu0 %v8200
        %8248 = vmatpush2.msra.mxu0 %v8199
        %8249 = vmatprep.subr.mxu0 %v8198
        %8250 = vmatpush2.msra.mxu0 %v8197
        %8251 = vmatprep.subr.mxu0 %v8196
        %8252 = vmatpush2.msra.mxu0 %v8195
        %8253 = vmatprep.subr.mxu0 %v8194
        %8254 = vmatpush2.msra.mxu0 %v8193
        %8255 = vmatprep.subr.mxu0 %v8192
        %8256 = vmatpush2.msra.mxu0 %v8191
        %8257 = vmatprep.subr.mxu0 %v8190
        %8258 = vmatpush2.msra.mxu0 %v8189
        %8259 = vmatprep.subr.mxu0 %v8188
        %8260 = vmatpush2.msra.mxu0 %v8187
        %8261 = vmatprep.subr.mxu0 %v8186
        %8262 = vmatpush2.msra.mxu0 %v8185
        %8263 = vmatprep.subr.mxu0 %v8184
        %8264 = vmatpush2.msra.mxu0 %v8183
        %8265 = vmatprep.subr.mxu0 %v8182
        %8266 = vmatpush2.msra.mxu0 %v8181
        %8267 = vmatprep.subr.mxu0 %v8180
        %8268 = vmatpush2.msra.mxu0 %v8179
        %8269 = vmatprep.subr.mxu0 %v8178
        %8270 = vmatpush2.msra.mxu0 %v8177
        %8271 = vmatprep.subr.mxu0 %v8176
        %8272 = vmatpush2.msra.mxu0 %v8175
        %8273 = vmatprep.subr.mxu0 %v8174
        %8274 = vmatpush2.msra.mxu0 %v8173
        %8275 = vmatprep.subr.mxu0 %v8172
        %8276 = vmatpush2.msra.mxu0 %v8171
        %8277 = vmatprep.subr.mxu0 %v8170
        %8278 = vmatpush2.msra.mxu0 %v8169
        %8279 = vmatprep.mubr.f32.mxu0 %v7514
        %8280 = vmatmul.mubr.f32.gmra.mxu0 %v7513
        %v8281 = vpop.f32.mrf.mxu0
        %v8282 = vadd.f32 0.0, %v8281
        %v8283 = vpop.f32.mrf.mxu0
        %v8284 = vadd.f32 0.0, %v8283
        %8285 = vmatprep.mubr.f32.mxu0 %v7549
        %8286 = vmatmul.mubr.f32.gmra.mxu0 %v7548
        %v8287 = vpop.f32.mrf.mxu0
        %v8288 = vadd.f32 0.0, %v8287
        %v8289 = vpop.f32.mrf.mxu0
        %v8290 = vadd.f32 0.0, %v8289
        %8291 = vmatprep.mubr.f32.mxu0 %v7584
        %8292 = vmatmul.mubr.f32.gmra.mxu0 %v7583
        %v8293 = vpop.f32.mrf.mxu0
        %v8294 = vadd.f32 0.0, %v8293
        %v8295 = vpop.f32.mrf.mxu0
        %v8296 = vadd.f32 0.0, %v8295
        %8297 = vmatprep.mubr.f32.mxu0 %v7619
        %8298 = vmatmul.mubr.f32.gmra.mxu0 %v7618
        %v8299 = vpop.f32.mrf.mxu0
        %v8300 = vadd.f32 0.0, %v8299
        %v8301 = vpop.f32.mrf.mxu0
        %v8302 = vadd.f32 0.0, %v8301
        %8303 = vmatprep.mubr.f32.mxu0 %v7654
        %8304 = vmatmul.mubr.f32.gmra.mxu0 %v7653
        %v8305 = vpop.f32.mrf.mxu0
        %v8306 = vadd.f32 0.0, %v8305
        %v8307 = vpop.f32.mrf.mxu0
        %v8308 = vadd.f32 0.0, %v8307
        %8309 = vdwg.mxu0
        %8310 = vmatprep.subr.mxu0 0.0
        %8311 = vmatpush1.msra.mxu0 0.0
        %8312 = vmatprep.subr.mxu0 0.0
        %8313 = vmatpush1.msra.mxu0 0.0
        %8314 = vmatprep.subr.mxu0 0.0
        %8315 = vmatpush1.msra.mxu0 0.0
        %8316 = vmatprep.subr.mxu0 0.0
        %8317 = vmatpush1.msra.mxu0 0.0
        %8318 = vmatprep.subr.mxu0 0.0
        %8319 = vmatpush1.msra.mxu0 0.0
        %8320 = vmatprep.subr.mxu0 0.0
        %8321 = vmatpush1.msra.mxu0 0.0
        %8322 = vmatprep.subr.mxu0 0.0
        %8323 = vmatpush1.msra.mxu0 0.0
        %8324 = vmatprep.subr.mxu0 0.0
        %8325 = vmatpush1.msra.mxu0 0.0
        %8326 = vmatprep.subr.mxu0 0.0
        %8327 = vmatpush1.msra.mxu0 0.0
        %8328 = vmatprep.subr.mxu0 %v8214
        %8329 = vmatpush1.msra.mxu0 %v8213
        %8330 = vmatprep.subr.mxu0 %v8212
        %8331 = vmatpush1.msra.mxu0 %v8211
        %8332 = vmatprep.subr.mxu0 %v8210
        %8333 = vmatpush1.msra.mxu0 %v8209
        %8334 = vmatprep.subr.mxu0 %v8208
        %8335 = vmatpush1.msra.mxu0 %v8207
        %8336 = vmatprep.subr.mxu0 %v8206
        %8337 = vmatpush1.msra.mxu0 %v8205
        %8338 = vmatprep.subr.mxu0 %v8204
        %8339 = vmatpush1.msra.mxu0 %v8203
        %8340 = vmatprep.subr.mxu0 %v8202
        %8341 = vmatpush1.msra.mxu0 %v8201
        %8342 = vmatprep.subr.mxu0 0.0
        %8343 = vmatpush2.msra.mxu0 0.0
        %8344 = vmatprep.subr.mxu0 0.0
        %8345 = vmatpush2.msra.mxu0 0.0
        %8346 = vmatprep.subr.mxu0 0.0
        %8347 = vmatpush2.msra.mxu0 0.0
        %8348 = vmatprep.subr.mxu0 0.0
        %8349 = vmatpush2.msra.mxu0 0.0
        %8350 = vmatprep.subr.mxu0 0.0
        %8351 = vmatpush2.msra.mxu0 0.0
        %8352 = vmatprep.subr.mxu0 0.0
        %8353 = vmatpush2.msra.mxu0 0.0
        %8354 = vmatprep.subr.mxu0 0.0
        %8355 = vmatpush2.msra.mxu0 0.0
        %8356 = vmatprep.subr.mxu0 0.0
        %8357 = vmatpush2.msra.mxu0 0.0
        %8358 = vmatprep.subr.mxu0 0.0
        %8359 = vmatpush2.msra.mxu0 0.0
        %8360 = vmatprep.subr.mxu0 0.0
        %8361 = vmatpush2.msra.mxu0 0.0
        %8362 = vmatprep.subr.mxu0 0.0
        %8363 = vmatpush2.msra.mxu0 0.0
        %8364 = vmatprep.subr.mxu0 0.0
        %8365 = vmatpush2.msra.mxu0 0.0
        %8366 = vmatprep.subr.mxu0 0.0
        %8367 = vmatpush2.msra.mxu0 0.0
        %8368 = vmatprep.subr.mxu0 0.0
        %8369 = vmatpush2.msra.mxu0 0.0
        %8370 = vmatprep.subr.mxu0 0.0
        %8371 = vmatpush2.msra.mxu0 0.0
        %8372 = vmatprep.subr.mxu0 0.0
        %8373 = vmatpush2.msra.mxu0 0.0
        %8374 = vmatprep.mubr.f32.mxu0 0.0
        %8375 = vmatmul.mubr.f32.gmra.mxu0 %v7667
        %v8376 = vpop.f32.mrf.mxu0
        %v8377 = vadd.f32 %v8282, %v8376
        %v8378 = vpop.f32.mrf.mxu0
        %v8379 = vadd.f32 %v8284, %v8378
        %8380 = vmatprep.mubr.f32.mxu0 0.0
        %8381 = vmatmul.mubr.f32.gmra.mxu0 %v7669
        %v8382 = vpop.f32.mrf.mxu0
        %v8383 = vadd.f32 %v8288, %v8382
        %v8384 = vpop.f32.mrf.mxu0
        %v8385 = vadd.f32 %v8290, %v8384
        %8386 = vmatprep.mubr.f32.mxu0 0.0
        %8387 = vmatmul.mubr.f32.gmra.mxu0 %v7671
        %v8388 = vpop.f32.mrf.mxu0
        %v8389 = vadd.f32 %v8294, %v8388
        %v8390 = vpop.f32.mrf.mxu0
        %v8391 = vadd.f32 %v8296, %v8390
        %8392 = vmatprep.mubr.f32.mxu0 0.0
        %8393 = vmatmul.mubr.f32.gmra.mxu0 %v7673
        %v8394 = vpop.f32.mrf.mxu0
        %v8395 = vadd.f32 %v8300, %v8394
        %v8396 = vpop.f32.mrf.mxu0
        %v8397 = vadd.f32 %v8302, %v8396
        %8398 = vmatprep.mubr.f32.mxu0 0.0
        %8399 = vmatmul.mubr.f32.gmra.mxu0 %v7675
        %v8400 = vpop.f32.mrf.mxu0
        %v8401 = vadd.f32 %v8306, %v8400
        %v8402 = vpop.f32.mrf.mxu0
        %v8403 = vadd.f32 %v8308, %v8402
        %8404 = vdwg.mxu0
        %vm8405 = vcmask 1046528
        %v8406 = vsel %vm8405, %v7863, 0.0
        %v8407 = vsel %vm8405, %v7865, 0.0
        %v8418 = vrot.slane %v8377, 7
        %v8419 = vrot.slane %v8379, 7
        %v8420 = vrot.slane %v8383, 7
        %v8421 = vsel %vm1172, %v8418, %v8420
        %v8422 = vrot.slane %v8385, 7
        %v8423 = vsel %vm1172, %v8419, %v8422
        %v8424 = vrot.slane %v8389, 7
        %v8425 = vsel %vm1172, %v8420, %v8424
        %v8426 = vrot.slane %v8391, 7
        %v8427 = vsel %vm1172, %v8422, %v8426
        %v8428 = vrot.slane %v8395, 7
        %v8429 = vsel %vm1172, %v8424, %v8428
        %v8430 = vrot.slane %v8397, 7
        %v8431 = vsel %vm1172, %v8426, %v8430
        %v8432 = vrot.slane %v8401, 7
        %v8433 = vsel %vm1172, %v8428, %v8432
        %v8434 = vrot.slane %v8403, 7
        %v8435 = vsel %vm1172, %v8430, %v8434
        %v8446 = vsel %vm1172, 0.0, %v8418
        %v8447 = vsel %vm1172, 0.0, %v8419
        %v8448 = vadd.f32 %v7839, %v8446
        %v8449 = vadd.f32 %v7841, %v8447
        %v8450 = vadd.f32 %v7845, %v8421
        %v8451 = vadd.f32 %v7847, %v8423
        %v8452 = vadd.f32 %v7851, %v8425
        %v8453 = vadd.f32 %v7853, %v8427
        %v8454 = vadd.f32 %v7857, %v8429
        %v8455 = vadd.f32 %v7859, %v8431
        %v8456 = vadd.f32 %v8406, %v8433
        %v8457 = vadd.f32 %v8407, %v8435
        %v8458 = vsel %vm8405, %v8132, 0.0
        %v8459 = vsel %vm8405, %v8134, 0.0
        %v8470 = vcombine.low %v8448, %v8449
        %v8471 = vcombine.high %v8448, %v8449
        %v8473 = vunpack.c.l.s4 1966171168
        %v8474 = vunpack.c.0.s8 %v8473
        %v8475 = vlaneseq
        %v8476 = vshrl.u32 %v8475, 7
        %v8477 = vsub.s32 %v8474, %v8476
        %v8478 = vrot.slane %v8470, %v8477
        %v8480 = vunpack.c.l.s4 1966171168
        %v8481 = vunpack.c.0.s8 %v8480
        %v8482 = vlaneseq
        %v8483 = vshrl.u32 %v8482, 7
        %v8484 = vsub.s32 %v8481, %v8483
        %v8485 = vrot.slane %v8471, %v8484
        %v8486 = vcombine.high %v8478, %v8478
        %v8487 = vcombine.high %v8485, %v8485
        %v8489 = vunpack.c.l.s4 1966171168
        %v8490 = vunpack.c.0.s8 %v8489
        %v8491 = vlaneseq
        %v8492 = vshrl.u32 %v8491, 7
        %v8493 = vsub.s32 %v8490, %v8492
        %v8494 = vrot.slane %v8478, %v8493
        %v8496 = vunpack.c.l.s4 1966171168
        %v8497 = vunpack.c.0.s8 %v8496
        %v8498 = vlaneseq
        %v8499 = vshrl.u32 %v8498, 7
        %v8500 = vsub.s32 %v8497, %v8499
        %v8501 = vrot.slane %v8485, %v8500
        %v8503 = vunpack.c.l.s4 1966171168
        %v8504 = vunpack.c.0.s8 %v8503
        %v8505 = vlaneseq
        %v8506 = vshrl.u32 %v8505, 7
        %v8507 = vsub.s32 %v8504, %v8506
        %v8508 = vrot.slane %v8486, %v8507
        %v8510 = vunpack.c.l.s4 1966171168
        %v8511 = vunpack.c.0.s8 %v8510
        %v8512 = vlaneseq
        %v8513 = vshrl.u32 %v8512, 7
        %v8514 = vsub.s32 %v8511, %v8513
        %v8515 = vrot.slane %v8487, %v8514
        %v8516 = vcombine.high %v8494, %v8494
        %v8517 = vcombine.high %v8501, %v8501
        %v8518 = vcombine.high %v8508, %v8508
        %v8519 = vcombine.high %v8515, %v8515
        %v8520 = vcombine.low %v8450, %v8451
        %v8521 = vcombine.high %v8450, %v8451
        %v8523 = vunpack.c.l.s4 1966171168
        %v8524 = vunpack.c.0.s8 %v8523
        %v8525 = vlaneseq
        %v8526 = vshrl.u32 %v8525, 7
        %v8527 = vsub.s32 %v8524, %v8526
        %v8528 = vrot.slane %v8520, %v8527
        %v8530 = vunpack.c.l.s4 1966171168
        %v8531 = vunpack.c.0.s8 %v8530
        %v8532 = vlaneseq
        %v8533 = vshrl.u32 %v8532, 7
        %v8534 = vsub.s32 %v8531, %v8533
        %v8535 = vrot.slane %v8521, %v8534
        %v8536 = vcombine.high %v8528, %v8528
        %v8537 = vcombine.high %v8535, %v8535
        %v8539 = vunpack.c.l.s4 1966171168
        %v8540 = vunpack.c.0.s8 %v8539
        %v8541 = vlaneseq
        %v8542 = vshrl.u32 %v8541, 7
        %v8543 = vsub.s32 %v8540, %v8542
        %v8544 = vrot.slane %v8528, %v8543
        %v8546 = vunpack.c.l.s4 1966171168
        %v8547 = vunpack.c.0.s8 %v8546
        %v8548 = vlaneseq
        %v8549 = vshrl.u32 %v8548, 7
        %v8550 = vsub.s32 %v8547, %v8549
        %v8551 = vrot.slane %v8535, %v8550
        %v8553 = vunpack.c.l.s4 1966171168
        %v8554 = vunpack.c.0.s8 %v8553
        %v8555 = vlaneseq
        %v8556 = vshrl.u32 %v8555, 7
        %v8557 = vsub.s32 %v8554, %v8556
        %v8558 = vrot.slane %v8536, %v8557
        %v8560 = vunpack.c.l.s4 1966171168
        %v8561 = vunpack.c.0.s8 %v8560
        %v8562 = vlaneseq
        %v8563 = vshrl.u32 %v8562, 7
        %v8564 = vsub.s32 %v8561, %v8563
        %v8565 = vrot.slane %v8537, %v8564
        %v8566 = vcombine.high %v8544, %v8544
        %v8567 = vcombine.high %v8551, %v8551
        %v8568 = vcombine.high %v8558, %v8558
        %v8569 = vcombine.high %v8565, %v8565
        %v8570 = vcombine.low %v8452, %v8453
        %v8571 = vcombine.high %v8452, %v8453
        %v8573 = vunpack.c.l.s4 1966171168
        %v8574 = vunpack.c.0.s8 %v8573
        %v8575 = vlaneseq
        %v8576 = vshrl.u32 %v8575, 7
        %v8577 = vsub.s32 %v8574, %v8576
        %v8578 = vrot.slane %v8570, %v8577
        %v8580 = vunpack.c.l.s4 1966171168
        %v8581 = vunpack.c.0.s8 %v8580
        %v8582 = vlaneseq
        %v8583 = vshrl.u32 %v8582, 7
        %v8584 = vsub.s32 %v8581, %v8583
        %v8585 = vrot.slane %v8571, %v8584
        %v8586 = vcombine.high %v8578, %v8578
        %v8587 = vcombine.high %v8585, %v8585
        %v8589 = vunpack.c.l.s4 1966171168
        %v8590 = vunpack.c.0.s8 %v8589
        %v8591 = vlaneseq
        %v8592 = vshrl.u32 %v8591, 7
        %v8593 = vsub.s32 %v8590, %v8592
        %v8594 = vrot.slane %v8578, %v8593
        %v8596 = vunpack.c.l.s4 1966171168
        %v8597 = vunpack.c.0.s8 %v8596
        %v8598 = vlaneseq
        %v8599 = vshrl.u32 %v8598, 7
        %v8600 = vsub.s32 %v8597, %v8599
        %v8601 = vrot.slane %v8585, %v8600
        %v8603 = vunpack.c.l.s4 1966171168
        %v8604 = vunpack.c.0.s8 %v8603
        %v8605 = vlaneseq
        %v8606 = vshrl.u32 %v8605, 7
        %v8607 = vsub.s32 %v8604, %v8606
        %v8608 = vrot.slane %v8586, %v8607
        %v8610 = vunpack.c.l.s4 1966171168
        %v8611 = vunpack.c.0.s8 %v8610
        %v8612 = vlaneseq
        %v8613 = vshrl.u32 %v8612, 7
        %v8614 = vsub.s32 %v8611, %v8613
        %v8615 = vrot.slane %v8587, %v8614
        %v8616 = vcombine.high %v8594, %v8594
        %v8617 = vcombine.high %v8601, %v8601
        %v8618 = vcombine.high %v8608, %v8608
        %v8619 = vcombine.high %v8615, %v8615
        %v8620 = vcombine.low %v8454, %v8455
        %v8621 = vcombine.high %v8454, %v8455
        %v8623 = vunpack.c.l.s4 1966171168
        %v8624 = vunpack.c.0.s8 %v8623
        %v8625 = vlaneseq
        %v8626 = vshrl.u32 %v8625, 7
        %v8627 = vsub.s32 %v8624, %v8626
        %v8628 = vrot.slane %v8620, %v8627
        %v8630 = vunpack.c.l.s4 1966171168
        %v8631 = vunpack.c.0.s8 %v8630
        %v8632 = vlaneseq
        %v8633 = vshrl.u32 %v8632, 7
        %v8634 = vsub.s32 %v8631, %v8633
        %v8635 = vrot.slane %v8621, %v8634
        %v8636 = vcombine.high %v8628, %v8628
        %v8637 = vcombine.high %v8635, %v8635
        %v8639 = vunpack.c.l.s4 1966171168
        %v8640 = vunpack.c.0.s8 %v8639
        %v8641 = vlaneseq
        %v8642 = vshrl.u32 %v8641, 7
        %v8643 = vsub.s32 %v8640, %v8642
        %v8644 = vrot.slane %v8628, %v8643
        %v8646 = vunpack.c.l.s4 1966171168
        %v8647 = vunpack.c.0.s8 %v8646
        %v8648 = vlaneseq
        %v8649 = vshrl.u32 %v8648, 7
        %v8650 = vsub.s32 %v8647, %v8649
        %v8651 = vrot.slane %v8635, %v8650
        %v8653 = vunpack.c.l.s4 1966171168
        %v8654 = vunpack.c.0.s8 %v8653
        %v8655 = vlaneseq
        %v8656 = vshrl.u32 %v8655, 7
        %v8657 = vsub.s32 %v8654, %v8656
        %v8658 = vrot.slane %v8636, %v8657
        %v8660 = vunpack.c.l.s4 1966171168
        %v8661 = vunpack.c.0.s8 %v8660
        %v8662 = vlaneseq
        %v8663 = vshrl.u32 %v8662, 7
        %v8664 = vsub.s32 %v8661, %v8663
        %v8665 = vrot.slane %v8637, %v8664
        %v8666 = vcombine.high %v8644, %v8644
        %v8667 = vcombine.high %v8651, %v8651
        %v8668 = vcombine.high %v8658, %v8658
        %v8669 = vcombine.high %v8665, %v8665
        %v8670 = vcombine.low %v8456, %v8457
        %v8671 = vcombine.high %v8456, %v8457
        %v8673 = vunpack.c.l.s4 1966171168
        %v8674 = vunpack.c.0.s8 %v8673
        %v8675 = vlaneseq
        %v8676 = vshrl.u32 %v8675, 7
        %v8677 = vsub.s32 %v8674, %v8676
        %v8678 = vrot.slane %v8670, %v8677
        %v8680 = vunpack.c.l.s4 1966171168
        %v8681 = vunpack.c.0.s8 %v8680
        %v8682 = vlaneseq
        %v8683 = vshrl.u32 %v8682, 7
        %v8684 = vsub.s32 %v8681, %v8683
        %v8685 = vrot.slane %v8671, %v8684
        %v8686 = vcombine.high %v8678, %v8678
        %v8687 = vcombine.high %v8685, %v8685
        %v8689 = vunpack.c.l.s4 1966171168
        %v8690 = vunpack.c.0.s8 %v8689
        %v8691 = vlaneseq
        %v8692 = vshrl.u32 %v8691, 7
        %v8693 = vsub.s32 %v8690, %v8692
        %v8694 = vrot.slane %v8678, %v8693
        %v8696 = vunpack.c.l.s4 1966171168
        %v8697 = vunpack.c.0.s8 %v8696
        %v8698 = vlaneseq
        %v8699 = vshrl.u32 %v8698, 7
        %v8700 = vsub.s32 %v8697, %v8699
        %v8701 = vrot.slane %v8685, %v8700
        %v8703 = vunpack.c.l.s4 1966171168
        %v8704 = vunpack.c.0.s8 %v8703
        %v8705 = vlaneseq
        %v8706 = vshrl.u32 %v8705, 7
        %v8707 = vsub.s32 %v8704, %v8706
        %v8708 = vrot.slane %v8686, %v8707
        %v8710 = vunpack.c.l.s4 1966171168
        %v8711 = vunpack.c.0.s8 %v8710
        %v8712 = vlaneseq
        %v8713 = vshrl.u32 %v8712, 7
        %v8714 = vsub.s32 %v8711, %v8713
        %v8715 = vrot.slane %v8687, %v8714
        %v8716 = vcombine.high %v8694, %v8694
        %v8717 = vcombine.high %v8701, %v8701
        %v8718 = vcombine.high %v8708, %v8708
        %v8719 = vcombine.high %v8715, %v8715
        %v8730 = vcombine.low %v8108, %v8110
        %v8731 = vcombine.high %v8108, %v8110
        %v8733 = vunpack.c.l.s4 1966171168
        %v8734 = vunpack.c.0.s8 %v8733
        %v8735 = vlaneseq
        %v8736 = vshrl.u32 %v8735, 7
        %v8737 = vsub.s32 %v8734, %v8736
        %v8738 = vrot.slane %v8730, %v8737
        %v8740 = vunpack.c.l.s4 1966171168
        %v8741 = vunpack.c.0.s8 %v8740
        %v8742 = vlaneseq
        %v8743 = vshrl.u32 %v8742, 7
        %v8744 = vsub.s32 %v8741, %v8743
        %v8745 = vrot.slane %v8731, %v8744
        %v8746 = vcombine.high %v8738, %v8738
        %v8747 = vcombine.high %v8745, %v8745
        %v8749 = vunpack.c.l.s4 1966171168
        %v8750 = vunpack.c.0.s8 %v8749
        %v8751 = vlaneseq
        %v8752 = vshrl.u32 %v8751, 7
        %v8753 = vsub.s32 %v8750, %v8752
        %v8754 = vrot.slane %v8738, %v8753
        %v8756 = vunpack.c.l.s4 1966171168
        %v8757 = vunpack.c.0.s8 %v8756
        %v8758 = vlaneseq
        %v8759 = vshrl.u32 %v8758, 7
        %v8760 = vsub.s32 %v8757, %v8759
        %v8761 = vrot.slane %v8745, %v8760
        %v8763 = vunpack.c.l.s4 1966171168
        %v8764 = vunpack.c.0.s8 %v8763
        %v8765 = vlaneseq
        %v8766 = vshrl.u32 %v8765, 7
        %v8767 = vsub.s32 %v8764, %v8766
        %v8768 = vrot.slane %v8746, %v8767
        %v8770 = vunpack.c.l.s4 1966171168
        %v8771 = vunpack.c.0.s8 %v8770
        %v8772 = vlaneseq
        %v8773 = vshrl.u32 %v8772, 7
        %v8774 = vsub.s32 %v8771, %v8773
        %v8775 = vrot.slane %v8747, %v8774
        %v8776 = vcombine.high %v8754, %v8754
        %v8777 = vcombine.high %v8761, %v8761
        %v8778 = vcombine.high %v8768, %v8768
        %v8779 = vcombine.high %v8775, %v8775
        %v8780 = vcombine.low %v8114, %v8116
        %v8781 = vcombine.high %v8114, %v8116
        %v8783 = vunpack.c.l.s4 1966171168
        %v8784 = vunpack.c.0.s8 %v8783
        %v8785 = vlaneseq
        %v8786 = vshrl.u32 %v8785, 7
        %v8787 = vsub.s32 %v8784, %v8786
        %v8788 = vrot.slane %v8780, %v8787
        %v8790 = vunpack.c.l.s4 1966171168
        %v8791 = vunpack.c.0.s8 %v8790
        %v8792 = vlaneseq
        %v8793 = vshrl.u32 %v8792, 7
        %v8794 = vsub.s32 %v8791, %v8793
        %v8795 = vrot.slane %v8781, %v8794
        %v8796 = vcombine.high %v8788, %v8788
        %v8797 = vcombine.high %v8795, %v8795
        %v8799 = vunpack.c.l.s4 1966171168
        %v8800 = vunpack.c.0.s8 %v8799
        %v8801 = vlaneseq
        %v8802 = vshrl.u32 %v8801, 7
        %v8803 = vsub.s32 %v8800, %v8802
        %v8804 = vrot.slane %v8788, %v8803
        %v8806 = vunpack.c.l.s4 1966171168
        %v8807 = vunpack.c.0.s8 %v8806
        %v8808 = vlaneseq
        %v8809 = vshrl.u32 %v8808, 7
        %v8810 = vsub.s32 %v8807, %v8809
        %v8811 = vrot.slane %v8795, %v8810
        %v8813 = vunpack.c.l.s4 1966171168
        %v8814 = vunpack.c.0.s8 %v8813
        %v8815 = vlaneseq
        %v8816 = vshrl.u32 %v8815, 7
        %v8817 = vsub.s32 %v8814, %v8816
        %v8818 = vrot.slane %v8796, %v8817
        %v8820 = vunpack.c.l.s4 1966171168
        %v8821 = vunpack.c.0.s8 %v8820
        %v8822 = vlaneseq
        %v8823 = vshrl.u32 %v8822, 7
        %v8824 = vsub.s32 %v8821, %v8823
        %v8825 = vrot.slane %v8797, %v8824
        %v8826 = vcombine.high %v8804, %v8804
        %v8827 = vcombine.high %v8811, %v8811
        %v8828 = vcombine.high %v8818, %v8818
        %v8829 = vcombine.high %v8825, %v8825
        %v8830 = vcombine.low %v8120, %v8122
        %v8831 = vcombine.high %v8120, %v8122
        %v8833 = vunpack.c.l.s4 1966171168
        %v8834 = vunpack.c.0.s8 %v8833
        %v8835 = vlaneseq
        %v8836 = vshrl.u32 %v8835, 7
        %v8837 = vsub.s32 %v8834, %v8836
        %v8838 = vrot.slane %v8830, %v8837
        %v8840 = vunpack.c.l.s4 1966171168
        %v8841 = vunpack.c.0.s8 %v8840
        %v8842 = vlaneseq
        %v8843 = vshrl.u32 %v8842, 7
        %v8844 = vsub.s32 %v8841, %v8843
        %v8845 = vrot.slane %v8831, %v8844
        %v8846 = vcombine.high %v8838, %v8838
        %v8847 = vcombine.high %v8845, %v8845
        %v8849 = vunpack.c.l.s4 1966171168
        %v8850 = vunpack.c.0.s8 %v8849
        %v8851 = vlaneseq
        %v8852 = vshrl.u32 %v8851, 7
        %v8853 = vsub.s32 %v8850, %v8852
        %v8854 = vrot.slane %v8838, %v8853
        %v8856 = vunpack.c.l.s4 1966171168
        %v8857 = vunpack.c.0.s8 %v8856
        %v8858 = vlaneseq
        %v8859 = vshrl.u32 %v8858, 7
        %v8860 = vsub.s32 %v8857, %v8859
        %v8861 = vrot.slane %v8845, %v8860
        %v8863 = vunpack.c.l.s4 1966171168
        %v8864 = vunpack.c.0.s8 %v8863
        %v8865 = vlaneseq
        %v8866 = vshrl.u32 %v8865, 7
        %v8867 = vsub.s32 %v8864, %v8866
        %v8868 = vrot.slane %v8846, %v8867
        %v8870 = vunpack.c.l.s4 1966171168
        %v8871 = vunpack.c.0.s8 %v8870
        %v8872 = vlaneseq
        %v8873 = vshrl.u32 %v8872, 7
        %v8874 = vsub.s32 %v8871, %v8873
        %v8875 = vrot.slane %v8847, %v8874
        %v8876 = vcombine.high %v8854, %v8854
        %v8877 = vcombine.high %v8861, %v8861
        %v8878 = vcombine.high %v8868, %v8868
        %v8879 = vcombine.high %v8875, %v8875
        %v8880 = vcombine.low %v8126, %v8128
        %v8881 = vcombine.high %v8126, %v8128
        %v8883 = vunpack.c.l.s4 1966171168
        %v8884 = vunpack.c.0.s8 %v8883
        %v8885 = vlaneseq
        %v8886 = vshrl.u32 %v8885, 7
        %v8887 = vsub.s32 %v8884, %v8886
        %v8888 = vrot.slane %v8880, %v8887
        %v8890 = vunpack.c.l.s4 1966171168
        %v8891 = vunpack.c.0.s8 %v8890
        %v8892 = vlaneseq
        %v8893 = vshrl.u32 %v8892, 7
        %v8894 = vsub.s32 %v8891, %v8893
        %v8895 = vrot.slane %v8881, %v8894
        %v8896 = vcombine.high %v8888, %v8888
        %v8897 = vcombine.high %v8895, %v8895
        %v8899 = vunpack.c.l.s4 1966171168
        %v8900 = vunpack.c.0.s8 %v8899
        %v8901 = vlaneseq
        %v8902 = vshrl.u32 %v8901, 7
        %v8903 = vsub.s32 %v8900, %v8902
        %v8904 = vrot.slane %v8888, %v8903
        %v8906 = vunpack.c.l.s4 1966171168
        %v8907 = vunpack.c.0.s8 %v8906
        %v8908 = vlaneseq
        %v8909 = vshrl.u32 %v8908, 7
        %v8910 = vsub.s32 %v8907, %v8909
        %v8911 = vrot.slane %v8895, %v8910
        %v8913 = vunpack.c.l.s4 1966171168
        %v8914 = vunpack.c.0.s8 %v8913
        %v8915 = vlaneseq
        %v8916 = vshrl.u32 %v8915, 7
        %v8917 = vsub.s32 %v8914, %v8916
        %v8918 = vrot.slane %v8896, %v8917
        %v8920 = vunpack.c.l.s4 1966171168
        %v8921 = vunpack.c.0.s8 %v8920
        %v8922 = vlaneseq
        %v8923 = vshrl.u32 %v8922, 7
        %v8924 = vsub.s32 %v8921, %v8923
        %v8925 = vrot.slane %v8897, %v8924
        %v8926 = vcombine.high %v8904, %v8904
        %v8927 = vcombine.high %v8911, %v8911
        %v8928 = vcombine.high %v8918, %v8918
        %v8929 = vcombine.high %v8925, %v8925
        %v8930 = vcombine.low %v8458, %v8459
        %v8931 = vcombine.high %v8458, %v8459
        %v8933 = vunpack.c.l.s4 1966171168
        %v8934 = vunpack.c.0.s8 %v8933
        %v8935 = vlaneseq
        %v8936 = vshrl.u32 %v8935, 7
        %v8937 = vsub.s32 %v8934, %v8936
        %v8938 = vrot.slane %v8930, %v8937
        %v8940 = vunpack.c.l.s4 1966171168
        %v8941 = vunpack.c.0.s8 %v8940
        %v8942 = vlaneseq
        %v8943 = vshrl.u32 %v8942, 7
        %v8944 = vsub.s32 %v8941, %v8943
        %v8945 = vrot.slane %v8931, %v8944
        %v8946 = vcombine.high %v8938, %v8938
        %v8947 = vcombine.high %v8945, %v8945
        %v8949 = vunpack.c.l.s4 1966171168
        %v8950 = vunpack.c.0.s8 %v8949
        %v8951 = vlaneseq
        %v8952 = vshrl.u32 %v8951, 7
        %v8953 = vsub.s32 %v8950, %v8952
        %v8954 = vrot.slane %v8938, %v8953
        %v8956 = vunpack.c.l.s4 1966171168
        %v8957 = vunpack.c.0.s8 %v8956
        %v8958 = vlaneseq
        %v8959 = vshrl.u32 %v8958, 7
        %v8960 = vsub.s32 %v8957, %v8959
        %v8961 = vrot.slane %v8945, %v8960
        %v8963 = vunpack.c.l.s4 1966171168
        %v8964 = vunpack.c.0.s8 %v8963
        %v8965 = vlaneseq
        %v8966 = vshrl.u32 %v8965, 7
        %v8967 = vsub.s32 %v8964, %v8966
        %v8968 = vrot.slane %v8946, %v8967
        %v8970 = vunpack.c.l.s4 1966171168
        %v8971 = vunpack.c.0.s8 %v8970
        %v8972 = vlaneseq
        %v8973 = vshrl.u32 %v8972, 7
        %v8974 = vsub.s32 %v8971, %v8973
        %v8975 = vrot.slane %v8947, %v8974
        %v8976 = vcombine.high %v8954, %v8954
        %v8977 = vcombine.high %v8961, %v8961
        %v8978 = vcombine.high %v8968, %v8968
        %v8979 = vcombine.high %v8975, %v8975
        %v8980 = vlaneseq
        %v8981 = vshrl.u32 %v8980, 7
        %v8982 = vsub.s32 0, %v8981
        %v8983 = vrot.slane %v8494, %v8982
        %v8984 = vlaneseq
        %v8985 = vshrl.u32 %v8984, 7
        %v8986 = vsub.s32 1, %v8985
        %v8987 = vrot.slane %v8494, %v8986
        %v8988 = vlaneseq
        %v8989 = vshrl.u32 %v8988, 7
        %v8990 = vsub.s32 0, %v8989
        %v8991 = vrot.slane %v8508, %v8990
        %v8992 = vlaneseq
        %v8993 = vshrl.u32 %v8992, 7
        %v8994 = vsub.s32 1, %v8993
        %v8995 = vrot.slane %v8508, %v8994
        %v8996 = vlaneseq
        %v8997 = vshrl.u32 %v8996, 7
        %v8998 = vsub.s32 0, %v8997
        %v8999 = vrot.slane %v8516, %v8998
        %v9000 = vlaneseq
        %v9001 = vshrl.u32 %v9000, 7
        %v9002 = vsub.s32 1, %v9001
        %v9003 = vrot.slane %v8516, %v9002
        %v9004 = vlaneseq
        %v9005 = vshrl.u32 %v9004, 7
        %v9006 = vsub.s32 0, %v9005
        %v9007 = vrot.slane %v8518, %v9006
        %v9008 = vlaneseq
        %v9009 = vshrl.u32 %v9008, 7
        %v9010 = vsub.s32 1, %v9009
        %v9011 = vrot.slane %v8518, %v9010
        %v9012 = vlaneseq
        %v9013 = vshrl.u32 %v9012, 7
        %v9014 = vsub.s32 0, %v9013
        %v9015 = vrot.slane %v8501, %v9014
        %v9016 = vlaneseq
        %v9017 = vshrl.u32 %v9016, 7
        %v9018 = vsub.s32 1, %v9017
        %v9019 = vrot.slane %v8501, %v9018
        %v9020 = vlaneseq
        %v9021 = vshrl.u32 %v9020, 7
        %v9022 = vsub.s32 0, %v9021
        %v9023 = vrot.slane %v8515, %v9022
        %v9024 = vlaneseq
        %v9025 = vshrl.u32 %v9024, 7
        %v9026 = vsub.s32 1, %v9025
        %v9027 = vrot.slane %v8515, %v9026
        %v9028 = vlaneseq
        %v9029 = vshrl.u32 %v9028, 7
        %v9030 = vsub.s32 0, %v9029
        %v9031 = vrot.slane %v8517, %v9030
        %v9032 = vlaneseq
        %v9033 = vshrl.u32 %v9032, 7
        %v9034 = vsub.s32 1, %v9033
        %v9035 = vrot.slane %v8517, %v9034
        %v9036 = vlaneseq
        %v9037 = vshrl.u32 %v9036, 7
        %v9038 = vsub.s32 0, %v9037
        %v9039 = vrot.slane %v8519, %v9038
        %v9040 = vlaneseq
        %v9041 = vshrl.u32 %v9040, 7
        %v9042 = vsub.s32 1, %v9041
        %v9043 = vrot.slane %v8519, %v9042
        %v9044 = vlaneseq
        %v9045 = vshrl.u32 %v9044, 7
        %v9046 = vsub.s32 0, %v9045
        %v9047 = vrot.slane %v8544, %v9046
        %v9048 = vlaneseq
        %v9049 = vshrl.u32 %v9048, 7
        %v9050 = vsub.s32 1, %v9049
        %v9051 = vrot.slane %v8544, %v9050
        %v9052 = vlaneseq
        %v9053 = vshrl.u32 %v9052, 7
        %v9054 = vsub.s32 0, %v9053
        %v9055 = vrot.slane %v8558, %v9054
        %v9056 = vlaneseq
        %v9057 = vshrl.u32 %v9056, 7
        %v9058 = vsub.s32 1, %v9057
        %v9059 = vrot.slane %v8558, %v9058
        %v9060 = vlaneseq
        %v9061 = vshrl.u32 %v9060, 7
        %v9062 = vsub.s32 0, %v9061
        %v9063 = vrot.slane %v8566, %v9062
        %v9064 = vlaneseq
        %v9065 = vshrl.u32 %v9064, 7
        %v9066 = vsub.s32 1, %v9065
        %v9067 = vrot.slane %v8566, %v9066
        %v9068 = vlaneseq
        %v9069 = vshrl.u32 %v9068, 7
        %v9070 = vsub.s32 0, %v9069
        %v9071 = vrot.slane %v8568, %v9070
        %v9072 = vlaneseq
        %v9073 = vshrl.u32 %v9072, 7
        %v9074 = vsub.s32 1, %v9073
        %v9075 = vrot.slane %v8568, %v9074
        %v9076 = vlaneseq
        %v9077 = vshrl.u32 %v9076, 7
        %v9078 = vsub.s32 0, %v9077
        %v9079 = vrot.slane %v8551, %v9078
        %v9080 = vlaneseq
        %v9081 = vshrl.u32 %v9080, 7
        %v9082 = vsub.s32 1, %v9081
        %v9083 = vrot.slane %v8551, %v9082
        %v9084 = vlaneseq
        %v9085 = vshrl.u32 %v9084, 7
        %v9086 = vsub.s32 0, %v9085
        %v9087 = vrot.slane %v8565, %v9086
        %v9088 = vlaneseq
        %v9089 = vshrl.u32 %v9088, 7
        %v9090 = vsub.s32 1, %v9089
        %v9091 = vrot.slane %v8565, %v9090
        %v9092 = vlaneseq
        %v9093 = vshrl.u32 %v9092, 7
        %v9094 = vsub.s32 0, %v9093
        %v9095 = vrot.slane %v8567, %v9094
        %v9096 = vlaneseq
        %v9097 = vshrl.u32 %v9096, 7
        %v9098 = vsub.s32 1, %v9097
        %v9099 = vrot.slane %v8567, %v9098
        %v9100 = vlaneseq
        %v9101 = vshrl.u32 %v9100, 7
        %v9102 = vsub.s32 0, %v9101
        %v9103 = vrot.slane %v8569, %v9102
        %v9104 = vlaneseq
        %v9105 = vshrl.u32 %v9104, 7
        %v9106 = vsub.s32 1, %v9105
        %v9107 = vrot.slane %v8569, %v9106
        %v9108 = vlaneseq
        %v9109 = vshrl.u32 %v9108, 7
        %v9110 = vsub.s32 0, %v9109
        %v9111 = vrot.slane %v8594, %v9110
        %v9112 = vlaneseq
        %v9113 = vshrl.u32 %v9112, 7
        %v9114 = vsub.s32 1, %v9113
        %v9115 = vrot.slane %v8594, %v9114
        %v9116 = vlaneseq
        %v9117 = vshrl.u32 %v9116, 7
        %v9118 = vsub.s32 0, %v9117
        %v9119 = vrot.slane %v8608, %v9118
        %v9120 = vlaneseq
        %v9121 = vshrl.u32 %v9120, 7
        %v9122 = vsub.s32 1, %v9121
        %v9123 = vrot.slane %v8608, %v9122
        %v9124 = vlaneseq
        %v9125 = vshrl.u32 %v9124, 7
        %v9126 = vsub.s32 0, %v9125
        %v9127 = vrot.slane %v8616, %v9126
        %v9128 = vlaneseq
        %v9129 = vshrl.u32 %v9128, 7
        %v9130 = vsub.s32 1, %v9129
        %v9131 = vrot.slane %v8616, %v9130
        %v9132 = vlaneseq
        %v9133 = vshrl.u32 %v9132, 7
        %v9134 = vsub.s32 0, %v9133
        %v9135 = vrot.slane %v8618, %v9134
        %v9136 = vlaneseq
        %v9137 = vshrl.u32 %v9136, 7
        %v9138 = vsub.s32 1, %v9137
        %v9139 = vrot.slane %v8618, %v9138
        %v9140 = vlaneseq
        %v9141 = vshrl.u32 %v9140, 7
        %v9142 = vsub.s32 0, %v9141
        %v9143 = vrot.slane %v8601, %v9142
        %v9144 = vlaneseq
        %v9145 = vshrl.u32 %v9144, 7
        %v9146 = vsub.s32 1, %v9145
        %v9147 = vrot.slane %v8601, %v9146
        %v9148 = vlaneseq
        %v9149 = vshrl.u32 %v9148, 7
        %v9150 = vsub.s32 0, %v9149
        %v9151 = vrot.slane %v8615, %v9150
        %v9152 = vlaneseq
        %v9153 = vshrl.u32 %v9152, 7
        %v9154 = vsub.s32 1, %v9153
        %v9155 = vrot.slane %v8615, %v9154
        %v9156 = vlaneseq
        %v9157 = vshrl.u32 %v9156, 7
        %v9158 = vsub.s32 0, %v9157
        %v9159 = vrot.slane %v8617, %v9158
        %v9160 = vlaneseq
        %v9161 = vshrl.u32 %v9160, 7
        %v9162 = vsub.s32 1, %v9161
        %v9163 = vrot.slane %v8617, %v9162
        %v9164 = vlaneseq
        %v9165 = vshrl.u32 %v9164, 7
        %v9166 = vsub.s32 0, %v9165
        %v9167 = vrot.slane %v8619, %v9166
        %v9168 = vlaneseq
        %v9169 = vshrl.u32 %v9168, 7
        %v9170 = vsub.s32 1, %v9169
        %v9171 = vrot.slane %v8619, %v9170
        %v9172 = vlaneseq
        %v9173 = vshrl.u32 %v9172, 7
        %v9174 = vsub.s32 0, %v9173
        %v9175 = vrot.slane %v8644, %v9174
        %v9176 = vlaneseq
        %v9177 = vshrl.u32 %v9176, 7
        %v9178 = vsub.s32 1, %v9177
        %v9179 = vrot.slane %v8644, %v9178
        %v9180 = vlaneseq
        %v9181 = vshrl.u32 %v9180, 7
        %v9182 = vsub.s32 0, %v9181
        %v9183 = vrot.slane %v8658, %v9182
        %v9184 = vlaneseq
        %v9185 = vshrl.u32 %v9184, 7
        %v9186 = vsub.s32 1, %v9185
        %v9187 = vrot.slane %v8658, %v9186
        %v9188 = vlaneseq
        %v9189 = vshrl.u32 %v9188, 7
        %v9190 = vsub.s32 0, %v9189
        %v9191 = vrot.slane %v8666, %v9190
        %v9192 = vlaneseq
        %v9193 = vshrl.u32 %v9192, 7
        %v9194 = vsub.s32 1, %v9193
        %v9195 = vrot.slane %v8666, %v9194
        %v9196 = vlaneseq
        %v9197 = vshrl.u32 %v9196, 7
        %v9198 = vsub.s32 0, %v9197
        %v9199 = vrot.slane %v8668, %v9198
        %v9200 = vlaneseq
        %v9201 = vshrl.u32 %v9200, 7
        %v9202 = vsub.s32 1, %v9201
        %v9203 = vrot.slane %v8668, %v9202
        %v9204 = vlaneseq
        %v9205 = vshrl.u32 %v9204, 7
        %v9206 = vsub.s32 0, %v9205
        %v9207 = vrot.slane %v8651, %v9206
        %v9208 = vlaneseq
        %v9209 = vshrl.u32 %v9208, 7
        %v9210 = vsub.s32 1, %v9209
        %v9211 = vrot.slane %v8651, %v9210
        %v9212 = vlaneseq
        %v9213 = vshrl.u32 %v9212, 7
        %v9214 = vsub.s32 0, %v9213
        %v9215 = vrot.slane %v8665, %v9214
        %v9216 = vlaneseq
        %v9217 = vshrl.u32 %v9216, 7
        %v9218 = vsub.s32 1, %v9217
        %v9219 = vrot.slane %v8665, %v9218
        %v9220 = vlaneseq
        %v9221 = vshrl.u32 %v9220, 7
        %v9222 = vsub.s32 0, %v9221
        %v9223 = vrot.slane %v8667, %v9222
        %v9224 = vlaneseq
        %v9225 = vshrl.u32 %v9224, 7
        %v9226 = vsub.s32 1, %v9225
        %v9227 = vrot.slane %v8667, %v9226
        %v9228 = vlaneseq
        %v9229 = vshrl.u32 %v9228, 7
        %v9230 = vsub.s32 0, %v9229
        %v9231 = vrot.slane %v8669, %v9230
        %v9232 = vlaneseq
        %v9233 = vshrl.u32 %v9232, 7
        %v9234 = vsub.s32 1, %v9233
        %v9235 = vrot.slane %v8669, %v9234
        %v9236 = vlaneseq
        %v9237 = vshrl.u32 %v9236, 7
        %v9238 = vsub.s32 0, %v9237
        %v9239 = vrot.slane %v8694, %v9238
        %v9240 = vlaneseq
        %v9241 = vshrl.u32 %v9240, 7
        %v9242 = vsub.s32 1, %v9241
        %v9243 = vrot.slane %v8694, %v9242
        %v9244 = vlaneseq
        %v9245 = vshrl.u32 %v9244, 7
        %v9246 = vsub.s32 0, %v9245
        %v9247 = vrot.slane %v8708, %v9246
        %v9248 = vlaneseq
        %v9249 = vshrl.u32 %v9248, 7
        %v9250 = vsub.s32 1, %v9249
        %v9251 = vrot.slane %v8708, %v9250
        %v9252 = vlaneseq
        %v9253 = vshrl.u32 %v9252, 7
        %v9254 = vsub.s32 0, %v9253
        %v9255 = vrot.slane %v8716, %v9254
        %v9256 = vlaneseq
        %v9257 = vshrl.u32 %v9256, 7
        %v9258 = vsub.s32 1, %v9257
        %v9259 = vrot.slane %v8716, %v9258
        %v9260 = vlaneseq
        %v9261 = vshrl.u32 %v9260, 7
        %v9262 = vsub.s32 0, %v9261
        %v9263 = vrot.slane %v8718, %v9262
        %v9264 = vlaneseq
        %v9265 = vshrl.u32 %v9264, 7
        %v9266 = vsub.s32 1, %v9265
        %v9267 = vrot.slane %v8718, %v9266
        %v9268 = vlaneseq
        %v9269 = vshrl.u32 %v9268, 7
        %v9270 = vsub.s32 0, %v9269
        %v9271 = vrot.slane %v8701, %v9270
        %v9272 = vlaneseq
        %v9273 = vshrl.u32 %v9272, 7
        %v9274 = vsub.s32 1, %v9273
        %v9275 = vrot.slane %v8701, %v9274
        %v9276 = vlaneseq
        %v9277 = vshrl.u32 %v9276, 7
        %v9278 = vsub.s32 0, %v9277
        %v9279 = vrot.slane %v8715, %v9278
        %v9280 = vlaneseq
        %v9281 = vshrl.u32 %v9280, 7
        %v9282 = vsub.s32 1, %v9281
        %v9283 = vrot.slane %v8715, %v9282
        %v9284 = vlaneseq
        %v9285 = vshrl.u32 %v9284, 7
        %v9286 = vsub.s32 0, %v9285
        %v9287 = vrot.slane %v8717, %v9286
        %v9288 = vlaneseq
        %v9289 = vshrl.u32 %v9288, 7
        %v9290 = vsub.s32 1, %v9289
        %v9291 = vrot.slane %v8717, %v9290
        %v9292 = vlaneseq
        %v9293 = vshrl.u32 %v9292, 7
        %v9294 = vsub.s32 0, %v9293
        %v9295 = vrot.slane %v8719, %v9294
        %v9296 = vlaneseq
        %v9297 = vshrl.u32 %v9296, 7
        %v9298 = vsub.s32 1, %v9297
        %v9299 = vrot.slane %v8719, %v9298
        %v9380 = vlaneseq
        %v9381 = vshrl.u32 %v9380, 7
        %v9382 = vsub.s32 0, %v9381
        %v9383 = vrot.slane %v8754, %v9382
        %v9384 = vlaneseq
        %v9385 = vshrl.u32 %v9384, 7
        %v9386 = vsub.s32 1, %v9385
        %v9387 = vrot.slane %v8754, %v9386
        %v9388 = vlaneseq
        %v9389 = vshrl.u32 %v9388, 7
        %v9390 = vsub.s32 0, %v9389
        %v9391 = vrot.slane %v8768, %v9390
        %v9392 = vlaneseq
        %v9393 = vshrl.u32 %v9392, 7
        %v9394 = vsub.s32 1, %v9393
        %v9395 = vrot.slane %v8768, %v9394
        %v9396 = vlaneseq
        %v9397 = vshrl.u32 %v9396, 7
        %v9398 = vsub.s32 0, %v9397
        %v9399 = vrot.slane %v8776, %v9398
        %v9400 = vlaneseq
        %v9401 = vshrl.u32 %v9400, 7
        %v9402 = vsub.s32 1, %v9401
        %v9403 = vrot.slane %v8776, %v9402
        %v9404 = vlaneseq
        %v9405 = vshrl.u32 %v9404, 7
        %v9406 = vsub.s32 0, %v9405
        %v9407 = vrot.slane %v8778, %v9406
        %v9408 = vlaneseq
        %v9409 = vshrl.u32 %v9408, 7
        %v9410 = vsub.s32 1, %v9409
        %v9411 = vrot.slane %v8778, %v9410
        %v9412 = vlaneseq
        %v9413 = vshrl.u32 %v9412, 7
        %v9414 = vsub.s32 0, %v9413
        %v9415 = vrot.slane %v8761, %v9414
        %v9416 = vlaneseq
        %v9417 = vshrl.u32 %v9416, 7
        %v9418 = vsub.s32 1, %v9417
        %v9419 = vrot.slane %v8761, %v9418
        %v9420 = vlaneseq
        %v9421 = vshrl.u32 %v9420, 7
        %v9422 = vsub.s32 0, %v9421
        %v9423 = vrot.slane %v8775, %v9422
        %v9424 = vlaneseq
        %v9425 = vshrl.u32 %v9424, 7
        %v9426 = vsub.s32 1, %v9425
        %v9427 = vrot.slane %v8775, %v9426
        %v9428 = vlaneseq
        %v9429 = vshrl.u32 %v9428, 7
        %v9430 = vsub.s32 0, %v9429
        %v9431 = vrot.slane %v8777, %v9430
        %v9432 = vlaneseq
        %v9433 = vshrl.u32 %v9432, 7
        %v9434 = vsub.s32 1, %v9433
        %v9435 = vrot.slane %v8777, %v9434
        %v9436 = vlaneseq
        %v9437 = vshrl.u32 %v9436, 7
        %v9438 = vsub.s32 0, %v9437
        %v9439 = vrot.slane %v8779, %v9438
        %v9440 = vlaneseq
        %v9441 = vshrl.u32 %v9440, 7
        %v9442 = vsub.s32 1, %v9441
        %v9443 = vrot.slane %v8779, %v9442
        %v9444 = vlaneseq
        %v9445 = vshrl.u32 %v9444, 7
        %v9446 = vsub.s32 0, %v9445
        %v9447 = vrot.slane %v8804, %v9446
        %v9448 = vlaneseq
        %v9449 = vshrl.u32 %v9448, 7
        %v9450 = vsub.s32 1, %v9449
        %v9451 = vrot.slane %v8804, %v9450
        %v9452 = vlaneseq
        %v9453 = vshrl.u32 %v9452, 7
        %v9454 = vsub.s32 0, %v9453
        %v9455 = vrot.slane %v8818, %v9454
        %v9456 = vlaneseq
        %v9457 = vshrl.u32 %v9456, 7
        %v9458 = vsub.s32 1, %v9457
        %v9459 = vrot.slane %v8818, %v9458
        %v9460 = vlaneseq
        %v9461 = vshrl.u32 %v9460, 7
        %v9462 = vsub.s32 0, %v9461
        %v9463 = vrot.slane %v8826, %v9462
        %v9464 = vlaneseq
        %v9465 = vshrl.u32 %v9464, 7
        %v9466 = vsub.s32 1, %v9465
        %v9467 = vrot.slane %v8826, %v9466
        %v9468 = vlaneseq
        %v9469 = vshrl.u32 %v9468, 7
        %v9470 = vsub.s32 0, %v9469
        %v9471 = vrot.slane %v8828, %v9470
        %v9472 = vlaneseq
        %v9473 = vshrl.u32 %v9472, 7
        %v9474 = vsub.s32 1, %v9473
        %v9475 = vrot.slane %v8828, %v9474
        %v9476 = vlaneseq
        %v9477 = vshrl.u32 %v9476, 7
        %v9478 = vsub.s32 0, %v9477
        %v9479 = vrot.slane %v8811, %v9478
        %v9480 = vlaneseq
        %v9481 = vshrl.u32 %v9480, 7
        %v9482 = vsub.s32 1, %v9481
        %v9483 = vrot.slane %v8811, %v9482
        %v9484 = vlaneseq
        %v9485 = vshrl.u32 %v9484, 7
        %v9486 = vsub.s32 0, %v9485
        %v9487 = vrot.slane %v8825, %v9486
        %v9488 = vlaneseq
        %v9489 = vshrl.u32 %v9488, 7
        %v9490 = vsub.s32 1, %v9489
        %v9491 = vrot.slane %v8825, %v9490
        %v9492 = vlaneseq
        %v9493 = vshrl.u32 %v9492, 7
        %v9494 = vsub.s32 0, %v9493
        %v9495 = vrot.slane %v8827, %v9494
        %v9496 = vlaneseq
        %v9497 = vshrl.u32 %v9496, 7
        %v9498 = vsub.s32 1, %v9497
        %v9499 = vrot.slane %v8827, %v9498
        %v9500 = vlaneseq
        %v9501 = vshrl.u32 %v9500, 7
        %v9502 = vsub.s32 0, %v9501
        %v9503 = vrot.slane %v8829, %v9502
        %v9504 = vlaneseq
        %v9505 = vshrl.u32 %v9504, 7
        %v9506 = vsub.s32 1, %v9505
        %v9507 = vrot.slane %v8829, %v9506
        %v9508 = vlaneseq
        %v9509 = vshrl.u32 %v9508, 7
        %v9510 = vsub.s32 0, %v9509
        %v9511 = vrot.slane %v8854, %v9510
        %v9512 = vlaneseq
        %v9513 = vshrl.u32 %v9512, 7
        %v9514 = vsub.s32 1, %v9513
        %v9515 = vrot.slane %v8854, %v9514
        %v9516 = vlaneseq
        %v9517 = vshrl.u32 %v9516, 7
        %v9518 = vsub.s32 0, %v9517
        %v9519 = vrot.slane %v8868, %v9518
        %v9520 = vlaneseq
        %v9521 = vshrl.u32 %v9520, 7
        %v9522 = vsub.s32 1, %v9521
        %v9523 = vrot.slane %v8868, %v9522
        %v9524 = vlaneseq
        %v9525 = vshrl.u32 %v9524, 7
        %v9526 = vsub.s32 0, %v9525
        %v9527 = vrot.slane %v8876, %v9526
        %v9528 = vlaneseq
        %v9529 = vshrl.u32 %v9528, 7
        %v9530 = vsub.s32 1, %v9529
        %v9531 = vrot.slane %v8876, %v9530
        %v9532 = vlaneseq
        %v9533 = vshrl.u32 %v9532, 7
        %v9534 = vsub.s32 0, %v9533
        %v9535 = vrot.slane %v8878, %v9534
        %v9536 = vlaneseq
        %v9537 = vshrl.u32 %v9536, 7
        %v9538 = vsub.s32 1, %v9537
        %v9539 = vrot.slane %v8878, %v9538
        %v9540 = vlaneseq
        %v9541 = vshrl.u32 %v9540, 7
        %v9542 = vsub.s32 0, %v9541
        %v9543 = vrot.slane %v8861, %v9542
        %v9544 = vlaneseq
        %v9545 = vshrl.u32 %v9544, 7
        %v9546 = vsub.s32 1, %v9545
        %v9547 = vrot.slane %v8861, %v9546
        %v9548 = vlaneseq
        %v9549 = vshrl.u32 %v9548, 7
        %v9550 = vsub.s32 0, %v9549
        %v9551 = vrot.slane %v8875, %v9550
        %v9552 = vlaneseq
        %v9553 = vshrl.u32 %v9552, 7
        %v9554 = vsub.s32 1, %v9553
        %v9555 = vrot.slane %v8875, %v9554
        %v9556 = vlaneseq
        %v9557 = vshrl.u32 %v9556, 7
        %v9558 = vsub.s32 0, %v9557
        %v9559 = vrot.slane %v8877, %v9558
        %v9560 = vlaneseq
        %v9561 = vshrl.u32 %v9560, 7
        %v9562 = vsub.s32 1, %v9561
        %v9563 = vrot.slane %v8877, %v9562
        %v9564 = vlaneseq
        %v9565 = vshrl.u32 %v9564, 7
        %v9566 = vsub.s32 0, %v9565
        %v9567 = vrot.slane %v8879, %v9566
        %v9568 = vlaneseq
        %v9569 = vshrl.u32 %v9568, 7
        %v9570 = vsub.s32 1, %v9569
        %v9571 = vrot.slane %v8879, %v9570
        %v9572 = vlaneseq
        %v9573 = vshrl.u32 %v9572, 7
        %v9574 = vsub.s32 0, %v9573
        %v9575 = vrot.slane %v8904, %v9574
        %v9576 = vlaneseq
        %v9577 = vshrl.u32 %v9576, 7
        %v9578 = vsub.s32 1, %v9577
        %v9579 = vrot.slane %v8904, %v9578
        %v9580 = vlaneseq
        %v9581 = vshrl.u32 %v9580, 7
        %v9582 = vsub.s32 0, %v9581
        %v9583 = vrot.slane %v8918, %v9582
        %v9584 = vlaneseq
        %v9585 = vshrl.u32 %v9584, 7
        %v9586 = vsub.s32 1, %v9585
        %v9587 = vrot.slane %v8918, %v9586
        %v9588 = vlaneseq
        %v9589 = vshrl.u32 %v9588, 7
        %v9590 = vsub.s32 0, %v9589
        %v9591 = vrot.slane %v8926, %v9590
        %v9592 = vlaneseq
        %v9593 = vshrl.u32 %v9592, 7
        %v9594 = vsub.s32 1, %v9593
        %v9595 = vrot.slane %v8926, %v9594
        %v9596 = vlaneseq
        %v9597 = vshrl.u32 %v9596, 7
        %v9598 = vsub.s32 0, %v9597
        %v9599 = vrot.slane %v8928, %v9598
        %v9600 = vlaneseq
        %v9601 = vshrl.u32 %v9600, 7
        %v9602 = vsub.s32 1, %v9601
        %v9603 = vrot.slane %v8928, %v9602
        %v9604 = vlaneseq
        %v9605 = vshrl.u32 %v9604, 7
        %v9606 = vsub.s32 0, %v9605
        %v9607 = vrot.slane %v8911, %v9606
        %v9608 = vlaneseq
        %v9609 = vshrl.u32 %v9608, 7
        %v9610 = vsub.s32 1, %v9609
        %v9611 = vrot.slane %v8911, %v9610
        %v9612 = vlaneseq
        %v9613 = vshrl.u32 %v9612, 7
        %v9614 = vsub.s32 0, %v9613
        %v9615 = vrot.slane %v8925, %v9614
        %v9616 = vlaneseq
        %v9617 = vshrl.u32 %v9616, 7
        %v9618 = vsub.s32 1, %v9617
        %v9619 = vrot.slane %v8925, %v9618
        %v9620 = vlaneseq
        %v9621 = vshrl.u32 %v9620, 7
        %v9622 = vsub.s32 0, %v9621
        %v9623 = vrot.slane %v8927, %v9622
        %v9624 = vlaneseq
        %v9625 = vshrl.u32 %v9624, 7
        %v9626 = vsub.s32 1, %v9625
        %v9627 = vrot.slane %v8927, %v9626
        %v9628 = vlaneseq
        %v9629 = vshrl.u32 %v9628, 7
        %v9630 = vsub.s32 0, %v9629
        %v9631 = vrot.slane %v8929, %v9630
        %v9632 = vlaneseq
        %v9633 = vshrl.u32 %v9632, 7
        %v9634 = vsub.s32 1, %v9633
        %v9635 = vrot.slane %v8929, %v9634
        %v9636 = vlaneseq
        %v9637 = vshrl.u32 %v9636, 7
        %v9638 = vsub.s32 0, %v9637
        %v9639 = vrot.slane %v8954, %v9638
        %v9640 = vlaneseq
        %v9641 = vshrl.u32 %v9640, 7
        %v9642 = vsub.s32 1, %v9641
        %v9643 = vrot.slane %v8954, %v9642
        %v9644 = vlaneseq
        %v9645 = vshrl.u32 %v9644, 7
        %v9646 = vsub.s32 0, %v9645
        %v9647 = vrot.slane %v8968, %v9646
        %v9648 = vlaneseq
        %v9649 = vshrl.u32 %v9648, 7
        %v9650 = vsub.s32 1, %v9649
        %v9651 = vrot.slane %v8968, %v9650
        %v9652 = vlaneseq
        %v9653 = vshrl.u32 %v9652, 7
        %v9654 = vsub.s32 0, %v9653
        %v9655 = vrot.slane %v8976, %v9654
        %v9656 = vlaneseq
        %v9657 = vshrl.u32 %v9656, 7
        %v9658 = vsub.s32 1, %v9657
        %v9659 = vrot.slane %v8976, %v9658
        %v9660 = vlaneseq
        %v9661 = vshrl.u32 %v9660, 7
        %v9662 = vsub.s32 0, %v9661
        %v9663 = vrot.slane %v8978, %v9662
        %v9664 = vlaneseq
        %v9665 = vshrl.u32 %v9664, 7
        %v9666 = vsub.s32 1, %v9665
        %v9667 = vrot.slane %v8978, %v9666
        %v9668 = vlaneseq
        %v9669 = vshrl.u32 %v9668, 7
        %v9670 = vsub.s32 0, %v9669
        %v9671 = vrot.slane %v8961, %v9670
        %v9672 = vlaneseq
        %v9673 = vshrl.u32 %v9672, 7
        %v9674 = vsub.s32 1, %v9673
        %v9675 = vrot.slane %v8961, %v9674
        %v9676 = vlaneseq
        %v9677 = vshrl.u32 %v9676, 7
        %v9678 = vsub.s32 0, %v9677
        %v9679 = vrot.slane %v8975, %v9678
        %v9680 = vlaneseq
        %v9681 = vshrl.u32 %v9680, 7
        %v9682 = vsub.s32 1, %v9681
        %v9683 = vrot.slane %v8975, %v9682
        %v9684 = vlaneseq
        %v9685 = vshrl.u32 %v9684, 7
        %v9686 = vsub.s32 0, %v9685
        %v9687 = vrot.slane %v8977, %v9686
        %v9688 = vlaneseq
        %v9689 = vshrl.u32 %v9688, 7
        %v9690 = vsub.s32 1, %v9689
        %v9691 = vrot.slane %v8977, %v9690
        %v9692 = vlaneseq
        %v9693 = vshrl.u32 %v9692, 7
        %v9694 = vsub.s32 0, %v9693
        %v9695 = vrot.slane %v8979, %v9694
        %v9696 = vlaneseq
        %v9697 = vshrl.u32 %v9696, 7
        %v9698 = vsub.s32 1, %v9697
        %v9699 = vrot.slane %v8979, %v9698
        %v9780 = vsel %vm1172, %v8983, %v9383
        %v9781 = vsel %vm1172, %v8987, %v9387
        %v9782 = vsel %vm1172, %v8991, %v9391
        %v9783 = vsel %vm1172, %v8995, %v9395
        %v9784 = vsel %vm1172, %v8999, %v9399
        %v9785 = vsel %vm1172, %v9003, %v9403
        %v9786 = vsel %vm1172, %v9007, %v9407
        %v9787 = vsel %vm1172, %v9011, %v9411
        %v9788 = vsel %vm1172, %v9015, %v9415
        %v9789 = vsel %vm1172, %v9019, %v9419
        %v9790 = vsel %vm1172, %v9023, %v9423
        %v9791 = vsel %vm1172, %v9027, %v9427
        %v9792 = vsel %vm1172, %v9031, %v9431
        %v9793 = vsel %vm1172, %v9035, %v9435
        %v9794 = vsel %vm1172, %v9039, %v9439
        %v9795 = vsel %vm1172, %v9043, %v9443
        %v9796 = vsel %vm1172, %v9047, %v9447
        %v9797 = vsel %vm1172, %v9051, %v9451
        %v9798 = vsel %vm1172, %v9055, %v9455
        %v9799 = vsel %vm1172, %v9059, %v9459
        %v9800 = vsel %vm1172, %v9063, %v9463
        %v9801 = vsel %vm1172, %v9067, %v9467
        %v9802 = vsel %vm1172, %v9071, %v9471
        %v9803 = vsel %vm1172, %v9075, %v9475
        %v9804 = vsel %vm1172, %v9079, %v9479
        %v9805 = vsel %vm1172, %v9083, %v9483
        %v9806 = vsel %vm1172, %v9087, %v9487
        %v9807 = vsel %vm1172, %v9091, %v9491
        %v9808 = vsel %vm1172, %v9095, %v9495
        %v9809 = vsel %vm1172, %v9099, %v9499
        %v9810 = vsel %vm1172, %v9103, %v9503
        %v9811 = vsel %vm1172, %v9107, %v9507
        %v9812 = vsel %vm1172, %v9111, %v9511
        %v9813 = vsel %vm1172, %v9115, %v9515
        %v9814 = vsel %vm1172, %v9119, %v9519
        %v9815 = vsel %vm1172, %v9123, %v9523
        %v9816 = vsel %vm1172, %v9127, %v9527
        %v9817 = vsel %vm1172, %v9131, %v9531
        %v9818 = vsel %vm1172, %v9135, %v9535
        %v9819 = vsel %vm1172, %v9139, %v9539
        %v9820 = vsel %vm1172, %v9143, %v9543
        %v9821 = vsel %vm1172, %v9147, %v9547
        %v9822 = vsel %vm1172, %v9151, %v9551
        %v9823 = vsel %vm1172, %v9155, %v9555
        %v9824 = vsel %vm1172, %v9159, %v9559
        %v9825 = vsel %vm1172, %v9163, %v9563
        %v9826 = vsel %vm1172, %v9167, %v9567
        %v9827 = vsel %vm1172, %v9171, %v9571
        %v9828 = vsel %vm1172, %v9175, %v9575
        %v9829 = vsel %vm1172, %v9179, %v9579
        %v9830 = vsel %vm1172, %v9183, %v9583
        %v9831 = vsel %vm1172, %v9187, %v9587
        %v9832 = vsel %vm1172, %v9191, %v9591
        %v9833 = vsel %vm1172, %v9195, %v9595
        %v9834 = vsel %vm1172, %v9199, %v9599
        %v9835 = vsel %vm1172, %v9203, %v9603
        %v9836 = vsel %vm1172, %v9207, %v9607
        %v9837 = vsel %vm1172, %v9211, %v9611
        %v9838 = vsel %vm1172, %v9215, %v9615
        %v9839 = vsel %vm1172, %v9219, %v9619
        %v9840 = vsel %vm1172, %v9223, %v9623
        %v9841 = vsel %vm1172, %v9227, %v9627
        %v9842 = vsel %vm1172, %v9231, %v9631
        %v9843 = vsel %vm1172, %v9235, %v9635
        %v9844 = vsel %vm1172, %v9239, %v9639
        %v9845 = vsel %vm1172, %v9243, %v9643
        %v9846 = vsel %vm1172, %v9247, %v9647
        %v9847 = vsel %vm1172, %v9251, %v9651
        %v9848 = vsel %vm1172, %v9255, %v9655
        %v9849 = vsel %vm1172, %v9259, %v9659
        %v9850 = vsel %vm1172, %v9263, %v9663
        %v9851 = vsel %vm1172, %v9267, %v9667
        %v9852 = vsel %vm1172, %v9271, %v9671
        %v9853 = vsel %vm1172, %v9275, %v9675
        %v9854 = vsel %vm1172, %v9279, %v9679
        %v9855 = vsel %vm1172, %v9283, %v9683
        %v9856 = vsel %vm1172, %v9287, %v9687
        %v9857 = vsel %vm1172, %v9291, %v9691
        %v9858 = vsel %vm1172, %v9295, %v9695
        %v9859 = vsel %vm1172, %v9299, %v9699
        %v9940 = vcombine.low %v9780, %v9781
        %v9942 = vunpack.c.l.s4 1983009808
        %v9943 = vunpack.c.0.s8 %v9942
        %v9944 = vlaneseq
        %v9945 = vshrl.u32 %v9944, 7
        %v9946 = vsub.s32 %v9943, %v9945
        %v9947 = vrot.slane %v9940, %v9946
        %v9948 = vcombine.low %v9782, %v9783
        %v9950 = vunpack.c.l.s4 1983009808
        %v9951 = vunpack.c.0.s8 %v9950
        %v9952 = vlaneseq
        %v9953 = vshrl.u32 %v9952, 7
        %v9954 = vsub.s32 %v9951, %v9953
        %v9955 = vrot.slane %v9948, %v9954
        %v9956 = vcombine.low %v9784, %v9785
        %v9958 = vunpack.c.l.s4 1983009808
        %v9959 = vunpack.c.0.s8 %v9958
        %v9960 = vlaneseq
        %v9961 = vshrl.u32 %v9960, 7
        %v9962 = vsub.s32 %v9959, %v9961
        %v9963 = vrot.slane %v9956, %v9962
        %v9964 = vcombine.low %v9786, %v9787
        %v9966 = vunpack.c.l.s4 1983009808
        %v9967 = vunpack.c.0.s8 %v9966
        %v9968 = vlaneseq
        %v9969 = vshrl.u32 %v9968, 7
        %v9970 = vsub.s32 %v9967, %v9969
        %v9971 = vrot.slane %v9964, %v9970
        %v9972 = vcombine.low %v9788, %v9789
        %v9974 = vunpack.c.l.s4 1983009808
        %v9975 = vunpack.c.0.s8 %v9974
        %v9976 = vlaneseq
        %v9977 = vshrl.u32 %v9976, 7
        %v9978 = vsub.s32 %v9975, %v9977
        %v9979 = vrot.slane %v9972, %v9978
        %v9980 = vcombine.low %v9790, %v9791
        %v9982 = vunpack.c.l.s4 1983009808
        %v9983 = vunpack.c.0.s8 %v9982
        %v9984 = vlaneseq
        %v9985 = vshrl.u32 %v9984, 7
        %v9986 = vsub.s32 %v9983, %v9985
        %v9987 = vrot.slane %v9980, %v9986
        %v9988 = vcombine.low %v9792, %v9793
        %v9990 = vunpack.c.l.s4 1983009808
        %v9991 = vunpack.c.0.s8 %v9990
        %v9992 = vlaneseq
        %v9993 = vshrl.u32 %v9992, 7
        %v9994 = vsub.s32 %v9991, %v9993
        %v9995 = vrot.slane %v9988, %v9994
        %v9996 = vcombine.low %v9794, %v9795
        %v9998 = vunpack.c.l.s4 1983009808
        %v9999 = vunpack.c.0.s8 %v9998
        %v10000 = vlaneseq
        %v10001 = vshrl.u32 %v10000, 7
        %v10002 = vsub.s32 %v9999, %v10001
        %v10003 = vrot.slane %v9996, %v10002
        %v10004 = vcombine.low %v9796, %v9797
        %v10006 = vunpack.c.l.s4 1983009808
        %v10007 = vunpack.c.0.s8 %v10006
        %v10008 = vlaneseq
        %v10009 = vshrl.u32 %v10008, 7
        %v10010 = vsub.s32 %v10007, %v10009
        %v10011 = vrot.slane %v10004, %v10010
        %v10012 = vcombine.low %v9798, %v9799
        %v10014 = vunpack.c.l.s4 1983009808
        %v10015 = vunpack.c.0.s8 %v10014
        %v10016 = vlaneseq
        %v10017 = vshrl.u32 %v10016, 7
        %v10018 = vsub.s32 %v10015, %v10017
        %v10019 = vrot.slane %v10012, %v10018
        %v10020 = vcombine.low %v9800, %v9801
        %v10022 = vunpack.c.l.s4 1983009808
        %v10023 = vunpack.c.0.s8 %v10022
        %v10024 = vlaneseq
        %v10025 = vshrl.u32 %v10024, 7
        %v10026 = vsub.s32 %v10023, %v10025
        %v10027 = vrot.slane %v10020, %v10026
        %v10028 = vcombine.low %v9802, %v9803
        %v10030 = vunpack.c.l.s4 1983009808
        %v10031 = vunpack.c.0.s8 %v10030
        %v10032 = vlaneseq
        %v10033 = vshrl.u32 %v10032, 7
        %v10034 = vsub.s32 %v10031, %v10033
        %v10035 = vrot.slane %v10028, %v10034
        %v10036 = vcombine.low %v9804, %v9805
        %v10038 = vunpack.c.l.s4 1983009808
        %v10039 = vunpack.c.0.s8 %v10038
        %v10040 = vlaneseq
        %v10041 = vshrl.u32 %v10040, 7
        %v10042 = vsub.s32 %v10039, %v10041
        %v10043 = vrot.slane %v10036, %v10042
        %v10044 = vcombine.low %v9806, %v9807
        %v10046 = vunpack.c.l.s4 1983009808
        %v10047 = vunpack.c.0.s8 %v10046
        %v10048 = vlaneseq
        %v10049 = vshrl.u32 %v10048, 7
        %v10050 = vsub.s32 %v10047, %v10049
        %v10051 = vrot.slane %v10044, %v10050
        %v10052 = vcombine.low %v9808, %v9809
        %v10054 = vunpack.c.l.s4 1983009808
        %v10055 = vunpack.c.0.s8 %v10054
        %v10056 = vlaneseq
        %v10057 = vshrl.u32 %v10056, 7
        %v10058 = vsub.s32 %v10055, %v10057
        %v10059 = vrot.slane %v10052, %v10058
        %v10060 = vcombine.low %v9810, %v9811
        %v10062 = vunpack.c.l.s4 1983009808
        %v10063 = vunpack.c.0.s8 %v10062
        %v10064 = vlaneseq
        %v10065 = vshrl.u32 %v10064, 7
        %v10066 = vsub.s32 %v10063, %v10065
        %v10067 = vrot.slane %v10060, %v10066
        %v10068 = vcombine.low %v9812, %v9813
        %v10070 = vunpack.c.l.s4 1983009808
        %v10071 = vunpack.c.0.s8 %v10070
        %v10072 = vlaneseq
        %v10073 = vshrl.u32 %v10072, 7
        %v10074 = vsub.s32 %v10071, %v10073
        %v10075 = vrot.slane %v10068, %v10074
        %v10076 = vcombine.low %v9814, %v9815
        %v10078 = vunpack.c.l.s4 1983009808
        %v10079 = vunpack.c.0.s8 %v10078
        %v10080 = vlaneseq
        %v10081 = vshrl.u32 %v10080, 7
        %v10082 = vsub.s32 %v10079, %v10081
        %v10083 = vrot.slane %v10076, %v10082
        %v10084 = vcombine.low %v9816, %v9817
        %v10086 = vunpack.c.l.s4 1983009808
        %v10087 = vunpack.c.0.s8 %v10086
        %v10088 = vlaneseq
        %v10089 = vshrl.u32 %v10088, 7
        %v10090 = vsub.s32 %v10087, %v10089
        %v10091 = vrot.slane %v10084, %v10090
        %v10092 = vcombine.low %v9818, %v9819
        %v10094 = vunpack.c.l.s4 1983009808
        %v10095 = vunpack.c.0.s8 %v10094
        %v10096 = vlaneseq
        %v10097 = vshrl.u32 %v10096, 7
        %v10098 = vsub.s32 %v10095, %v10097
        %v10099 = vrot.slane %v10092, %v10098
        %v10100 = vcombine.low %v9820, %v9821
        %v10102 = vunpack.c.l.s4 1983009808
        %v10103 = vunpack.c.0.s8 %v10102
        %v10104 = vlaneseq
        %v10105 = vshrl.u32 %v10104, 7
        %v10106 = vsub.s32 %v10103, %v10105
        %v10107 = vrot.slane %v10100, %v10106
        %v10108 = vcombine.low %v9822, %v9823
        %v10110 = vunpack.c.l.s4 1983009808
        %v10111 = vunpack.c.0.s8 %v10110
        %v10112 = vlaneseq
        %v10113 = vshrl.u32 %v10112, 7
        %v10114 = vsub.s32 %v10111, %v10113
        %v10115 = vrot.slane %v10108, %v10114
        %v10116 = vcombine.low %v9824, %v9825
        %v10118 = vunpack.c.l.s4 1983009808
        %v10119 = vunpack.c.0.s8 %v10118
        %v10120 = vlaneseq
        %v10121 = vshrl.u32 %v10120, 7
        %v10122 = vsub.s32 %v10119, %v10121
        %v10123 = vrot.slane %v10116, %v10122
        %v10124 = vcombine.low %v9826, %v9827
        %v10126 = vunpack.c.l.s4 1983009808
        %v10127 = vunpack.c.0.s8 %v10126
        %v10128 = vlaneseq
        %v10129 = vshrl.u32 %v10128, 7
        %v10130 = vsub.s32 %v10127, %v10129
        %v10131 = vrot.slane %v10124, %v10130
        %v10132 = vcombine.low %v9828, %v9829
        %v10134 = vunpack.c.l.s4 1983009808
        %v10135 = vunpack.c.0.s8 %v10134
        %v10136 = vlaneseq
        %v10137 = vshrl.u32 %v10136, 7
        %v10138 = vsub.s32 %v10135, %v10137
        %v10139 = vrot.slane %v10132, %v10138
        %v10140 = vcombine.low %v9830, %v9831
        %v10142 = vunpack.c.l.s4 1983009808
        %v10143 = vunpack.c.0.s8 %v10142
        %v10144 = vlaneseq
        %v10145 = vshrl.u32 %v10144, 7
        %v10146 = vsub.s32 %v10143, %v10145
        %v10147 = vrot.slane %v10140, %v10146
        %v10148 = vcombine.low %v9832, %v9833
        %v10150 = vunpack.c.l.s4 1983009808
        %v10151 = vunpack.c.0.s8 %v10150
        %v10152 = vlaneseq
        %v10153 = vshrl.u32 %v10152, 7
        %v10154 = vsub.s32 %v10151, %v10153
        %v10155 = vrot.slane %v10148, %v10154
        %v10156 = vcombine.low %v9834, %v9835
        %v10158 = vunpack.c.l.s4 1983009808
        %v10159 = vunpack.c.0.s8 %v10158
        %v10160 = vlaneseq
        %v10161 = vshrl.u32 %v10160, 7
        %v10162 = vsub.s32 %v10159, %v10161
        %v10163 = vrot.slane %v10156, %v10162
        %v10164 = vcombine.low %v9836, %v9837
        %v10166 = vunpack.c.l.s4 1983009808
        %v10167 = vunpack.c.0.s8 %v10166
        %v10168 = vlaneseq
        %v10169 = vshrl.u32 %v10168, 7
        %v10170 = vsub.s32 %v10167, %v10169
        %v10171 = vrot.slane %v10164, %v10170
        %v10172 = vcombine.low %v9838, %v9839
        %v10174 = vunpack.c.l.s4 1983009808
        %v10175 = vunpack.c.0.s8 %v10174
        %v10176 = vlaneseq
        %v10177 = vshrl.u32 %v10176, 7
        %v10178 = vsub.s32 %v10175, %v10177
        %v10179 = vrot.slane %v10172, %v10178
        %v10180 = vcombine.low %v9840, %v9841
        %v10182 = vunpack.c.l.s4 1983009808
        %v10183 = vunpack.c.0.s8 %v10182
        %v10184 = vlaneseq
        %v10185 = vshrl.u32 %v10184, 7
        %v10186 = vsub.s32 %v10183, %v10185
        %v10187 = vrot.slane %v10180, %v10186
        %v10188 = vcombine.low %v9842, %v9843
        %v10190 = vunpack.c.l.s4 1983009808
        %v10191 = vunpack.c.0.s8 %v10190
        %v10192 = vlaneseq
        %v10193 = vshrl.u32 %v10192, 7
        %v10194 = vsub.s32 %v10191, %v10193
        %v10195 = vrot.slane %v10188, %v10194
        %v10196 = vcombine.low %v9844, %v9845
        %v10198 = vunpack.c.l.s4 1983009808
        %v10199 = vunpack.c.0.s8 %v10198
        %v10200 = vlaneseq
        %v10201 = vshrl.u32 %v10200, 7
        %v10202 = vsub.s32 %v10199, %v10201
        %v10203 = vrot.slane %v10196, %v10202
        %v10204 = vcombine.low %v9846, %v9847
        %v10206 = vunpack.c.l.s4 1983009808
        %v10207 = vunpack.c.0.s8 %v10206
        %v10208 = vlaneseq
        %v10209 = vshrl.u32 %v10208, 7
        %v10210 = vsub.s32 %v10207, %v10209
        %v10211 = vrot.slane %v10204, %v10210
        %v10212 = vcombine.low %v9848, %v9849
        %v10214 = vunpack.c.l.s4 1983009808
        %v10215 = vunpack.c.0.s8 %v10214
        %v10216 = vlaneseq
        %v10217 = vshrl.u32 %v10216, 7
        %v10218 = vsub.s32 %v10215, %v10217
        %v10219 = vrot.slane %v10212, %v10218
        %v10220 = vcombine.low %v9850, %v9851
        %v10222 = vunpack.c.l.s4 1983009808
        %v10223 = vunpack.c.0.s8 %v10222
        %v10224 = vlaneseq
        %v10225 = vshrl.u32 %v10224, 7
        %v10226 = vsub.s32 %v10223, %v10225
        %v10227 = vrot.slane %v10220, %v10226
        %v10228 = vcombine.low %v9852, %v9853
        %v10230 = vunpack.c.l.s4 1983009808
        %v10231 = vunpack.c.0.s8 %v10230
        %v10232 = vlaneseq
        %v10233 = vshrl.u32 %v10232, 7
        %v10234 = vsub.s32 %v10231, %v10233
        %v10235 = vrot.slane %v10228, %v10234
        %v10236 = vcombine.low %v9854, %v9855
        %v10238 = vunpack.c.l.s4 1983009808
        %v10239 = vunpack.c.0.s8 %v10238
        %v10240 = vlaneseq
        %v10241 = vshrl.u32 %v10240, 7
        %v10242 = vsub.s32 %v10239, %v10241
        %v10243 = vrot.slane %v10236, %v10242
        %v10244 = vcombine.low %v9856, %v9857
        %v10246 = vunpack.c.l.s4 1983009808
        %v10247 = vunpack.c.0.s8 %v10246
        %v10248 = vlaneseq
        %v10249 = vshrl.u32 %v10248, 7
        %v10250 = vsub.s32 %v10247, %v10249
        %v10251 = vrot.slane %v10244, %v10250
        %v10252 = vcombine.low %v9858, %v9859
        %v10254 = vunpack.c.l.s4 1983009808
        %v10255 = vunpack.c.0.s8 %v10254
        %v10256 = vlaneseq
        %v10257 = vshrl.u32 %v10256, 7
        %v10258 = vsub.s32 %v10255, %v10257
        %v10259 = vrot.slane %v10252, %v10258
        %v10300 = vld [vmem:[#allocation13] sm:$0x77]
        %v10302 = vlaneseq
        %v10303 = vshrl.u32 %v10302, 7
        %v10304 = vsub.s32 0, %v10303
        %v10305 = vrot.slane %v10300, %v10304
        %v10306 = vlaneseq
        %v10307 = vshrl.u32 %v10306, 7
        %v10308 = vsub.s32 4, %v10307
        %v10309 = vrot.slane %v10300, %v10308
        %v10312 = vlaneseq
        %v10313 = vshrl.u32 %v10312, 7
        %v10314 = vsub.s32 0, %v10313
        %v10315 = vrot.slane %v10305, %v10314
        %v10316 = vlaneseq
        %v10317 = vshrl.u32 %v10316, 7
        %v10318 = vsub.s32 0, %v10317
        %v10319 = vrot.slane %v10309, %v10318
        %v10322 = vcombine.low %v10315, %v10319
        %v10323 = vcombine.high %v10315, %v10319
        %v10325 = vunpack.c.l.s4 1983009808
        %v10326 = vunpack.c.0.s8 %v10325
        %v10327 = vlaneseq
        %v10328 = vshrl.u32 %v10327, 7
        %v10329 = vsub.s32 %v10326, %v10328
        %v10330 = vrot.slane %v10322, %v10329
        %v10332 = vunpack.c.l.s4 1983009808
        %v10333 = vunpack.c.0.s8 %v10332
        %v10334 = vlaneseq
        %v10335 = vshrl.u32 %v10334, 7
        %v10336 = vsub.s32 %v10333, %v10335
        %v10337 = vrot.slane %v10323, %v10336
        %v10338 = vcombine.high %v10330, %v10330
        %v10339 = vcombine.high %v10337, %v10337
        %v10344 = vadd.f32 %v9947, %v10330
        %v10345 = vadd.f32 %v9955, %v10338
        %v10346 = vadd.f32 %v9963, %v10337
        %v10347 = vadd.f32 %v9971, %v10339
        %v10348 = vadd.f32 %v9979, %v10330
        %v10349 = vadd.f32 %v9987, %v10338
        %v10350 = vadd.f32 %v9995, %v10337
        %v10351 = vadd.f32 %v10003, %v10339
        %v10352 = vadd.f32 %v10011, %v10330
        %v10353 = vadd.f32 %v10019, %v10338
        %v10354 = vadd.f32 %v10027, %v10337
        %v10355 = vadd.f32 %v10035, %v10339
        %v10356 = vadd.f32 %v10043, %v10330
        %v10357 = vadd.f32 %v10051, %v10338
        %v10358 = vadd.f32 %v10059, %v10337
        %v10359 = vadd.f32 %v10067, %v10339
        %v10360 = vadd.f32 %v10075, %v10330
        %v10361 = vadd.f32 %v10083, %v10338
        %v10362 = vadd.f32 %v10091, %v10337
        %v10363 = vadd.f32 %v10099, %v10339
        %v10364 = vadd.f32 %v10107, %v10330
        %v10365 = vadd.f32 %v10115, %v10338
        %v10366 = vadd.f32 %v10123, %v10337
        %v10367 = vadd.f32 %v10131, %v10339
        %v10368 = vadd.f32 %v10139, %v10330
        %v10369 = vadd.f32 %v10147, %v10338
        %v10370 = vadd.f32 %v10155, %v10337
        %v10371 = vadd.f32 %v10163, %v10339
        %v10372 = vadd.f32 %v10171, %v10330
        %v10373 = vadd.f32 %v10179, %v10338
        %v10374 = vadd.f32 %v10187, %v10337
        %v10375 = vadd.f32 %v10195, %v10339
        %v10376 = vadd.f32 %v10203, %v10330
        %v10377 = vadd.f32 %v10211, %v10338
        %v10378 = vadd.f32 %v10219, %v10337
        %v10379 = vadd.f32 %v10227, %v10339
        %v10380 = vadd.f32 %v10235, %v10330
        %v10381 = vadd.f32 %v10243, %v10338
        %v10382 = vadd.f32 %v10251, %v10337
        %v10383 = vadd.f32 %v10259, %v10339
        %vm10384 = vcmp.ge.f32.partialorder %v10344, 0.0
        %vm10385 = vcmp.ge.f32.partialorder %v10345, 0.0
        %vm10386 = vcmp.ge.f32.partialorder %v10346, 0.0
        %vm10387 = vcmp.ge.f32.partialorder %v10347, 0.0
        %vm10388 = vcmp.ge.f32.partialorder %v10348, 0.0
        %vm10389 = vcmp.ge.f32.partialorder %v10349, 0.0
        %vm10390 = vcmp.ge.f32.partialorder %v10350, 0.0
        %vm10391 = vcmp.ge.f32.partialorder %v10351, 0.0
        %vm10392 = vcmp.ge.f32.partialorder %v10352, 0.0
        %vm10393 = vcmp.ge.f32.partialorder %v10353, 0.0
        %vm10394 = vcmp.ge.f32.partialorder %v10354, 0.0
        %vm10395 = vcmp.ge.f32.partialorder %v10355, 0.0
        %vm10396 = vcmp.ge.f32.partialorder %v10356, 0.0
        %vm10397 = vcmp.ge.f32.partialorder %v10357, 0.0
        %vm10398 = vcmp.ge.f32.partialorder %v10358, 0.0
        %vm10399 = vcmp.ge.f32.partialorder %v10359, 0.0
        %vm10400 = vcmp.ge.f32.partialorder %v10360, 0.0
        %vm10401 = vcmp.ge.f32.partialorder %v10361, 0.0
        %vm10402 = vcmp.ge.f32.partialorder %v10362, 0.0
        %vm10403 = vcmp.ge.f32.partialorder %v10363, 0.0
        %vm10404 = vcmp.ge.f32.partialorder %v10364, 0.0
        %vm10405 = vcmp.ge.f32.partialorder %v10365, 0.0
        %vm10406 = vcmp.ge.f32.partialorder %v10366, 0.0
        %vm10407 = vcmp.ge.f32.partialorder %v10367, 0.0
        %vm10408 = vcmp.ge.f32.partialorder %v10368, 0.0
        %vm10409 = vcmp.ge.f32.partialorder %v10369, 0.0
        %vm10410 = vcmp.ge.f32.partialorder %v10370, 0.0
        %vm10411 = vcmp.ge.f32.partialorder %v10371, 0.0
        %vm10412 = vcmp.ge.f32.partialorder %v10372, 0.0
        %vm10413 = vcmp.ge.f32.partialorder %v10373, 0.0
        %vm10414 = vcmp.ge.f32.partialorder %v10374, 0.0
        %vm10415 = vcmp.ge.f32.partialorder %v10375, 0.0
        %vm10416 = vcmp.ge.f32.partialorder %v10376, 0.0
        %vm10417 = vcmp.ge.f32.partialorder %v10377, 0.0
        %vm10418 = vcmp.ge.f32.partialorder %v10378, 0.0
        %vm10419 = vcmp.ge.f32.partialorder %v10379, 0.0
        %vm10420 = vcmp.ge.f32.partialorder %v10380, 0.0
        %vm10421 = vcmp.ge.f32.partialorder %v10381, 0.0
        %vm10422 = vcmp.ge.f32.partialorder %v10382, 0.0
        %vm10423 = vcmp.ge.f32.partialorder %v10383, 0.0
        %v10424 = vmul.f32 %v10344, 0.3
        %v10425 = vmul.f32 %v10345, 0.3
        %v10426 = vmul.f32 %v10346, 0.3
        %v10427 = vmul.f32 %v10347, 0.3
        %v10428 = vmul.f32 %v10348, 0.3
        %v10429 = vmul.f32 %v10349, 0.3
        %v10430 = vmul.f32 %v10350, 0.3
        %v10431 = vmul.f32 %v10351, 0.3
        %v10432 = vmul.f32 %v10352, 0.3
        %v10433 = vmul.f32 %v10353, 0.3
        %v10434 = vmul.f32 %v10354, 0.3
        %v10435 = vmul.f32 %v10355, 0.3
        %v10436 = vmul.f32 %v10356, 0.3
        %v10437 = vmul.f32 %v10357, 0.3
        %v10438 = vmul.f32 %v10358, 0.3
        %v10439 = vmul.f32 %v10359, 0.3
        %v10440 = vmul.f32 %v10360, 0.3
        %v10441 = vmul.f32 %v10361, 0.3
        %v10442 = vmul.f32 %v10362, 0.3
        %v10443 = vmul.f32 %v10363, 0.3
        %v10444 = vmul.f32 %v10364, 0.3
        %v10445 = vmul.f32 %v10365, 0.3
        %v10446 = vmul.f32 %v10366, 0.3
        %v10447 = vmul.f32 %v10367, 0.3
        %v10448 = vmul.f32 %v10368, 0.3
        %v10449 = vmul.f32 %v10369, 0.3
        %v10450 = vmul.f32 %v10370, 0.3
        %v10451 = vmul.f32 %v10371, 0.3
        %v10452 = vmul.f32 %v10372, 0.3
        %v10453 = vmul.f32 %v10373, 0.3
        %v10454 = vmul.f32 %v10374, 0.3
        %v10455 = vmul.f32 %v10375, 0.3
        %v10456 = vmul.f32 %v10376, 0.3
        %v10457 = vmul.f32 %v10377, 0.3
        %v10458 = vmul.f32 %v10378, 0.3
        %v10459 = vmul.f32 %v10379, 0.3
        %v10460 = vmul.f32 %v10380, 0.3
        %v10461 = vmul.f32 %v10381, 0.3
        %v10462 = vmul.f32 %v10382, 0.3
        %v10463 = vmul.f32 %v10383, 0.3
        %v10464 = vsel %vm10384, %v10344, %v10424
        %v10465 = vsel %vm10385, %v10345, %v10425
        %v10466 = vsel %vm10386, %v10346, %v10426
        %v10467 = vsel %vm10387, %v10347, %v10427
        %v10468 = vsel %vm10388, %v10348, %v10428
        %v10469 = vsel %vm10389, %v10349, %v10429
        %v10470 = vsel %vm10390, %v10350, %v10430
        %v10471 = vsel %vm10391, %v10351, %v10431
        %v10472 = vsel %vm10392, %v10352, %v10432
        %v10473 = vsel %vm10393, %v10353, %v10433
        %v10474 = vsel %vm10394, %v10354, %v10434
        %v10475 = vsel %vm10395, %v10355, %v10435
        %v10476 = vsel %vm10396, %v10356, %v10436
        %v10477 = vsel %vm10397, %v10357, %v10437
        %v10478 = vsel %vm10398, %v10358, %v10438
        %v10479 = vsel %vm10399, %v10359, %v10439
        %v10480 = vsel %vm10400, %v10360, %v10440
        %v10481 = vsel %vm10401, %v10361, %v10441
        %v10482 = vsel %vm10402, %v10362, %v10442
        %v10483 = vsel %vm10403, %v10363, %v10443
        %v10484 = vsel %vm10404, %v10364, %v10444
        %v10485 = vsel %vm10405, %v10365, %v10445
        %v10486 = vsel %vm10406, %v10366, %v10446
        %v10487 = vsel %vm10407, %v10367, %v10447
        %v10488 = vsel %vm10408, %v10368, %v10448
        %v10489 = vsel %vm10409, %v10369, %v10449
        %v10490 = vsel %vm10410, %v10370, %v10450
        %v10491 = vsel %vm10411, %v10371, %v10451
        %v10492 = vsel %vm10412, %v10372, %v10452
        %v10493 = vsel %vm10413, %v10373, %v10453
        %v10494 = vsel %vm10414, %v10374, %v10454
        %v10495 = vsel %vm10415, %v10375, %v10455
        %v10496 = vsel %vm10416, %v10376, %v10456
        %v10497 = vsel %vm10417, %v10377, %v10457
        %v10498 = vsel %vm10418, %v10378, %v10458
        %v10499 = vsel %vm10419, %v10379, %v10459
        %v10500 = vsel %vm10420, %v10380, %v10460
        %v10501 = vsel %vm10421, %v10381, %v10461
        %v10502 = vsel %vm10422, %v10382, %v10462
        %v10503 = vsel %vm10423, %v10383, %v10463
        %v10504 = vlaneseq
        %v10505 = vshrl.u32 %v10504, 7
        %v10506 = vsub.s32 1, %v10505
        %v10507 = vrot.slane %v10300, %v10506
        %v10508 = vlaneseq
        %v10509 = vshrl.u32 %v10508, 7
        %v10510 = vsub.s32 5, %v10509
        %v10511 = vrot.slane %v10300, %v10510
        %v10514 = vlaneseq
        %v10515 = vshrl.u32 %v10514, 7
        %v10516 = vsub.s32 1, %v10515
        %v10517 = vrot.slane %v10507, %v10516
        %v10518 = vlaneseq
        %v10519 = vshrl.u32 %v10518, 7
        %v10520 = vsub.s32 1, %v10519
        %v10521 = vrot.slane %v10511, %v10520
        %v10524 = vcombine.low %v10517, %v10521
        %v10525 = vcombine.high %v10517, %v10521
        %v10527 = vunpack.c.l.s4 1983009808
        %v10528 = vunpack.c.0.s8 %v10527
        %v10529 = vlaneseq
        %v10530 = vshrl.u32 %v10529, 7
        %v10531 = vsub.s32 %v10528, %v10530
        %v10532 = vrot.slane %v10524, %v10531
        %v10534 = vunpack.c.l.s4 1983009808
        %v10535 = vunpack.c.0.s8 %v10534
        %v10536 = vlaneseq
        %v10537 = vshrl.u32 %v10536, 7
        %v10538 = vsub.s32 %v10535, %v10537
        %v10539 = vrot.slane %v10525, %v10538
        %v10540 = vcombine.high %v10532, %v10532
        %v10541 = vcombine.high %v10539, %v10539
        %v10546 = vmul.f32 %v10464, %v10532
        %v10547 = vmul.f32 %v10465, %v10540
        %v10548 = vmul.f32 %v10466, %v10539
        %v10549 = vmul.f32 %v10467, %v10541
        %v10550 = vmul.f32 %v10468, %v10532
        %v10551 = vmul.f32 %v10469, %v10540
        %v10552 = vmul.f32 %v10470, %v10539
        %v10553 = vmul.f32 %v10471, %v10541
        %v10554 = vmul.f32 %v10472, %v10532
        %v10555 = vmul.f32 %v10473, %v10540
        %v10556 = vmul.f32 %v10474, %v10539
        %v10557 = vmul.f32 %v10475, %v10541
        %v10558 = vmul.f32 %v10476, %v10532
        %v10559 = vmul.f32 %v10477, %v10540
        %v10560 = vmul.f32 %v10478, %v10539
        %v10561 = vmul.f32 %v10479, %v10541
        %v10562 = vmul.f32 %v10480, %v10532
        %v10563 = vmul.f32 %v10481, %v10540
        %v10564 = vmul.f32 %v10482, %v10539
        %v10565 = vmul.f32 %v10483, %v10541
        %v10566 = vmul.f32 %v10484, %v10532
        %v10567 = vmul.f32 %v10485, %v10540
        %v10568 = vmul.f32 %v10486, %v10539
        %v10569 = vmul.f32 %v10487, %v10541
        %v10570 = vmul.f32 %v10488, %v10532
        %v10571 = vmul.f32 %v10489, %v10540
        %v10572 = vmul.f32 %v10490, %v10539
        %v10573 = vmul.f32 %v10491, %v10541
        %v10574 = vmul.f32 %v10492, %v10532
        %v10575 = vmul.f32 %v10493, %v10540
        %v10576 = vmul.f32 %v10494, %v10539
        %v10577 = vmul.f32 %v10495, %v10541
        %v10578 = vmul.f32 %v10496, %v10532
        %v10579 = vmul.f32 %v10497, %v10540
        %v10580 = vmul.f32 %v10498, %v10539
        %v10581 = vmul.f32 %v10499, %v10541
        %v10582 = vmul.f32 %v10500, %v10532
        %v10583 = vmul.f32 %v10501, %v10540
        %v10584 = vmul.f32 %v10502, %v10539
        %v10585 = vmul.f32 %v10503, %v10541
        %v10586 = vlaneseq
        %v10587 = vshrl.u32 %v10586, 7
        %v10588 = vsub.s32 2, %v10587
        %v10589 = vrot.slane %v10300, %v10588
        %v10590 = vlaneseq
        %v10591 = vshrl.u32 %v10590, 7
        %v10592 = vsub.s32 6, %v10591
        %v10593 = vrot.slane %v10300, %v10592
        %v10596 = vlaneseq
        %v10597 = vshrl.u32 %v10596, 7
        %v10598 = vsub.s32 2, %v10597
        %v10599 = vrot.slane %v10589, %v10598
        %v10600 = vlaneseq
        %v10601 = vshrl.u32 %v10600, 7
        %v10602 = vsub.s32 2, %v10601
        %v10603 = vrot.slane %v10593, %v10602
        %v10606 = vcombine.low %v10599, %v10603
        %v10607 = vcombine.high %v10599, %v10603
        %v10609 = vunpack.c.l.s4 1983009808
        %v10610 = vunpack.c.0.s8 %v10609
        %v10611 = vlaneseq
        %v10612 = vshrl.u32 %v10611, 7
        %v10613 = vsub.s32 %v10610, %v10612
        %v10614 = vrot.slane %v10606, %v10613
        %v10616 = vunpack.c.l.s4 1983009808
        %v10617 = vunpack.c.0.s8 %v10616
        %v10618 = vlaneseq
        %v10619 = vshrl.u32 %v10618, 7
        %v10620 = vsub.s32 %v10617, %v10619
        %v10621 = vrot.slane %v10607, %v10620
        %v10622 = vcombine.high %v10614, %v10614
        %v10623 = vcombine.high %v10621, %v10621
        %v10628 = vadd.f32 %v10546, %v10614
        %v10629 = vadd.f32 %v10547, %v10622
        %v10630 = vadd.f32 %v10548, %v10621
        %v10631 = vadd.f32 %v10549, %v10623
        %v10632 = vadd.f32 %v10550, %v10614
        %v10633 = vadd.f32 %v10551, %v10622
        %v10634 = vadd.f32 %v10552, %v10621
        %v10635 = vadd.f32 %v10553, %v10623
        %v10636 = vadd.f32 %v10554, %v10614
        %v10637 = vadd.f32 %v10555, %v10622
        %v10638 = vadd.f32 %v10556, %v10621
        %v10639 = vadd.f32 %v10557, %v10623
        %v10640 = vadd.f32 %v10558, %v10614
        %v10641 = vadd.f32 %v10559, %v10622
        %v10642 = vadd.f32 %v10560, %v10621
        %v10643 = vadd.f32 %v10561, %v10623
        %v10644 = vadd.f32 %v10562, %v10614
        %v10645 = vadd.f32 %v10563, %v10622
        %v10646 = vadd.f32 %v10564, %v10621
        %v10647 = vadd.f32 %v10565, %v10623
        %v10648 = vadd.f32 %v10566, %v10614
        %v10649 = vadd.f32 %v10567, %v10622
        %v10650 = vadd.f32 %v10568, %v10621
        %v10651 = vadd.f32 %v10569, %v10623
        %v10652 = vadd.f32 %v10570, %v10614
        %v10653 = vadd.f32 %v10571, %v10622
        %v10654 = vadd.f32 %v10572, %v10621
        %v10655 = vadd.f32 %v10573, %v10623
        %v10656 = vadd.f32 %v10574, %v10614
        %v10657 = vadd.f32 %v10575, %v10622
        %v10658 = vadd.f32 %v10576, %v10621
        %v10659 = vadd.f32 %v10577, %v10623
        %v10660 = vadd.f32 %v10578, %v10614
        %v10661 = vadd.f32 %v10579, %v10622
        %v10662 = vadd.f32 %v10580, %v10621
        %v10663 = vadd.f32 %v10581, %v10623
        %v10664 = vadd.f32 %v10582, %v10614
        %v10665 = vadd.f32 %v10583, %v10622
        %v10666 = vadd.f32 %v10584, %v10621
        %v10667 = vadd.f32 %v10585, %v10623
        %v10708 = vcombine.low %v10628, %v10629
        %v10709 = vcombine.low %v10630, %v10631
        %v10711 = vunpack.c.l.s4 1983009808
        %v10712 = vunpack.c.0.s8 %v10711
        %v10713 = vlaneseq
        %v10714 = vshrl.u32 %v10713, 7
        %v10715 = vsub.s32 %v10712, %v10714
        %v10716 = vrot.slane %v10708, %v10715
        %v10718 = vunpack.c.l.s4 1983009808
        %v10719 = vunpack.c.0.s8 %v10718
        %v10720 = vlaneseq
        %v10721 = vshrl.u32 %v10720, 7
        %v10722 = vsub.s32 %v10719, %v10721
        %v10723 = vrot.slane %v10709, %v10722
        %v10724 = vcombine.low %v10716, %v10723
        %v10725 = vcombine.high %v10716, %v10723
        %v10726 = vcombine.low %v10632, %v10633
        %v10727 = vcombine.low %v10634, %v10635
        %v10729 = vunpack.c.l.s4 1983009808
        %v10730 = vunpack.c.0.s8 %v10729
        %v10731 = vlaneseq
        %v10732 = vshrl.u32 %v10731, 7
        %v10733 = vsub.s32 %v10730, %v10732
        %v10734 = vrot.slane %v10726, %v10733
        %v10736 = vunpack.c.l.s4 1983009808
        %v10737 = vunpack.c.0.s8 %v10736
        %v10738 = vlaneseq
        %v10739 = vshrl.u32 %v10738, 7
        %v10740 = vsub.s32 %v10737, %v10739
        %v10741 = vrot.slane %v10727, %v10740
        %v10742 = vcombine.low %v10734, %v10741
        %v10743 = vcombine.high %v10734, %v10741
        %v10744 = vcombine.low %v10636, %v10637
        %v10745 = vcombine.low %v10638, %v10639
        %v10747 = vunpack.c.l.s4 1983009808
        %v10748 = vunpack.c.0.s8 %v10747
        %v10749 = vlaneseq
        %v10750 = vshrl.u32 %v10749, 7
        %v10751 = vsub.s32 %v10748, %v10750
        %v10752 = vrot.slane %v10744, %v10751
        %v10754 = vunpack.c.l.s4 1983009808
        %v10755 = vunpack.c.0.s8 %v10754
        %v10756 = vlaneseq
        %v10757 = vshrl.u32 %v10756, 7
        %v10758 = vsub.s32 %v10755, %v10757
        %v10759 = vrot.slane %v10745, %v10758
        %v10760 = vcombine.low %v10752, %v10759
        %v10761 = vcombine.high %v10752, %v10759
        %v10762 = vcombine.low %v10640, %v10641
        %v10763 = vcombine.low %v10642, %v10643
        %v10765 = vunpack.c.l.s4 1983009808
        %v10766 = vunpack.c.0.s8 %v10765
        %v10767 = vlaneseq
        %v10768 = vshrl.u32 %v10767, 7
        %v10769 = vsub.s32 %v10766, %v10768
        %v10770 = vrot.slane %v10762, %v10769
        %v10772 = vunpack.c.l.s4 1983009808
        %v10773 = vunpack.c.0.s8 %v10772
        %v10774 = vlaneseq
        %v10775 = vshrl.u32 %v10774, 7
        %v10776 = vsub.s32 %v10773, %v10775
        %v10777 = vrot.slane %v10763, %v10776
        %v10778 = vcombine.low %v10770, %v10777
        %v10779 = vcombine.high %v10770, %v10777
        %v10780 = vcombine.low %v10644, %v10645
        %v10781 = vcombine.low %v10646, %v10647
        %v10783 = vunpack.c.l.s4 1983009808
        %v10784 = vunpack.c.0.s8 %v10783
        %v10785 = vlaneseq
        %v10786 = vshrl.u32 %v10785, 7
        %v10787 = vsub.s32 %v10784, %v10786
        %v10788 = vrot.slane %v10780, %v10787
        %v10790 = vunpack.c.l.s4 1983009808
        %v10791 = vunpack.c.0.s8 %v10790
        %v10792 = vlaneseq
        %v10793 = vshrl.u32 %v10792, 7
        %v10794 = vsub.s32 %v10791, %v10793
        %v10795 = vrot.slane %v10781, %v10794
        %v10796 = vcombine.low %v10788, %v10795
        %v10797 = vcombine.high %v10788, %v10795
        %v10798 = vcombine.low %v10648, %v10649
        %v10799 = vcombine.low %v10650, %v10651
        %v10801 = vunpack.c.l.s4 1983009808
        %v10802 = vunpack.c.0.s8 %v10801
        %v10803 = vlaneseq
        %v10804 = vshrl.u32 %v10803, 7
        %v10805 = vsub.s32 %v10802, %v10804
        %v10806 = vrot.slane %v10798, %v10805
        %v10808 = vunpack.c.l.s4 1983009808
        %v10809 = vunpack.c.0.s8 %v10808
        %v10810 = vlaneseq
        %v10811 = vshrl.u32 %v10810, 7
        %v10812 = vsub.s32 %v10809, %v10811
        %v10813 = vrot.slane %v10799, %v10812
        %v10814 = vcombine.low %v10806, %v10813
        %v10815 = vcombine.high %v10806, %v10813
        %v10816 = vcombine.low %v10652, %v10653
        %v10817 = vcombine.low %v10654, %v10655
        %v10819 = vunpack.c.l.s4 1983009808
        %v10820 = vunpack.c.0.s8 %v10819
        %v10821 = vlaneseq
        %v10822 = vshrl.u32 %v10821, 7
        %v10823 = vsub.s32 %v10820, %v10822
        %v10824 = vrot.slane %v10816, %v10823
        %v10826 = vunpack.c.l.s4 1983009808
        %v10827 = vunpack.c.0.s8 %v10826
        %v10828 = vlaneseq
        %v10829 = vshrl.u32 %v10828, 7
        %v10830 = vsub.s32 %v10827, %v10829
        %v10831 = vrot.slane %v10817, %v10830
        %v10832 = vcombine.low %v10824, %v10831
        %v10833 = vcombine.high %v10824, %v10831
        %v10834 = vcombine.low %v10656, %v10657
        %v10835 = vcombine.low %v10658, %v10659
        %v10837 = vunpack.c.l.s4 1983009808
        %v10838 = vunpack.c.0.s8 %v10837
        %v10839 = vlaneseq
        %v10840 = vshrl.u32 %v10839, 7
        %v10841 = vsub.s32 %v10838, %v10840
        %v10842 = vrot.slane %v10834, %v10841
        %v10844 = vunpack.c.l.s4 1983009808
        %v10845 = vunpack.c.0.s8 %v10844
        %v10846 = vlaneseq
        %v10847 = vshrl.u32 %v10846, 7
        %v10848 = vsub.s32 %v10845, %v10847
        %v10849 = vrot.slane %v10835, %v10848
        %v10850 = vcombine.low %v10842, %v10849
        %v10851 = vcombine.high %v10842, %v10849
        %v10852 = vcombine.low %v10660, %v10661
        %v10853 = vcombine.low %v10662, %v10663
        %v10855 = vunpack.c.l.s4 1983009808
        %v10856 = vunpack.c.0.s8 %v10855
        %v10857 = vlaneseq
        %v10858 = vshrl.u32 %v10857, 7
        %v10859 = vsub.s32 %v10856, %v10858
        %v10860 = vrot.slane %v10852, %v10859
        %v10862 = vunpack.c.l.s4 1983009808
        %v10863 = vunpack.c.0.s8 %v10862
        %v10864 = vlaneseq
        %v10865 = vshrl.u32 %v10864, 7
        %v10866 = vsub.s32 %v10863, %v10865
        %v10867 = vrot.slane %v10853, %v10866
        %v10868 = vcombine.low %v10860, %v10867
        %v10869 = vcombine.high %v10860, %v10867
        %v10870 = vcombine.low %v10664, %v10665
        %v10871 = vcombine.low %v10666, %v10667
        %v10873 = vunpack.c.l.s4 1983009808
        %v10874 = vunpack.c.0.s8 %v10873
        %v10875 = vlaneseq
        %v10876 = vshrl.u32 %v10875, 7
        %v10877 = vsub.s32 %v10874, %v10876
        %v10878 = vrot.slane %v10870, %v10877
        %v10880 = vunpack.c.l.s4 1983009808
        %v10881 = vunpack.c.0.s8 %v10880
        %v10882 = vlaneseq
        %v10883 = vshrl.u32 %v10882, 7
        %v10884 = vsub.s32 %v10881, %v10883
        %v10885 = vrot.slane %v10871, %v10884
        %v10886 = vcombine.low %v10878, %v10885
        %v10887 = vcombine.high %v10878, %v10885
        %10908 = vst [vmem:[%s441] sm:$0xff] %v10724
        %vm10909 = vcmask 891904
        %10910 = vst.msk [vmem:[%s441 + $0x8] sm:$0xff] %vm10909, %v10725
        %10911 = vst [vmem:[%s441 + $0x10] sm:$0xff] %v10742
        %10912 = vst.msk [vmem:[%s441 + $0x18] sm:$0xff] %vm10909, %v10743
        %10913 = vst [vmem:[%s441 + $0x20] sm:$0xff] %v10760
        %10914 = vst.msk [vmem:[%s441 + $0x28] sm:$0xff] %vm10909, %v10761
        %10915 = vst [vmem:[%s441 + $0x30] sm:$0xff] %v10778
        %10916 = vst.msk [vmem:[%s441 + $0x38] sm:$0xff] %vm10909, %v10779
        %10917 = vst [vmem:[%s441 + $0x40] sm:$0xff] %v10796
        %10918 = vst.msk [vmem:[%s441 + $0x48] sm:$0xff] %vm10909, %v10797
        %10919 = vst [vmem:[%s441 + $0x50] sm:$0xff] %v10814
        %10920 = vst.msk [vmem:[%s441 + $0x58] sm:$0xff] %vm10909, %v10815
        %10921 = vst [vmem:[%s441 + $0x60] sm:$0xff] %v10832
        %10922 = vst.msk [vmem:[%s441 + $0x68] sm:$0xff] %vm10909, %v10833
        %10923 = vst [vmem:[%s441 + $0x70] sm:$0xff] %v10850
        %10924 = vst.msk [vmem:[%s441 + $0x78] sm:$0xff] %vm10909, %v10851
        %10925 = vst [vmem:[%s441 + $0x80] sm:$0xff] %v10868
        %10926 = vst.msk [vmem:[%s441 + $0x88] sm:$0xff] %vm10909, %v10869
        %10927 = vst [vmem:[%s441 + $0x90] sm:$0x7f] %v10886
        %vm10928 = vcmask 890880
        %10929 = vst.msk [vmem:[%s441 + $0x98] sm:$0x7f] %vm10928, %v10887
        %p10930 = scmp.lt.s32.totalorder %s25, 1
        %s10931 = scalar_select %p10930, %s25, 1
        %s10932 = smul.addr %s10931, 20
        %s10933 = smul.addr %s10932, 8
        %s10934 = scalar_lea.vmem %s9, %s10933
        // Predicated region
        $region89: #{decoder_forward.1} parent=55 // pred_check
          %p10935 = pneg %p237
        $region90: #{decoder_forward.1} parent=55 // pred_check_branch
          %10937 = sbr.rel (%p10935) target = $region92
        $region91: #{decoder_forward.1} parent=55 // pred_region
          _
        $region92: #{decoder_forward.1} parent=55 // pred_fallthru
          _
      $region56: #{decoder_forward.1} parent=5 // pred_fallthru
        _
      %p10938 = scmp.le.s32.totalorder 2, %s20
      // Predicated region
      $region93: #{decoder_forward.1} parent=5 // pred_check
        %p10939 = pneg %p10938
      $region94: #{decoder_forward.1} parent=5 // pred_check_branch
        %10941 = sbr.rel (%p10939) target = $region96
      $region95: #{decoder_forward.1} parent=5 // pred_region
        %s10942 = ssub.s32 %s20, 2
        // Predicated region
        $region97: #{decoder_forward.1} parent=95 // pred_check
          %p10943 = pneg %p243
        $region98: #{decoder_forward.1} parent=95 // pred_check_branch
          %10945 = sbr.rel (%p10943) target = $region100
        $region99: #{decoder_forward.1} parent=95 // pred_region
          %p10946 = scmp.lt.s32.totalorder %s26, 1
          %s10947 = scalar_select %p10946, %s26, 1
          %s10948 = smul.addr %s10947, 20
          %s10949 = smul.addr %s10948, 8
          %s10950 = scalar_lea.vmem %s9, %s10949
        $region100: #{decoder_forward.1} parent=95 // pred_fallthru
          _
      $region96: #{decoder_forward.1} parent=5 // pred_fallthru
        _
    $region6: #{decoder_forward.1} parent=1 // loop_footer
      %s24 = sadd.s32 1, %s20
    $region7: #{decoder_forward.1} parent=1 // loop_footer_branch
      %19 = sbr.rel target = $region3
    $region8: #{decoder_forward.1} parent=1 // loop_exit
      _
    %10951 = vsyncpa [#allocation3], 1
    %s10952 = scalar_lea.sflag [#allocation3], 1
    %10953 = vsyncpa %s10952, 1
    %10954 = vsyncpa [#allocation5], 1
    %10955 = vsyncpa [#allocation8], 1
    %10956 = vsyncpa [#allocation11], 1
    %10957 = vsyncpa [#allocation14], 1

</llo_original>
